<compile_context>
chip_gen: v6e
topology: v6e:2x2x1
jax: 0.10.0
libtpu: 0.0.40
codegen_flags: <defaults>
</compile_context>

<pallas_src>
import jax
import jax.numpy as jnp
from jax.experimental import pallas as pl
from jax.experimental.pallas import tpu as pltpu

C_IN = 1000            # Conv1d in_channels
C_MID = 100            # Conv1d out_channels == LSTM hidden size
KSIZE = 15             # "height15": Conv1d kernel_size
PAD = 7                # Conv1d padding
FC1 = 30
FC2 = 3
NUM_LSTM_LAYERS = 2

HP = 128               # padded hidden/channel dim (lane-dense)
GP = 4 * HP            # padded fused-gate dim (i|f|g|o blocks of 128)
FCP = 128              # padded fc1 / fc2 width
ALIGN_PAD = 8          # in-kernel time padding (>= PAD, sublane aligned)


# ----------------------------- fused kernel ----------------------------------
def fused_kernel(x_ref, conv_w_ref, conv_b_ref,
                 wih0_ref, whh0_ref, bg0_ref,
                 wih1_ref, whh1_ref, bg1_ref,
                 h0_ref, c0_ref,
                 fc1_w_ref, fc1_b_ref, fc2_w_ref, fc2_b_ref,
                 out_ref,
                 xpad_ref):
    t_len = x_ref.shape[1]
    ofs = ALIGN_PAD - PAD                        # = 1

    # ---- Conv1d(1000->100, k=15, pad=7) + BatchNorm(eval, folded) + ReLU ----
    # Zero-pad in time inside the kernel; input cast to bf16 exactly once.
    xpad_ref[...] = jnp.zeros_like(xpad_ref)
    xpad_ref[ALIGN_PAD:ALIGN_PAD + t_len, :] = x_ref[0].astype(jnp.bfloat16)
    # One big matmul over all 15 taps: (T+16, 1000) @ (1000, 15*128).
    y = jnp.dot(xpad_ref[...], conv_w_ref[...],
                preferred_element_type=jnp.float32)          # (T+16, 15*HP)
    acc = jnp.zeros((t_len, HP), jnp.float32)
    for k in range(KSIZE):                                   # narrow shifted blocks
        acc = acc + y[k + ofs:k + ofs + t_len, k * HP:(k + 1) * HP]
    seq = jnp.maximum(acc + conv_b_ref[...], 0.0)            # (T, HP)

    # ---- 2-layer LSTM (hoisted input projection + static time unroll) ----
    layers = ((wih0_ref, whh0_ref, bg0_ref), (wih1_ref, whh1_ref, bg1_ref))
    for l, (wih_ref, whh_ref, bg_ref) in enumerate(layers):
        xg = jnp.dot(seq.astype(jnp.bfloat16), wih_ref[...],
                     preferred_element_type=jnp.float32) + bg_ref[...]   # (T, 4*HP)
        h = h0_ref[0, l:l + 1, :]                            # (1, HP)
        c = c0_ref[0, l:l + 1, :]
        hs = []
        for t in range(t_len):
            g = xg[t:t + 1, :] + jnp.dot(h.astype(jnp.bfloat16), whh_ref[...],
                                         preferred_element_type=jnp.float32)
            i_g = jax.nn.sigmoid(g[:, 0 * HP:1 * HP])        # torch gate order i,f,g,o
            f_g = jax.nn.sigmoid(g[:, 1 * HP:2 * HP])
            g_g = jnp.tanh(g[:, 2 * HP:3 * HP])
            o_g = jax.nn.sigmoid(g[:, 3 * HP:4 * HP])
            c = f_g * c + i_g * g_g
            h = o_g * jnp.tanh(c)
            hs.append(h)
        seq = jnp.concatenate(hs, axis=0)                    # (T, HP)

    # ---- fc1 -> dropout(eval: identity) -> ReLU -> fc2, written as (T, 3) ----
    h1 = jnp.maximum(jnp.dot(seq.astype(jnp.bfloat16), fc1_w_ref[...],
                             preferred_element_type=jnp.float32) + fc1_b_ref[...],
                     0.0)
    o = jnp.dot(h1.astype(jnp.bfloat16), fc2_w_ref[...],
                preferred_element_type=jnp.float32) + fc2_b_ref[...]     # (T, FCP)
    out_ref[0] = o[:, :FC2]


def forward(kp, X):
    """Full forward pass: one pallas_call, grid over batch ('parallel')."""
    batch, t_len, _ = X.shape
    wih0, whh0, bg0 = kp['lstm'][0]
    wih1, whh1, bg1 = kp['lstm'][1]
    return pl.pallas_call(
        fused_kernel,
        out_shape=jax.ShapeDtypeStruct((batch, t_len, FC2), jnp.float32),
        grid=(batch,),
        in_specs=[
            pl.BlockSpec((1, t_len, C_IN), lambda b: (b, 0, 0)),          # X
            pl.BlockSpec((C_IN, KSIZE * HP), lambda b: (0, 0)),           # conv W (taps concat)
            pl.BlockSpec((1, HP), lambda b: (0, 0)),                      # conv bias (BN folded)
            pl.BlockSpec((HP, GP), lambda b: (0, 0)),                     # Wih layer 0
            pl.BlockSpec((HP, GP), lambda b: (0, 0)),                     # Whh layer 0
            pl.BlockSpec((1, GP), lambda b: (0, 0)),                      # gate bias layer 0
            pl.BlockSpec((HP, GP), lambda b: (0, 0)),                     # Wih layer 1
            pl.BlockSpec((HP, GP), lambda b: (0, 0)),                     # Whh layer 1
            pl.BlockSpec((1, GP), lambda b: (0, 0)),                      # gate bias layer 1
            pl.BlockSpec((1, NUM_LSTM_LAYERS, HP), lambda b: (b, 0, 0)),  # h0 (per batch)
            pl.BlockSpec((1, NUM_LSTM_LAYERS, HP), lambda b: (b, 0, 0)),  # c0 (per batch)
            pl.BlockSpec((HP, FCP), lambda b: (0, 0)),                    # fc1 W
            pl.BlockSpec((1, FCP), lambda b: (0, 0)),                     # fc1 b
            pl.BlockSpec((FCP, FCP), lambda b: (0, 0)),                   # fc2 W
            pl.BlockSpec((1, FCP), lambda b: (0, 0)),                     # fc2 b
        ],
        out_specs=pl.BlockSpec((1, t_len, FC2), lambda b: (b, 0, 0)),
        scratch_shapes=[pltpu.VMEM((t_len + 2 * ALIGN_PAD, C_IN), jnp.bfloat16)],
        compiler_params=pltpu.CompilerParams(
            dimension_semantics=("parallel",),
            vmem_limit_bytes=32 * 1024 * 1024,
        ),
    )(X, kp['conv_w'], kp['conv_b'], wih0, whh0, bg0, wih1, whh1, bg1,
      kp['h0'], kp['c0'], kp['fc1_w'], kp['fc1_b'], kp['fc2_w'], kp['fc2_b'])


# --------------------- parameters (canonical + kernel layout) -----------------
def init_params(key, batch_size):
    """Canonical f32 parameters in torch layout (for the pure-JAX reference)."""
    ks = jax.random.split(key, 12)

    def unif(k, shape, fan_in):
        bound = 1.0 / (fan_in ** 0.5)
        return jax.random.uniform(k, shape, jnp.float32, -bound, bound)

    cp = {}
    cp['conv_w'] = unif(ks[0], (C_MID, C_IN, KSIZE), C_IN * KSIZE)
    cp['conv_b'] = unif(ks[1], (C_MID,), C_IN * KSIZE)
    cp['bn_gamma'] = jnp.ones((C_MID,), jnp.float32)
    cp['bn_beta'] = jnp.zeros((C_MID,), jnp.float32)
    cp['bn_mean'] = jnp.zeros((C_MID,), jnp.float32)
    cp['bn_var'] = jnp.ones((C_MID,), jnp.float32)
    cp['lstm'] = []
    for l in range(NUM_LSTM_LAYERS):
        kk = jax.random.split(ks[2 + l], 4)
        cp['lstm'].append((unif(kk[0], (4 * C_MID, C_MID), C_MID),   # w_ih
                           unif(kk[1], (4 * C_MID, C_MID), C_MID),   # w_hh
                           unif(kk[2], (4 * C_MID,), C_MID),         # b_ih
                           unif(kk[3], (4 * C_MID,), C_MID)))        # b_hh
    # module's fixed initial states: torch.rand(2, batch, 100)
    cp['h0'] = jax.random.uniform(ks[6], (NUM_LSTM_LAYERS, batch_size, C_MID), jnp.float32)
    cp['c0'] = jax.random.uniform(ks[7], (NUM_LSTM_LAYERS, batch_size, C_MID), jnp.float32)
    cp['fc1_w'] = unif(ks[8], (FC1, C_MID), C_MID)
    cp['fc1_b'] = unif(ks[9], (FC1,), C_MID)
    cp['fc2_w'] = unif(ks[10], (FC2, FC1), FC1)
    cp['fc2_b'] = unif(ks[11], (FC2,), FC1)
    return cp


def pack_params(cp):
    """Pad / fuse / transpose canonical params into the kernel layout."""
    eps = 1e-5
    scale = cp['bn_gamma'] / jnp.sqrt(cp['bn_var'] + eps)
    # Conv weight -> (C_IN, KSIZE*HP): column block k holds tap k, BN folded.
    w_tap = jnp.transpose(cp['conv_w'], (2, 1, 0)) * scale[None, None, :]   # (K, Cin, 100)
    w_tap = jnp.pad(w_tap, ((0, 0), (0, 0), (0, HP - C_MID)))               # (K, Cin, HP)
    kp = {}
    kp['conv_w'] = (jnp.transpose(w_tap, (1, 0, 2))
                    .reshape(C_IN, KSIZE * HP).astype(jnp.bfloat16))
    b_fold = (cp['conv_b'] - cp['bn_mean']) * scale + cp['bn_beta']
    kp['conv_b'] = jnp.pad(b_fold, (0, HP - C_MID)).reshape(1, HP)

    def fuse_gate_w(w, in_dim):
        w4 = w.reshape(4, C_MID, in_dim)               # torch (4H, in), gate-major i|f|g|o
        w4 = jnp.transpose(w4, (2, 0, 1))              # (in, 4, H)
        w4 = jnp.pad(w4, ((0, HP - in_dim), (0, 0), (0, HP - C_MID)))
        return w4.reshape(HP, GP).astype(jnp.bfloat16)

    kp['lstm'] = []
    for (wih, whh, bih, bhh) in cp['lstm']:
        bg = jnp.pad((bih + bhh).reshape(4, C_MID),
                     ((0, 0), (0, HP - C_MID))).reshape(1, GP)
        kp['lstm'].append((fuse_gate_w(wih, C_MID), fuse_gate_w(whh, C_MID), bg))

    # h0/c0 -> batch-major (B, L, HP), zero pad lanes (keeps pad-lane invariant).
    kp['h0'] = jnp.pad(jnp.transpose(cp['h0'], (1, 0, 2)),
                       ((0, 0), (0, 0), (0, HP - C_MID)))
    kp['c0'] = jnp.pad(jnp.transpose(cp['c0'], (1, 0, 2)),
                       ((0, 0), (0, 0), (0, HP - C_MID)))

    kp['fc1_w'] = jnp.pad(cp['fc1_w'].T, ((0, HP - C_MID), (0, FCP - FC1))).astype(jnp.bfloat16)
    kp['fc1_b'] = jnp.pad(cp['fc1_b'], (0, FCP - FC1)).reshape(1, FCP)
    kp['fc2_w'] = jnp.pad(cp['fc2_w'].T, ((0, FCP - FC1), (0, FCP - FC2))).astype(jnp.bfloat16)
    kp['fc2_b'] = jnp.pad(cp['fc2_b'], (0, FCP - FC2)).reshape(1, FCP)
    return kp


# ----------------------- pure-JAX reference (eval mode) -----------------------
def reference_forward(cp, X):
    B, T, _ = X.shape
    scale = cp['bn_gamma'] / jnp.sqrt(cp['bn_var'] + 1e-5)
    xpad = jnp.pad(X, ((0, 0), (PAD, PAD), (0, 0)))                 # (B, T+14, Cin)
    out = jnp.zeros((B, T, C_MID), jnp.float32)
    for k in range(KSIZE):
        out = out + jnp.einsum('btc,oc->bto', xpad[:, k:k + T, :], cp['conv_w'][:, :, k])
    out = out + cp['conv_b']
    out = (out - cp['bn_mean']) * scale + cp['bn_beta']
    seq = jnp.maximum(out, 0.0)                                     # (B, T, 100)
    for l in range(NUM_LSTM_LAYERS):
        wih, whh, bih, bhh = cp['lstm'][l]
        h = cp['h0'][l]
        c = cp['c0'][l]
        hs = []
        for t in range(T):
            g = seq[:, t, :] @ wih.T + bih + h @ whh.T + bhh
            i = jax.nn.sigmoid(g[:, :C_MID])
            f = jax.nn.sigmoid(g[:, C_MID:2 * C_MID])
            gg = jnp.tanh(g[:, 2 * C_MID:3 * C_MID])
            o = jax.nn.sigmoid(g[:, 3 * C_MID:])
            c = f * c + i * gg
            h = o * jnp.tanh(c)
            hs.append(h)
        seq = jnp.stack(hs, axis=1)
    h1 = jnp.maximum(seq @ cp['fc1_w'].T + cp['fc1_b'], 0.0)        # dropout(eval)=identity
    return h1 @ cp['fc2_w'].T + cp['fc2_b']                          # (B, T, 3)


if __name__ == "__main__":
    B, T = 2, 8                                   # small batch / seq; feature dim fixed at 1000
    key = jax.random.PRNGKey(0)
    k_param, k_x = jax.random.split(key)
    cparams = init_params(k_param, B)
    kparams = pack_params(cparams)
    X = jax.random.normal(k_x, (B, T, C_IN), jnp.float32)

    out = jax.jit(forward)(kparams, X)
    out = jax.block_until_ready(out)

    assert out.shape == (B, T, FC2), out.shape
    assert bool(jnp.all(jnp.isfinite(out)))

    ref = reference_forward(cparams, X)
    err = float(jnp.max(jnp.abs(out - ref)))
    assert err < 5e-2, f"max abs diff vs reference: {err}"
    print("KERNEL_OK")
</pallas_src>

<mosaic_0001>
module attributes {stable_mosaic.version = 11 : i64} {
  func.func @fused_kernel(%arg0: i32, %arg1: memref<1x8x1000xf32, #tpu.memory_space<vmem>>, %arg2: memref<1000x1920xbf16, #tpu.memory_space<vmem>>, %arg3: memref<1x128xf32, #tpu.memory_space<vmem>>, %arg4: memref<128x512xbf16, #tpu.memory_space<vmem>>, %arg5: memref<128x512xbf16, #tpu.memory_space<vmem>>, %arg6: memref<1x512xf32, #tpu.memory_space<vmem>>, %arg7: memref<128x512xbf16, #tpu.memory_space<vmem>>, %arg8: memref<128x512xbf16, #tpu.memory_space<vmem>>, %arg9: memref<1x512xf32, #tpu.memory_space<vmem>>, %arg10: memref<1x2x128xf32, #tpu.memory_space<vmem>>, %arg11: memref<1x2x128xf32, #tpu.memory_space<vmem>>, %arg12: memref<128x128xbf16, #tpu.memory_space<vmem>>, %arg13: memref<1x128xf32, #tpu.memory_space<vmem>>, %arg14: memref<128x128xbf16, #tpu.memory_space<vmem>>, %arg15: memref<1x128xf32, #tpu.memory_space<vmem>>, %arg16: memref<1x8x3xf32, #tpu.memory_space<vmem>>, %arg17: memref<24x1000xbf16, #tpu.memory_space<vmem>>) attributes {dimension_semantics = [#tpu.dimension_semantics<parallel>], iteration_bounds = array<i64: 2>, scalar_prefetch = 0 : i64, scratch_operands = 1 : i64, tpu.core_type = #tpu.core_type<tc>, window_params = [{transform_indices = @transform_0, window_bounds = array<i64: 1, 8, 1000>}, {pipeline_mode = #tpu.pipeline_mode<synchronous>, transform_indices = @transform_1, window_bounds = array<i64: 1000, 1920>}, {pipeline_mode = #tpu.pipeline_mode<synchronous>, transform_indices = @transform_2, window_bounds = array<i64: 1, 128>}, {pipeline_mode = #tpu.pipeline_mode<synchronous>, transform_indices = @transform_3, window_bounds = array<i64: 128, 512>}, {pipeline_mode = #tpu.pipeline_mode<synchronous>, transform_indices = @transform_4, window_bounds = array<i64: 128, 512>}, {pipeline_mode = #tpu.pipeline_mode<synchronous>, transform_indices = @transform_5, window_bounds = array<i64: 1, 512>}, {pipeline_mode = #tpu.pipeline_mode<synchronous>, transform_indices = @transform_6, window_bounds = array<i64: 128, 512>}, {pipeline_mode = #tpu.pipeline_mode<synchronous>, transform_indices = @transform_7, window_bounds = array<i64: 128, 512>}, {pipeline_mode = #tpu.pipeline_mode<synchronous>, transform_indices = @transform_8, window_bounds = array<i64: 1, 512>}, {transform_indices = @transform_9, window_bounds = array<i64: 1, 2, 128>}, {transform_indices = @transform_10, window_bounds = array<i64: 1, 2, 128>}, {pipeline_mode = #tpu.pipeline_mode<synchronous>, transform_indices = @transform_11, window_bounds = array<i64: 128, 128>}, {pipeline_mode = #tpu.pipeline_mode<synchronous>, transform_indices = @transform_12, window_bounds = array<i64: 1, 128>}, {pipeline_mode = #tpu.pipeline_mode<synchronous>, transform_indices = @transform_13, window_bounds = array<i64: 128, 128>}, {pipeline_mode = #tpu.pipeline_mode<synchronous>, transform_indices = @transform_14, window_bounds = array<i64: 1, 128>}, {transform_indices = @transform_15, window_bounds = array<i64: 1, 8, 3>}]} {
    %cst = arith.constant 0.000000e+00 : bf16
    %0 = vector.broadcast %cst : bf16 to vector<24x1000xbf16>
    %c0 = arith.constant 0 : index
    %c0_0 = arith.constant 0 : index
    %1 = vector.load %arg17[%c0, %c0_0] : memref<24x1000xbf16, #tpu.memory_space<vmem>>, vector<24x1000xbf16>
    tpu.vector_store %arg17[%c0, %c0_0], %0 {strides = array<i32>} : memref<24x1000xbf16, #tpu.memory_space<vmem>>, vector<24x1000xbf16>,
    %c0_1 = arith.constant 0 : index
    %c0_2 = arith.constant 0 : index
    %c0_3 = arith.constant 0 : index
    %2 = vector.load %arg1[%c0_1, %c0_2, %c0_3] : memref<1x8x1000xf32, #tpu.memory_space<vmem>>, vector<1x8x1000xf32>
    %3 = vector.shape_cast %2 : vector<1x8x1000xf32> to vector<8x1000xf32>
    %4 = arith.truncf %3 : vector<8x1000xf32> to vector<8x1000xbf16>
    %c8 = arith.constant 8 : index
    %c0_4 = arith.constant 0 : index
    %5 = vector.load %arg17[%c8, %c0_4] : memref<24x1000xbf16, #tpu.memory_space<vmem>>, vector<8x1000xbf16>
    tpu.vector_store %arg17[%c8, %c0_4], %4 {strides = array<i32>} : memref<24x1000xbf16, #tpu.memory_space<vmem>>, vector<8x1000xbf16>,
    %c0_5 = arith.constant 0 : index
    %c0_6 = arith.constant 0 : index
    %6 = vector.load %arg17[%c0_5, %c0_6] : memref<24x1000xbf16, #tpu.memory_space<vmem>>, vector<24x1000xbf16>
    %c0_7 = arith.constant 0 : index
    %c0_8 = arith.constant 0 : index
    %7 = vector.load %arg2[%c0_7, %c0_8] : memref<1000x1920xbf16, #tpu.memory_space<vmem>>, vector<1000x1920xbf16>
    %cst_9 = arith.constant dense<0.000000e+00> : vector<24x1920xf32>
    %8 = tpu.matmul %6, %7, %cst_9 {dimension_numbers = #tpu.dot_dimension_numbers<[1], [0], [0], [1], [0, 0, 1, 1], [], []>} : vector<24x1000xbf16>, vector<1000x1920xbf16>, vector<24x1920xf32> -> vector<24x1920xf32>
    %cst_10 = arith.constant 0.000000e+00 : f32
    %9 = vector.broadcast %cst_10 : f32 to vector<8x128xf32>
    %10 = vector.extract_strided_slice %8 {offsets = [1, 0], sizes = [8, 128], strides = [1, 1]} : vector<24x1920xf32> to vector<8x128xf32>
    %11 = arith.addf %9, %10 : vector<8x128xf32>
    %12 = vector.extract_strided_slice %8 {offsets = [2, 128], sizes = [8, 128], strides = [1, 1]} : vector<24x1920xf32> to vector<8x128xf32>
    %13 = arith.addf %11, %12 : vector<8x128xf32>
    %14 = vector.extract_strided_slice %8 {offsets = [3, 256], sizes = [8, 128], strides = [1, 1]} : vector<24x1920xf32> to vector<8x128xf32>
    %15 = arith.addf %13, %14 : vector<8x128xf32>
    %16 = vector.extract_strided_slice %8 {offsets = [4, 384], sizes = [8, 128], strides = [1, 1]} : vector<24x1920xf32> to vector<8x128xf32>
    %17 = arith.addf %15, %16 : vector<8x128xf32>
    %18 = vector.extract_strided_slice %8 {offsets = [5, 512], sizes = [8, 128], strides = [1, 1]} : vector<24x1920xf32> to vector<8x128xf32>
    %19 = arith.addf %17, %18 : vector<8x128xf32>
    %20 = vector.extract_strided_slice %8 {offsets = [6, 640], sizes = [8, 128], strides = [1, 1]} : vector<24x1920xf32> to vector<8x128xf32>
    %21 = arith.addf %19, %20 : vector<8x128xf32>
    %22 = vector.extract_strided_slice %8 {offsets = [7, 768], sizes = [8, 128], strides = [1, 1]} : vector<24x1920xf32> to vector<8x128xf32>
    %23 = arith.addf %21, %22 : vector<8x128xf32>
    %24 = vector.extract_strided_slice %8 {offsets = [8, 896], sizes = [8, 128], strides = [1, 1]} : vector<24x1920xf32> to vector<8x128xf32>
    %25 = arith.addf %23, %24 : vector<8x128xf32>
    %26 = vector.extract_strided_slice %8 {offsets = [9, 1024], sizes = [8, 128], strides = [1, 1]} : vector<24x1920xf32> to vector<8x128xf32>
    %27 = arith.addf %25, %26 : vector<8x128xf32>
    %28 = vector.extract_strided_slice %8 {offsets = [10, 1152], sizes = [8, 128], strides = [1, 1]} : vector<24x1920xf32> to vector<8x128xf32>
    %29 = arith.addf %27, %28 : vector<8x128xf32>
    %30 = vector.extract_strided_slice %8 {offsets = [11, 1280], sizes = [8, 128], strides = [1, 1]} : vector<24x1920xf32> to vector<8x128xf32>
    %31 = arith.addf %29, %30 : vector<8x128xf32>
    %32 = vector.extract_strided_slice %8 {offsets = [12, 1408], sizes = [8, 128], strides = [1, 1]} : vector<24x1920xf32> to vector<8x128xf32>
    %33 = arith.addf %31, %32 : vector<8x128xf32>
    %34 = vector.extract_strided_slice %8 {offsets = [13, 1536], sizes = [8, 128], strides = [1, 1]} : vector<24x1920xf32> to vector<8x128xf32>
    %35 = arith.addf %33, %34 : vector<8x128xf32>
    %36 = vector.extract_strided_slice %8 {offsets = [14, 1664], sizes = [8, 128], strides = [1, 1]} : vector<24x1920xf32> to vector<8x128xf32>
    %37 = arith.addf %35, %36 : vector<8x128xf32>
    %38 = vector.extract_strided_slice %8 {offsets = [15, 1792], sizes = [8, 128], strides = [1, 1]} : vector<24x1920xf32> to vector<8x128xf32>
    %39 = arith.addf %37, %38 : vector<8x128xf32>
    %c0_11 = arith.constant 0 : index
    %c0_12 = arith.constant 0 : index
    %40 = vector.load %arg3[%c0_11, %c0_12] : memref<1x128xf32, #tpu.memory_space<vmem>>, vector<1x128xf32>
    %41 = vector.broadcast %40 : vector<1x128xf32> to vector<8x128xf32>
    %42 = arith.addf %39, %41 : vector<8x128xf32>
    %cst_13 = arith.constant 0.000000e+00 : f32
    %43 = vector.broadcast %cst_13 : f32 to vector<8x128xf32>
    %44 = arith.maximumf %42, %43 : vector<8x128xf32>
    %45 = arith.truncf %44 : vector<8x128xf32> to vector<8x128xbf16>
    %c0_14 = arith.constant 0 : index
    %c0_15 = arith.constant 0 : index
    %46 = vector.load %arg4[%c0_14, %c0_15] : memref<128x512xbf16, #tpu.memory_space<vmem>>, vector<128x512xbf16>
    %cst_16 = arith.constant dense<0.000000e+00> : vector<8x512xf32>
    %47 = tpu.matmul %45, %46, %cst_16 {dimension_numbers = #tpu.dot_dimension_numbers<[1], [0], [0], [1], [0, 0, 1, 1], [], []>} : vector<8x128xbf16>, vector<128x512xbf16>, vector<8x512xf32> -> vector<8x512xf32>
    %c0_17 = arith.constant 0 : index
    %c0_18 = arith.constant 0 : index
    %48 = vector.load %arg6[%c0_17, %c0_18] : memref<1x512xf32, #tpu.memory_space<vmem>>, vector<1x512xf32>
    %49 = vector.broadcast %48 : vector<1x512xf32> to vector<8x512xf32>
    %50 = arith.addf %47, %49 : vector<8x512xf32>
    %c0_19 = arith.constant 0 : index
    %c0_20 = arith.constant 0 : index
    %c0_21 = arith.constant 0 : index
    %51 = vector.load %arg10[%c0_19, %c0_20, %c0_21] : memref<1x2x128xf32, #tpu.memory_space<vmem>>, vector<1x1x128xf32>
    %52 = vector.shape_cast %51 : vector<1x1x128xf32> to vector<1x128xf32>
    %c0_22 = arith.constant 0 : index
    %c0_23 = arith.constant 0 : index
    %c0_24 = arith.constant 0 : index
    %53 = vector.load %arg11[%c0_22, %c0_23, %c0_24] : memref<1x2x128xf32, #tpu.memory_space<vmem>>, vector<1x1x128xf32>
    %54 = vector.shape_cast %53 : vector<1x1x128xf32> to vector<1x128xf32>
    %55 = vector.extract_strided_slice %50 {offsets = [0, 0], sizes = [1, 512], strides = [1, 1]} : vector<8x512xf32> to vector<1x512xf32>
    %56 = arith.truncf %52 : vector<1x128xf32> to vector<1x128xbf16>
    %c0_25 = arith.constant 0 : index
    %c0_26 = arith.constant 0 : index
    %57 = vector.load %arg5[%c0_25, %c0_26] : memref<128x512xbf16, #tpu.memory_space<vmem>>, vector<128x512xbf16>
    %cst_27 = arith.constant dense<0.000000e+00> : vector<1x512xf32>
    %58 = tpu.matmul %56, %57, %cst_27 {dimension_numbers = #tpu.dot_dimension_numbers<[1], [0], [0], [1], [0, 0, 1, 1], [], []>} : vector<1x128xbf16>, vector<128x512xbf16>, vector<1x512xf32> -> vector<1x512xf32>
    %59 = arith.addf %55, %58 : vector<1x512xf32>
    %60 = vector.extract_strided_slice %59 {offsets = [0, 0], sizes = [1, 128], strides = [1, 1]} : vector<1x512xf32> to vector<1x128xf32>
    %61 = arith.negf %60 : vector<1x128xf32>
    %62 = math.exp %61 : vector<1x128xf32>
    %cst_28 = arith.constant 1.000000e+00 : f32
    %63 = vector.broadcast %cst_28 : f32 to vector<1x128xf32>
    %64 = arith.addf %63, %62 : vector<1x128xf32>
    %65 = arith.divf %63, %64 : vector<1x128xf32>
    %66 = vector.extract_strided_slice %59 {offsets = [0, 128], sizes = [1, 128], strides = [1, 1]} : vector<1x512xf32> to vector<1x128xf32>
    %67 = arith.negf %66 : vector<1x128xf32>
    %68 = math.exp %67 : vector<1x128xf32>
    %cst_29 = arith.constant 1.000000e+00 : f32
    %69 = vector.broadcast %cst_29 : f32 to vector<1x128xf32>
    %70 = arith.addf %69, %68 : vector<1x128xf32>
    %71 = arith.divf %69, %70 : vector<1x128xf32>
    %72 = vector.extract_strided_slice %59 {offsets = [0, 256], sizes = [1, 128], strides = [1, 1]} : vector<1x512xf32> to vector<1x128xf32>
    %73 = math.tanh %72 : vector<1x128xf32>
    %74 = vector.extract_strided_slice %59 {offsets = [0, 384], sizes = [1, 128], strides = [1, 1]} : vector<1x512xf32> to vector<1x128xf32>
    %75 = arith.negf %74 : vector<1x128xf32>
    %76 = math.exp %75 : vector<1x128xf32>
    %cst_30 = arith.constant 1.000000e+00 : f32
    %77 = vector.broadcast %cst_30 : f32 to vector<1x128xf32>
    %78 = arith.addf %77, %76 : vector<1x128xf32>
    %79 = arith.divf %77, %78 : vector<1x128xf32>
    %80 = arith.mulf %71, %54 : vector<1x128xf32>
    %81 = arith.mulf %65, %73 : vector<1x128xf32>
    %82 = arith.addf %80, %81 : vector<1x128xf32>
    %83 = math.tanh %82 : vector<1x128xf32>
    %84 = arith.mulf %79, %83 : vector<1x128xf32>
    %85 = vector.extract_strided_slice %50 {offsets = [1, 0], sizes = [1, 512], strides = [1, 1]} : vector<8x512xf32> to vector<1x512xf32>
    %86 = arith.truncf %84 : vector<1x128xf32> to vector<1x128xbf16>
    %c0_31 = arith.constant 0 : index
    %c0_32 = arith.constant 0 : index
    %87 = vector.load %arg5[%c0_31, %c0_32] : memref<128x512xbf16, #tpu.memory_space<vmem>>, vector<128x512xbf16>
    %cst_33 = arith.constant dense<0.000000e+00> : vector<1x512xf32>
    %88 = tpu.matmul %86, %87, %cst_33 {dimension_numbers = #tpu.dot_dimension_numbers<[1], [0], [0], [1], [0, 0, 1, 1], [], []>} : vector<1x128xbf16>, vector<128x512xbf16>, vector<1x512xf32> -> vector<1x512xf32>
    %89 = arith.addf %85, %88 : vector<1x512xf32>
    %90 = vector.extract_strided_slice %89 {offsets = [0, 0], sizes = [1, 128], strides = [1, 1]} : vector<1x512xf32> to vector<1x128xf32>
    %91 = arith.negf %90 : vector<1x128xf32>
    %92 = math.exp %91 : vector<1x128xf32>
    %cst_34 = arith.constant 1.000000e+00 : f32
    %93 = vector.broadcast %cst_34 : f32 to vector<1x128xf32>
    %94 = arith.addf %93, %92 : vector<1x128xf32>
    %95 = arith.divf %93, %94 : vector<1x128xf32>
    %96 = vector.extract_strided_slice %89 {offsets = [0, 128], sizes = [1, 128], strides = [1, 1]} : vector<1x512xf32> to vector<1x128xf32>
    %97 = arith.negf %96 : vector<1x128xf32>
    %98 = math.exp %97 : vector<1x128xf32>
    %cst_35 = arith.constant 1.000000e+00 : f32
    %99 = vector.broadcast %cst_35 : f32 to vector<1x128xf32>
    %100 = arith.addf %99, %98 : vector<1x128xf32>
    %101 = arith.divf %99, %100 : vector<1x128xf32>
    %102 = vector.extract_strided_slice %89 {offsets = [0, 256], sizes = [1, 128], strides = [1, 1]} : vector<1x512xf32> to vector<1x128xf32>
    %103 = math.tanh %102 : vector<1x128xf32>
    %104 = vector.extract_strided_slice %89 {offsets = [0, 384], sizes = [1, 128], strides = [1, 1]} : vector<1x512xf32> to vector<1x128xf32>
    %105 = arith.negf %104 : vector<1x128xf32>
    %106 = math.exp %105 : vector<1x128xf32>
    %cst_36 = arith.constant 1.000000e+00 : f32
    %107 = vector.broadcast %cst_36 : f32 to vector<1x128xf32>
    %108 = arith.addf %107, %106 : vector<1x128xf32>
    %109 = arith.divf %107, %108 : vector<1x128xf32>
    %110 = arith.mulf %101, %82 : vector<1x128xf32>
    %111 = arith.mulf %95, %103 : vector<1x128xf32>
    %112 = arith.addf %110, %111 : vector<1x128xf32>
    %113 = math.tanh %112 : vector<1x128xf32>
    %114 = arith.mulf %109, %113 : vector<1x128xf32>
    %115 = vector.extract_strided_slice %50 {offsets = [2, 0], sizes = [1, 512], strides = [1, 1]} : vector<8x512xf32> to vector<1x512xf32>
    %116 = arith.truncf %114 : vector<1x128xf32> to vector<1x128xbf16>
    %c0_37 = arith.constant 0 : index
    %c0_38 = arith.constant 0 : index
    %117 = vector.load %arg5[%c0_37, %c0_38] : memref<128x512xbf16, #tpu.memory_space<vmem>>, vector<128x512xbf16>
    %cst_39 = arith.constant dense<0.000000e+00> : vector<1x512xf32>
    %118 = tpu.matmul %116, %117, %cst_39 {dimension_numbers = #tpu.dot_dimension_numbers<[1], [0], [0], [1], [0, 0, 1, 1], [], []>} : vector<1x128xbf16>, vector<128x512xbf16>, vector<1x512xf32> -> vector<1x512xf32>
    %119 = arith.addf %115, %118 : vector<1x512xf32>
    %120 = vector.extract_strided_slice %119 {offsets = [0, 0], sizes = [1, 128], strides = [1, 1]} : vector<1x512xf32> to vector<1x128xf32>
    %121 = arith.negf %120 : vector<1x128xf32>
    %122 = math.exp %121 : vector<1x128xf32>
    %cst_40 = arith.constant 1.000000e+00 : f32
    %123 = vector.broadcast %cst_40 : f32 to vector<1x128xf32>
    %124 = arith.addf %123, %122 : vector<1x128xf32>
    %125 = arith.divf %123, %124 : vector<1x128xf32>
    %126 = vector.extract_strided_slice %119 {offsets = [0, 128], sizes = [1, 128], strides = [1, 1]} : vector<1x512xf32> to vector<1x128xf32>
    %127 = arith.negf %126 : vector<1x128xf32>
    %128 = math.exp %127 : vector<1x128xf32>
    %cst_41 = arith.constant 1.000000e+00 : f32
    %129 = vector.broadcast %cst_41 : f32 to vector<1x128xf32>
    %130 = arith.addf %129, %128 : vector<1x128xf32>
    %131 = arith.divf %129, %130 : vector<1x128xf32>
    %132 = vector.extract_strided_slice %119 {offsets = [0, 256], sizes = [1, 128], strides = [1, 1]} : vector<1x512xf32> to vector<1x128xf32>
    %133 = math.tanh %132 : vector<1x128xf32>
    %134 = vector.extract_strided_slice %119 {offsets = [0, 384], sizes = [1, 128], strides = [1, 1]} : vector<1x512xf32> to vector<1x128xf32>
    %135 = arith.negf %134 : vector<1x128xf32>
    %136 = math.exp %135 : vector<1x128xf32>
    %cst_42 = arith.constant 1.000000e+00 : f32
    %137 = vector.broadcast %cst_42 : f32 to vector<1x128xf32>
    %138 = arith.addf %137, %136 : vector<1x128xf32>
    %139 = arith.divf %137, %138 : vector<1x128xf32>
    %140 = arith.mulf %131, %112 : vector<1x128xf32>
    %141 = arith.mulf %125, %133 : vector<1x128xf32>
    %142 = arith.addf %140, %141 : vector<1x128xf32>
    %143 = math.tanh %142 : vector<1x128xf32>
    %144 = arith.mulf %139, %143 : vector<1x128xf32>
    %145 = vector.extract_strided_slice %50 {offsets = [3, 0], sizes = [1, 512], strides = [1, 1]} : vector<8x512xf32> to vector<1x512xf32>
    %146 = arith.truncf %144 : vector<1x128xf32> to vector<1x128xbf16>
    %c0_43 = arith.constant 0 : index
    %c0_44 = arith.constant 0 : index
    %147 = vector.load %arg5[%c0_43, %c0_44] : memref<128x512xbf16, #tpu.memory_space<vmem>>, vector<128x512xbf16>
    %cst_45 = arith.constant dense<0.000000e+00> : vector<1x512xf32>
    %148 = tpu.matmul %146, %147, %cst_45 {dimension_numbers = #tpu.dot_dimension_numbers<[1], [0], [0], [1], [0, 0, 1, 1], [], []>} : vector<1x128xbf16>, vector<128x512xbf16>, vector<1x512xf32> -> vector<1x512xf32>
    %149 = arith.addf %145, %148 : vector<1x512xf32>
    %150 = vector.extract_strided_slice %149 {offsets = [0, 0], sizes = [1, 128], strides = [1, 1]} : vector<1x512xf32> to vector<1x128xf32>
    %151 = arith.negf %150 : vector<1x128xf32>
    %152 = math.exp %151 : vector<1x128xf32>
    %cst_46 = arith.constant 1.000000e+00 : f32
    %153 = vector.broadcast %cst_46 : f32 to vector<1x128xf32>
    %154 = arith.addf %153, %152 : vector<1x128xf32>
    %155 = arith.divf %153, %154 : vector<1x128xf32>
    %156 = vector.extract_strided_slice %149 {offsets = [0, 128], sizes = [1, 128], strides = [1, 1]} : vector<1x512xf32> to vector<1x128xf32>
    %157 = arith.negf %156 : vector<1x128xf32>
    %158 = math.exp %157 : vector<1x128xf32>
    %cst_47 = arith.constant 1.000000e+00 : f32
    %159 = vector.broadcast %cst_47 : f32 to vector<1x128xf32>
    %160 = arith.addf %159, %158 : vector<1x128xf32>
    %161 = arith.divf %159, %160 : vector<1x128xf32>
    %162 = vector.extract_strided_slice %149 {offsets = [0, 256], sizes = [1, 128], strides = [1, 1]} : vector<1x512xf32> to vector<1x128xf32>
    %163 = math.tanh %162 : vector<1x128xf32>
    %164 = vector.extract_strided_slice %149 {offsets = [0, 384], sizes = [1, 128], strides = [1, 1]} : vector<1x512xf32> to vector<1x128xf32>
    %165 = arith.negf %164 : vector<1x128xf32>
    %166 = math.exp %165 : vector<1x128xf32>
    %cst_48 = arith.constant 1.000000e+00 : f32
    %167 = vector.broadcast %cst_48 : f32 to vector<1x128xf32>
    %168 = arith.addf %167, %166 : vector<1x128xf32>
    %169 = arith.divf %167, %168 : vector<1x128xf32>
    %170 = arith.mulf %161, %142 : vector<1x128xf32>
    %171 = arith.mulf %155, %163 : vector<1x128xf32>
    %172 = arith.addf %170, %171 : vector<1x128xf32>
    %173 = math.tanh %172 : vector<1x128xf32>
    %174 = arith.mulf %169, %173 : vector<1x128xf32>
    %175 = vector.extract_strided_slice %50 {offsets = [4, 0], sizes = [1, 512], strides = [1, 1]} : vector<8x512xf32> to vector<1x512xf32>
    %176 = arith.truncf %174 : vector<1x128xf32> to vector<1x128xbf16>
    %c0_49 = arith.constant 0 : index
    %c0_50 = arith.constant 0 : index
    %177 = vector.load %arg5[%c0_49, %c0_50] : memref<128x512xbf16, #tpu.memory_space<vmem>>, vector<128x512xbf16>
    %cst_51 = arith.constant dense<0.000000e+00> : vector<1x512xf32>
    %178 = tpu.matmul %176, %177, %cst_51 {dimension_numbers = #tpu.dot_dimension_numbers<[1], [0], [0], [1], [0, 0, 1, 1], [], []>} : vector<1x128xbf16>, vector<128x512xbf16>, vector<1x512xf32> -> vector<1x512xf32>
    %179 = arith.addf %175, %178 : vector<1x512xf32>
    %180 = vector.extract_strided_slice %179 {offsets = [0, 0], sizes = [1, 128], strides = [1, 1]} : vector<1x512xf32> to vector<1x128xf32>
    %181 = arith.negf %180 : vector<1x128xf32>
    %182 = math.exp %181 : vector<1x128xf32>
    %cst_52 = arith.constant 1.000000e+00 : f32
    %183 = vector.broadcast %cst_52 : f32 to vector<1x128xf32>
    %184 = arith.addf %183, %182 : vector<1x128xf32>
    %185 = arith.divf %183, %184 : vector<1x128xf32>
    %186 = vector.extract_strided_slice %179 {offsets = [0, 128], sizes = [1, 128], strides = [1, 1]} : vector<1x512xf32> to vector<1x128xf32>
    %187 = arith.negf %186 : vector<1x128xf32>
    %188 = math.exp %187 : vector<1x128xf32>
    %cst_53 = arith.constant 1.000000e+00 : f32
    %189 = vector.broadcast %cst_53 : f32 to vector<1x128xf32>
    %190 = arith.addf %189, %188 : vector<1x128xf32>
    %191 = arith.divf %189, %190 : vector<1x128xf32>
    %192 = vector.extract_strided_slice %179 {offsets = [0, 256], sizes = [1, 128], strides = [1, 1]} : vector<1x512xf32> to vector<1x128xf32>
    %193 = math.tanh %192 : vector<1x128xf32>
    %194 = vector.extract_strided_slice %179 {offsets = [0, 384], sizes = [1, 128], strides = [1, 1]} : vector<1x512xf32> to vector<1x128xf32>
    %195 = arith.negf %194 : vector<1x128xf32>
    %196 = math.exp %195 : vector<1x128xf32>
    %cst_54 = arith.constant 1.000000e+00 : f32
    %197 = vector.broadcast %cst_54 : f32 to vector<1x128xf32>
    %198 = arith.addf %197, %196 : vector<1x128xf32>
    %199 = arith.divf %197, %198 : vector<1x128xf32>
    %200 = arith.mulf %191, %172 : vector<1x128xf32>
    %201 = arith.mulf %185, %193 : vector<1x128xf32>
    %202 = arith.addf %200, %201 : vector<1x128xf32>
    %203 = math.tanh %202 : vector<1x128xf32>
    %204 = arith.mulf %199, %203 : vector<1x128xf32>
    %205 = vector.extract_strided_slice %50 {offsets = [5, 0], sizes = [1, 512], strides = [1, 1]} : vector<8x512xf32> to vector<1x512xf32>
    %206 = arith.truncf %204 : vector<1x128xf32> to vector<1x128xbf16>
    %c0_55 = arith.constant 0 : index
    %c0_56 = arith.constant 0 : index
    %207 = vector.load %arg5[%c0_55, %c0_56] : memref<128x512xbf16, #tpu.memory_space<vmem>>, vector<128x512xbf16>
    %cst_57 = arith.constant dense<0.000000e+00> : vector<1x512xf32>
    %208 = tpu.matmul %206, %207, %cst_57 {dimension_numbers = #tpu.dot_dimension_numbers<[1], [0], [0], [1], [0, 0, 1, 1], [], []>} : vector<1x128xbf16>, vector<128x512xbf16>, vector<1x512xf32> -> vector<1x512xf32>
    %209 = arith.addf %205, %208 : vector<1x512xf32>
    %210 = vector.extract_strided_slice %209 {offsets = [0, 0], sizes = [1, 128], strides = [1, 1]} : vector<1x512xf32> to vector<1x128xf32>
    %211 = arith.negf %210 : vector<1x128xf32>
    %212 = math.exp %211 : vector<1x128xf32>
    %cst_58 = arith.constant 1.000000e+00 : f32
    %213 = vector.broadcast %cst_58 : f32 to vector<1x128xf32>
    %214 = arith.addf %213, %212 : vector<1x128xf32>
    %215 = arith.divf %213, %214 : vector<1x128xf32>
    %216 = vector.extract_strided_slice %209 {offsets = [0, 128], sizes = [1, 128], strides = [1, 1]} : vector<1x512xf32> to vector<1x128xf32>
    %217 = arith.negf %216 : vector<1x128xf32>
    %218 = math.exp %217 : vector<1x128xf32>
    %cst_59 = arith.constant 1.000000e+00 : f32
    %219 = vector.broadcast %cst_59 : f32 to vector<1x128xf32>
    %220 = arith.addf %219, %218 : vector<1x128xf32>
    %221 = arith.divf %219, %220 : vector<1x128xf32>
    %222 = vector.extract_strided_slice %209 {offsets = [0, 256], sizes = [1, 128], strides = [1, 1]} : vector<1x512xf32> to vector<1x128xf32>
    %223 = math.tanh %222 : vector<1x128xf32>
    %224 = vector.extract_strided_slice %209 {offsets = [0, 384], sizes = [1, 128], strides = [1, 1]} : vector<1x512xf32> to vector<1x128xf32>
    %225 = arith.negf %224 : vector<1x128xf32>
    %226 = math.exp %225 : vector<1x128xf32>
    %cst_60 = arith.constant 1.000000e+00 : f32
    %227 = vector.broadcast %cst_60 : f32 to vector<1x128xf32>
    %228 = arith.addf %227, %226 : vector<1x128xf32>
    %229 = arith.divf %227, %228 : vector<1x128xf32>
    %230 = arith.mulf %221, %202 : vector<1x128xf32>
    %231 = arith.mulf %215, %223 : vector<1x128xf32>
    %232 = arith.addf %230, %231 : vector<1x128xf32>
    %233 = math.tanh %232 : vector<1x128xf32>
    %234 = arith.mulf %229, %233 : vector<1x128xf32>
    %235 = vector.extract_strided_slice %50 {offsets = [6, 0], sizes = [1, 512], strides = [1, 1]} : vector<8x512xf32> to vector<1x512xf32>
    %236 = arith.truncf %234 : vector<1x128xf32> to vector<1x128xbf16>
    %c0_61 = arith.constant 0 : index
    %c0_62 = arith.constant 0 : index
    %237 = vector.load %arg5[%c0_61, %c0_62] : memref<128x512xbf16, #tpu.memory_space<vmem>>, vector<128x512xbf16>
    %cst_63 = arith.constant dense<0.000000e+00> : vector<1x512xf32>
    %238 = tpu.matmul %236, %237, %cst_63 {dimension_numbers = #tpu.dot_dimension_numbers<[1], [0], [0], [1], [0, 0, 1, 1], [], []>} : vector<1x128xbf16>, vector<128x512xbf16>, vector<1x512xf32> -> vector<1x512xf32>
    %239 = arith.addf %235, %238 : vector<1x512xf32>
    %240 = vector.extract_strided_slice %239 {offsets = [0, 0], sizes = [1, 128], strides = [1, 1]} : vector<1x512xf32> to vector<1x128xf32>
    %241 = arith.negf %240 : vector<1x128xf32>
    %242 = math.exp %241 : vector<1x128xf32>
    %cst_64 = arith.constant 1.000000e+00 : f32
    %243 = vector.broadcast %cst_64 : f32 to vector<1x128xf32>
    %244 = arith.addf %243, %242 : vector<1x128xf32>
    %245 = arith.divf %243, %244 : vector<1x128xf32>
    %246 = vector.extract_strided_slice %239 {offsets = [0, 128], sizes = [1, 128], strides = [1, 1]} : vector<1x512xf32> to vector<1x128xf32>
    %247 = arith.negf %246 : vector<1x128xf32>
    %248 = math.exp %247 : vector<1x128xf32>
    %cst_65 = arith.constant 1.000000e+00 : f32
    %249 = vector.broadcast %cst_65 : f32 to vector<1x128xf32>
    %250 = arith.addf %249, %248 : vector<1x128xf32>
    %251 = arith.divf %249, %250 : vector<1x128xf32>
    %252 = vector.extract_strided_slice %239 {offsets = [0, 256], sizes = [1, 128], strides = [1, 1]} : vector<1x512xf32> to vector<1x128xf32>
    %253 = math.tanh %252 : vector<1x128xf32>
    %254 = vector.extract_strided_slice %239 {offsets = [0, 384], sizes = [1, 128], strides = [1, 1]} : vector<1x512xf32> to vector<1x128xf32>
    %255 = arith.negf %254 : vector<1x128xf32>
    %256 = math.exp %255 : vector<1x128xf32>
    %cst_66 = arith.constant 1.000000e+00 : f32
    %257 = vector.broadcast %cst_66 : f32 to vector<1x128xf32>
    %258 = arith.addf %257, %256 : vector<1x128xf32>
    %259 = arith.divf %257, %258 : vector<1x128xf32>
    %260 = arith.mulf %251, %232 : vector<1x128xf32>
    %261 = arith.mulf %245, %253 : vector<1x128xf32>
    %262 = arith.addf %260, %261 : vector<1x128xf32>
    %263 = math.tanh %262 : vector<1x128xf32>
    %264 = arith.mulf %259, %263 : vector<1x128xf32>
    %265 = vector.extract_strided_slice %50 {offsets = [7, 0], sizes = [1, 512], strides = [1, 1]} : vector<8x512xf32> to vector<1x512xf32>
    %266 = arith.truncf %264 : vector<1x128xf32> to vector<1x128xbf16>
    %c0_67 = arith.constant 0 : index
    %c0_68 = arith.constant 0 : index
    %267 = vector.load %arg5[%c0_67, %c0_68] : memref<128x512xbf16, #tpu.memory_space<vmem>>, vector<128x512xbf16>
    %cst_69 = arith.constant dense<0.000000e+00> : vector<1x512xf32>
    %268 = tpu.matmul %266, %267, %cst_69 {dimension_numbers = #tpu.dot_dimension_numbers<[1], [0], [0], [1], [0, 0, 1, 1], [], []>} : vector<1x128xbf16>, vector<128x512xbf16>, vector<1x512xf32> -> vector<1x512xf32>
    %269 = arith.addf %265, %268 : vector<1x512xf32>
    %270 = vector.extract_strided_slice %269 {offsets = [0, 0], sizes = [1, 128], strides = [1, 1]} : vector<1x512xf32> to vector<1x128xf32>
    %271 = arith.negf %270 : vector<1x128xf32>
    %272 = math.exp %271 : vector<1x128xf32>
    %cst_70 = arith.constant 1.000000e+00 : f32
    %273 = vector.broadcast %cst_70 : f32 to vector<1x128xf32>
    %274 = arith.addf %273, %272 : vector<1x128xf32>
    %275 = arith.divf %273, %274 : vector<1x128xf32>
    %276 = vector.extract_strided_slice %269 {offsets = [0, 128], sizes = [1, 128], strides = [1, 1]} : vector<1x512xf32> to vector<1x128xf32>
    %277 = arith.negf %276 : vector<1x128xf32>
    %278 = math.exp %277 : vector<1x128xf32>
    %cst_71 = arith.constant 1.000000e+00 : f32
    %279 = vector.broadcast %cst_71 : f32 to vector<1x128xf32>
    %280 = arith.addf %279, %278 : vector<1x128xf32>
    %281 = arith.divf %279, %280 : vector<1x128xf32>
    %282 = vector.extract_strided_slice %269 {offsets = [0, 256], sizes = [1, 128], strides = [1, 1]} : vector<1x512xf32> to vector<1x128xf32>
    %283 = math.tanh %282 : vector<1x128xf32>
    %284 = vector.extract_strided_slice %269 {offsets = [0, 384], sizes = [1, 128], strides = [1, 1]} : vector<1x512xf32> to vector<1x128xf32>
    %285 = arith.negf %284 : vector<1x128xf32>
    %286 = math.exp %285 : vector<1x128xf32>
    %cst_72 = arith.constant 1.000000e+00 : f32
    %287 = vector.broadcast %cst_72 : f32 to vector<1x128xf32>
    %288 = arith.addf %287, %286 : vector<1x128xf32>
    %289 = arith.divf %287, %288 : vector<1x128xf32>
    %290 = arith.mulf %281, %262 : vector<1x128xf32>
    %291 = arith.mulf %275, %283 : vector<1x128xf32>
    %292 = arith.addf %290, %291 : vector<1x128xf32>
    %293 = math.tanh %292 : vector<1x128xf32>
    %294 = arith.mulf %289, %293 : vector<1x128xf32>
    %295 = tpu.concatenate %84, %114, %144, %174, %204, %234, %264, %294 in 0 : vector<1x128xf32>, vector<1x128xf32>, vector<1x128xf32>, vector<1x128xf32>, vector<1x128xf32>, vector<1x128xf32>, vector<1x128xf32>, vector<1x128xf32> -> vector<8x128xf32>
    %296 = arith.truncf %295 : vector<8x128xf32> to vector<8x128xbf16>
    %c0_73 = arith.constant 0 : index
    %c0_74 = arith.constant 0 : index
    %297 = vector.load %arg7[%c0_73, %c0_74] : memref<128x512xbf16, #tpu.memory_space<vmem>>, vector<128x512xbf16>
    %cst_75 = arith.constant dense<0.000000e+00> : vector<8x512xf32>
    %298 = tpu.matmul %296, %297, %cst_75 {dimension_numbers = #tpu.dot_dimension_numbers<[1], [0], [0], [1], [0, 0, 1, 1], [], []>} : vector<8x128xbf16>, vector<128x512xbf16>, vector<8x512xf32> -> vector<8x512xf32>
    %c0_76 = arith.constant 0 : index
    %c0_77 = arith.constant 0 : index
    %299 = vector.load %arg9[%c0_76, %c0_77] : memref<1x512xf32, #tpu.memory_space<vmem>>, vector<1x512xf32>
    %300 = vector.broadcast %299 : vector<1x512xf32> to vector<8x512xf32>
    %301 = arith.addf %298, %300 : vector<8x512xf32>
    %c0_78 = arith.constant 0 : index
    %c1 = arith.constant 1 : index
    %c0_79 = arith.constant 0 : index
    %302 = vector.load %arg10[%c0_78, %c1, %c0_79] : memref<1x2x128xf32, #tpu.memory_space<vmem>>, vector<1x1x128xf32>
    %303 = vector.shape_cast %302 : vector<1x1x128xf32> to vector<1x128xf32>
    %c0_80 = arith.constant 0 : index
    %c1_81 = arith.constant 1 : index
    %c0_82 = arith.constant 0 : index
    %304 = vector.load %arg11[%c0_80, %c1_81, %c0_82] : memref<1x2x128xf32, #tpu.memory_space<vmem>>, vector<1x1x128xf32>
    %305 = vector.shape_cast %304 : vector<1x1x128xf32> to vector<1x128xf32>
    %306 = vector.extract_strided_slice %301 {offsets = [0, 0], sizes = [1, 512], strides = [1, 1]} : vector<8x512xf32> to vector<1x512xf32>
    %307 = arith.truncf %303 : vector<1x128xf32> to vector<1x128xbf16>
    %c0_83 = arith.constant 0 : index
    %c0_84 = arith.constant 0 : index
    %308 = vector.load %arg8[%c0_83, %c0_84] : memref<128x512xbf16, #tpu.memory_space<vmem>>, vector<128x512xbf16>
    %cst_85 = arith.constant dense<0.000000e+00> : vector<1x512xf32>
    %309 = tpu.matmul %307, %308, %cst_85 {dimension_numbers = #tpu.dot_dimension_numbers<[1], [0], [0], [1], [0, 0, 1, 1], [], []>} : vector<1x128xbf16>, vector<128x512xbf16>, vector<1x512xf32> -> vector<1x512xf32>
    %310 = arith.addf %306, %309 : vector<1x512xf32>
    %311 = vector.extract_strided_slice %310 {offsets = [0, 0], sizes = [1, 128], strides = [1, 1]} : vector<1x512xf32> to vector<1x128xf32>
    %312 = arith.negf %311 : vector<1x128xf32>
    %313 = math.exp %312 : vector<1x128xf32>
    %cst_86 = arith.constant 1.000000e+00 : f32
    %314 = vector.broadcast %cst_86 : f32 to vector<1x128xf32>
    %315 = arith.addf %314, %313 : vector<1x128xf32>
    %316 = arith.divf %314, %315 : vector<1x128xf32>
    %317 = vector.extract_strided_slice %310 {offsets = [0, 128], sizes = [1, 128], strides = [1, 1]} : vector<1x512xf32> to vector<1x128xf32>
    %318 = arith.negf %317 : vector<1x128xf32>
    %319 = math.exp %318 : vector<1x128xf32>
    %cst_87 = arith.constant 1.000000e+00 : f32
    %320 = vector.broadcast %cst_87 : f32 to vector<1x128xf32>
    %321 = arith.addf %320, %319 : vector<1x128xf32>
    %322 = arith.divf %320, %321 : vector<1x128xf32>
    %323 = vector.extract_strided_slice %310 {offsets = [0, 256], sizes = [1, 128], strides = [1, 1]} : vector<1x512xf32> to vector<1x128xf32>
    %324 = math.tanh %323 : vector<1x128xf32>
    %325 = vector.extract_strided_slice %310 {offsets = [0, 384], sizes = [1, 128], strides = [1, 1]} : vector<1x512xf32> to vector<1x128xf32>
    %326 = arith.negf %325 : vector<1x128xf32>
    %327 = math.exp %326 : vector<1x128xf32>
    %cst_88 = arith.constant 1.000000e+00 : f32
    %328 = vector.broadcast %cst_88 : f32 to vector<1x128xf32>
    %329 = arith.addf %328, %327 : vector<1x128xf32>
    %330 = arith.divf %328, %329 : vector<1x128xf32>
    %331 = arith.mulf %322, %305 : vector<1x128xf32>
    %332 = arith.mulf %316, %324 : vector<1x128xf32>
    %333 = arith.addf %331, %332 : vector<1x128xf32>
    %334 = math.tanh %333 : vector<1x128xf32>
    %335 = arith.mulf %330, %334 : vector<1x128xf32>
    %336 = vector.extract_strided_slice %301 {offsets = [1, 0], sizes = [1, 512], strides = [1, 1]} : vector<8x512xf32> to vector<1x512xf32>
    %337 = arith.truncf %335 : vector<1x128xf32> to vector<1x128xbf16>
    %c0_89 = arith.constant 0 : index
    %c0_90 = arith.constant 0 : index
    %338 = vector.load %arg8[%c0_89, %c0_90] : memref<128x512xbf16, #tpu.memory_space<vmem>>, vector<128x512xbf16>
    %cst_91 = arith.constant dense<0.000000e+00> : vector<1x512xf32>
    %339 = tpu.matmul %337, %338, %cst_91 {dimension_numbers = #tpu.dot_dimension_numbers<[1], [0], [0], [1], [0, 0, 1, 1], [], []>} : vector<1x128xbf16>, vector<128x512xbf16>, vector<1x512xf32> -> vector<1x512xf32>
    %340 = arith.addf %336, %339 : vector<1x512xf32>
    %341 = vector.extract_strided_slice %340 {offsets = [0, 0], sizes = [1, 128], strides = [1, 1]} : vector<1x512xf32> to vector<1x128xf32>
    %342 = arith.negf %341 : vector<1x128xf32>
    %343 = math.exp %342 : vector<1x128xf32>
    %cst_92 = arith.constant 1.000000e+00 : f32
    %344 = vector.broadcast %cst_92 : f32 to vector<1x128xf32>
    %345 = arith.addf %344, %343 : vector<1x128xf32>
    %346 = arith.divf %344, %345 : vector<1x128xf32>
    %347 = vector.extract_strided_slice %340 {offsets = [0, 128], sizes = [1, 128], strides = [1, 1]} : vector<1x512xf32> to vector<1x128xf32>
    %348 = arith.negf %347 : vector<1x128xf32>
    %349 = math.exp %348 : vector<1x128xf32>
    %cst_93 = arith.constant 1.000000e+00 : f32
    %350 = vector.broadcast %cst_93 : f32 to vector<1x128xf32>
    %351 = arith.addf %350, %349 : vector<1x128xf32>
    %352 = arith.divf %350, %351 : vector<1x128xf32>
    %353 = vector.extract_strided_slice %340 {offsets = [0, 256], sizes = [1, 128], strides = [1, 1]} : vector<1x512xf32> to vector<1x128xf32>
    %354 = math.tanh %353 : vector<1x128xf32>
    %355 = vector.extract_strided_slice %340 {offsets = [0, 384], sizes = [1, 128], strides = [1, 1]} : vector<1x512xf32> to vector<1x128xf32>
    %356 = arith.negf %355 : vector<1x128xf32>
    %357 = math.exp %356 : vector<1x128xf32>
    %cst_94 = arith.constant 1.000000e+00 : f32
    %358 = vector.broadcast %cst_94 : f32 to vector<1x128xf32>
    %359 = arith.addf %358, %357 : vector<1x128xf32>
    %360 = arith.divf %358, %359 : vector<1x128xf32>
    %361 = arith.mulf %352, %333 : vector<1x128xf32>
    %362 = arith.mulf %346, %354 : vector<1x128xf32>
    %363 = arith.addf %361, %362 : vector<1x128xf32>
    %364 = math.tanh %363 : vector<1x128xf32>
    %365 = arith.mulf %360, %364 : vector<1x128xf32>
    %366 = vector.extract_strided_slice %301 {offsets = [2, 0], sizes = [1, 512], strides = [1, 1]} : vector<8x512xf32> to vector<1x512xf32>
    %367 = arith.truncf %365 : vector<1x128xf32> to vector<1x128xbf16>
    %c0_95 = arith.constant 0 : index
    %c0_96 = arith.constant 0 : index
    %368 = vector.load %arg8[%c0_95, %c0_96] : memref<128x512xbf16, #tpu.memory_space<vmem>>, vector<128x512xbf16>
    %cst_97 = arith.constant dense<0.000000e+00> : vector<1x512xf32>
    %369 = tpu.matmul %367, %368, %cst_97 {dimension_numbers = #tpu.dot_dimension_numbers<[1], [0], [0], [1], [0, 0, 1, 1], [], []>} : vector<1x128xbf16>, vector<128x512xbf16>, vector<1x512xf32> -> vector<1x512xf32>
    %370 = arith.addf %366, %369 : vector<1x512xf32>
    %371 = vector.extract_strided_slice %370 {offsets = [0, 0], sizes = [1, 128], strides = [1, 1]} : vector<1x512xf32> to vector<1x128xf32>
    %372 = arith.negf %371 : vector<1x128xf32>
    %373 = math.exp %372 : vector<1x128xf32>
    %cst_98 = arith.constant 1.000000e+00 : f32
    %374 = vector.broadcast %cst_98 : f32 to vector<1x128xf32>
    %375 = arith.addf %374, %373 : vector<1x128xf32>
    %376 = arith.divf %374, %375 : vector<1x128xf32>
    %377 = vector.extract_strided_slice %370 {offsets = [0, 128], sizes = [1, 128], strides = [1, 1]} : vector<1x512xf32> to vector<1x128xf32>
    %378 = arith.negf %377 : vector<1x128xf32>
    %379 = math.exp %378 : vector<1x128xf32>
    %cst_99 = arith.constant 1.000000e+00 : f32
    %380 = vector.broadcast %cst_99 : f32 to vector<1x128xf32>
    %381 = arith.addf %380, %379 : vector<1x128xf32>
    %382 = arith.divf %380, %381 : vector<1x128xf32>
    %383 = vector.extract_strided_slice %370 {offsets = [0, 256], sizes = [1, 128], strides = [1, 1]} : vector<1x512xf32> to vector<1x128xf32>
    %384 = math.tanh %383 : vector<1x128xf32>
    %385 = vector.extract_strided_slice %370 {offsets = [0, 384], sizes = [1, 128], strides = [1, 1]} : vector<1x512xf32> to vector<1x128xf32>
    %386 = arith.negf %385 : vector<1x128xf32>
    %387 = math.exp %386 : vector<1x128xf32>
    %cst_100 = arith.constant 1.000000e+00 : f32
    %388 = vector.broadcast %cst_100 : f32 to vector<1x128xf32>
    %389 = arith.addf %388, %387 : vector<1x128xf32>
    %390 = arith.divf %388, %389 : vector<1x128xf32>
    %391 = arith.mulf %382, %363 : vector<1x128xf32>
    %392 = arith.mulf %376, %384 : vector<1x128xf32>
    %393 = arith.addf %391, %392 : vector<1x128xf32>
    %394 = math.tanh %393 : vector<1x128xf32>
    %395 = arith.mulf %390, %394 : vector<1x128xf32>
    %396 = vector.extract_strided_slice %301 {offsets = [3, 0], sizes = [1, 512], strides = [1, 1]} : vector<8x512xf32> to vector<1x512xf32>
    %397 = arith.truncf %395 : vector<1x128xf32> to vector<1x128xbf16>
    %c0_101 = arith.constant 0 : index
    %c0_102 = arith.constant 0 : index
    %398 = vector.load %arg8[%c0_101, %c0_102] : memref<128x512xbf16, #tpu.memory_space<vmem>>, vector<128x512xbf16>
    %cst_103 = arith.constant dense<0.000000e+00> : vector<1x512xf32>
    %399 = tpu.matmul %397, %398, %cst_103 {dimension_numbers = #tpu.dot_dimension_numbers<[1], [0], [0], [1], [0, 0, 1, 1], [], []>} : vector<1x128xbf16>, vector<128x512xbf16>, vector<1x512xf32> -> vector<1x512xf32>
    %400 = arith.addf %396, %399 : vector<1x512xf32>
    %401 = vector.extract_strided_slice %400 {offsets = [0, 0], sizes = [1, 128], strides = [1, 1]} : vector<1x512xf32> to vector<1x128xf32>
    %402 = arith.negf %401 : vector<1x128xf32>
    %403 = math.exp %402 : vector<1x128xf32>
    %cst_104 = arith.constant 1.000000e+00 : f32
    %404 = vector.broadcast %cst_104 : f32 to vector<1x128xf32>
    %405 = arith.addf %404, %403 : vector<1x128xf32>
    %406 = arith.divf %404, %405 : vector<1x128xf32>
    %407 = vector.extract_strided_slice %400 {offsets = [0, 128], sizes = [1, 128], strides = [1, 1]} : vector<1x512xf32> to vector<1x128xf32>
    %408 = arith.negf %407 : vector<1x128xf32>
    %409 = math.exp %408 : vector<1x128xf32>
    %cst_105 = arith.constant 1.000000e+00 : f32
    %410 = vector.broadcast %cst_105 : f32 to vector<1x128xf32>
    %411 = arith.addf %410, %409 : vector<1x128xf32>
    %412 = arith.divf %410, %411 : vector<1x128xf32>
    %413 = vector.extract_strided_slice %400 {offsets = [0, 256], sizes = [1, 128], strides = [1, 1]} : vector<1x512xf32> to vector<1x128xf32>
    %414 = math.tanh %413 : vector<1x128xf32>
    %415 = vector.extract_strided_slice %400 {offsets = [0, 384], sizes = [1, 128], strides = [1, 1]} : vector<1x512xf32> to vector<1x128xf32>
    %416 = arith.negf %415 : vector<1x128xf32>
    %417 = math.exp %416 : vector<1x128xf32>
    %cst_106 = arith.constant 1.000000e+00 : f32
    %418 = vector.broadcast %cst_106 : f32 to vector<1x128xf32>
    %419 = arith.addf %418, %417 : vector<1x128xf32>
    %420 = arith.divf %418, %419 : vector<1x128xf32>
    %421 = arith.mulf %412, %393 : vector<1x128xf32>
    %422 = arith.mulf %406, %414 : vector<1x128xf32>
    %423 = arith.addf %421, %422 : vector<1x128xf32>
    %424 = math.tanh %423 : vector<1x128xf32>
    %425 = arith.mulf %420, %424 : vector<1x128xf32>
    %426 = vector.extract_strided_slice %301 {offsets = [4, 0], sizes = [1, 512], strides = [1, 1]} : vector<8x512xf32> to vector<1x512xf32>
    %427 = arith.truncf %425 : vector<1x128xf32> to vector<1x128xbf16>
    %c0_107 = arith.constant 0 : index
    %c0_108 = arith.constant 0 : index
    %428 = vector.load %arg8[%c0_107, %c0_108] : memref<128x512xbf16, #tpu.memory_space<vmem>>, vector<128x512xbf16>
    %cst_109 = arith.constant dense<0.000000e+00> : vector<1x512xf32>
    %429 = tpu.matmul %427, %428, %cst_109 {dimension_numbers = #tpu.dot_dimension_numbers<[1], [0], [0], [1], [0, 0, 1, 1], [], []>} : vector<1x128xbf16>, vector<128x512xbf16>, vector<1x512xf32> -> vector<1x512xf32>
    %430 = arith.addf %426, %429 : vector<1x512xf32>
    %431 = vector.extract_strided_slice %430 {offsets = [0, 0], sizes = [1, 128], strides = [1, 1]} : vector<1x512xf32> to vector<1x128xf32>
    %432 = arith.negf %431 : vector<1x128xf32>
    %433 = math.exp %432 : vector<1x128xf32>
    %cst_110 = arith.constant 1.000000e+00 : f32
    %434 = vector.broadcast %cst_110 : f32 to vector<1x128xf32>
    %435 = arith.addf %434, %433 : vector<1x128xf32>
    %436 = arith.divf %434, %435 : vector<1x128xf32>
    %437 = vector.extract_strided_slice %430 {offsets = [0, 128], sizes = [1, 128], strides = [1, 1]} : vector<1x512xf32> to vector<1x128xf32>
    %438 = arith.negf %437 : vector<1x128xf32>
    %439 = math.exp %438 : vector<1x128xf32>
    %cst_111 = arith.constant 1.000000e+00 : f32
    %440 = vector.broadcast %cst_111 : f32 to vector<1x128xf32>
    %441 = arith.addf %440, %439 : vector<1x128xf32>
    %442 = arith.divf %440, %441 : vector<1x128xf32>
    %443 = vector.extract_strided_slice %430 {offsets = [0, 256], sizes = [1, 128], strides = [1, 1]} : vector<1x512xf32> to vector<1x128xf32>
    %444 = math.tanh %443 : vector<1x128xf32>
    %445 = vector.extract_strided_slice %430 {offsets = [0, 384], sizes = [1, 128], strides = [1, 1]} : vector<1x512xf32> to vector<1x128xf32>
    %446 = arith.negf %445 : vector<1x128xf32>
    %447 = math.exp %446 : vector<1x128xf32>
    %cst_112 = arith.constant 1.000000e+00 : f32
    %448 = vector.broadcast %cst_112 : f32 to vector<1x128xf32>
    %449 = arith.addf %448, %447 : vector<1x128xf32>
    %450 = arith.divf %448, %449 : vector<1x128xf32>
    %451 = arith.mulf %442, %423 : vector<1x128xf32>
    %452 = arith.mulf %436, %444 : vector<1x128xf32>
    %453 = arith.addf %451, %452 : vector<1x128xf32>
    %454 = math.tanh %453 : vector<1x128xf32>
    %455 = arith.mulf %450, %454 : vector<1x128xf32>
    %456 = vector.extract_strided_slice %301 {offsets = [5, 0], sizes = [1, 512], strides = [1, 1]} : vector<8x512xf32> to vector<1x512xf32>
    %457 = arith.truncf %455 : vector<1x128xf32> to vector<1x128xbf16>
    %c0_113 = arith.constant 0 : index
    %c0_114 = arith.constant 0 : index
    %458 = vector.load %arg8[%c0_113, %c0_114] : memref<128x512xbf16, #tpu.memory_space<vmem>>, vector<128x512xbf16>
    %cst_115 = arith.constant dense<0.000000e+00> : vector<1x512xf32>
    %459 = tpu.matmul %457, %458, %cst_115 {dimension_numbers = #tpu.dot_dimension_numbers<[1], [0], [0], [1], [0, 0, 1, 1], [], []>} : vector<1x128xbf16>, vector<128x512xbf16>, vector<1x512xf32> -> vector<1x512xf32>
    %460 = arith.addf %456, %459 : vector<1x512xf32>
    %461 = vector.extract_strided_slice %460 {offsets = [0, 0], sizes = [1, 128], strides = [1, 1]} : vector<1x512xf32> to vector<1x128xf32>
    %462 = arith.negf %461 : vector<1x128xf32>
    %463 = math.exp %462 : vector<1x128xf32>
    %cst_116 = arith.constant 1.000000e+00 : f32
    %464 = vector.broadcast %cst_116 : f32 to vector<1x128xf32>
    %465 = arith.addf %464, %463 : vector<1x128xf32>
    %466 = arith.divf %464, %465 : vector<1x128xf32>
    %467 = vector.extract_strided_slice %460 {offsets = [0, 128], sizes = [1, 128], strides = [1, 1]} : vector<1x512xf32> to vector<1x128xf32>
    %468 = arith.negf %467 : vector<1x128xf32>
    %469 = math.exp %468 : vector<1x128xf32>
    %cst_117 = arith.constant 1.000000e+00 : f32
    %470 = vector.broadcast %cst_117 : f32 to vector<1x128xf32>
    %471 = arith.addf %470, %469 : vector<1x128xf32>
    %472 = arith.divf %470, %471 : vector<1x128xf32>
    %473 = vector.extract_strided_slice %460 {offsets = [0, 256], sizes = [1, 128], strides = [1, 1]} : vector<1x512xf32> to vector<1x128xf32>
    %474 = math.tanh %473 : vector<1x128xf32>
    %475 = vector.extract_strided_slice %460 {offsets = [0, 384], sizes = [1, 128], strides = [1, 1]} : vector<1x512xf32> to vector<1x128xf32>
    %476 = arith.negf %475 : vector<1x128xf32>
    %477 = math.exp %476 : vector<1x128xf32>
    %cst_118 = arith.constant 1.000000e+00 : f32
    %478 = vector.broadcast %cst_118 : f32 to vector<1x128xf32>
    %479 = arith.addf %478, %477 : vector<1x128xf32>
    %480 = arith.divf %478, %479 : vector<1x128xf32>
    %481 = arith.mulf %472, %453 : vector<1x128xf32>
    %482 = arith.mulf %466, %474 : vector<1x128xf32>
    %483 = arith.addf %481, %482 : vector<1x128xf32>
    %484 = math.tanh %483 : vector<1x128xf32>
    %485 = arith.mulf %480, %484 : vector<1x128xf32>
    %486 = vector.extract_strided_slice %301 {offsets = [6, 0], sizes = [1, 512], strides = [1, 1]} : vector<8x512xf32> to vector<1x512xf32>
    %487 = arith.truncf %485 : vector<1x128xf32> to vector<1x128xbf16>
    %c0_119 = arith.constant 0 : index
    %c0_120 = arith.constant 0 : index
    %488 = vector.load %arg8[%c0_119, %c0_120] : memref<128x512xbf16, #tpu.memory_space<vmem>>, vector<128x512xbf16>
    %cst_121 = arith.constant dense<0.000000e+00> : vector<1x512xf32>
    %489 = tpu.matmul %487, %488, %cst_121 {dimension_numbers = #tpu.dot_dimension_numbers<[1], [0], [0], [1], [0, 0, 1, 1], [], []>} : vector<1x128xbf16>, vector<128x512xbf16>, vector<1x512xf32> -> vector<1x512xf32>
    %490 = arith.addf %486, %489 : vector<1x512xf32>
    %491 = vector.extract_strided_slice %490 {offsets = [0, 0], sizes = [1, 128], strides = [1, 1]} : vector<1x512xf32> to vector<1x128xf32>
    %492 = arith.negf %491 : vector<1x128xf32>
    %493 = math.exp %492 : vector<1x128xf32>
    %cst_122 = arith.constant 1.000000e+00 : f32
    %494 = vector.broadcast %cst_122 : f32 to vector<1x128xf32>
    %495 = arith.addf %494, %493 : vector<1x128xf32>
    %496 = arith.divf %494, %495 : vector<1x128xf32>
    %497 = vector.extract_strided_slice %490 {offsets = [0, 128], sizes = [1, 128], strides = [1, 1]} : vector<1x512xf32> to vector<1x128xf32>
    %498 = arith.negf %497 : vector<1x128xf32>
    %499 = math.exp %498 : vector<1x128xf32>
    %cst_123 = arith.constant 1.000000e+00 : f32
    %500 = vector.broadcast %cst_123 : f32 to vector<1x128xf32>
    %501 = arith.addf %500, %499 : vector<1x128xf32>
    %502 = arith.divf %500, %501 : vector<1x128xf32>
    %503 = vector.extract_strided_slice %490 {offsets = [0, 256], sizes = [1, 128], strides = [1, 1]} : vector<1x512xf32> to vector<1x128xf32>
    %504 = math.tanh %503 : vector<1x128xf32>
    %505 = vector.extract_strided_slice %490 {offsets = [0, 384], sizes = [1, 128], strides = [1, 1]} : vector<1x512xf32> to vector<1x128xf32>
    %506 = arith.negf %505 : vector<1x128xf32>
    %507 = math.exp %506 : vector<1x128xf32>
    %cst_124 = arith.constant 1.000000e+00 : f32
    %508 = vector.broadcast %cst_124 : f32 to vector<1x128xf32>
    %509 = arith.addf %508, %507 : vector<1x128xf32>
    %510 = arith.divf %508, %509 : vector<1x128xf32>
    %511 = arith.mulf %502, %483 : vector<1x128xf32>
    %512 = arith.mulf %496, %504 : vector<1x128xf32>
    %513 = arith.addf %511, %512 : vector<1x128xf32>
    %514 = math.tanh %513 : vector<1x128xf32>
    %515 = arith.mulf %510, %514 : vector<1x128xf32>
    %516 = vector.extract_strided_slice %301 {offsets = [7, 0], sizes = [1, 512], strides = [1, 1]} : vector<8x512xf32> to vector<1x512xf32>
    %517 = arith.truncf %515 : vector<1x128xf32> to vector<1x128xbf16>
    %c0_125 = arith.constant 0 : index
    %c0_126 = arith.constant 0 : index
    %518 = vector.load %arg8[%c0_125, %c0_126] : memref<128x512xbf16, #tpu.memory_space<vmem>>, vector<128x512xbf16>
    %cst_127 = arith.constant dense<0.000000e+00> : vector<1x512xf32>
    %519 = tpu.matmul %517, %518, %cst_127 {dimension_numbers = #tpu.dot_dimension_numbers<[1], [0], [0], [1], [0, 0, 1, 1], [], []>} : vector<1x128xbf16>, vector<128x512xbf16>, vector<1x512xf32> -> vector<1x512xf32>
    %520 = arith.addf %516, %519 : vector<1x512xf32>
    %521 = vector.extract_strided_slice %520 {offsets = [0, 0], sizes = [1, 128], strides = [1, 1]} : vector<1x512xf32> to vector<1x128xf32>
    %522 = arith.negf %521 : vector<1x128xf32>
    %523 = math.exp %522 : vector<1x128xf32>
    %cst_128 = arith.constant 1.000000e+00 : f32
    %524 = vector.broadcast %cst_128 : f32 to vector<1x128xf32>
    %525 = arith.addf %524, %523 : vector<1x128xf32>
    %526 = arith.divf %524, %525 : vector<1x128xf32>
    %527 = vector.extract_strided_slice %520 {offsets = [0, 128], sizes = [1, 128], strides = [1, 1]} : vector<1x512xf32> to vector<1x128xf32>
    %528 = arith.negf %527 : vector<1x128xf32>
    %529 = math.exp %528 : vector<1x128xf32>
    %cst_129 = arith.constant 1.000000e+00 : f32
    %530 = vector.broadcast %cst_129 : f32 to vector<1x128xf32>
    %531 = arith.addf %530, %529 : vector<1x128xf32>
    %532 = arith.divf %530, %531 : vector<1x128xf32>
    %533 = vector.extract_strided_slice %520 {offsets = [0, 256], sizes = [1, 128], strides = [1, 1]} : vector<1x512xf32> to vector<1x128xf32>
    %534 = math.tanh %533 : vector<1x128xf32>
    %535 = vector.extract_strided_slice %520 {offsets = [0, 384], sizes = [1, 128], strides = [1, 1]} : vector<1x512xf32> to vector<1x128xf32>
    %536 = arith.negf %535 : vector<1x128xf32>
    %537 = math.exp %536 : vector<1x128xf32>
    %cst_130 = arith.constant 1.000000e+00 : f32
    %538 = vector.broadcast %cst_130 : f32 to vector<1x128xf32>
    %539 = arith.addf %538, %537 : vector<1x128xf32>
    %540 = arith.divf %538, %539 : vector<1x128xf32>
    %541 = arith.mulf %532, %513 : vector<1x128xf32>
    %542 = arith.mulf %526, %534 : vector<1x128xf32>
    %543 = arith.addf %541, %542 : vector<1x128xf32>
    %544 = math.tanh %543 : vector<1x128xf32>
    %545 = arith.mulf %540, %544 : vector<1x128xf32>
    %546 = tpu.concatenate %335, %365, %395, %425, %455, %485, %515, %545 in 0 : vector<1x128xf32>, vector<1x128xf32>, vector<1x128xf32>, vector<1x128xf32>, vector<1x128xf32>, vector<1x128xf32>, vector<1x128xf32>, vector<1x128xf32> -> vector<8x128xf32>
    %547 = arith.truncf %546 : vector<8x128xf32> to vector<8x128xbf16>
    %c0_131 = arith.constant 0 : index
    %c0_132 = arith.constant 0 : index
    %548 = vector.load %arg12[%c0_131, %c0_132] : memref<128x128xbf16, #tpu.memory_space<vmem>>, vector<128x128xbf16>
    %cst_133 = arith.constant dense<0.000000e+00> : vector<8x128xf32>
    %549 = tpu.matmul %547, %548, %cst_133 {dimension_numbers = #tpu.dot_dimension_numbers<[1], [0], [0], [1], [0, 0, 1, 1], [], []>} : vector<8x128xbf16>, vector<128x128xbf16>, vector<8x128xf32> -> vector<8x128xf32>
    %c0_134 = arith.constant 0 : index
    %c0_135 = arith.constant 0 : index
    %550 = vector.load %arg13[%c0_134, %c0_135] : memref<1x128xf32, #tpu.memory_space<vmem>>, vector<1x128xf32>
    %551 = vector.broadcast %550 : vector<1x128xf32> to vector<8x128xf32>
    %552 = arith.addf %549, %551 : vector<8x128xf32>
    %cst_136 = arith.constant 0.000000e+00 : f32
    %553 = vector.broadcast %cst_136 : f32 to vector<8x128xf32>
    %554 = arith.maximumf %552, %553 : vector<8x128xf32>
    %555 = arith.truncf %554 : vector<8x128xf32> to vector<8x128xbf16>
    %c0_137 = arith.constant 0 : index
    %c0_138 = arith.constant 0 : index
    %556 = vector.load %arg14[%c0_137, %c0_138] : memref<128x128xbf16, #tpu.memory_space<vmem>>, vector<128x128xbf16>
    %cst_139 = arith.constant dense<0.000000e+00> : vector<8x128xf32>
    %557 = tpu.matmul %555, %556, %cst_139 {dimension_numbers = #tpu.dot_dimension_numbers<[1], [0], [0], [1], [0, 0, 1, 1], [], []>} : vector<8x128xbf16>, vector<128x128xbf16>, vector<8x128xf32> -> vector<8x128xf32>
    %c0_140 = arith.constant 0 : index
    %c0_141 = arith.constant 0 : index
    %558 = vector.load %arg15[%c0_140, %c0_141] : memref<1x128xf32, #tpu.memory_space<vmem>>, vector<1x128xf32>
    %559 = vector.broadcast %558 : vector<1x128xf32> to vector<8x128xf32>
    %560 = arith.addf %557, %559 : vector<8x128xf32>
    %561 = vector.extract_strided_slice %560 {offsets = [0, 0], sizes = [8, 3], strides = [1, 1]} : vector<8x128xf32> to vector<8x3xf32>
    %c0_142 = arith.constant 0 : index
    %c0_143 = arith.constant 0 : index
    %c0_144 = arith.constant 0 : index
    %562 = vector.load %arg16[%c0_142, %c0_143, %c0_144] : memref<1x8x3xf32, #tpu.memory_space<vmem>>, vector<1x8x3xf32>
    %563 = vector.shape_cast %562 : vector<1x8x3xf32> to vector<8x3xf32>
    %564 = vector.shape_cast %561 : vector<8x3xf32> to vector<1x8x3xf32>
    tpu.vector_store %arg16[%c0_142, %c0_143, %c0_144], %564 {strides = array<i32>} : memref<1x8x3xf32, #tpu.memory_space<vmem>>, vector<1x8x3xf32>,
    return
  }
  func.func @transform_0(%arg0: i32) -> (i32, i32, i32) {
    %c0_i32 = arith.constant 0 : i32
    %c0_i32_0 = arith.constant 0 : i32
    %c0_i32_1 = arith.constant 0 : i32
    return %arg0, %c0_i32, %c0_i32_0 : i32, i32, i32
  }
  func.func @transform_1(%arg0: i32) -> (i32, i32) {
    %c0_i32 = arith.constant 0 : i32
    %c0_i32_0 = arith.constant 0 : i32
    %c0_i32_1 = arith.constant 0 : i32
    return %c0_i32, %c0_i32_0 : i32, i32
  }
  func.func @transform_2(%arg0: i32) -> (i32, i32) {
    %c0_i32 = arith.constant 0 : i32
    %c0_i32_0 = arith.constant 0 : i32
    %c0_i32_1 = arith.constant 0 : i32
    return %c0_i32, %c0_i32_0 : i32, i32
  }
  func.func @transform_3(%arg0: i32) -> (i32, i32) {
    %c0_i32 = arith.constant 0 : i32
    %c0_i32_0 = arith.constant 0 : i32
    %c0_i32_1 = arith.constant 0 : i32
    return %c0_i32, %c0_i32_0 : i32, i32
  }
  func.func @transform_4(%arg0: i32) -> (i32, i32) {
    %c0_i32 = arith.constant 0 : i32
    %c0_i32_0 = arith.constant 0 : i32
    %c0_i32_1 = arith.constant 0 : i32
    return %c0_i32, %c0_i32_0 : i32, i32
  }
  func.func @transform_5(%arg0: i32) -> (i32, i32) {
    %c0_i32 = arith.constant 0 : i32
    %c0_i32_0 = arith.constant 0 : i32
    %c0_i32_1 = arith.constant 0 : i32
    return %c0_i32, %c0_i32_0 : i32, i32
  }
  func.func @transform_6(%arg0: i32) -> (i32, i32) {
    %c0_i32 = arith.constant 0 : i32
    %c0_i32_0 = arith.constant 0 : i32
    %c0_i32_1 = arith.constant 0 : i32
    return %c0_i32, %c0_i32_0 : i32, i32
  }
  func.func @transform_7(%arg0: i32) -> (i32, i32) {
    %c0_i32 = arith.constant 0 : i32
    %c0_i32_0 = arith.constant 0 : i32
    %c0_i32_1 = arith.constant 0 : i32
    return %c0_i32, %c0_i32_0 : i32, i32
  }
  func.func @transform_8(%arg0: i32) -> (i32, i32) {
    %c0_i32 = arith.constant 0 : i32
    %c0_i32_0 = arith.constant 0 : i32
    %c0_i32_1 = arith.constant 0 : i32
    return %c0_i32, %c0_i32_0 : i32, i32
  }
  func.func @transform_9(%arg0: i32) -> (i32, i32, i32) {
    %c0_i32 = arith.constant 0 : i32
    %c0_i32_0 = arith.constant 0 : i32
    %c0_i32_1 = arith.constant 0 : i32
    return %arg0, %c0_i32, %c0_i32_0 : i32, i32, i32
  }
  func.func @transform_10(%arg0: i32) -> (i32, i32, i32) {
    %c0_i32 = arith.constant 0 : i32
    %c0_i32_0 = arith.constant 0 : i32
    %c0_i32_1 = arith.constant 0 : i32
    return %arg0, %c0_i32, %c0_i32_0 : i32, i32, i32
  }
  func.func @transform_11(%arg0: i32) -> (i32, i32) {
    %c0_i32 = arith.constant 0 : i32
    %c0_i32_0 = arith.constant 0 : i32
    %c0_i32_1 = arith.constant 0 : i32
    return %c0_i32, %c0_i32_0 : i32, i32
  }
  func.func @transform_12(%arg0: i32) -> (i32, i32) {
    %c0_i32 = arith.constant 0 : i32
    %c0_i32_0 = arith.constant 0 : i32
    %c0_i32_1 = arith.constant 0 : i32
    return %c0_i32, %c0_i32_0 : i32, i32
  }
  func.func @transform_13(%arg0: i32) -> (i32, i32) {
    %c0_i32 = arith.constant 0 : i32
    %c0_i32_0 = arith.constant 0 : i32
    %c0_i32_1 = arith.constant 0 : i32
    return %c0_i32, %c0_i32_0 : i32, i32
  }
  func.func @transform_14(%arg0: i32) -> (i32, i32) {
    %c0_i32 = arith.constant 0 : i32
    %c0_i32_0 = arith.constant 0 : i32
    %c0_i32_1 = arith.constant 0 : i32
    return %c0_i32, %c0_i32_0 : i32, i32
  }
  func.func @transform_15(%arg0: i32) -> (i32, i32, i32) {
    %c0_i32 = arith.constant 0 : i32
    %c0_i32_0 = arith.constant 0 : i32
    %c0_i32_1 = arith.constant 0 : i32
    return %arg0, %c0_i32, %c0_i32_0 : i32, i32, i32
  }
}

</mosaic_0001>

<llo_original>
// kernel: forward.1
$region0: #{forward.1}
  #allocation0 [shape = 'u32[]', space=smem, size = 0x4, offset = 0x4, fixed_abs, tag = 'smem constant byte address 0x4 - core index']
  #allocation1 [shape = 'u32[144,128]{1,0:T(1,128)}', space=vmem, size = 0x12000, scoped, tag = 'internal scratch']
  #allocation2 [shape = 'bf16[24,1000]{1,0:T(8,128)(2,1)}', space=vmem, size = 0xc000, scoped, tag = 'scratch operand']
  %s0 = inlined_call_operand.hbm [shape: f32[2,8,1000], index: 0, kind: input, shape index: {}]
  %s1 = inlined_call_operand.hbm [shape: bf16[1000,1920], index: 1, kind: input, shape index: {}]
  %s2 = inlined_call_operand.hbm [shape: f32[1,128], index: 2, kind: input, shape index: {}]
  %s3 = inlined_call_operand.hbm [shape: bf16[128,512], index: 3, kind: input, shape index: {}]
  %s4 = inlined_call_operand.hbm [shape: bf16[128,512], index: 4, kind: input, shape index: {}]
  %s5 = inlined_call_operand.hbm [shape: f32[1,512], index: 5, kind: input, shape index: {}]
  %s6 = inlined_call_operand.hbm [shape: bf16[128,512], index: 6, kind: input, shape index: {}]
  %s7 = inlined_call_operand.hbm [shape: bf16[128,512], index: 7, kind: input, shape index: {}]
  %s8 = inlined_call_operand.hbm [shape: f32[1,512], index: 8, kind: input, shape index: {}]
  %s9 = inlined_call_operand.hbm [shape: f32[2,2,128], index: 9, kind: input, shape index: {}]
  %s10 = inlined_call_operand.hbm [shape: f32[2,2,128], index: 10, kind: input, shape index: {}]
  %s11 = inlined_call_operand.hbm [shape: bf16[128,128], index: 11, kind: input, shape index: {}]
  %s12 = inlined_call_operand.hbm [shape: f32[1,128], index: 12, kind: input, shape index: {}]
  %s13 = inlined_call_operand.hbm [shape: bf16[128,128], index: 13, kind: input, shape index: {}]
  %s14 = inlined_call_operand.hbm [shape: f32[1,128], index: 14, kind: input, shape index: {}]
  %s15 = inlined_call_operand.vmem [shape: f32[2,8,3], index: 15, kind: output, shape index: {}]
  %s16 = sld [smem:[#allocation0]]
  $region153: #{forward.1} parent=0
    _
  %s18 = ssub.s32 1, %s16
  %s19 = scalar_select 0, %s18, %s16
  $region1: #{forward.1} parent=0
    #allocation3 [shape = 'u8[65536]{0}', space=vmem, size = 0x10000, scoped, tag = 'input window, operand 0']
    #allocation4 [shape = 's32[2]{0}', space=sflag, size = 0x8, scoped, tag = 'scoped memory for forward.1']
    #allocation5 [shape = 'u8[3840000]{0}', space=vmem, size = 0x3a9800, scoped, tag = 'input window, operand 1, single buffered']
    #allocation6 [shape = 's32[1]{0}', space=sflag, size = 0x4, scoped, tag = 'scoped memory for forward.1']
    #allocation7 [shape = 'u8[512]{0}', space=vmem, size = 0x400, scoped, tag = 'input window, operand 2, single buffered']
    #allocation8 [shape = 'u8[131072]{0}', space=vmem, size = 0x20000, scoped, tag = 'input window, operand 3, single buffered']
    #allocation9 [shape = 's32[1]{0}', space=sflag, size = 0x4, scoped, tag = 'scoped memory for forward.1']
    #allocation10 [shape = 'u8[131072]{0}', space=vmem, size = 0x20000, scoped, tag = 'input window, operand 4, single buffered']
    #allocation11 [shape = 'u8[2048]{0}', space=vmem, size = 0x800, scoped, tag = 'input window, operand 5, single buffered']
    #allocation12 [shape = 's32[1]{0}', space=sflag, size = 0x4, scoped, tag = 'scoped memory for forward.1']
    #allocation13 [shape = 'u8[131072]{0}', space=vmem, size = 0x20000, scoped, tag = 'input window, operand 6, single buffered']
    #allocation14 [shape = 'u8[131072]{0}', space=vmem, size = 0x20000, scoped, tag = 'input window, operand 7, single buffered']
    #allocation15 [shape = 's32[1]{0}', space=sflag, size = 0x4, scoped, tag = 'scoped memory for forward.1']
    #allocation16 [shape = 'u8[2048]{0}', space=vmem, size = 0x800, scoped, tag = 'input window, operand 8, single buffered']
    #allocation17 [shape = 'u8[2048]{0}', space=vmem, size = 0x800, scoped, tag = 'input window, operand 9']
    #allocation18 [shape = 's32[2]{0}', space=sflag, size = 0x8, scoped, tag = 'scoped memory for forward.1']
    #allocation19 [shape = 'u8[2048]{0}', space=vmem, size = 0x800, scoped, tag = 'input window, operand 10']
    #allocation20 [shape = 'u8[32768]{0}', space=vmem, size = 0x8000, scoped, tag = 'input window, operand 11, single buffered']
    #allocation21 [shape = 's32[1]{0}', space=sflag, size = 0x4, scoped, tag = 'scoped memory for forward.1']
    #allocation22 [shape = 'u8[512]{0}', space=vmem, size = 0x400, scoped, tag = 'input window, operand 12, single buffered']
    #allocation23 [shape = 'u8[32768]{0}', space=vmem, size = 0x8000, scoped, tag = 'input window, operand 13, single buffered']
    #allocation24 [shape = 's32[1]{0}', space=sflag, size = 0x4, scoped, tag = 'scoped memory for forward.1']
    #allocation25 [shape = 'u8[512]{0}', space=vmem, size = 0x400, scoped, tag = 'input window, operand 14, single buffered']
    %20 = vsyncpa [#allocation4], 0
    %s21 = scalar_lea.sflag [#allocation4], 1
    %22 = vsyncpa %s21, 0
    %23 = vsyncpa [#allocation6], 0
    %24 = vsyncpa [#allocation9], 0
    %25 = vsyncpa [#allocation12], 0
    %26 = vsyncpa [#allocation15], 0
    %27 = vsyncpa [#allocation18], 0
    %s28 = scalar_lea.sflag [#allocation18], 1
    %29 = vsyncpa %s28, 0
    %30 = vsyncpa [#allocation21], 0
    %31 = vsyncpa [#allocation24], 0
    loop: start=0, step=1, limit=4
    $region2: #{forward.1} parent=1 // loop_pre_header
      _
    $region3: #{forward.1} parent=1 // loop_header
      %s33 = sphi 0, %s37
      %p34 = scmp.ge.s32.totalorder %s33, 4
      %s43 = sphi 0, %s45
      %s46 = sphi 0, %s43
      %s47 = sphi 0, %s46
      %s63 = sphi 0, %s47
      %s67 = sphi 0, %s67
      %s69 = sphi 0, %s67
      %s70 = sphi 0, %s69
      %s84 = sphi 0, %s70
      %s88 = sphi 0, %s88
      %s90 = sphi 0, %s88
      %s91 = sphi 0, %s90
      %s105 = sphi 0, %s91
      %s109 = sphi 0, %s109
      %s111 = sphi 0, %s109
      %s112 = sphi 0, %s111
      %s126 = sphi 0, %s112
      %s130 = sphi 0, %s130
      %s132 = sphi 0, %s130
      %s133 = sphi 0, %s132
      %s147 = sphi 0, %s133
      %s151 = sphi 0, %s151
      %s153 = sphi 0, %s151
      %s154 = sphi 0, %s153
      %s168 = sphi 0, %s154
      %s172 = sphi 0, %s172
      %s174 = sphi 0, %s172
      %s175 = sphi 0, %s174
      %s189 = sphi 0, %s175
      %s193 = sphi 0, %s193
      %s195 = sphi 0, %s193
      %s196 = sphi 0, %s195
      %s210 = sphi 0, %s196
      %s214 = sphi 0, %s214
      %s216 = sphi 0, %s214
      %s217 = sphi 0, %s216
      %s231 = sphi 0, %s217
      %s237 = sphi 0, %s239
      %s240 = sphi 0, %s237
      %s241 = sphi 0, %s240
      %s257 = sphi 0, %s241
      %s263 = sphi 0, %s265
      %s266 = sphi 0, %s263
      %s267 = sphi 0, %s266
      %s283 = sphi 0, %s267
      %s287 = sphi 0, %s287
      %s289 = sphi 0, %s287
      %s290 = sphi 0, %s289
      %s304 = sphi 0, %s290
      %s308 = sphi 0, %s308
      %s310 = sphi 0, %s308
      %s311 = sphi 0, %s310
      %s325 = sphi 0, %s311
      %s329 = sphi 0, %s329
      %s331 = sphi 0, %s329
      %s332 = sphi 0, %s331
      %s346 = sphi 0, %s332
      %s350 = sphi 0, %s350
      %s352 = sphi 0, %s350
      %s353 = sphi 0, %s352
      %s367 = sphi 0, %s353
      %s373 = sphi 0, %s375
      %s376 = sphi 0, %s373
      %s377 = sphi 0, %s376
      %s393 = sphi 0, %s377
    $region4: #{forward.1} parent=1 // loop_header_branch
      %36 = sbr.rel (%p34) target = $region8
    $region5: #{forward.1} parent=1 // loop_body
      %s38 = ssub.s32 %s33, 1
      %s39 = ssub.s32 %s33, 2
      %s40 = sadd.s32 %s33, 1
      %s41 = ssub.s32 %s33, %s40
      %p42 = scmp.eq.s32.totalorder %s41, 0
      %s44 = sadd.s32 %s43, 1
      %s45 = scalar_select %p42, %s43, %s44
      %p48 = pneg %p42
      %p49 = scmp.eq.s32.totalorder %s33, 1
      %p50 = por %p48, %p49
      %p51 = scmp.ne.s32.totalorder %s43, %s46
      %p52 = scmp.eq.s32.totalorder %s33, 0
      %p53 = por %p51, %p52
      %p54 = scmp.ne.s32.totalorder %s43, %s46
      %p55 = scmp.eq.s32.totalorder %s38, 1
      %p56 = por %p54, %p55
      %p57 = scmp.ne.s32.totalorder %s46, %s47
      %p58 = scmp.eq.s32.totalorder %s38, 0
      %p59 = por %p57, %p58
      %p60 = scmp.ne.s32.totalorder %s46, %s47
      %p61 = scmp.eq.s32.totalorder %s39, 1
      %p62 = por %p60, %p61
      %p64 = scmp.ne.s32.totalorder %s47, %s63
      %p65 = scmp.eq.s32.totalorder %s39, 0
      %p66 = por %p64, %p65
      %s68 = sadd.s32 %s67, 1
      %p71 = scmp.eq.s32.totalorder %s33, 1
      %p72 = scmp.ne.s32.totalorder %s67, %s69
      %p73 = scmp.eq.s32.totalorder %s33, 0
      %p74 = por %p72, %p73
      %p75 = scmp.ne.s32.totalorder %s67, %s69
      %p76 = scmp.eq.s32.totalorder %s38, 1
      %p77 = por %p75, %p76
      %p78 = scmp.ne.s32.totalorder %s69, %s70
      %p79 = scmp.eq.s32.totalorder %s38, 0
      %p80 = por %p78, %p79
      %p81 = scmp.ne.s32.totalorder %s69, %s70
      %p82 = scmp.eq.s32.totalorder %s39, 1
      %p83 = por %p81, %p82
      %p85 = scmp.ne.s32.totalorder %s70, %s84
      %p86 = scmp.eq.s32.totalorder %s39, 0
      %p87 = por %p85, %p86
      %s89 = sadd.s32 %s88, 1
      %p92 = scmp.eq.s32.totalorder %s33, 1
      %p93 = scmp.ne.s32.totalorder %s88, %s90
      %p94 = scmp.eq.s32.totalorder %s33, 0
      %p95 = por %p93, %p94
      %p96 = scmp.ne.s32.totalorder %s88, %s90
      %p97 = scmp.eq.s32.totalorder %s38, 1
      %p98 = por %p96, %p97
      %p99 = scmp.ne.s32.totalorder %s90, %s91
      %p100 = scmp.eq.s32.totalorder %s38, 0
      %p101 = por %p99, %p100
      %p102 = scmp.ne.s32.totalorder %s90, %s91
      %p103 = scmp.eq.s32.totalorder %s39, 1
      %p104 = por %p102, %p103
      %p106 = scmp.ne.s32.totalorder %s91, %s105
      %p107 = scmp.eq.s32.totalorder %s39, 0
      %p108 = por %p106, %p107
      %s110 = sadd.s32 %s109, 1
      %p113 = scmp.eq.s32.totalorder %s33, 1
      %p114 = scmp.ne.s32.totalorder %s109, %s111
      %p115 = scmp.eq.s32.totalorder %s33, 0
      %p116 = por %p114, %p115
      %p117 = scmp.ne.s32.totalorder %s109, %s111
      %p118 = scmp.eq.s32.totalorder %s38, 1
      %p119 = por %p117, %p118
      %p120 = scmp.ne.s32.totalorder %s111, %s112
      %p121 = scmp.eq.s32.totalorder %s38, 0
      %p122 = por %p120, %p121
      %p123 = scmp.ne.s32.totalorder %s111, %s112
      %p124 = scmp.eq.s32.totalorder %s39, 1
      %p125 = por %p123, %p124
      %p127 = scmp.ne.s32.totalorder %s112, %s126
      %p128 = scmp.eq.s32.totalorder %s39, 0
      %p129 = por %p127, %p128
      %s131 = sadd.s32 %s130, 1
      %p134 = scmp.eq.s32.totalorder %s33, 1
      %p135 = scmp.ne.s32.totalorder %s130, %s132
      %p136 = scmp.eq.s32.totalorder %s33, 0
      %p137 = por %p135, %p136
      %p138 = scmp.ne.s32.totalorder %s130, %s132
      %p139 = scmp.eq.s32.totalorder %s38, 1
      %p140 = por %p138, %p139
      %p141 = scmp.ne.s32.totalorder %s132, %s133
      %p142 = scmp.eq.s32.totalorder %s38, 0
      %p143 = por %p141, %p142
      %p144 = scmp.ne.s32.totalorder %s132, %s133
      %p145 = scmp.eq.s32.totalorder %s39, 1
      %p146 = por %p144, %p145
      %p148 = scmp.ne.s32.totalorder %s133, %s147
      %p149 = scmp.eq.s32.totalorder %s39, 0
      %p150 = por %p148, %p149
      %s152 = sadd.s32 %s151, 1
      %p155 = scmp.eq.s32.totalorder %s33, 1
      %p156 = scmp.ne.s32.totalorder %s151, %s153
      %p157 = scmp.eq.s32.totalorder %s33, 0
      %p158 = por %p156, %p157
      %p159 = scmp.ne.s32.totalorder %s151, %s153
      %p160 = scmp.eq.s32.totalorder %s38, 1
      %p161 = por %p159, %p160
      %p162 = scmp.ne.s32.totalorder %s153, %s154
      %p163 = scmp.eq.s32.totalorder %s38, 0
      %p164 = por %p162, %p163
      %p165 = scmp.ne.s32.totalorder %s153, %s154
      %p166 = scmp.eq.s32.totalorder %s39, 1
      %p167 = por %p165, %p166
      %p169 = scmp.ne.s32.totalorder %s154, %s168
      %p170 = scmp.eq.s32.totalorder %s39, 0
      %p171 = por %p169, %p170
      %s173 = sadd.s32 %s172, 1
      %p176 = scmp.eq.s32.totalorder %s33, 1
      %p177 = scmp.ne.s32.totalorder %s172, %s174
      %p178 = scmp.eq.s32.totalorder %s33, 0
      %p179 = por %p177, %p178
      %p180 = scmp.ne.s32.totalorder %s172, %s174
      %p181 = scmp.eq.s32.totalorder %s38, 1
      %p182 = por %p180, %p181
      %p183 = scmp.ne.s32.totalorder %s174, %s175
      %p184 = scmp.eq.s32.totalorder %s38, 0
      %p185 = por %p183, %p184
      %p186 = scmp.ne.s32.totalorder %s174, %s175
      %p187 = scmp.eq.s32.totalorder %s39, 1
      %p188 = por %p186, %p187
      %p190 = scmp.ne.s32.totalorder %s175, %s189
      %p191 = scmp.eq.s32.totalorder %s39, 0
      %p192 = por %p190, %p191
      %s194 = sadd.s32 %s193, 1
      %p197 = scmp.eq.s32.totalorder %s33, 1
      %p198 = scmp.ne.s32.totalorder %s193, %s195
      %p199 = scmp.eq.s32.totalorder %s33, 0
      %p200 = por %p198, %p199
      %p201 = scmp.ne.s32.totalorder %s193, %s195
      %p202 = scmp.eq.s32.totalorder %s38, 1
      %p203 = por %p201, %p202
      %p204 = scmp.ne.s32.totalorder %s195, %s196
      %p205 = scmp.eq.s32.totalorder %s38, 0
      %p206 = por %p204, %p205
      %p207 = scmp.ne.s32.totalorder %s195, %s196
      %p208 = scmp.eq.s32.totalorder %s39, 1
      %p209 = por %p207, %p208
      %p211 = scmp.ne.s32.totalorder %s196, %s210
      %p212 = scmp.eq.s32.totalorder %s39, 0
      %p213 = por %p211, %p212
      %s215 = sadd.s32 %s214, 1
      %p218 = scmp.eq.s32.totalorder %s33, 1
      %p219 = scmp.ne.s32.totalorder %s214, %s216
      %p220 = scmp.eq.s32.totalorder %s33, 0
      %p221 = por %p219, %p220
      %p222 = scmp.ne.s32.totalorder %s214, %s216
      %p223 = scmp.eq.s32.totalorder %s38, 1
      %p224 = por %p222, %p223
      %p225 = scmp.ne.s32.totalorder %s216, %s217
      %p226 = scmp.eq.s32.totalorder %s38, 0
      %p227 = por %p225, %p226
      %p228 = scmp.ne.s32.totalorder %s216, %s217
      %p229 = scmp.eq.s32.totalorder %s39, 1
      %p230 = por %p228, %p229
      %p232 = scmp.ne.s32.totalorder %s217, %s231
      %p233 = scmp.eq.s32.totalorder %s39, 0
      %p234 = por %p232, %p233
      %s235 = ssub.s32 %s33, %s40
      %p236 = scmp.eq.s32.totalorder %s235, 0
      %s238 = sadd.s32 %s237, 1
      %s239 = scalar_select %p236, %s237, %s238
      %p242 = pneg %p236
      %p243 = scmp.eq.s32.totalorder %s33, 1
      %p244 = por %p242, %p243
      %p245 = scmp.ne.s32.totalorder %s237, %s240
      %p246 = scmp.eq.s32.totalorder %s33, 0
      %p247 = por %p245, %p246
      %p248 = scmp.ne.s32.totalorder %s237, %s240
      %p249 = scmp.eq.s32.totalorder %s38, 1
      %p250 = por %p248, %p249
      %p251 = scmp.ne.s32.totalorder %s240, %s241
      %p252 = scmp.eq.s32.totalorder %s38, 0
      %p253 = por %p251, %p252
      %p254 = scmp.ne.s32.totalorder %s240, %s241
      %p255 = scmp.eq.s32.totalorder %s39, 1
      %p256 = por %p254, %p255
      %p258 = scmp.ne.s32.totalorder %s241, %s257
      %p259 = scmp.eq.s32.totalorder %s39, 0
      %p260 = por %p258, %p259
      %s261 = ssub.s32 %s33, %s40
      %p262 = scmp.eq.s32.totalorder %s261, 0
      %s264 = sadd.s32 %s263, 1
      %s265 = scalar_select %p262, %s263, %s264
      %p268 = pneg %p262
      %p269 = scmp.eq.s32.totalorder %s33, 1
      %p270 = por %p268, %p269
      %p271 = scmp.ne.s32.totalorder %s263, %s266
      %p272 = scmp.eq.s32.totalorder %s33, 0
      %p273 = por %p271, %p272
      %p274 = scmp.ne.s32.totalorder %s263, %s266
      %p275 = scmp.eq.s32.totalorder %s38, 1
      %p276 = por %p274, %p275
      %p277 = scmp.ne.s32.totalorder %s266, %s267
      %p278 = scmp.eq.s32.totalorder %s38, 0
      %p279 = por %p277, %p278
      %p280 = scmp.ne.s32.totalorder %s266, %s267
      %p281 = scmp.eq.s32.totalorder %s39, 1
      %p282 = por %p280, %p281
      %p284 = scmp.ne.s32.totalorder %s267, %s283
      %p285 = scmp.eq.s32.totalorder %s39, 0
      %p286 = por %p284, %p285
      %s288 = sadd.s32 %s287, 1
      %p291 = scmp.eq.s32.totalorder %s33, 1
      %p292 = scmp.ne.s32.totalorder %s287, %s289
      %p293 = scmp.eq.s32.totalorder %s33, 0
      %p294 = por %p292, %p293
      %p295 = scmp.ne.s32.totalorder %s287, %s289
      %p296 = scmp.eq.s32.totalorder %s38, 1
      %p297 = por %p295, %p296
      %p298 = scmp.ne.s32.totalorder %s289, %s290
      %p299 = scmp.eq.s32.totalorder %s38, 0
      %p300 = por %p298, %p299
      %p301 = scmp.ne.s32.totalorder %s289, %s290
      %p302 = scmp.eq.s32.totalorder %s39, 1
      %p303 = por %p301, %p302
      %p305 = scmp.ne.s32.totalorder %s290, %s304
      %p306 = scmp.eq.s32.totalorder %s39, 0
      %p307 = por %p305, %p306
      %s309 = sadd.s32 %s308, 1
      %p312 = scmp.eq.s32.totalorder %s33, 1
      %p313 = scmp.ne.s32.totalorder %s308, %s310
      %p314 = scmp.eq.s32.totalorder %s33, 0
      %p315 = por %p313, %p314
      %p316 = scmp.ne.s32.totalorder %s308, %s310
      %p317 = scmp.eq.s32.totalorder %s38, 1
      %p318 = por %p316, %p317
      %p319 = scmp.ne.s32.totalorder %s310, %s311
      %p320 = scmp.eq.s32.totalorder %s38, 0
      %p321 = por %p319, %p320
      %p322 = scmp.ne.s32.totalorder %s310, %s311
      %p323 = scmp.eq.s32.totalorder %s39, 1
      %p324 = por %p322, %p323
      %p326 = scmp.ne.s32.totalorder %s311, %s325
      %p327 = scmp.eq.s32.totalorder %s39, 0
      %p328 = por %p326, %p327
      %s330 = sadd.s32 %s329, 1
      %p333 = scmp.eq.s32.totalorder %s33, 1
      %p334 = scmp.ne.s32.totalorder %s329, %s331
      %p335 = scmp.eq.s32.totalorder %s33, 0
      %p336 = por %p334, %p335
      %p337 = scmp.ne.s32.totalorder %s329, %s331
      %p338 = scmp.eq.s32.totalorder %s38, 1
      %p339 = por %p337, %p338
      %p340 = scmp.ne.s32.totalorder %s331, %s332
      %p341 = scmp.eq.s32.totalorder %s38, 0
      %p342 = por %p340, %p341
      %p343 = scmp.ne.s32.totalorder %s331, %s332
      %p344 = scmp.eq.s32.totalorder %s39, 1
      %p345 = por %p343, %p344
      %p347 = scmp.ne.s32.totalorder %s332, %s346
      %p348 = scmp.eq.s32.totalorder %s39, 0
      %p349 = por %p347, %p348
      %s351 = sadd.s32 %s350, 1
      %p354 = scmp.eq.s32.totalorder %s33, 1
      %p355 = scmp.ne.s32.totalorder %s350, %s352
      %p356 = scmp.eq.s32.totalorder %s33, 0
      %p357 = por %p355, %p356
      %p358 = scmp.ne.s32.totalorder %s350, %s352
      %p359 = scmp.eq.s32.totalorder %s38, 1
      %p360 = por %p358, %p359
      %p361 = scmp.ne.s32.totalorder %s352, %s353
      %p362 = scmp.eq.s32.totalorder %s38, 0
      %p363 = por %p361, %p362
      %p364 = scmp.ne.s32.totalorder %s352, %s353
      %p365 = scmp.eq.s32.totalorder %s39, 1
      %p366 = por %p364, %p365
      %p368 = scmp.ne.s32.totalorder %s353, %s367
      %p369 = scmp.eq.s32.totalorder %s39, 0
      %p370 = por %p368, %p369
      %s371 = ssub.s32 %s33, %s40
      %p372 = scmp.eq.s32.totalorder %s371, 0
      %s374 = sadd.s32 %s373, 1
      %s375 = scalar_select %p372, %s373, %s374
      %p378 = pneg %p372
      %p379 = scmp.eq.s32.totalorder %s33, 1
      %p380 = por %p378, %p379
      %p381 = scmp.ne.s32.totalorder %s373, %s376
      %p382 = scmp.eq.s32.totalorder %s33, 0
      %p383 = por %p381, %p382
      %p384 = scmp.ne.s32.totalorder %s373, %s376
      %p385 = scmp.eq.s32.totalorder %s38, 1
      %p386 = por %p384, %p385
      %p387 = scmp.ne.s32.totalorder %s376, %s377
      %p388 = scmp.eq.s32.totalorder %s38, 0
      %p389 = por %p387, %p388
      %p390 = scmp.ne.s32.totalorder %s376, %s377
      %p391 = scmp.eq.s32.totalorder %s39, 1
      %p392 = por %p390, %p391
      %p394 = scmp.ne.s32.totalorder %s377, %s393
      %p395 = scmp.eq.s32.totalorder %s39, 0
      %p396 = por %p394, %p395
      %p397 = scmp.le.s32.totalorder 1, %s33
      %p398 = scmp.lt.s32.totalorder %s33, 3
      %p399 = pnand %p397, %p398
      %p400 = pneg %p399
      // Predicated region
      $region9: #{forward.1} parent=5 // pred_check
        _
      $region10: #{forward.1} parent=5 // pred_check_branch
        %402 = sbr.rel (%p399) target = $region12
      $region11: #{forward.1} parent=5 // pred_region
        %s403 = ssub.s32 %s33, 1
        // Predicated region
        $region13: #{forward.1} parent=11 // pred_check
          %p404 = pneg %p80
        $region14: #{forward.1} parent=11 // pred_check_branch
          %406 = sbr.rel (%p404) target = $region16
        $region15: #{forward.1} parent=11 // pred_region
          %s408 = ssub.s32 120000, 120000
          %409 = vsyncadd [#allocation6], %s408
          %s410 = sshll.u32 [#allocation5], 4
          %s411 = int_to_ptr.vmem [resolvable:$true] %s410
          %416 = dma.hbm_to_vmem [thread:$0]  %s1, 120000, %s411, [#allocation6], 960, 960, 60
        $region16: #{forward.1} parent=11 // pred_fallthru
          _
        // Predicated region
        $region17: #{forward.1} parent=11 // pred_check
          %p417 = pneg %p101
        $region18: #{forward.1} parent=11 // pred_check_branch
          %419 = sbr.rel (%p417) target = $region20
        $region19: #{forward.1} parent=11 // pred_region
          %s421 = ssub.s32 16, 16
          %422 = vsyncadd [#allocation6], %s421
          %s424 = sshll.u32 [#allocation7], 4
          %s425 = int_to_ptr.vmem [resolvable:$true] %s424
          %427 = dma.hbm_to_vmem [thread:$0]  %s2, 16, %s425, [#allocation6]
        $region20: #{forward.1} parent=11 // pred_fallthru
          _
        // Predicated region
        $region21: #{forward.1} parent=11 // pred_check
          %p428 = pneg %p122
        $region22: #{forward.1} parent=11 // pred_check_branch
          %430 = sbr.rel (%p428) target = $region24
        $region23: #{forward.1} parent=11 // pred_region
          %s432 = ssub.s32 4096, 4096
          %433 = vsyncadd [#allocation9], %s432
          %s434 = sshll.u32 [#allocation8], 4
          %s435 = int_to_ptr.vmem [resolvable:$true] %s434
          %440 = dma.hbm_to_vmem [thread:$0]  %s3, 4096, %s435, [#allocation9], 256, 256, 16
        $region24: #{forward.1} parent=11 // pred_fallthru
          _
        // Predicated region
        $region25: #{forward.1} parent=11 // pred_check
          %p441 = pneg %p143
        $region26: #{forward.1} parent=11 // pred_check_branch
          %443 = sbr.rel (%p441) target = $region28
        $region27: #{forward.1} parent=11 // pred_region
          %s445 = ssub.s32 4096, 4096
          %446 = vsyncadd [#allocation9], %s445
          %s447 = sshll.u32 [#allocation10], 4
          %s448 = int_to_ptr.vmem [resolvable:$true] %s447
          %453 = dma.hbm_to_vmem [thread:$0]  %s4, 4096, %s448, [#allocation9], 256, 256, 16
        $region28: #{forward.1} parent=11 // pred_fallthru
          _
        // Predicated region
        $region29: #{forward.1} parent=11 // pred_check
          %p454 = pneg %p164
        $region30: #{forward.1} parent=11 // pred_check_branch
          %456 = sbr.rel (%p454) target = $region32
        $region31: #{forward.1} parent=11 // pred_region
          %s458 = ssub.s32 64, 64
          %459 = vsyncadd [#allocation12], %s458
          %s461 = sshll.u32 [#allocation11], 4
          %s462 = int_to_ptr.vmem [resolvable:$true] %s461
          %464 = dma.hbm_to_vmem [thread:$0]  %s5, 64, %s462, [#allocation12]
        $region32: #{forward.1} parent=11 // pred_fallthru
          _
        // Predicated region
        $region33: #{forward.1} parent=11 // pred_check
          %p465 = pneg %p185
        $region34: #{forward.1} parent=11 // pred_check_branch
          %467 = sbr.rel (%p465) target = $region36
        $region35: #{forward.1} parent=11 // pred_region
          %s469 = ssub.s32 4096, 4096
          %470 = vsyncadd [#allocation12], %s469
          %s471 = sshll.u32 [#allocation13], 4
          %s472 = int_to_ptr.vmem [resolvable:$true] %s471
          %477 = dma.hbm_to_vmem [thread:$0]  %s6, 4096, %s472, [#allocation12], 256, 256, 16
        $region36: #{forward.1} parent=11 // pred_fallthru
          _
        // Predicated region
        $region37: #{forward.1} parent=11 // pred_check
          %p478 = pneg %p206
        $region38: #{forward.1} parent=11 // pred_check_branch
          %480 = sbr.rel (%p478) target = $region40
        $region39: #{forward.1} parent=11 // pred_region
          %s482 = ssub.s32 4096, 4096
          %483 = vsyncadd [#allocation15], %s482
          %s484 = sshll.u32 [#allocation14], 4
          %s485 = int_to_ptr.vmem [resolvable:$true] %s484
          %490 = dma.hbm_to_vmem [thread:$0]  %s7, 4096, %s485, [#allocation15], 256, 256, 16
        $region40: #{forward.1} parent=11 // pred_fallthru
          _
        // Predicated region
        $region41: #{forward.1} parent=11 // pred_check
          %p491 = pneg %p227
        $region42: #{forward.1} parent=11 // pred_check_branch
          %493 = sbr.rel (%p491) target = $region44
        $region43: #{forward.1} parent=11 // pred_region
          %s495 = ssub.s32 64, 64
          %496 = vsyncadd [#allocation15], %s495
          %s498 = sshll.u32 [#allocation16], 4
          %s499 = int_to_ptr.vmem [resolvable:$true] %s498
          %501 = dma.hbm_to_vmem [thread:$0]  %s8, 64, %s499, [#allocation15]
        $region44: #{forward.1} parent=11 // pred_fallthru
          _
        // Predicated region
        $region45: #{forward.1} parent=11 // pred_check
          %p502 = pneg %p300
        $region46: #{forward.1} parent=11 // pred_check_branch
          %504 = sbr.rel (%p502) target = $region48
        $region47: #{forward.1} parent=11 // pred_region
          %s506 = ssub.s32 1024, 1024
          %507 = vsyncadd [#allocation21], %s506
          %s508 = sshll.u32 [#allocation20], 4
          %s509 = int_to_ptr.vmem [resolvable:$true] %s508
          %514 = dma.hbm_to_vmem [thread:$0]  %s11, 1024, %s509, [#allocation21], 64, 64, 4
        $region48: #{forward.1} parent=11 // pred_fallthru
          _
        // Predicated region
        $region49: #{forward.1} parent=11 // pred_check
          %p515 = pneg %p321
        $region50: #{forward.1} parent=11 // pred_check_branch
          %517 = sbr.rel (%p515) target = $region52
        $region51: #{forward.1} parent=11 // pred_region
          %s519 = ssub.s32 16, 16
          %520 = vsyncadd [#allocation21], %s519
          %s522 = sshll.u32 [#allocation22], 4
          %s523 = int_to_ptr.vmem [resolvable:$true] %s522
          %525 = dma.hbm_to_vmem [thread:$0]  %s12, 16, %s523, [#allocation21]
        $region52: #{forward.1} parent=11 // pred_fallthru
          _
        // Predicated region
        $region53: #{forward.1} parent=11 // pred_check
          %p526 = pneg %p342
        $region54: #{forward.1} parent=11 // pred_check_branch
          %528 = sbr.rel (%p526) target = $region56
        $region55: #{forward.1} parent=11 // pred_region
          %s530 = ssub.s32 1024, 1024
          %531 = vsyncadd [#allocation24], %s530
          %s532 = sshll.u32 [#allocation23], 4
          %s533 = int_to_ptr.vmem [resolvable:$true] %s532
          %538 = dma.hbm_to_vmem [thread:$0]  %s13, 1024, %s533, [#allocation24], 64, 64, 4
        $region56: #{forward.1} parent=11 // pred_fallthru
          _
        // Predicated region
        $region57: #{forward.1} parent=11 // pred_check
          %p539 = pneg %p363
        $region58: #{forward.1} parent=11 // pred_check_branch
          %541 = sbr.rel (%p539) target = $region60
        $region59: #{forward.1} parent=11 // pred_region
          %s543 = ssub.s32 16, 16
          %544 = vsyncadd [#allocation24], %s543
          %s546 = sshll.u32 [#allocation25], 4
          %s547 = int_to_ptr.vmem [resolvable:$true] %s546
          %549 = dma.hbm_to_vmem [thread:$0]  %s14, 16, %s547, [#allocation24]
        $region60: #{forward.1} parent=11 // pred_fallthru
          _
      $region12: #{forward.1} parent=5 // pred_fallthru
        _
      %p550 = scmp.lt.s32.totalorder %s33, 2
      // Predicated region
      $region61: #{forward.1} parent=5 // pred_check
        %p551 = pneg %p550
      $region62: #{forward.1} parent=5 // pred_check_branch
        %553 = sbr.rel (%p551) target = $region64
      $region63: #{forward.1} parent=5 // pred_region
        // Predicated region
        $region65: #{forward.1} parent=63 // pred_check
          %p554 = pneg %p53
        $region66: #{forward.1} parent=63 // pred_check_branch
          %556 = sbr.rel (%p554) target = $region68
        $region67: #{forward.1} parent=63 // pred_region
          %s557 = sand.u32 %s43, 1
          %s558 = scalar_lea.sflag [#allocation4], %s557
          %s559 = sand.u32 %s43, 1
          %s560 = smul.addr %s559, 64
          %s561 = scalar_lea.vmem [#allocation3], %s560
          %s563 = ssub.s32 1024, 1024
          %564 = vsyncadd %s558, %s563
          %s565 = smul.addr %s33, 8
          %s566 = smul.addr %s565, 128
          %s567 = scalar_lea.hbm %s0, %s566
          %s569 = sshll.u32 %s561, 4
          %s570 = int_to_ptr.vmem [resolvable:$true] %s569
          %572 = dma.hbm_to_vmem [thread:$0]  %s567, 1024, %s570, %s558
        $region68: #{forward.1} parent=63 // pred_fallthru
          _
        // Predicated region
        $region69: #{forward.1} parent=63 // pred_check
          %p573 = pneg %p247
        $region70: #{forward.1} parent=63 // pred_check_branch
          %575 = sbr.rel (%p573) target = $region72
        $region71: #{forward.1} parent=63 // pred_region
          %s576 = sand.u32 %s33, 1
          %s577 = scalar_lea.sflag [#allocation18], %s576
          %s578 = sand.u32 %s237, 1
          %s579 = smul.addr %s578, 2
          %s580 = scalar_lea.vmem [#allocation17], %s579
          %s582 = ssub.s32 32, 32
          %583 = vsyncadd %s577, %s582
          %s584 = smul.addr %s33, 32
          %s585 = scalar_lea.hbm %s9, %s584
          %s587 = sshll.u32 %s580, 4
          %s588 = int_to_ptr.vmem [resolvable:$true] %s587
          %590 = dma.hbm_to_vmem [thread:$0]  %s585, 32, %s588, %s577
        $region72: #{forward.1} parent=63 // pred_fallthru
          _
        // Predicated region
        $region73: #{forward.1} parent=63 // pred_check
          %p591 = pneg %p273
        $region74: #{forward.1} parent=63 // pred_check_branch
          %593 = sbr.rel (%p591) target = $region76
        $region75: #{forward.1} parent=63 // pred_region
          %s594 = sand.u32 %s33, 1
          %s595 = scalar_lea.sflag [#allocation18], %s594
          %s596 = sand.u32 %s263, 1
          %s597 = smul.addr %s596, 2
          %s598 = scalar_lea.vmem [#allocation19], %s597
          %s600 = ssub.s32 32, 32
          %601 = vsyncadd %s595, %s600
          %s602 = smul.addr %s33, 32
          %s603 = scalar_lea.hbm %s10, %s602
          %s605 = sshll.u32 %s598, 4
          %s606 = int_to_ptr.vmem [resolvable:$true] %s605
          %608 = dma.hbm_to_vmem [thread:$0]  %s603, 32, %s606, %s595
        $region76: #{forward.1} parent=63 // pred_fallthru
          _
      $region64: #{forward.1} parent=5 // pred_fallthru
        _
      %p609 = scmp.le.s32.totalorder 1, %s33
      %p610 = scmp.lt.s32.totalorder %s33, 3
      %p611 = pnand %p609, %p610
      %p612 = pneg %p611
      // Predicated region
      $region77: #{forward.1} parent=5 // pred_check
        _
      $region78: #{forward.1} parent=5 // pred_check_branch
        %614 = sbr.rel (%p611) target = $region80
      $region79: #{forward.1} parent=5 // pred_region
        %s615 = ssub.s32 %s33, 1
        %s616 = sand.u32 %s46, 1
        %s617 = scalar_lea.sflag [#allocation4], %s616
        %s618 = sand.u32 %s46, 1
        %s619 = smul.addr %s618, 64
        %s620 = scalar_lea.vmem [#allocation3], %s619
        // Predicated region
        $region81: #{forward.1} parent=79 // pred_check
          %p621 = pneg %p59
        $region82: #{forward.1} parent=79 // pred_check_branch
          %623 = sbr.rel (%p621) target = $region84
        $region83: #{forward.1} parent=79 // pred_region
          %624 = dma.done %s617, 1024
        $region84: #{forward.1} parent=79 // pred_fallthru
          _
        // Predicated region
        $region85: #{forward.1} parent=79 // pred_check
          %p625 = pneg %p80
        $region86: #{forward.1} parent=79 // pred_check_branch
          %627 = sbr.rel (%p625) target = $region88
        $region87: #{forward.1} parent=79 // pred_region
          %628 = dma.done [#allocation6], 120000
        $region88: #{forward.1} parent=79 // pred_fallthru
          _
        // Predicated region
        $region89: #{forward.1} parent=79 // pred_check
          %p629 = pneg %p101
        $region90: #{forward.1} parent=79 // pred_check_branch
          %631 = sbr.rel (%p629) target = $region92
        $region91: #{forward.1} parent=79 // pred_region
          %632 = dma.done [#allocation6], 16
        $region92: #{forward.1} parent=79 // pred_fallthru
          _
        // Predicated region
        $region93: #{forward.1} parent=79 // pred_check
          %p633 = pneg %p122
        $region94: #{forward.1} parent=79 // pred_check_branch
          %635 = sbr.rel (%p633) target = $region96
        $region95: #{forward.1} parent=79 // pred_region
          %636 = dma.done [#allocation9], 4096
        $region96: #{forward.1} parent=79 // pred_fallthru
          _
        // Predicated region
        $region97: #{forward.1} parent=79 // pred_check
          %p637 = pneg %p143
        $region98: #{forward.1} parent=79 // pred_check_branch
          %639 = sbr.rel (%p637) target = $region100
        $region99: #{forward.1} parent=79 // pred_region
          %640 = dma.done [#allocation9], 4096
        $region100: #{forward.1} parent=79 // pred_fallthru
          _
        // Predicated region
        $region101: #{forward.1} parent=79 // pred_check
          %p641 = pneg %p164
        $region102: #{forward.1} parent=79 // pred_check_branch
          %643 = sbr.rel (%p641) target = $region104
        $region103: #{forward.1} parent=79 // pred_region
          %644 = dma.done [#allocation12], 64
        $region104: #{forward.1} parent=79 // pred_fallthru
          _
        // Predicated region
        $region105: #{forward.1} parent=79 // pred_check
          %p645 = pneg %p185
        $region106: #{forward.1} parent=79 // pred_check_branch
          %647 = sbr.rel (%p645) target = $region108
        $region107: #{forward.1} parent=79 // pred_region
          %648 = dma.done [#allocation12], 4096
        $region108: #{forward.1} parent=79 // pred_fallthru
          _
        // Predicated region
        $region109: #{forward.1} parent=79 // pred_check
          %p649 = pneg %p206
        $region110: #{forward.1} parent=79 // pred_check_branch
          %651 = sbr.rel (%p649) target = $region112
        $region111: #{forward.1} parent=79 // pred_region
          %652 = dma.done [#allocation15], 4096
        $region112: #{forward.1} parent=79 // pred_fallthru
          _
        // Predicated region
        $region113: #{forward.1} parent=79 // pred_check
          %p653 = pneg %p227
        $region114: #{forward.1} parent=79 // pred_check_branch
          %655 = sbr.rel (%p653) target = $region116
        $region115: #{forward.1} parent=79 // pred_region
          %656 = dma.done [#allocation15], 64
        $region116: #{forward.1} parent=79 // pred_fallthru
          _
        %s657 = sand.u32 %s38, 1
        %s658 = scalar_lea.sflag [#allocation18], %s657
        %s659 = sand.u32 %s240, 1
        %s660 = smul.addr %s659, 2
        %s661 = scalar_lea.vmem [#allocation17], %s660
        // Predicated region
        $region117: #{forward.1} parent=79 // pred_check
          %p662 = pneg %p253
        $region118: #{forward.1} parent=79 // pred_check_branch
          %664 = sbr.rel (%p662) target = $region120
        $region119: #{forward.1} parent=79 // pred_region
          %665 = dma.done %s658, 32
        $region120: #{forward.1} parent=79 // pred_fallthru
          _
        %s666 = sand.u32 %s38, 1
        %s667 = scalar_lea.sflag [#allocation18], %s666
        %s668 = sand.u32 %s266, 1
        %s669 = smul.addr %s668, 2
        %s670 = scalar_lea.vmem [#allocation19], %s669
        // Predicated region
        $region121: #{forward.1} parent=79 // pred_check
          %p671 = pneg %p279
        $region122: #{forward.1} parent=79 // pred_check_branch
          %673 = sbr.rel (%p671) target = $region124
        $region123: #{forward.1} parent=79 // pred_region
          %674 = dma.done %s667, 32
        $region124: #{forward.1} parent=79 // pred_fallthru
          _
        // Predicated region
        $region125: #{forward.1} parent=79 // pred_check
          %p675 = pneg %p300
        $region126: #{forward.1} parent=79 // pred_check_branch
          %677 = sbr.rel (%p675) target = $region128
        $region127: #{forward.1} parent=79 // pred_region
          %678 = dma.done [#allocation21], 1024
        $region128: #{forward.1} parent=79 // pred_fallthru
          _
        // Predicated region
        $region129: #{forward.1} parent=79 // pred_check
          %p679 = pneg %p321
        $region130: #{forward.1} parent=79 // pred_check_branch
          %681 = sbr.rel (%p679) target = $region132
        $region131: #{forward.1} parent=79 // pred_region
          %682 = dma.done [#allocation21], 16
        $region132: #{forward.1} parent=79 // pred_fallthru
          _
        // Predicated region
        $region133: #{forward.1} parent=79 // pred_check
          %p683 = pneg %p342
        $region134: #{forward.1} parent=79 // pred_check_branch
          %685 = sbr.rel (%p683) target = $region136
        $region135: #{forward.1} parent=79 // pred_region
          %686 = dma.done [#allocation24], 1024
        $region136: #{forward.1} parent=79 // pred_fallthru
          _
        // Predicated region
        $region137: #{forward.1} parent=79 // pred_check
          %p687 = pneg %p363
        $region138: #{forward.1} parent=79 // pred_check_branch
          %689 = sbr.rel (%p687) target = $region140
        $region139: #{forward.1} parent=79 // pred_region
          %690 = dma.done [#allocation24], 16
        $region140: #{forward.1} parent=79 // pred_fallthru
          _
        %s691 = sand.u32 %s46, 1
        %s692 = scalar_lea.sflag [#allocation4], %s691
        %s693 = sand.u32 %s46, 1
        %s694 = smul.addr %s693, 64
        %s695 = scalar_lea.vmem [#allocation3], %s694
        %p696 = pneg %p59
        %p697 = pneg %p56
        %p698 = pneg %p80
        %p699 = pneg %p77
        %p700 = pneg %p101
        %p701 = pneg %p98
        %p702 = pneg %p122
        %p703 = pneg %p119
        %p704 = pneg %p143
        %p705 = pneg %p140
        %p706 = pneg %p164
        %p707 = pneg %p161
        %p708 = pneg %p185
        %p709 = pneg %p182
        %p710 = pneg %p206
        %p711 = pneg %p203
        %p712 = pneg %p227
        %p713 = pneg %p224
        %s714 = sand.u32 %s38, 1
        %s715 = scalar_lea.sflag [#allocation18], %s714
        %s716 = sand.u32 %s240, 1
        %s717 = smul.addr %s716, 2
        %s718 = scalar_lea.vmem [#allocation17], %s717
        %p719 = pneg %p253
        %p720 = pneg %p250
        %s721 = sand.u32 %s38, 1
        %s722 = scalar_lea.sflag [#allocation18], %s721
        %s723 = sand.u32 %s266, 1
        %s724 = smul.addr %s723, 2
        %s725 = scalar_lea.vmem [#allocation19], %s724
        %p726 = pneg %p279
        %p727 = pneg %p276
        %p728 = pneg %p300
        %p729 = pneg %p297
        %p730 = pneg %p321
        %p731 = pneg %p318
        %p732 = pneg %p342
        %p733 = pneg %p339
        %p734 = pneg %p363
        %p735 = pneg %p360
        %p736 = pneg %p389
        %p737 = pneg %p386
        %p738 = scmp.lt.s32.totalorder %s38, 1
        %s739 = scalar_select %p738, %s38, 1
        %s740 = smul.addr %s739, 8
        %s741 = scalar_lea.vmem %s15, %s740
        %p742 = scmp.lt.s32.totalorder %s38, 1
        %s743 = scalar_select %p742, %s38, 1
        %s744 = smul.addr %s743, 8
        %s745 = scalar_lea.vmem %s15, %s744
        %747 = vst [vmem:[#allocation2] sm:$0xff] 0
        %748 = vst [vmem:[#allocation2 + $0x8] sm:$0xff] 0
        %749 = vst [vmem:[#allocation2 + $0x10] sm:$0xff] 0
        %vm750 = vcmask 1043456
        %vm751 = vcmask 850948
        %vm752 = vmor %vm751, %vm750
        %753 = vst.msk [vmem:[#allocation2 + $0x18] sm:$0xff] %vm752, 0
        %754 = vst [vmem:[#allocation2 + $0x20] sm:$0xff] 0
        %755 = vst [vmem:[#allocation2 + $0x28] sm:$0xff] 0
        %756 = vst [vmem:[#allocation2 + $0x30] sm:$0xff] 0
        %757 = vst.msk [vmem:[#allocation2 + $0x38] sm:$0xff] %vm752, 0
        %758 = vst [vmem:[#allocation2 + $0x40] sm:$0xff] 0
        %759 = vst [vmem:[#allocation2 + $0x48] sm:$0xff] 0
        %760 = vst [vmem:[#allocation2 + $0x50] sm:$0xff] 0
        %761 = vst.msk [vmem:[#allocation2 + $0x58] sm:$0xff] %vm752, 0
        %v762 = vld [vmem:[%s620] sm:$0xff]
        %v763 = vld [vmem:[%s620 + $0x8] sm:$0xff]
        %v764 = vld [vmem:[%s620 + $0x10] sm:$0xff]
        %v765 = vld [vmem:[%s620 + $0x18] sm:$0xff]
        %v766 = vld [vmem:[%s620 + $0x20] sm:$0xff]
        %v767 = vld [vmem:[%s620 + $0x28] sm:$0xff]
        %v768 = vld [vmem:[%s620 + $0x30] sm:$0xff]
        %v769 = vld [vmem:[%s620 + $0x38] sm:$0xff]
        %v770 = vpack.c.bf16 %v762, %v762
        %v771 = vpack.c.bf16 %v763, %v763
        %v772 = vpack.c.bf16 %v764, %v764
        %v773 = vpack.c.bf16 %v765, %v765
        %v774 = vpack.c.bf16 %v766, %v766
        %v775 = vpack.c.bf16 %v767, %v767
        %v776 = vpack.c.bf16 %v768, %v768
        %v777 = vpack.c.bf16 %v769, %v769
        %v786 = vunpack.c.l.b16 %v770
        %v787 = vunpack.c.l.b16 %v771
        %v788 = vunpack.c.l.b16 %v772
        %v789 = vunpack.c.l.b16 %v773
        %v790 = vunpack.c.l.b16 %v774
        %v791 = vunpack.c.l.b16 %v775
        %v792 = vunpack.c.l.b16 %v776
        %v793 = vunpack.c.l.b16 %v777
        %v794 = vpack.c.b16 %v787, %v786
        %v795 = vpack.c.b16 %v789, %v788
        %v796 = vpack.c.b16 %v791, %v790
        %v797 = vpack.c.b16 %v793, %v792
        %802 = vst [vmem:[#allocation2 + $0x20] sm:$0xff] %v794
        %803 = vst [vmem:[#allocation2 + $0x28] sm:$0xff] %v795
        %804 = vst [vmem:[#allocation2 + $0x30] sm:$0xff] %v796
        %805 = vst.msk [vmem:[#allocation2 + $0x38] sm:$0xff] %vm752, %v797
        %v806 = vld [vmem:[#allocation2] sm:$0xff]
        %v807 = vld [vmem:[#allocation2 + $0x8] sm:$0xff]
        %v808 = vld [vmem:[#allocation2 + $0x10] sm:$0xff]
        %v809 = vld [vmem:[#allocation2 + $0x18] sm:$0xff]
        %v810 = vld [vmem:[#allocation2 + $0x20] sm:$0xff]
        %v811 = vld [vmem:[#allocation2 + $0x28] sm:$0xff]
        %v812 = vld [vmem:[#allocation2 + $0x30] sm:$0xff]
        %v813 = vld [vmem:[#allocation2 + $0x38] sm:$0xff]
        %v814 = vld [vmem:[#allocation2 + $0x40] sm:$0xff]
        %v815 = vld [vmem:[#allocation2 + $0x48] sm:$0xff]
        %v816 = vld [vmem:[#allocation2 + $0x50] sm:$0xff]
        %v817 = vld [vmem:[#allocation2 + $0x58] sm:$0xff]
        %v818 = vld [vmem:[#allocation5] sm:$0xff]
        %v819 = vld [vmem:[#allocation5 + $0x8] sm:$0xff]
        %v820 = vld [vmem:[#allocation5 + $0x10] sm:$0xff]
        %v821 = vld [vmem:[#allocation5 + $0x18] sm:$0xff]
        %v822 = vld [vmem:[#allocation5 + $0x20] sm:$0xff]
        %v823 = vld [vmem:[#allocation5 + $0x28] sm:$0xff]
        %v824 = vld [vmem:[#allocation5 + $0x30] sm:$0xff]
        %v825 = vld [vmem:[#allocation5 + $0x38] sm:$0xf]
        %v826 = vld [vmem:[#allocation5 + $0x3c] sm:$0xff]
        %v827 = vld [vmem:[#allocation5 + $0x44] sm:$0xff]
        %v828 = vld [vmem:[#allocation5 + $0x4c] sm:$0xff]
        %v829 = vld [vmem:[#allocation5 + $0x54] sm:$0xff]
        %v830 = vld [vmem:[#allocation5 + $0x5c] sm:$0xff]
        %v831 = vld [vmem:[#allocation5 + $0x64] sm:$0xff]
        %v832 = vld [vmem:[#allocation5 + $0x6c] sm:$0xff]
        %v833 = vld [vmem:[#allocation5 + $0x74] sm:$0xf]
        %v834 = vld [vmem:[#allocation5 + $0x78] sm:$0xff]
        %v835 = vld [vmem:[#allocation5 + $0x80] sm:$0xff]
        %v836 = vld [vmem:[#allocation5 + $0x88] sm:$0xff]
        %v837 = vld [vmem:[#allocation5 + $0x90] sm:$0xff]
        %v838 = vld [vmem:[#allocation5 + $0x98] sm:$0xff]
        %v839 = vld [vmem:[#allocation5 + $0xa0] sm:$0xff]
        %v840 = vld [vmem:[#allocation5 + $0xa8] sm:$0xff]
        %v841 = vld [vmem:[#allocation5 + $0xb0] sm:$0xf]
        %v842 = vld [vmem:[#allocation5 + $0xb4] sm:$0xff]
        %v843 = vld [vmem:[#allocation5 + $0xbc] sm:$0xff]
        %v844 = vld [vmem:[#allocation5 + $0xc4] sm:$0xff]
        %v845 = vld [vmem:[#allocation5 + $0xcc] sm:$0xff]
        %v846 = vld [vmem:[#allocation5 + $0xd4] sm:$0xff]
        %v847 = vld [vmem:[#allocation5 + $0xdc] sm:$0xff]
        %v848 = vld [vmem:[#allocation5 + $0xe4] sm:$0xff]
        %v849 = vld [vmem:[#allocation5 + $0xec] sm:$0xf]
        %v850 = vld [vmem:[#allocation5 + $0xf0] sm:$0xff]
        %v851 = vld [vmem:[#allocation5 + $0xf8] sm:$0xff]
        %v852 = vld [vmem:[#allocation5 + $0x100] sm:$0xff]
        %v853 = vld [vmem:[#allocation5 + $0x108] sm:$0xff]
        %v854 = vld [vmem:[#allocation5 + $0x110] sm:$0xff]
        %v855 = vld [vmem:[#allocation5 + $0x118] sm:$0xff]
        %v856 = vld [vmem:[#allocation5 + $0x120] sm:$0xff]
        %v857 = vld [vmem:[#allocation5 + $0x128] sm:$0xf]
        %v858 = vld [vmem:[#allocation5 + $0x12c] sm:$0xff]
        %v859 = vld [vmem:[#allocation5 + $0x134] sm:$0xff]
        %v860 = vld [vmem:[#allocation5 + $0x13c] sm:$0xff]
        %v861 = vld [vmem:[#allocation5 + $0x144] sm:$0xff]
        %v862 = vld [vmem:[#allocation5 + $0x14c] sm:$0xff]
        %v863 = vld [vmem:[#allocation5 + $0x154] sm:$0xff]
        %v864 = vld [vmem:[#allocation5 + $0x15c] sm:$0xff]
        %v865 = vld [vmem:[#allocation5 + $0x164] sm:$0xf]
        %v866 = vld [vmem:[#allocation5 + $0x168] sm:$0xff]
        %v867 = vld [vmem:[#allocation5 + $0x170] sm:$0xff]
        %v868 = vld [vmem:[#allocation5 + $0x178] sm:$0xff]
        %v869 = vld [vmem:[#allocation5 + $0x180] sm:$0xff]
        %v870 = vld [vmem:[#allocation5 + $0x188] sm:$0xff]
        %v871 = vld [vmem:[#allocation5 + $0x190] sm:$0xff]
        %v872 = vld [vmem:[#allocation5 + $0x198] sm:$0xff]
        %v873 = vld [vmem:[#allocation5 + $0x1a0] sm:$0xf]
        %v874 = vld [vmem:[#allocation5 + $0x1a4] sm:$0xff]
        %v875 = vld [vmem:[#allocation5 + $0x1ac] sm:$0xff]
        %v876 = vld [vmem:[#allocation5 + $0x1b4] sm:$0xff]
        %v877 = vld [vmem:[#allocation5 + $0x1bc] sm:$0xff]
        %v878 = vld [vmem:[#allocation5 + $0x1c4] sm:$0xff]
        %v879 = vld [vmem:[#allocation5 + $0x1cc] sm:$0xff]
        %v880 = vld [vmem:[#allocation5 + $0x1d4] sm:$0xff]
        %v881 = vld [vmem:[#allocation5 + $0x1dc] sm:$0xf]
        %v882 = vld [vmem:[#allocation5 + $0x1e0] sm:$0xff]
        %v883 = vld [vmem:[#allocation5 + $0x1e8] sm:$0xff]
        %v884 = vld [vmem:[#allocation5 + $0x1f0] sm:$0xff]
        %v885 = vld [vmem:[#allocation5 + $0x1f8] sm:$0xff]
        %v886 = vld [vmem:[#allocation5 + $0x200] sm:$0xff]
        %v887 = vld [vmem:[#allocation5 + $0x208] sm:$0xff]
        %v888 = vld [vmem:[#allocation5 + $0x210] sm:$0xff]
        %v889 = vld [vmem:[#allocation5 + $0x218] sm:$0xf]
        %v890 = vld [vmem:[#allocation5 + $0x21c] sm:$0xff]
        %v891 = vld [vmem:[#allocation5 + $0x224] sm:$0xff]
        %v892 = vld [vmem:[#allocation5 + $0x22c] sm:$0xff]
        %v893 = vld [vmem:[#allocation5 + $0x234] sm:$0xff]
        %v894 = vld [vmem:[#allocation5 + $0x23c] sm:$0xff]
        %v895 = vld [vmem:[#allocation5 + $0x244] sm:$0xff]
        %v896 = vld [vmem:[#allocation5 + $0x24c] sm:$0xff]
        %v897 = vld [vmem:[#allocation5 + $0x254] sm:$0xf]
        %v898 = vld [vmem:[#allocation5 + $0x258] sm:$0xff]
        %v899 = vld [vmem:[#allocation5 + $0x260] sm:$0xff]
        %v900 = vld [vmem:[#allocation5 + $0x268] sm:$0xff]
        %v901 = vld [vmem:[#allocation5 + $0x270] sm:$0xff]
        %v902 = vld [vmem:[#allocation5 + $0x278] sm:$0xff]
        %v903 = vld [vmem:[#allocation5 + $0x280] sm:$0xff]
        %v904 = vld [vmem:[#allocation5 + $0x288] sm:$0xff]
        %v905 = vld [vmem:[#allocation5 + $0x290] sm:$0xf]
        %v906 = vld [vmem:[#allocation5 + $0x294] sm:$0xff]
        %v907 = vld [vmem:[#allocation5 + $0x29c] sm:$0xff]
        %v908 = vld [vmem:[#allocation5 + $0x2a4] sm:$0xff]
        %v909 = vld [vmem:[#allocation5 + $0x2ac] sm:$0xff]
        %v910 = vld [vmem:[#allocation5 + $0x2b4] sm:$0xff]
        %v911 = vld [vmem:[#allocation5 + $0x2bc] sm:$0xff]
        %v912 = vld [vmem:[#allocation5 + $0x2c4] sm:$0xff]
        %v913 = vld [vmem:[#allocation5 + $0x2cc] sm:$0xf]
        %v914 = vld [vmem:[#allocation5 + $0x2d0] sm:$0xff]
        %v915 = vld [vmem:[#allocation5 + $0x2d8] sm:$0xff]
        %v916 = vld [vmem:[#allocation5 + $0x2e0] sm:$0xff]
        %v917 = vld [vmem:[#allocation5 + $0x2e8] sm:$0xff]
        %v918 = vld [vmem:[#allocation5 + $0x2f0] sm:$0xff]
        %v919 = vld [vmem:[#allocation5 + $0x2f8] sm:$0xff]
        %v920 = vld [vmem:[#allocation5 + $0x300] sm:$0xff]
        %v921 = vld [vmem:[#allocation5 + $0x308] sm:$0xf]
        %v922 = vld [vmem:[#allocation5 + $0x30c] sm:$0xff]
        %v923 = vld [vmem:[#allocation5 + $0x314] sm:$0xff]
        %v924 = vld [vmem:[#allocation5 + $0x31c] sm:$0xff]
        %v925 = vld [vmem:[#allocation5 + $0x324] sm:$0xff]
        %v926 = vld [vmem:[#allocation5 + $0x32c] sm:$0xff]
        %v927 = vld [vmem:[#allocation5 + $0x334] sm:$0xff]
        %v928 = vld [vmem:[#allocation5 + $0x33c] sm:$0xff]
        %v929 = vld [vmem:[#allocation5 + $0x344] sm:$0xf]
        %v930 = vld [vmem:[#allocation5 + $0x348] sm:$0xff]
        %v931 = vld [vmem:[#allocation5 + $0x350] sm:$0xff]
        %v932 = vld [vmem:[#allocation5 + $0x358] sm:$0xff]
        %v933 = vld [vmem:[#allocation5 + $0x360] sm:$0xff]
        %v934 = vld [vmem:[#allocation5 + $0x368] sm:$0xff]
        %v935 = vld [vmem:[#allocation5 + $0x370] sm:$0xff]
        %v936 = vld [vmem:[#allocation5 + $0x378] sm:$0xff]
        %v937 = vld [vmem:[#allocation5 + $0x380] sm:$0xf]
        %v938 = vld [vmem:[#allocation5 + $0x384] sm:$0xff]
        %v939 = vld [vmem:[#allocation5 + $0x38c] sm:$0xff]
        %v940 = vld [vmem:[#allocation5 + $0x394] sm:$0xff]
        %v941 = vld [vmem:[#allocation5 + $0x39c] sm:$0xff]
        %v942 = vld [vmem:[#allocation5 + $0x3a4] sm:$0xff]
        %v943 = vld [vmem:[#allocation5 + $0x3ac] sm:$0xff]
        %v944 = vld [vmem:[#allocation5 + $0x3b4] sm:$0xff]
        %v945 = vld [vmem:[#allocation5 + $0x3bc] sm:$0xf]
        %v946 = vld [vmem:[#allocation5 + $0x3c0] sm:$0xff]
        %v947 = vld [vmem:[#allocation5 + $0x3c8] sm:$0xff]
        %v948 = vld [vmem:[#allocation5 + $0x3d0] sm:$0xff]
        %v949 = vld [vmem:[#allocation5 + $0x3d8] sm:$0xff]
        %v950 = vld [vmem:[#allocation5 + $0x3e0] sm:$0xff]
        %v951 = vld [vmem:[#allocation5 + $0x3e8] sm:$0xff]
        %v952 = vld [vmem:[#allocation5 + $0x3f0] sm:$0xff]
        %v953 = vld [vmem:[#allocation5 + $0x3f8] sm:$0xf]
        %v954 = vld [vmem:[#allocation5 + $0x3fc] sm:$0xff]
        %v955 = vld [vmem:[#allocation5 + $0x404] sm:$0xff]
        %v956 = vld [vmem:[#allocation5 + $0x40c] sm:$0xff]
        %v957 = vld [vmem:[#allocation5 + $0x414] sm:$0xff]
        %v958 = vld [vmem:[#allocation5 + $0x41c] sm:$0xff]
        %v959 = vld [vmem:[#allocation5 + $0x424] sm:$0xff]
        %v960 = vld [vmem:[#allocation5 + $0x42c] sm:$0xff]
        %v961 = vld [vmem:[#allocation5 + $0x434] sm:$0xf]
        %v962 = vld [vmem:[#allocation5 + $0x438] sm:$0xff]
        %v963 = vld [vmem:[#allocation5 + $0x440] sm:$0xff]
        %v964 = vld [vmem:[#allocation5 + $0x448] sm:$0xff]
        %v965 = vld [vmem:[#allocation5 + $0x450] sm:$0xff]
        %v966 = vld [vmem:[#allocation5 + $0x458] sm:$0xff]
        %v967 = vld [vmem:[#allocation5 + $0x460] sm:$0xff]
        %v968 = vld [vmem:[#allocation5 + $0x468] sm:$0xff]
        %v969 = vld [vmem:[#allocation5 + $0x470] sm:$0xf]
        %v970 = vld [vmem:[#allocation5 + $0x474] sm:$0xff]
        %v971 = vld [vmem:[#allocation5 + $0x47c] sm:$0xff]
        %v972 = vld [vmem:[#allocation5 + $0x484] sm:$0xff]
        %v973 = vld [vmem:[#allocation5 + $0x48c] sm:$0xff]
        %v974 = vld [vmem:[#allocation5 + $0x494] sm:$0xff]
        %v975 = vld [vmem:[#allocation5 + $0x49c] sm:$0xff]
        %v976 = vld [vmem:[#allocation5 + $0x4a4] sm:$0xff]
        %v977 = vld [vmem:[#allocation5 + $0x4ac] sm:$0xf]
        %v978 = vld [vmem:[#allocation5 + $0x4b0] sm:$0xff]
        %v979 = vld [vmem:[#allocation5 + $0x4b8] sm:$0xff]
        %v980 = vld [vmem:[#allocation5 + $0x4c0] sm:$0xff]
        %v981 = vld [vmem:[#allocation5 + $0x4c8] sm:$0xff]
        %v982 = vld [vmem:[#allocation5 + $0x4d0] sm:$0xff]
        %v983 = vld [vmem:[#allocation5 + $0x4d8] sm:$0xff]
        %v984 = vld [vmem:[#allocation5 + $0x4e0] sm:$0xff]
        %v985 = vld [vmem:[#allocation5 + $0x4e8] sm:$0xf]
        %v986 = vld [vmem:[#allocation5 + $0x4ec] sm:$0xff]
        %v987 = vld [vmem:[#allocation5 + $0x4f4] sm:$0xff]
        %v988 = vld [vmem:[#allocation5 + $0x4fc] sm:$0xff]
        %v989 = vld [vmem:[#allocation5 + $0x504] sm:$0xff]
        %v990 = vld [vmem:[#allocation5 + $0x50c] sm:$0xff]
        %v991 = vld [vmem:[#allocation5 + $0x514] sm:$0xff]
        %v992 = vld [vmem:[#allocation5 + $0x51c] sm:$0xff]
        %v993 = vld [vmem:[#allocation5 + $0x524] sm:$0xf]
        %v994 = vld [vmem:[#allocation5 + $0x528] sm:$0xff]
        %v995 = vld [vmem:[#allocation5 + $0x530] sm:$0xff]
        %v996 = vld [vmem:[#allocation5 + $0x538] sm:$0xff]
        %v997 = vld [vmem:[#allocation5 + $0x540] sm:$0xff]
        %v998 = vld [vmem:[#allocation5 + $0x548] sm:$0xff]
        %v999 = vld [vmem:[#allocation5 + $0x550] sm:$0xff]
        %v1000 = vld [vmem:[#allocation5 + $0x558] sm:$0xff]
        %v1001 = vld [vmem:[#allocation5 + $0x560] sm:$0xf]
        %v1002 = vld [vmem:[#allocation5 + $0x564] sm:$0xff]
        %v1003 = vld [vmem:[#allocation5 + $0x56c] sm:$0xff]
        %v1004 = vld [vmem:[#allocation5 + $0x574] sm:$0xff]
        %v1005 = vld [vmem:[#allocation5 + $0x57c] sm:$0xff]
        %v1006 = vld [vmem:[#allocation5 + $0x584] sm:$0xff]
        %v1007 = vld [vmem:[#allocation5 + $0x58c] sm:$0xff]
        %v1008 = vld [vmem:[#allocation5 + $0x594] sm:$0xff]
        %v1009 = vld [vmem:[#allocation5 + $0x59c] sm:$0xf]
        %v1010 = vld [vmem:[#allocation5 + $0x5a0] sm:$0xff]
        %v1011 = vld [vmem:[#allocation5 + $0x5a8] sm:$0xff]
        %v1012 = vld [vmem:[#allocation5 + $0x5b0] sm:$0xff]
        %v1013 = vld [vmem:[#allocation5 + $0x5b8] sm:$0xff]
        %v1014 = vld [vmem:[#allocation5 + $0x5c0] sm:$0xff]
        %v1015 = vld [vmem:[#allocation5 + $0x5c8] sm:$0xff]
        %v1016 = vld [vmem:[#allocation5 + $0x5d0] sm:$0xff]
        %v1017 = vld [vmem:[#allocation5 + $0x5d8] sm:$0xf]
        %v1018 = vld [vmem:[#allocation5 + $0x5dc] sm:$0xff]
        %v1019 = vld [vmem:[#allocation5 + $0x5e4] sm:$0xff]
        %v1020 = vld [vmem:[#allocation5 + $0x5ec] sm:$0xff]
        %v1021 = vld [vmem:[#allocation5 + $0x5f4] sm:$0xff]
        %v1022 = vld [vmem:[#allocation5 + $0x5fc] sm:$0xff]
        %v1023 = vld [vmem:[#allocation5 + $0x604] sm:$0xff]
        %v1024 = vld [vmem:[#allocation5 + $0x60c] sm:$0xff]
        %v1025 = vld [vmem:[#allocation5 + $0x614] sm:$0xf]
        %v1026 = vld [vmem:[#allocation5 + $0x618] sm:$0xff]
        %v1027 = vld [vmem:[#allocation5 + $0x620] sm:$0xff]
        %v1028 = vld [vmem:[#allocation5 + $0x628] sm:$0xff]
        %v1029 = vld [vmem:[#allocation5 + $0x630] sm:$0xff]
        %v1030 = vld [vmem:[#allocation5 + $0x638] sm:$0xff]
        %v1031 = vld [vmem:[#allocation5 + $0x640] sm:$0xff]
        %v1032 = vld [vmem:[#allocation5 + $0x648] sm:$0xff]
        %v1033 = vld [vmem:[#allocation5 + $0x650] sm:$0xf]
        %v1034 = vld [vmem:[#allocation5 + $0x654] sm:$0xff]
        %v1035 = vld [vmem:[#allocation5 + $0x65c] sm:$0xff]
        %v1036 = vld [vmem:[#allocation5 + $0x664] sm:$0xff]
        %v1037 = vld [vmem:[#allocation5 + $0x66c] sm:$0xff]
        %v1038 = vld [vmem:[#allocation5 + $0x674] sm:$0xff]
        %v1039 = vld [vmem:[#allocation5 + $0x67c] sm:$0xff]
        %v1040 = vld [vmem:[#allocation5 + $0x684] sm:$0xff]
        %v1041 = vld [vmem:[#allocation5 + $0x68c] sm:$0xf]
        %v1042 = vld [vmem:[#allocation5 + $0x690] sm:$0xff]
        %v1043 = vld [vmem:[#allocation5 + $0x698] sm:$0xff]
        %v1044 = vld [vmem:[#allocation5 + $0x6a0] sm:$0xff]
        %v1045 = vld [vmem:[#allocation5 + $0x6a8] sm:$0xff]
        %v1046 = vld [vmem:[#allocation5 + $0x6b0] sm:$0xff]
        %v1047 = vld [vmem:[#allocation5 + $0x6b8] sm:$0xff]
        %v1048 = vld [vmem:[#allocation5 + $0x6c0] sm:$0xff]
        %v1049 = vld [vmem:[#allocation5 + $0x6c8] sm:$0xf]
        %v1050 = vld [vmem:[#allocation5 + $0x6cc] sm:$0xff]
        %v1051 = vld [vmem:[#allocation5 + $0x6d4] sm:$0xff]
        %v1052 = vld [vmem:[#allocation5 + $0x6dc] sm:$0xff]
        %v1053 = vld [vmem:[#allocation5 + $0x6e4] sm:$0xff]
        %v1054 = vld [vmem:[#allocation5 + $0x6ec] sm:$0xff]
        %v1055 = vld [vmem:[#allocation5 + $0x6f4] sm:$0xff]
        %v1056 = vld [vmem:[#allocation5 + $0x6fc] sm:$0xff]
        %v1057 = vld [vmem:[#allocation5 + $0x704] sm:$0xf]
        %v1058 = vld [vmem:[#allocation5 + $0x708] sm:$0xff]
        %v1059 = vld [vmem:[#allocation5 + $0x710] sm:$0xff]
        %v1060 = vld [vmem:[#allocation5 + $0x718] sm:$0xff]
        %v1061 = vld [vmem:[#allocation5 + $0x720] sm:$0xff]
        %v1062 = vld [vmem:[#allocation5 + $0x728] sm:$0xff]
        %v1063 = vld [vmem:[#allocation5 + $0x730] sm:$0xff]
        %v1064 = vld [vmem:[#allocation5 + $0x738] sm:$0xff]
        %v1065 = vld [vmem:[#allocation5 + $0x740] sm:$0xf]
        %v1066 = vld [vmem:[#allocation5 + $0x744] sm:$0xff]
        %v1067 = vld [vmem:[#allocation5 + $0x74c] sm:$0xff]
        %v1068 = vld [vmem:[#allocation5 + $0x754] sm:$0xff]
        %v1069 = vld [vmem:[#allocation5 + $0x75c] sm:$0xff]
        %v1070 = vld [vmem:[#allocation5 + $0x764] sm:$0xff]
        %v1071 = vld [vmem:[#allocation5 + $0x76c] sm:$0xff]
        %v1072 = vld [vmem:[#allocation5 + $0x774] sm:$0xff]
        %v1073 = vld [vmem:[#allocation5 + $0x77c] sm:$0xf]
        %v1074 = vld [vmem:[#allocation5 + $0x780] sm:$0xff]
        %v1075 = vld [vmem:[#allocation5 + $0x788] sm:$0xff]
        %v1076 = vld [vmem:[#allocation5 + $0x790] sm:$0xff]
        %v1077 = vld [vmem:[#allocation5 + $0x798] sm:$0xff]
        %v1078 = vld [vmem:[#allocation5 + $0x7a0] sm:$0xff]
        %v1079 = vld [vmem:[#allocation5 + $0x7a8] sm:$0xff]
        %v1080 = vld [vmem:[#allocation5 + $0x7b0] sm:$0xff]
        %v1081 = vld [vmem:[#allocation5 + $0x7b8] sm:$0xf]
        %v1082 = vld [vmem:[#allocation5 + $0x7bc] sm:$0xff]
        %v1083 = vld [vmem:[#allocation5 + $0x7c4] sm:$0xff]
        %v1084 = vld [vmem:[#allocation5 + $0x7cc] sm:$0xff]
        %v1085 = vld [vmem:[#allocation5 + $0x7d4] sm:$0xff]
        %v1086 = vld [vmem:[#allocation5 + $0x7dc] sm:$0xff]
        %v1087 = vld [vmem:[#allocation5 + $0x7e4] sm:$0xff]
        %v1088 = vld [vmem:[#allocation5 + $0x7ec] sm:$0xff]
        %v1089 = vld [vmem:[#allocation5 + $0x7f4] sm:$0xf]
        %v1090 = vld [vmem:[#allocation5 + $0x7f8] sm:$0xff]
        %v1091 = vld [vmem:[#allocation5 + $0x800] sm:$0xff]
        %v1092 = vld [vmem:[#allocation5 + $0x808] sm:$0xff]
        %v1093 = vld [vmem:[#allocation5 + $0x810] sm:$0xff]
        %v1094 = vld [vmem:[#allocation5 + $0x818] sm:$0xff]
        %v1095 = vld [vmem:[#allocation5 + $0x820] sm:$0xff]
        %v1096 = vld [vmem:[#allocation5 + $0x828] sm:$0xff]
        %v1097 = vld [vmem:[#allocation5 + $0x830] sm:$0xf]
        %v1098 = vld [vmem:[#allocation5 + $0x834] sm:$0xff]
        %v1099 = vld [vmem:[#allocation5 + $0x83c] sm:$0xff]
        %v1100 = vld [vmem:[#allocation5 + $0x844] sm:$0xff]
        %v1101 = vld [vmem:[#allocation5 + $0x84c] sm:$0xff]
        %v1102 = vld [vmem:[#allocation5 + $0x854] sm:$0xff]
        %v1103 = vld [vmem:[#allocation5 + $0x85c] sm:$0xff]
        %v1104 = vld [vmem:[#allocation5 + $0x864] sm:$0xff]
        %v1105 = vld [vmem:[#allocation5 + $0x86c] sm:$0xf]
        %v1106 = vld [vmem:[#allocation5 + $0x870] sm:$0xff]
        %v1107 = vld [vmem:[#allocation5 + $0x878] sm:$0xff]
        %v1108 = vld [vmem:[#allocation5 + $0x880] sm:$0xff]
        %v1109 = vld [vmem:[#allocation5 + $0x888] sm:$0xff]
        %v1110 = vld [vmem:[#allocation5 + $0x890] sm:$0xff]
        %v1111 = vld [vmem:[#allocation5 + $0x898] sm:$0xff]
        %v1112 = vld [vmem:[#allocation5 + $0x8a0] sm:$0xff]
        %v1113 = vld [vmem:[#allocation5 + $0x8a8] sm:$0xf]
        %v1114 = vld [vmem:[#allocation5 + $0x8ac] sm:$0xff]
        %v1115 = vld [vmem:[#allocation5 + $0x8b4] sm:$0xff]
        %v1116 = vld [vmem:[#allocation5 + $0x8bc] sm:$0xff]
        %v1117 = vld [vmem:[#allocation5 + $0x8c4] sm:$0xff]
        %v1118 = vld [vmem:[#allocation5 + $0x8cc] sm:$0xff]
        %v1119 = vld [vmem:[#allocation5 + $0x8d4] sm:$0xff]
        %v1120 = vld [vmem:[#allocation5 + $0x8dc] sm:$0xff]
        %v1121 = vld [vmem:[#allocation5 + $0x8e4] sm:$0xf]
        %v1122 = vld [vmem:[#allocation5 + $0x8e8] sm:$0xff]
        %v1123 = vld [vmem:[#allocation5 + $0x8f0] sm:$0xff]
        %v1124 = vld [vmem:[#allocation5 + $0x8f8] sm:$0xff]
        %v1125 = vld [vmem:[#allocation5 + $0x900] sm:$0xff]
        %v1126 = vld [vmem:[#allocation5 + $0x908] sm:$0xff]
        %v1127 = vld [vmem:[#allocation5 + $0x910] sm:$0xff]
        %v1128 = vld [vmem:[#allocation5 + $0x918] sm:$0xff]
        %v1129 = vld [vmem:[#allocation5 + $0x920] sm:$0xf]
        %v1130 = vld [vmem:[#allocation5 + $0x924] sm:$0xff]
        %v1131 = vld [vmem:[#allocation5 + $0x92c] sm:$0xff]
        %v1132 = vld [vmem:[#allocation5 + $0x934] sm:$0xff]
        %v1133 = vld [vmem:[#allocation5 + $0x93c] sm:$0xff]
        %v1134 = vld [vmem:[#allocation5 + $0x944] sm:$0xff]
        %v1135 = vld [vmem:[#allocation5 + $0x94c] sm:$0xff]
        %v1136 = vld [vmem:[#allocation5 + $0x954] sm:$0xff]
        %v1137 = vld [vmem:[#allocation5 + $0x95c] sm:$0xf]
        %v1138 = vld [vmem:[#allocation5 + $0x960] sm:$0xff]
        %v1139 = vld [vmem:[#allocation5 + $0x968] sm:$0xff]
        %v1140 = vld [vmem:[#allocation5 + $0x970] sm:$0xff]
        %v1141 = vld [vmem:[#allocation5 + $0x978] sm:$0xff]
        %v1142 = vld [vmem:[#allocation5 + $0x980] sm:$0xff]
        %v1143 = vld [vmem:[#allocation5 + $0x988] sm:$0xff]
        %v1144 = vld [vmem:[#allocation5 + $0x990] sm:$0xff]
        %v1145 = vld [vmem:[#allocation5 + $0x998] sm:$0xf]
        %v1146 = vld [vmem:[#allocation5 + $0x99c] sm:$0xff]
        %v1147 = vld [vmem:[#allocation5 + $0x9a4] sm:$0xff]
        %v1148 = vld [vmem:[#allocation5 + $0x9ac] sm:$0xff]
        %v1149 = vld [vmem:[#allocation5 + $0x9b4] sm:$0xff]
        %v1150 = vld [vmem:[#allocation5 + $0x9bc] sm:$0xff]
        %v1151 = vld [vmem:[#allocation5 + $0x9c4] sm:$0xff]
        %v1152 = vld [vmem:[#allocation5 + $0x9cc] sm:$0xff]
        %v1153 = vld [vmem:[#allocation5 + $0x9d4] sm:$0xf]
        %v1154 = vld [vmem:[#allocation5 + $0x9d8] sm:$0xff]
        %v1155 = vld [vmem:[#allocation5 + $0x9e0] sm:$0xff]
        %v1156 = vld [vmem:[#allocation5 + $0x9e8] sm:$0xff]
        %v1157 = vld [vmem:[#allocation5 + $0x9f0] sm:$0xff]
        %v1158 = vld [vmem:[#allocation5 + $0x9f8] sm:$0xff]
        %v1159 = vld [vmem:[#allocation5 + $0xa00] sm:$0xff]
        %v1160 = vld [vmem:[#allocation5 + $0xa08] sm:$0xff]
        %v1161 = vld [vmem:[#allocation5 + $0xa10] sm:$0xf]
        %v1162 = vld [vmem:[#allocation5 + $0xa14] sm:$0xff]
        %v1163 = vld [vmem:[#allocation5 + $0xa1c] sm:$0xff]
        %v1164 = vld [vmem:[#allocation5 + $0xa24] sm:$0xff]
        %v1165 = vld [vmem:[#allocation5 + $0xa2c] sm:$0xff]
        %v1166 = vld [vmem:[#allocation5 + $0xa34] sm:$0xff]
        %v1167 = vld [vmem:[#allocation5 + $0xa3c] sm:$0xff]
        %v1168 = vld [vmem:[#allocation5 + $0xa44] sm:$0xff]
        %v1169 = vld [vmem:[#allocation5 + $0xa4c] sm:$0xf]
        %v1170 = vld [vmem:[#allocation5 + $0xa50] sm:$0xff]
        %v1171 = vld [vmem:[#allocation5 + $0xa58] sm:$0xff]
        %v1172 = vld [vmem:[#allocation5 + $0xa60] sm:$0xff]
        %v1173 = vld [vmem:[#allocation5 + $0xa68] sm:$0xff]
        %v1174 = vld [vmem:[#allocation5 + $0xa70] sm:$0xff]
        %v1175 = vld [vmem:[#allocation5 + $0xa78] sm:$0xff]
        %v1176 = vld [vmem:[#allocation5 + $0xa80] sm:$0xff]
        %v1177 = vld [vmem:[#allocation5 + $0xa88] sm:$0xf]
        %v1178 = vld [vmem:[#allocation5 + $0xa8c] sm:$0xff]
        %v1179 = vld [vmem:[#allocation5 + $0xa94] sm:$0xff]
        %v1180 = vld [vmem:[#allocation5 + $0xa9c] sm:$0xff]
        %v1181 = vld [vmem:[#allocation5 + $0xaa4] sm:$0xff]
        %v1182 = vld [vmem:[#allocation5 + $0xaac] sm:$0xff]
        %v1183 = vld [vmem:[#allocation5 + $0xab4] sm:$0xff]
        %v1184 = vld [vmem:[#allocation5 + $0xabc] sm:$0xff]
        %v1185 = vld [vmem:[#allocation5 + $0xac4] sm:$0xf]
        %v1186 = vld [vmem:[#allocation5 + $0xac8] sm:$0xff]
        %v1187 = vld [vmem:[#allocation5 + $0xad0] sm:$0xff]
        %v1188 = vld [vmem:[#allocation5 + $0xad8] sm:$0xff]
        %v1189 = vld [vmem:[#allocation5 + $0xae0] sm:$0xff]
        %v1190 = vld [vmem:[#allocation5 + $0xae8] sm:$0xff]
        %v1191 = vld [vmem:[#allocation5 + $0xaf0] sm:$0xff]
        %v1192 = vld [vmem:[#allocation5 + $0xaf8] sm:$0xff]
        %v1193 = vld [vmem:[#allocation5 + $0xb00] sm:$0xf]
        %v1194 = vld [vmem:[#allocation5 + $0xb04] sm:$0xff]
        %v1195 = vld [vmem:[#allocation5 + $0xb0c] sm:$0xff]
        %v1196 = vld [vmem:[#allocation5 + $0xb14] sm:$0xff]
        %v1197 = vld [vmem:[#allocation5 + $0xb1c] sm:$0xff]
        %v1198 = vld [vmem:[#allocation5 + $0xb24] sm:$0xff]
        %v1199 = vld [vmem:[#allocation5 + $0xb2c] sm:$0xff]
        %v1200 = vld [vmem:[#allocation5 + $0xb34] sm:$0xff]
        %v1201 = vld [vmem:[#allocation5 + $0xb3c] sm:$0xf]
        %v1202 = vld [vmem:[#allocation5 + $0xb40] sm:$0xff]
        %v1203 = vld [vmem:[#allocation5 + $0xb48] sm:$0xff]
        %v1204 = vld [vmem:[#allocation5 + $0xb50] sm:$0xff]
        %v1205 = vld [vmem:[#allocation5 + $0xb58] sm:$0xff]
        %v1206 = vld [vmem:[#allocation5 + $0xb60] sm:$0xff]
        %v1207 = vld [vmem:[#allocation5 + $0xb68] sm:$0xff]
        %v1208 = vld [vmem:[#allocation5 + $0xb70] sm:$0xff]
        %v1209 = vld [vmem:[#allocation5 + $0xb78] sm:$0xf]
        %v1210 = vld [vmem:[#allocation5 + $0xb7c] sm:$0xff]
        %v1211 = vld [vmem:[#allocation5 + $0xb84] sm:$0xff]
        %v1212 = vld [vmem:[#allocation5 + $0xb8c] sm:$0xff]
        %v1213 = vld [vmem:[#allocation5 + $0xb94] sm:$0xff]
        %v1214 = vld [vmem:[#allocation5 + $0xb9c] sm:$0xff]
        %v1215 = vld [vmem:[#allocation5 + $0xba4] sm:$0xff]
        %v1216 = vld [vmem:[#allocation5 + $0xbac] sm:$0xff]
        %v1217 = vld [vmem:[#allocation5 + $0xbb4] sm:$0xf]
        %v1218 = vld [vmem:[#allocation5 + $0xbb8] sm:$0xff]
        %v1219 = vld [vmem:[#allocation5 + $0xbc0] sm:$0xff]
        %v1220 = vld [vmem:[#allocation5 + $0xbc8] sm:$0xff]
        %v1221 = vld [vmem:[#allocation5 + $0xbd0] sm:$0xff]
        %v1222 = vld [vmem:[#allocation5 + $0xbd8] sm:$0xff]
        %v1223 = vld [vmem:[#allocation5 + $0xbe0] sm:$0xff]
        %v1224 = vld [vmem:[#allocation5 + $0xbe8] sm:$0xff]
        %v1225 = vld [vmem:[#allocation5 + $0xbf0] sm:$0xf]
        %v1226 = vld [vmem:[#allocation5 + $0xbf4] sm:$0xff]
        %v1227 = vld [vmem:[#allocation5 + $0xbfc] sm:$0xff]
        %v1228 = vld [vmem:[#allocation5 + $0xc04] sm:$0xff]
        %v1229 = vld [vmem:[#allocation5 + $0xc0c] sm:$0xff]
        %v1230 = vld [vmem:[#allocation5 + $0xc14] sm:$0xff]
        %v1231 = vld [vmem:[#allocation5 + $0xc1c] sm:$0xff]
        %v1232 = vld [vmem:[#allocation5 + $0xc24] sm:$0xff]
        %v1233 = vld [vmem:[#allocation5 + $0xc2c] sm:$0xf]
        %v1234 = vld [vmem:[#allocation5 + $0xc30] sm:$0xff]
        %v1235 = vld [vmem:[#allocation5 + $0xc38] sm:$0xff]
        %v1236 = vld [vmem:[#allocation5 + $0xc40] sm:$0xff]
        %v1237 = vld [vmem:[#allocation5 + $0xc48] sm:$0xff]
        %v1238 = vld [vmem:[#allocation5 + $0xc50] sm:$0xff]
        %v1239 = vld [vmem:[#allocation5 + $0xc58] sm:$0xff]
        %v1240 = vld [vmem:[#allocation5 + $0xc60] sm:$0xff]
        %v1241 = vld [vmem:[#allocation5 + $0xc68] sm:$0xf]
        %v1242 = vld [vmem:[#allocation5 + $0xc6c] sm:$0xff]
        %v1243 = vld [vmem:[#allocation5 + $0xc74] sm:$0xff]
        %v1244 = vld [vmem:[#allocation5 + $0xc7c] sm:$0xff]
        %v1245 = vld [vmem:[#allocation5 + $0xc84] sm:$0xff]
        %v1246 = vld [vmem:[#allocation5 + $0xc8c] sm:$0xff]
        %v1247 = vld [vmem:[#allocation5 + $0xc94] sm:$0xff]
        %v1248 = vld [vmem:[#allocation5 + $0xc9c] sm:$0xff]
        %v1249 = vld [vmem:[#allocation5 + $0xca4] sm:$0xf]
        %v1250 = vld [vmem:[#allocation5 + $0xca8] sm:$0xff]
        %v1251 = vld [vmem:[#allocation5 + $0xcb0] sm:$0xff]
        %v1252 = vld [vmem:[#allocation5 + $0xcb8] sm:$0xff]
        %v1253 = vld [vmem:[#allocation5 + $0xcc0] sm:$0xff]
        %v1254 = vld [vmem:[#allocation5 + $0xcc8] sm:$0xff]
        %v1255 = vld [vmem:[#allocation5 + $0xcd0] sm:$0xff]
        %v1256 = vld [vmem:[#allocation5 + $0xcd8] sm:$0xff]
        %v1257 = vld [vmem:[#allocation5 + $0xce0] sm:$0xf]
        %v1258 = vld [vmem:[#allocation5 + $0xce4] sm:$0xff]
        %v1259 = vld [vmem:[#allocation5 + $0xcec] sm:$0xff]
        %v1260 = vld [vmem:[#allocation5 + $0xcf4] sm:$0xff]
        %v1261 = vld [vmem:[#allocation5 + $0xcfc] sm:$0xff]
        %v1262 = vld [vmem:[#allocation5 + $0xd04] sm:$0xff]
        %v1263 = vld [vmem:[#allocation5 + $0xd0c] sm:$0xff]
        %v1264 = vld [vmem:[#allocation5 + $0xd14] sm:$0xff]
        %v1265 = vld [vmem:[#allocation5 + $0xd1c] sm:$0xf]
        %v1266 = vld [vmem:[#allocation5 + $0xd20] sm:$0xff]
        %v1267 = vld [vmem:[#allocation5 + $0xd28] sm:$0xff]
        %v1268 = vld [vmem:[#allocation5 + $0xd30] sm:$0xff]
        %v1269 = vld [vmem:[#allocation5 + $0xd38] sm:$0xff]
        %v1270 = vld [vmem:[#allocation5 + $0xd40] sm:$0xff]
        %v1271 = vld [vmem:[#allocation5 + $0xd48] sm:$0xff]
        %v1272 = vld [vmem:[#allocation5 + $0xd50] sm:$0xff]
        %v1273 = vld [vmem:[#allocation5 + $0xd58] sm:$0xf]
        %v1274 = vld [vmem:[#allocation5 + $0xd5c] sm:$0xff]
        %v1275 = vld [vmem:[#allocation5 + $0xd64] sm:$0xff]
        %v1276 = vld [vmem:[#allocation5 + $0xd6c] sm:$0xff]
        %v1277 = vld [vmem:[#allocation5 + $0xd74] sm:$0xff]
        %v1278 = vld [vmem:[#allocation5 + $0xd7c] sm:$0xff]
        %v1279 = vld [vmem:[#allocation5 + $0xd84] sm:$0xff]
        %v1280 = vld [vmem:[#allocation5 + $0xd8c] sm:$0xff]
        %v1281 = vld [vmem:[#allocation5 + $0xd94] sm:$0xf]
        %v1282 = vld [vmem:[#allocation5 + $0xd98] sm:$0xff]
        %v1283 = vld [vmem:[#allocation5 + $0xda0] sm:$0xff]
        %v1284 = vld [vmem:[#allocation5 + $0xda8] sm:$0xff]
        %v1285 = vld [vmem:[#allocation5 + $0xdb0] sm:$0xff]
        %v1286 = vld [vmem:[#allocation5 + $0xdb8] sm:$0xff]
        %v1287 = vld [vmem:[#allocation5 + $0xdc0] sm:$0xff]
        %v1288 = vld [vmem:[#allocation5 + $0xdc8] sm:$0xff]
        %v1289 = vld [vmem:[#allocation5 + $0xdd0] sm:$0xf]
        %v1290 = vld [vmem:[#allocation5 + $0xdd4] sm:$0xff]
        %v1291 = vld [vmem:[#allocation5 + $0xddc] sm:$0xff]
        %v1292 = vld [vmem:[#allocation5 + $0xde4] sm:$0xff]
        %v1293 = vld [vmem:[#allocation5 + $0xdec] sm:$0xff]
        %v1294 = vld [vmem:[#allocation5 + $0xdf4] sm:$0xff]
        %v1295 = vld [vmem:[#allocation5 + $0xdfc] sm:$0xff]
        %v1296 = vld [vmem:[#allocation5 + $0xe04] sm:$0xff]
        %v1297 = vld [vmem:[#allocation5 + $0xe0c] sm:$0xf]
        %v1298 = vld [vmem:[#allocation5 + $0xe10] sm:$0xff]
        %v1299 = vld [vmem:[#allocation5 + $0xe18] sm:$0xff]
        %v1300 = vld [vmem:[#allocation5 + $0xe20] sm:$0xff]
        %v1301 = vld [vmem:[#allocation5 + $0xe28] sm:$0xff]
        %v1302 = vld [vmem:[#allocation5 + $0xe30] sm:$0xff]
        %v1303 = vld [vmem:[#allocation5 + $0xe38] sm:$0xff]
        %v1304 = vld [vmem:[#allocation5 + $0xe40] sm:$0xff]
        %v1305 = vld [vmem:[#allocation5 + $0xe48] sm:$0xf]
        %v1306 = vld [vmem:[#allocation5 + $0xe4c] sm:$0xff]
        %v1307 = vld [vmem:[#allocation5 + $0xe54] sm:$0xff]
        %v1308 = vld [vmem:[#allocation5 + $0xe5c] sm:$0xff]
        %v1309 = vld [vmem:[#allocation5 + $0xe64] sm:$0xff]
        %v1310 = vld [vmem:[#allocation5 + $0xe6c] sm:$0xff]
        %v1311 = vld [vmem:[#allocation5 + $0xe74] sm:$0xff]
        %v1312 = vld [vmem:[#allocation5 + $0xe7c] sm:$0xff]
        %v1313 = vld [vmem:[#allocation5 + $0xe84] sm:$0xf]
        %v1314 = vld [vmem:[#allocation5 + $0xe88] sm:$0xff]
        %v1315 = vld [vmem:[#allocation5 + $0xe90] sm:$0xff]
        %v1316 = vld [vmem:[#allocation5 + $0xe98] sm:$0xff]
        %v1317 = vld [vmem:[#allocation5 + $0xea0] sm:$0xff]
        %v1318 = vld [vmem:[#allocation5 + $0xea8] sm:$0xff]
        %v1319 = vld [vmem:[#allocation5 + $0xeb0] sm:$0xff]
        %v1320 = vld [vmem:[#allocation5 + $0xeb8] sm:$0xff]
        %v1321 = vld [vmem:[#allocation5 + $0xec0] sm:$0xf]
        %v1322 = vld [vmem:[#allocation5 + $0xec4] sm:$0xff]
        %v1323 = vld [vmem:[#allocation5 + $0xecc] sm:$0xff]
        %v1324 = vld [vmem:[#allocation5 + $0xed4] sm:$0xff]
        %v1325 = vld [vmem:[#allocation5 + $0xedc] sm:$0xff]
        %v1326 = vld [vmem:[#allocation5 + $0xee4] sm:$0xff]
        %v1327 = vld [vmem:[#allocation5 + $0xeec] sm:$0xff]
        %v1328 = vld [vmem:[#allocation5 + $0xef4] sm:$0xff]
        %v1329 = vld [vmem:[#allocation5 + $0xefc] sm:$0xf]
        %v1330 = vld [vmem:[#allocation5 + $0xf00] sm:$0xff]
        %v1331 = vld [vmem:[#allocation5 + $0xf08] sm:$0xff]
        %v1332 = vld [vmem:[#allocation5 + $0xf10] sm:$0xff]
        %v1333 = vld [vmem:[#allocation5 + $0xf18] sm:$0xff]
        %v1334 = vld [vmem:[#allocation5 + $0xf20] sm:$0xff]
        %v1335 = vld [vmem:[#allocation5 + $0xf28] sm:$0xff]
        %v1336 = vld [vmem:[#allocation5 + $0xf30] sm:$0xff]
        %v1337 = vld [vmem:[#allocation5 + $0xf38] sm:$0xf]
        %v1338 = vld [vmem:[#allocation5 + $0xf3c] sm:$0xff]
        %v1339 = vld [vmem:[#allocation5 + $0xf44] sm:$0xff]
        %v1340 = vld [vmem:[#allocation5 + $0xf4c] sm:$0xff]
        %v1341 = vld [vmem:[#allocation5 + $0xf54] sm:$0xff]
        %v1342 = vld [vmem:[#allocation5 + $0xf5c] sm:$0xff]
        %v1343 = vld [vmem:[#allocation5 + $0xf64] sm:$0xff]
        %v1344 = vld [vmem:[#allocation5 + $0xf6c] sm:$0xff]
        %v1345 = vld [vmem:[#allocation5 + $0xf74] sm:$0xf]
        %v1346 = vld [vmem:[#allocation5 + $0xf78] sm:$0xff]
        %v1347 = vld [vmem:[#allocation5 + $0xf80] sm:$0xff]
        %v1348 = vld [vmem:[#allocation5 + $0xf88] sm:$0xff]
        %v1349 = vld [vmem:[#allocation5 + $0xf90] sm:$0xff]
        %v1350 = vld [vmem:[#allocation5 + $0xf98] sm:$0xff]
        %v1351 = vld [vmem:[#allocation5 + $0xfa0] sm:$0xff]
        %v1352 = vld [vmem:[#allocation5 + $0xfa8] sm:$0xff]
        %v1353 = vld [vmem:[#allocation5 + $0xfb0] sm:$0xf]
        %v1354 = vld [vmem:[#allocation5 + $0xfb4] sm:$0xff]
        %v1355 = vld [vmem:[#allocation5 + $0xfbc] sm:$0xff]
        %v1356 = vld [vmem:[#allocation5 + $0xfc4] sm:$0xff]
        %v1357 = vld [vmem:[#allocation5 + $0xfcc] sm:$0xff]
        %v1358 = vld [vmem:[#allocation5 + $0xfd4] sm:$0xff]
        %v1359 = vld [vmem:[#allocation5 + $0xfdc] sm:$0xff]
        %v1360 = vld [vmem:[#allocation5 + $0xfe4] sm:$0xff]
        %v1361 = vld [vmem:[#allocation5 + $0xfec] sm:$0xf]
        %v1362 = vld [vmem:[#allocation5 + $0xff0] sm:$0xff]
        %v1363 = vld [vmem:[#allocation5 + $0xff8] sm:$0xff]
        %v1364 = vld [vmem:[#allocation5 + $0x1000] sm:$0xff]
        %v1365 = vld [vmem:[#allocation5 + $0x1008] sm:$0xff]
        %v1366 = vld [vmem:[#allocation5 + $0x1010] sm:$0xff]
        %v1367 = vld [vmem:[#allocation5 + $0x1018] sm:$0xff]
        %v1368 = vld [vmem:[#allocation5 + $0x1020] sm:$0xff]
        %v1369 = vld [vmem:[#allocation5 + $0x1028] sm:$0xf]
        %v1370 = vld [vmem:[#allocation5 + $0x102c] sm:$0xff]
        %v1371 = vld [vmem:[#allocation5 + $0x1034] sm:$0xff]
        %v1372 = vld [vmem:[#allocation5 + $0x103c] sm:$0xff]
        %v1373 = vld [vmem:[#allocation5 + $0x1044] sm:$0xff]
        %v1374 = vld [vmem:[#allocation5 + $0x104c] sm:$0xff]
        %v1375 = vld [vmem:[#allocation5 + $0x1054] sm:$0xff]
        %v1376 = vld [vmem:[#allocation5 + $0x105c] sm:$0xff]
        %v1377 = vld [vmem:[#allocation5 + $0x1064] sm:$0xf]
        %v1378 = vld [vmem:[#allocation5 + $0x1068] sm:$0xff]
        %v1379 = vld [vmem:[#allocation5 + $0x1070] sm:$0xff]
        %v1380 = vld [vmem:[#allocation5 + $0x1078] sm:$0xff]
        %v1381 = vld [vmem:[#allocation5 + $0x1080] sm:$0xff]
        %v1382 = vld [vmem:[#allocation5 + $0x1088] sm:$0xff]
        %v1383 = vld [vmem:[#allocation5 + $0x1090] sm:$0xff]
        %v1384 = vld [vmem:[#allocation5 + $0x1098] sm:$0xff]
        %v1385 = vld [vmem:[#allocation5 + $0x10a0] sm:$0xf]
        %v1386 = vld [vmem:[#allocation5 + $0x10a4] sm:$0xff]
        %v1387 = vld [vmem:[#allocation5 + $0x10ac] sm:$0xff]
        %v1388 = vld [vmem:[#allocation5 + $0x10b4] sm:$0xff]
        %v1389 = vld [vmem:[#allocation5 + $0x10bc] sm:$0xff]
        %v1390 = vld [vmem:[#allocation5 + $0x10c4] sm:$0xff]
        %v1391 = vld [vmem:[#allocation5 + $0x10cc] sm:$0xff]
        %v1392 = vld [vmem:[#allocation5 + $0x10d4] sm:$0xff]
        %v1393 = vld [vmem:[#allocation5 + $0x10dc] sm:$0xf]
        %v1394 = vld [vmem:[#allocation5 + $0x10e0] sm:$0xff]
        %v1395 = vld [vmem:[#allocation5 + $0x10e8] sm:$0xff]
        %v1396 = vld [vmem:[#allocation5 + $0x10f0] sm:$0xff]
        %v1397 = vld [vmem:[#allocation5 + $0x10f8] sm:$0xff]
        %v1398 = vld [vmem:[#allocation5 + $0x1100] sm:$0xff]
        %v1399 = vld [vmem:[#allocation5 + $0x1108] sm:$0xff]
        %v1400 = vld [vmem:[#allocation5 + $0x1110] sm:$0xff]
        %v1401 = vld [vmem:[#allocation5 + $0x1118] sm:$0xf]
        %v1402 = vld [vmem:[#allocation5 + $0x111c] sm:$0xff]
        %v1403 = vld [vmem:[#allocation5 + $0x1124] sm:$0xff]
        %v1404 = vld [vmem:[#allocation5 + $0x112c] sm:$0xff]
        %v1405 = vld [vmem:[#allocation5 + $0x1134] sm:$0xff]
        %v1406 = vld [vmem:[#allocation5 + $0x113c] sm:$0xff]
        %v1407 = vld [vmem:[#allocation5 + $0x1144] sm:$0xff]
        %v1408 = vld [vmem:[#allocation5 + $0x114c] sm:$0xff]
        %v1409 = vld [vmem:[#allocation5 + $0x1154] sm:$0xf]
        %v1410 = vld [vmem:[#allocation5 + $0x1158] sm:$0xff]
        %v1411 = vld [vmem:[#allocation5 + $0x1160] sm:$0xff]
        %v1412 = vld [vmem:[#allocation5 + $0x1168] sm:$0xff]
        %v1413 = vld [vmem:[#allocation5 + $0x1170] sm:$0xff]
        %v1414 = vld [vmem:[#allocation5 + $0x1178] sm:$0xff]
        %v1415 = vld [vmem:[#allocation5 + $0x1180] sm:$0xff]
        %v1416 = vld [vmem:[#allocation5 + $0x1188] sm:$0xff]
        %v1417 = vld [vmem:[#allocation5 + $0x1190] sm:$0xf]
        %v1418 = vld [vmem:[#allocation5 + $0x1194] sm:$0xff]
        %v1419 = vld [vmem:[#allocation5 + $0x119c] sm:$0xff]
        %v1420 = vld [vmem:[#allocation5 + $0x11a4] sm:$0xff]
        %v1421 = vld [vmem:[#allocation5 + $0x11ac] sm:$0xff]
        %v1422 = vld [vmem:[#allocation5 + $0x11b4] sm:$0xff]
        %v1423 = vld [vmem:[#allocation5 + $0x11bc] sm:$0xff]
        %v1424 = vld [vmem:[#allocation5 + $0x11c4] sm:$0xff]
        %v1425 = vld [vmem:[#allocation5 + $0x11cc] sm:$0xf]
        %v1426 = vld [vmem:[#allocation5 + $0x11d0] sm:$0xff]
        %v1427 = vld [vmem:[#allocation5 + $0x11d8] sm:$0xff]
        %v1428 = vld [vmem:[#allocation5 + $0x11e0] sm:$0xff]
        %v1429 = vld [vmem:[#allocation5 + $0x11e8] sm:$0xff]
        %v1430 = vld [vmem:[#allocation5 + $0x11f0] sm:$0xff]
        %v1431 = vld [vmem:[#allocation5 + $0x11f8] sm:$0xff]
        %v1432 = vld [vmem:[#allocation5 + $0x1200] sm:$0xff]
        %v1433 = vld [vmem:[#allocation5 + $0x1208] sm:$0xf]
        %v1434 = vld [vmem:[#allocation5 + $0x120c] sm:$0xff]
        %v1435 = vld [vmem:[#allocation5 + $0x1214] sm:$0xff]
        %v1436 = vld [vmem:[#allocation5 + $0x121c] sm:$0xff]
        %v1437 = vld [vmem:[#allocation5 + $0x1224] sm:$0xff]
        %v1438 = vld [vmem:[#allocation5 + $0x122c] sm:$0xff]
        %v1439 = vld [vmem:[#allocation5 + $0x1234] sm:$0xff]
        %v1440 = vld [vmem:[#allocation5 + $0x123c] sm:$0xff]
        %v1441 = vld [vmem:[#allocation5 + $0x1244] sm:$0xf]
        %v1442 = vld [vmem:[#allocation5 + $0x1248] sm:$0xff]
        %v1443 = vld [vmem:[#allocation5 + $0x1250] sm:$0xff]
        %v1444 = vld [vmem:[#allocation5 + $0x1258] sm:$0xff]
        %v1445 = vld [vmem:[#allocation5 + $0x1260] sm:$0xff]
        %v1446 = vld [vmem:[#allocation5 + $0x1268] sm:$0xff]
        %v1447 = vld [vmem:[#allocation5 + $0x1270] sm:$0xff]
        %v1448 = vld [vmem:[#allocation5 + $0x1278] sm:$0xff]
        %v1449 = vld [vmem:[#allocation5 + $0x1280] sm:$0xf]
        %v1450 = vld [vmem:[#allocation5 + $0x1284] sm:$0xff]
        %v1451 = vld [vmem:[#allocation5 + $0x128c] sm:$0xff]
        %v1452 = vld [vmem:[#allocation5 + $0x1294] sm:$0xff]
        %v1453 = vld [vmem:[#allocation5 + $0x129c] sm:$0xff]
        %v1454 = vld [vmem:[#allocation5 + $0x12a4] sm:$0xff]
        %v1455 = vld [vmem:[#allocation5 + $0x12ac] sm:$0xff]
        %v1456 = vld [vmem:[#allocation5 + $0x12b4] sm:$0xff]
        %v1457 = vld [vmem:[#allocation5 + $0x12bc] sm:$0xf]
        %v1458 = vld [vmem:[#allocation5 + $0x12c0] sm:$0xff]
        %v1459 = vld [vmem:[#allocation5 + $0x12c8] sm:$0xff]
        %v1460 = vld [vmem:[#allocation5 + $0x12d0] sm:$0xff]
        %v1461 = vld [vmem:[#allocation5 + $0x12d8] sm:$0xff]
        %v1462 = vld [vmem:[#allocation5 + $0x12e0] sm:$0xff]
        %v1463 = vld [vmem:[#allocation5 + $0x12e8] sm:$0xff]
        %v1464 = vld [vmem:[#allocation5 + $0x12f0] sm:$0xff]
        %v1465 = vld [vmem:[#allocation5 + $0x12f8] sm:$0xf]
        %v1466 = vld [vmem:[#allocation5 + $0x12fc] sm:$0xff]
        %v1467 = vld [vmem:[#allocation5 + $0x1304] sm:$0xff]
        %v1468 = vld [vmem:[#allocation5 + $0x130c] sm:$0xff]
        %v1469 = vld [vmem:[#allocation5 + $0x1314] sm:$0xff]
        %v1470 = vld [vmem:[#allocation5 + $0x131c] sm:$0xff]
        %v1471 = vld [vmem:[#allocation5 + $0x1324] sm:$0xff]
        %v1472 = vld [vmem:[#allocation5 + $0x132c] sm:$0xff]
        %v1473 = vld [vmem:[#allocation5 + $0x1334] sm:$0xf]
        %v1474 = vld [vmem:[#allocation5 + $0x1338] sm:$0xff]
        %v1475 = vld [vmem:[#allocation5 + $0x1340] sm:$0xff]
        %v1476 = vld [vmem:[#allocation5 + $0x1348] sm:$0xff]
        %v1477 = vld [vmem:[#allocation5 + $0x1350] sm:$0xff]
        %v1478 = vld [vmem:[#allocation5 + $0x1358] sm:$0xff]
        %v1479 = vld [vmem:[#allocation5 + $0x1360] sm:$0xff]
        %v1480 = vld [vmem:[#allocation5 + $0x1368] sm:$0xff]
        %v1481 = vld [vmem:[#allocation5 + $0x1370] sm:$0xf]
        %v1482 = vld [vmem:[#allocation5 + $0x1374] sm:$0xff]
        %v1483 = vld [vmem:[#allocation5 + $0x137c] sm:$0xff]
        %v1484 = vld [vmem:[#allocation5 + $0x1384] sm:$0xff]
        %v1485 = vld [vmem:[#allocation5 + $0x138c] sm:$0xff]
        %v1486 = vld [vmem:[#allocation5 + $0x1394] sm:$0xff]
        %v1487 = vld [vmem:[#allocation5 + $0x139c] sm:$0xff]
        %v1488 = vld [vmem:[#allocation5 + $0x13a4] sm:$0xff]
        %v1489 = vld [vmem:[#allocation5 + $0x13ac] sm:$0xf]
        %v1490 = vld [vmem:[#allocation5 + $0x13b0] sm:$0xff]
        %v1491 = vld [vmem:[#allocation5 + $0x13b8] sm:$0xff]
        %v1492 = vld [vmem:[#allocation5 + $0x13c0] sm:$0xff]
        %v1493 = vld [vmem:[#allocation5 + $0x13c8] sm:$0xff]
        %v1494 = vld [vmem:[#allocation5 + $0x13d0] sm:$0xff]
        %v1495 = vld [vmem:[#allocation5 + $0x13d8] sm:$0xff]
        %v1496 = vld [vmem:[#allocation5 + $0x13e0] sm:$0xff]
        %v1497 = vld [vmem:[#allocation5 + $0x13e8] sm:$0xf]
        %v1498 = vld [vmem:[#allocation5 + $0x13ec] sm:$0xff]
        %v1499 = vld [vmem:[#allocation5 + $0x13f4] sm:$0xff]
        %v1500 = vld [vmem:[#allocation5 + $0x13fc] sm:$0xff]
        %v1501 = vld [vmem:[#allocation5 + $0x1404] sm:$0xff]
        %v1502 = vld [vmem:[#allocation5 + $0x140c] sm:$0xff]
        %v1503 = vld [vmem:[#allocation5 + $0x1414] sm:$0xff]
        %v1504 = vld [vmem:[#allocation5 + $0x141c] sm:$0xff]
        %v1505 = vld [vmem:[#allocation5 + $0x1424] sm:$0xf]
        %v1506 = vld [vmem:[#allocation5 + $0x1428] sm:$0xff]
        %v1507 = vld [vmem:[#allocation5 + $0x1430] sm:$0xff]
        %v1508 = vld [vmem:[#allocation5 + $0x1438] sm:$0xff]
        %v1509 = vld [vmem:[#allocation5 + $0x1440] sm:$0xff]
        %v1510 = vld [vmem:[#allocation5 + $0x1448] sm:$0xff]
        %v1511 = vld [vmem:[#allocation5 + $0x1450] sm:$0xff]
        %v1512 = vld [vmem:[#allocation5 + $0x1458] sm:$0xff]
        %v1513 = vld [vmem:[#allocation5 + $0x1460] sm:$0xf]
        %v1514 = vld [vmem:[#allocation5 + $0x1464] sm:$0xff]
        %v1515 = vld [vmem:[#allocation5 + $0x146c] sm:$0xff]
        %v1516 = vld [vmem:[#allocation5 + $0x1474] sm:$0xff]
        %v1517 = vld [vmem:[#allocation5 + $0x147c] sm:$0xff]
        %v1518 = vld [vmem:[#allocation5 + $0x1484] sm:$0xff]
        %v1519 = vld [vmem:[#allocation5 + $0x148c] sm:$0xff]
        %v1520 = vld [vmem:[#allocation5 + $0x1494] sm:$0xff]
        %v1521 = vld [vmem:[#allocation5 + $0x149c] sm:$0xf]
        %v1522 = vld [vmem:[#allocation5 + $0x14a0] sm:$0xff]
        %v1523 = vld [vmem:[#allocation5 + $0x14a8] sm:$0xff]
        %v1524 = vld [vmem:[#allocation5 + $0x14b0] sm:$0xff]
        %v1525 = vld [vmem:[#allocation5 + $0x14b8] sm:$0xff]
        %v1526 = vld [vmem:[#allocation5 + $0x14c0] sm:$0xff]
        %v1527 = vld [vmem:[#allocation5 + $0x14c8] sm:$0xff]
        %v1528 = vld [vmem:[#allocation5 + $0x14d0] sm:$0xff]
        %v1529 = vld [vmem:[#allocation5 + $0x14d8] sm:$0xf]
        %v1530 = vld [vmem:[#allocation5 + $0x14dc] sm:$0xff]
        %v1531 = vld [vmem:[#allocation5 + $0x14e4] sm:$0xff]
        %v1532 = vld [vmem:[#allocation5 + $0x14ec] sm:$0xff]
        %v1533 = vld [vmem:[#allocation5 + $0x14f4] sm:$0xff]
        %v1534 = vld [vmem:[#allocation5 + $0x14fc] sm:$0xff]
        %v1535 = vld [vmem:[#allocation5 + $0x1504] sm:$0xff]
        %v1536 = vld [vmem:[#allocation5 + $0x150c] sm:$0xff]
        %v1537 = vld [vmem:[#allocation5 + $0x1514] sm:$0xf]
        %v1538 = vld [vmem:[#allocation5 + $0x1518] sm:$0xff]
        %v1539 = vld [vmem:[#allocation5 + $0x1520] sm:$0xff]
        %v1540 = vld [vmem:[#allocation5 + $0x1528] sm:$0xff]
        %v1541 = vld [vmem:[#allocation5 + $0x1530] sm:$0xff]
        %v1542 = vld [vmem:[#allocation5 + $0x1538] sm:$0xff]
        %v1543 = vld [vmem:[#allocation5 + $0x1540] sm:$0xff]
        %v1544 = vld [vmem:[#allocation5 + $0x1548] sm:$0xff]
        %v1545 = vld [vmem:[#allocation5 + $0x1550] sm:$0xf]
        %v1546 = vld [vmem:[#allocation5 + $0x1554] sm:$0xff]
        %v1547 = vld [vmem:[#allocation5 + $0x155c] sm:$0xff]
        %v1548 = vld [vmem:[#allocation5 + $0x1564] sm:$0xff]
        %v1549 = vld [vmem:[#allocation5 + $0x156c] sm:$0xff]
        %v1550 = vld [vmem:[#allocation5 + $0x1574] sm:$0xff]
        %v1551 = vld [vmem:[#allocation5 + $0x157c] sm:$0xff]
        %v1552 = vld [vmem:[#allocation5 + $0x1584] sm:$0xff]
        %v1553 = vld [vmem:[#allocation5 + $0x158c] sm:$0xf]
        %v1554 = vld [vmem:[#allocation5 + $0x1590] sm:$0xff]
        %v1555 = vld [vmem:[#allocation5 + $0x1598] sm:$0xff]
        %v1556 = vld [vmem:[#allocation5 + $0x15a0] sm:$0xff]
        %v1557 = vld [vmem:[#allocation5 + $0x15a8] sm:$0xff]
        %v1558 = vld [vmem:[#allocation5 + $0x15b0] sm:$0xff]
        %v1559 = vld [vmem:[#allocation5 + $0x15b8] sm:$0xff]
        %v1560 = vld [vmem:[#allocation5 + $0x15c0] sm:$0xff]
        %v1561 = vld [vmem:[#allocation5 + $0x15c8] sm:$0xf]
        %v1562 = vld [vmem:[#allocation5 + $0x15cc] sm:$0xff]
        %v1563 = vld [vmem:[#allocation5 + $0x15d4] sm:$0xff]
        %v1564 = vld [vmem:[#allocation5 + $0x15dc] sm:$0xff]
        %v1565 = vld [vmem:[#allocation5 + $0x15e4] sm:$0xff]
        %v1566 = vld [vmem:[#allocation5 + $0x15ec] sm:$0xff]
        %v1567 = vld [vmem:[#allocation5 + $0x15f4] sm:$0xff]
        %v1568 = vld [vmem:[#allocation5 + $0x15fc] sm:$0xff]
        %v1569 = vld [vmem:[#allocation5 + $0x1604] sm:$0xf]
        %v1570 = vld [vmem:[#allocation5 + $0x1608] sm:$0xff]
        %v1571 = vld [vmem:[#allocation5 + $0x1610] sm:$0xff]
        %v1572 = vld [vmem:[#allocation5 + $0x1618] sm:$0xff]
        %v1573 = vld [vmem:[#allocation5 + $0x1620] sm:$0xff]
        %v1574 = vld [vmem:[#allocation5 + $0x1628] sm:$0xff]
        %v1575 = vld [vmem:[#allocation5 + $0x1630] sm:$0xff]
        %v1576 = vld [vmem:[#allocation5 + $0x1638] sm:$0xff]
        %v1577 = vld [vmem:[#allocation5 + $0x1640] sm:$0xf]
        %v1578 = vld [vmem:[#allocation5 + $0x1644] sm:$0xff]
        %v1579 = vld [vmem:[#allocation5 + $0x164c] sm:$0xff]
        %v1580 = vld [vmem:[#allocation5 + $0x1654] sm:$0xff]
        %v1581 = vld [vmem:[#allocation5 + $0x165c] sm:$0xff]
        %v1582 = vld [vmem:[#allocation5 + $0x1664] sm:$0xff]
        %v1583 = vld [vmem:[#allocation5 + $0x166c] sm:$0xff]
        %v1584 = vld [vmem:[#allocation5 + $0x1674] sm:$0xff]
        %v1585 = vld [vmem:[#allocation5 + $0x167c] sm:$0xf]
        %v1586 = vld [vmem:[#allocation5 + $0x1680] sm:$0xff]
        %v1587 = vld [vmem:[#allocation5 + $0x1688] sm:$0xff]
        %v1588 = vld [vmem:[#allocation5 + $0x1690] sm:$0xff]
        %v1589 = vld [vmem:[#allocation5 + $0x1698] sm:$0xff]
        %v1590 = vld [vmem:[#allocation5 + $0x16a0] sm:$0xff]
        %v1591 = vld [vmem:[#allocation5 + $0x16a8] sm:$0xff]
        %v1592 = vld [vmem:[#allocation5 + $0x16b0] sm:$0xff]
        %v1593 = vld [vmem:[#allocation5 + $0x16b8] sm:$0xf]
        %v1594 = vld [vmem:[#allocation5 + $0x16bc] sm:$0xff]
        %v1595 = vld [vmem:[#allocation5 + $0x16c4] sm:$0xff]
        %v1596 = vld [vmem:[#allocation5 + $0x16cc] sm:$0xff]
        %v1597 = vld [vmem:[#allocation5 + $0x16d4] sm:$0xff]
        %v1598 = vld [vmem:[#allocation5 + $0x16dc] sm:$0xff]
        %v1599 = vld [vmem:[#allocation5 + $0x16e4] sm:$0xff]
        %v1600 = vld [vmem:[#allocation5 + $0x16ec] sm:$0xff]
        %v1601 = vld [vmem:[#allocation5 + $0x16f4] sm:$0xf]
        %v1602 = vld [vmem:[#allocation5 + $0x16f8] sm:$0xff]
        %v1603 = vld [vmem:[#allocation5 + $0x1700] sm:$0xff]
        %v1604 = vld [vmem:[#allocation5 + $0x1708] sm:$0xff]
        %v1605 = vld [vmem:[#allocation5 + $0x1710] sm:$0xff]
        %v1606 = vld [vmem:[#allocation5 + $0x1718] sm:$0xff]
        %v1607 = vld [vmem:[#allocation5 + $0x1720] sm:$0xff]
        %v1608 = vld [vmem:[#allocation5 + $0x1728] sm:$0xff]
        %v1609 = vld [vmem:[#allocation5 + $0x1730] sm:$0xf]
        %v1610 = vld [vmem:[#allocation5 + $0x1734] sm:$0xff]
        %v1611 = vld [vmem:[#allocation5 + $0x173c] sm:$0xff]
        %v1612 = vld [vmem:[#allocation5 + $0x1744] sm:$0xff]
        %v1613 = vld [vmem:[#allocation5 + $0x174c] sm:$0xff]
        %v1614 = vld [vmem:[#allocation5 + $0x1754] sm:$0xff]
        %v1615 = vld [vmem:[#allocation5 + $0x175c] sm:$0xff]
        %v1616 = vld [vmem:[#allocation5 + $0x1764] sm:$0xff]
        %v1617 = vld [vmem:[#allocation5 + $0x176c] sm:$0xf]
        %v1618 = vld [vmem:[#allocation5 + $0x1770] sm:$0xff]
        %v1619 = vld [vmem:[#allocation5 + $0x1778] sm:$0xff]
        %v1620 = vld [vmem:[#allocation5 + $0x1780] sm:$0xff]
        %v1621 = vld [vmem:[#allocation5 + $0x1788] sm:$0xff]
        %v1622 = vld [vmem:[#allocation5 + $0x1790] sm:$0xff]
        %v1623 = vld [vmem:[#allocation5 + $0x1798] sm:$0xff]
        %v1624 = vld [vmem:[#allocation5 + $0x17a0] sm:$0xff]
        %v1625 = vld [vmem:[#allocation5 + $0x17a8] sm:$0xf]
        %v1626 = vld [vmem:[#allocation5 + $0x17ac] sm:$0xff]
        %v1627 = vld [vmem:[#allocation5 + $0x17b4] sm:$0xff]
        %v1628 = vld [vmem:[#allocation5 + $0x17bc] sm:$0xff]
        %v1629 = vld [vmem:[#allocation5 + $0x17c4] sm:$0xff]
        %v1630 = vld [vmem:[#allocation5 + $0x17cc] sm:$0xff]
        %v1631 = vld [vmem:[#allocation5 + $0x17d4] sm:$0xff]
        %v1632 = vld [vmem:[#allocation5 + $0x17dc] sm:$0xff]
        %v1633 = vld [vmem:[#allocation5 + $0x17e4] sm:$0xf]
        %v1634 = vld [vmem:[#allocation5 + $0x17e8] sm:$0xff]
        %v1635 = vld [vmem:[#allocation5 + $0x17f0] sm:$0xff]
        %v1636 = vld [vmem:[#allocation5 + $0x17f8] sm:$0xff]
        %v1637 = vld [vmem:[#allocation5 + $0x1800] sm:$0xff]
        %v1638 = vld [vmem:[#allocation5 + $0x1808] sm:$0xff]
        %v1639 = vld [vmem:[#allocation5 + $0x1810] sm:$0xff]
        %v1640 = vld [vmem:[#allocation5 + $0x1818] sm:$0xff]
        %v1641 = vld [vmem:[#allocation5 + $0x1820] sm:$0xf]
        %v1642 = vld [vmem:[#allocation5 + $0x1824] sm:$0xff]
        %v1643 = vld [vmem:[#allocation5 + $0x182c] sm:$0xff]
        %v1644 = vld [vmem:[#allocation5 + $0x1834] sm:$0xff]
        %v1645 = vld [vmem:[#allocation5 + $0x183c] sm:$0xff]
        %v1646 = vld [vmem:[#allocation5 + $0x1844] sm:$0xff]
        %v1647 = vld [vmem:[#allocation5 + $0x184c] sm:$0xff]
        %v1648 = vld [vmem:[#allocation5 + $0x1854] sm:$0xff]
        %v1649 = vld [vmem:[#allocation5 + $0x185c] sm:$0xf]
        %v1650 = vld [vmem:[#allocation5 + $0x1860] sm:$0xff]
        %v1651 = vld [vmem:[#allocation5 + $0x1868] sm:$0xff]
        %v1652 = vld [vmem:[#allocation5 + $0x1870] sm:$0xff]
        %v1653 = vld [vmem:[#allocation5 + $0x1878] sm:$0xff]
        %v1654 = vld [vmem:[#allocation5 + $0x1880] sm:$0xff]
        %v1655 = vld [vmem:[#allocation5 + $0x1888] sm:$0xff]
        %v1656 = vld [vmem:[#allocation5 + $0x1890] sm:$0xff]
        %v1657 = vld [vmem:[#allocation5 + $0x1898] sm:$0xf]
        %v1658 = vld [vmem:[#allocation5 + $0x189c] sm:$0xff]
        %v1659 = vld [vmem:[#allocation5 + $0x18a4] sm:$0xff]
        %v1660 = vld [vmem:[#allocation5 + $0x18ac] sm:$0xff]
        %v1661 = vld [vmem:[#allocation5 + $0x18b4] sm:$0xff]
        %v1662 = vld [vmem:[#allocation5 + $0x18bc] sm:$0xff]
        %v1663 = vld [vmem:[#allocation5 + $0x18c4] sm:$0xff]
        %v1664 = vld [vmem:[#allocation5 + $0x18cc] sm:$0xff]
        %v1665 = vld [vmem:[#allocation5 + $0x18d4] sm:$0xf]
        %v1666 = vld [vmem:[#allocation5 + $0x18d8] sm:$0xff]
        %v1667 = vld [vmem:[#allocation5 + $0x18e0] sm:$0xff]
        %v1668 = vld [vmem:[#allocation5 + $0x18e8] sm:$0xff]
        %v1669 = vld [vmem:[#allocation5 + $0x18f0] sm:$0xff]
        %v1670 = vld [vmem:[#allocation5 + $0x18f8] sm:$0xff]
        %v1671 = vld [vmem:[#allocation5 + $0x1900] sm:$0xff]
        %v1672 = vld [vmem:[#allocation5 + $0x1908] sm:$0xff]
        %v1673 = vld [vmem:[#allocation5 + $0x1910] sm:$0xf]
        %v1674 = vld [vmem:[#allocation5 + $0x1914] sm:$0xff]
        %v1675 = vld [vmem:[#allocation5 + $0x191c] sm:$0xff]
        %v1676 = vld [vmem:[#allocation5 + $0x1924] sm:$0xff]
        %v1677 = vld [vmem:[#allocation5 + $0x192c] sm:$0xff]
        %v1678 = vld [vmem:[#allocation5 + $0x1934] sm:$0xff]
        %v1679 = vld [vmem:[#allocation5 + $0x193c] sm:$0xff]
        %v1680 = vld [vmem:[#allocation5 + $0x1944] sm:$0xff]
        %v1681 = vld [vmem:[#allocation5 + $0x194c] sm:$0xf]
        %v1682 = vld [vmem:[#allocation5 + $0x1950] sm:$0xff]
        %v1683 = vld [vmem:[#allocation5 + $0x1958] sm:$0xff]
        %v1684 = vld [vmem:[#allocation5 + $0x1960] sm:$0xff]
        %v1685 = vld [vmem:[#allocation5 + $0x1968] sm:$0xff]
        %v1686 = vld [vmem:[#allocation5 + $0x1970] sm:$0xff]
        %v1687 = vld [vmem:[#allocation5 + $0x1978] sm:$0xff]
        %v1688 = vld [vmem:[#allocation5 + $0x1980] sm:$0xff]
        %v1689 = vld [vmem:[#allocation5 + $0x1988] sm:$0xf]
        %v1690 = vld [vmem:[#allocation5 + $0x198c] sm:$0xff]
        %v1691 = vld [vmem:[#allocation5 + $0x1994] sm:$0xff]
        %v1692 = vld [vmem:[#allocation5 + $0x199c] sm:$0xff]
        %v1693 = vld [vmem:[#allocation5 + $0x19a4] sm:$0xff]
        %v1694 = vld [vmem:[#allocation5 + $0x19ac] sm:$0xff]
        %v1695 = vld [vmem:[#allocation5 + $0x19b4] sm:$0xff]
        %v1696 = vld [vmem:[#allocation5 + $0x19bc] sm:$0xff]
        %v1697 = vld [vmem:[#allocation5 + $0x19c4] sm:$0xf]
        %v1698 = vld [vmem:[#allocation5 + $0x19c8] sm:$0xff]
        %v1699 = vld [vmem:[#allocation5 + $0x19d0] sm:$0xff]
        %v1700 = vld [vmem:[#allocation5 + $0x19d8] sm:$0xff]
        %v1701 = vld [vmem:[#allocation5 + $0x19e0] sm:$0xff]
        %v1702 = vld [vmem:[#allocation5 + $0x19e8] sm:$0xff]
        %v1703 = vld [vmem:[#allocation5 + $0x19f0] sm:$0xff]
        %v1704 = vld [vmem:[#allocation5 + $0x19f8] sm:$0xff]
        %v1705 = vld [vmem:[#allocation5 + $0x1a00] sm:$0xf]
        %v1706 = vld [vmem:[#allocation5 + $0x1a04] sm:$0xff]
        %v1707 = vld [vmem:[#allocation5 + $0x1a0c] sm:$0xff]
        %v1708 = vld [vmem:[#allocation5 + $0x1a14] sm:$0xff]
        %v1709 = vld [vmem:[#allocation5 + $0x1a1c] sm:$0xff]
        %v1710 = vld [vmem:[#allocation5 + $0x1a24] sm:$0xff]
        %v1711 = vld [vmem:[#allocation5 + $0x1a2c] sm:$0xff]
        %v1712 = vld [vmem:[#allocation5 + $0x1a34] sm:$0xff]
        %v1713 = vld [vmem:[#allocation5 + $0x1a3c] sm:$0xf]
        %v1714 = vld [vmem:[#allocation5 + $0x1a40] sm:$0xff]
        %v1715 = vld [vmem:[#allocation5 + $0x1a48] sm:$0xff]
        %v1716 = vld [vmem:[#allocation5 + $0x1a50] sm:$0xff]
        %v1717 = vld [vmem:[#allocation5 + $0x1a58] sm:$0xff]
        %v1718 = vld [vmem:[#allocation5 + $0x1a60] sm:$0xff]
        %v1719 = vld [vmem:[#allocation5 + $0x1a68] sm:$0xff]
        %v1720 = vld [vmem:[#allocation5 + $0x1a70] sm:$0xff]
        %v1721 = vld [vmem:[#allocation5 + $0x1a78] sm:$0xf]
        %v1722 = vld [vmem:[#allocation5 + $0x1a7c] sm:$0xff]
        %v1723 = vld [vmem:[#allocation5 + $0x1a84] sm:$0xff]
        %v1724 = vld [vmem:[#allocation5 + $0x1a8c] sm:$0xff]
        %v1725 = vld [vmem:[#allocation5 + $0x1a94] sm:$0xff]
        %v1726 = vld [vmem:[#allocation5 + $0x1a9c] sm:$0xff]
        %v1727 = vld [vmem:[#allocation5 + $0x1aa4] sm:$0xff]
        %v1728 = vld [vmem:[#allocation5 + $0x1aac] sm:$0xff]
        %v1729 = vld [vmem:[#allocation5 + $0x1ab4] sm:$0xf]
        %v1730 = vld [vmem:[#allocation5 + $0x1ab8] sm:$0xff]
        %v1731 = vld [vmem:[#allocation5 + $0x1ac0] sm:$0xff]
        %v1732 = vld [vmem:[#allocation5 + $0x1ac8] sm:$0xff]
        %v1733 = vld [vmem:[#allocation5 + $0x1ad0] sm:$0xff]
        %v1734 = vld [vmem:[#allocation5 + $0x1ad8] sm:$0xff]
        %v1735 = vld [vmem:[#allocation5 + $0x1ae0] sm:$0xff]
        %v1736 = vld [vmem:[#allocation5 + $0x1ae8] sm:$0xff]
        %v1737 = vld [vmem:[#allocation5 + $0x1af0] sm:$0xf]
        %v1738 = vld [vmem:[#allocation5 + $0x1af4] sm:$0xff]
        %v1739 = vld [vmem:[#allocation5 + $0x1afc] sm:$0xff]
        %v1740 = vld [vmem:[#allocation5 + $0x1b04] sm:$0xff]
        %v1741 = vld [vmem:[#allocation5 + $0x1b0c] sm:$0xff]
        %v1742 = vld [vmem:[#allocation5 + $0x1b14] sm:$0xff]
        %v1743 = vld [vmem:[#allocation5 + $0x1b1c] sm:$0xff]
        %v1744 = vld [vmem:[#allocation5 + $0x1b24] sm:$0xff]
        %v1745 = vld [vmem:[#allocation5 + $0x1b2c] sm:$0xf]
        %v1746 = vld [vmem:[#allocation5 + $0x1b30] sm:$0xff]
        %v1747 = vld [vmem:[#allocation5 + $0x1b38] sm:$0xff]
        %v1748 = vld [vmem:[#allocation5 + $0x1b40] sm:$0xff]
        %v1749 = vld [vmem:[#allocation5 + $0x1b48] sm:$0xff]
        %v1750 = vld [vmem:[#allocation5 + $0x1b50] sm:$0xff]
        %v1751 = vld [vmem:[#allocation5 + $0x1b58] sm:$0xff]
        %v1752 = vld [vmem:[#allocation5 + $0x1b60] sm:$0xff]
        %v1753 = vld [vmem:[#allocation5 + $0x1b68] sm:$0xf]
        %v1754 = vld [vmem:[#allocation5 + $0x1b6c] sm:$0xff]
        %v1755 = vld [vmem:[#allocation5 + $0x1b74] sm:$0xff]
        %v1756 = vld [vmem:[#allocation5 + $0x1b7c] sm:$0xff]
        %v1757 = vld [vmem:[#allocation5 + $0x1b84] sm:$0xff]
        %v1758 = vld [vmem:[#allocation5 + $0x1b8c] sm:$0xff]
        %v1759 = vld [vmem:[#allocation5 + $0x1b94] sm:$0xff]
        %v1760 = vld [vmem:[#allocation5 + $0x1b9c] sm:$0xff]
        %v1761 = vld [vmem:[#allocation5 + $0x1ba4] sm:$0xf]
        %v1762 = vld [vmem:[#allocation5 + $0x1ba8] sm:$0xff]
        %v1763 = vld [vmem:[#allocation5 + $0x1bb0] sm:$0xff]
        %v1764 = vld [vmem:[#allocation5 + $0x1bb8] sm:$0xff]
        %v1765 = vld [vmem:[#allocation5 + $0x1bc0] sm:$0xff]
        %v1766 = vld [vmem:[#allocation5 + $0x1bc8] sm:$0xff]
        %v1767 = vld [vmem:[#allocation5 + $0x1bd0] sm:$0xff]
        %v1768 = vld [vmem:[#allocation5 + $0x1bd8] sm:$0xff]
        %v1769 = vld [vmem:[#allocation5 + $0x1be0] sm:$0xf]
        %v1770 = vld [vmem:[#allocation5 + $0x1be4] sm:$0xff]
        %v1771 = vld [vmem:[#allocation5 + $0x1bec] sm:$0xff]
        %v1772 = vld [vmem:[#allocation5 + $0x1bf4] sm:$0xff]
        %v1773 = vld [vmem:[#allocation5 + $0x1bfc] sm:$0xff]
        %v1774 = vld [vmem:[#allocation5 + $0x1c04] sm:$0xff]
        %v1775 = vld [vmem:[#allocation5 + $0x1c0c] sm:$0xff]
        %v1776 = vld [vmem:[#allocation5 + $0x1c14] sm:$0xff]
        %v1777 = vld [vmem:[#allocation5 + $0x1c1c] sm:$0xf]
        %v1778 = vld [vmem:[#allocation5 + $0x1c20] sm:$0xff]
        %v1779 = vld [vmem:[#allocation5 + $0x1c28] sm:$0xff]
        %v1780 = vld [vmem:[#allocation5 + $0x1c30] sm:$0xff]
        %v1781 = vld [vmem:[#allocation5 + $0x1c38] sm:$0xff]
        %v1782 = vld [vmem:[#allocation5 + $0x1c40] sm:$0xff]
        %v1783 = vld [vmem:[#allocation5 + $0x1c48] sm:$0xff]
        %v1784 = vld [vmem:[#allocation5 + $0x1c50] sm:$0xff]
        %v1785 = vld [vmem:[#allocation5 + $0x1c58] sm:$0xf]
        %v1786 = vld [vmem:[#allocation5 + $0x1c5c] sm:$0xff]
        %v1787 = vld [vmem:[#allocation5 + $0x1c64] sm:$0xff]
        %v1788 = vld [vmem:[#allocation5 + $0x1c6c] sm:$0xff]
        %v1789 = vld [vmem:[#allocation5 + $0x1c74] sm:$0xff]
        %v1790 = vld [vmem:[#allocation5 + $0x1c7c] sm:$0xff]
        %v1791 = vld [vmem:[#allocation5 + $0x1c84] sm:$0xff]
        %v1792 = vld [vmem:[#allocation5 + $0x1c8c] sm:$0xff]
        %v1793 = vld [vmem:[#allocation5 + $0x1c94] sm:$0xf]
        %v1794 = vld [vmem:[#allocation5 + $0x1c98] sm:$0xff]
        %v1795 = vld [vmem:[#allocation5 + $0x1ca0] sm:$0xff]
        %v1796 = vld [vmem:[#allocation5 + $0x1ca8] sm:$0xff]
        %v1797 = vld [vmem:[#allocation5 + $0x1cb0] sm:$0xff]
        %v1798 = vld [vmem:[#allocation5 + $0x1cb8] sm:$0xff]
        %v1799 = vld [vmem:[#allocation5 + $0x1cc0] sm:$0xff]
        %v1800 = vld [vmem:[#allocation5 + $0x1cc8] sm:$0xff]
        %v1801 = vld [vmem:[#allocation5 + $0x1cd0] sm:$0xf]
        %v1802 = vld [vmem:[#allocation5 + $0x1cd4] sm:$0xff]
        %v1803 = vld [vmem:[#allocation5 + $0x1cdc] sm:$0xff]
        %v1804 = vld [vmem:[#allocation5 + $0x1ce4] sm:$0xff]
        %v1805 = vld [vmem:[#allocation5 + $0x1cec] sm:$0xff]
        %v1806 = vld [vmem:[#allocation5 + $0x1cf4] sm:$0xff]
        %v1807 = vld [vmem:[#allocation5 + $0x1cfc] sm:$0xff]
        %v1808 = vld [vmem:[#allocation5 + $0x1d04] sm:$0xff]
        %v1809 = vld [vmem:[#allocation5 + $0x1d0c] sm:$0xf]
        %v1810 = vld [vmem:[#allocation5 + $0x1d10] sm:$0xff]
        %v1811 = vld [vmem:[#allocation5 + $0x1d18] sm:$0xff]
        %v1812 = vld [vmem:[#allocation5 + $0x1d20] sm:$0xff]
        %v1813 = vld [vmem:[#allocation5 + $0x1d28] sm:$0xff]
        %v1814 = vld [vmem:[#allocation5 + $0x1d30] sm:$0xff]
        %v1815 = vld [vmem:[#allocation5 + $0x1d38] sm:$0xff]
        %v1816 = vld [vmem:[#allocation5 + $0x1d40] sm:$0xff]
        %v1817 = vld [vmem:[#allocation5 + $0x1d48] sm:$0xf]
        %v1830 = vunpack.c.l.b16 %v806
        %v1831 = vunpack.c.h.b16 %v806
        %v1832 = vunpack.c.l.b16 %v807
        %v1833 = vunpack.c.h.b16 %v807
        %v1834 = vunpack.c.l.b16 %v808
        %v1835 = vunpack.c.h.b16 %v808
        %v1836 = vunpack.c.l.b16 %v809
        %v1837 = vunpack.c.h.b16 %v809
        %v1838 = vunpack.c.l.b16 %v810
        %v1839 = vunpack.c.h.b16 %v810
        %v1840 = vunpack.c.l.b16 %v811
        %v1841 = vunpack.c.h.b16 %v811
        %v1842 = vunpack.c.l.b16 %v812
        %v1843 = vunpack.c.h.b16 %v812
        %v1844 = vunpack.c.l.b16 %v813
        %v1845 = vunpack.c.h.b16 %v813
        %v1846 = vunpack.c.l.b16 %v814
        %v1847 = vunpack.c.h.b16 %v814
        %v1848 = vunpack.c.l.b16 %v815
        %v1849 = vunpack.c.h.b16 %v815
        %v1850 = vunpack.c.l.b16 %v816
        %v1851 = vunpack.c.h.b16 %v816
        %v1852 = vunpack.c.l.b16 %v817
        %v1853 = vunpack.c.h.b16 %v817
        %v1854 = vpack.c.b16 %v1838, %v1830
        %v1855 = vpack.c.b16 %v1839, %v1831
        %v1856 = vpack.c.b16 %v1840, %v1832
        %v1857 = vpack.c.b16 %v1841, %v1833
        %v1858 = vpack.c.b16 %v1842, %v1834
        %v1859 = vpack.c.b16 %v1843, %v1835
        %v1860 = vpack.c.b16 %v1844, %v1836
        %v1861 = vpack.c.b16 %v1845, %v1837
        %v1862 = vpack.c.b16 %v1846, %v1846
        %v1863 = vpack.c.b16 %v1847, %v1847
        %v1864 = vpack.c.b16 %v1848, %v1848
        %v1865 = vpack.c.b16 %v1849, %v1849
        %v1866 = vpack.c.b16 %v1850, %v1850
        %v1867 = vpack.c.b16 %v1851, %v1851
        %v1868 = vpack.c.b16 %v1852, %v1852
        %v1869 = vpack.c.b16 %v1853, %v1853
        %v2884 = vunpack.c.l.b16 %v818
        %v2885 = vunpack.c.h.b16 %v818
        %v2886 = vunpack.c.l.b16 %v819
        %v2887 = vunpack.c.h.b16 %v819
        %v2888 = vunpack.c.l.b16 %v820
        %v2889 = vunpack.c.h.b16 %v820
        %v2890 = vunpack.c.l.b16 %v821
        %v2891 = vunpack.c.h.b16 %v821
        %v2892 = vunpack.c.l.b16 %v822
        %v2893 = vunpack.c.h.b16 %v822
        %v2894 = vunpack.c.l.b16 %v823
        %v2895 = vunpack.c.h.b16 %v823
        %v2896 = vunpack.c.l.b16 %v824
        %v2897 = vunpack.c.h.b16 %v824
        %v2898 = vunpack.c.l.b16 %v825
        %v2899 = vunpack.c.l.b16 %v826
        %v2900 = vunpack.c.h.b16 %v826
        %v2901 = vunpack.c.l.b16 %v827
        %v2902 = vunpack.c.h.b16 %v827
        %v2903 = vunpack.c.l.b16 %v828
        %v2904 = vunpack.c.h.b16 %v828
        %v2905 = vunpack.c.l.b16 %v829
        %v2906 = vunpack.c.h.b16 %v829
        %v2907 = vunpack.c.l.b16 %v830
        %v2908 = vunpack.c.h.b16 %v830
        %v2909 = vunpack.c.l.b16 %v831
        %v2910 = vunpack.c.h.b16 %v831
        %v2911 = vunpack.c.l.b16 %v832
        %v2912 = vunpack.c.h.b16 %v832
        %v2913 = vunpack.c.l.b16 %v833
        %v2914 = vunpack.c.l.b16 %v834
        %v2915 = vunpack.c.h.b16 %v834
        %v2916 = vunpack.c.l.b16 %v835
        %v2917 = vunpack.c.h.b16 %v835
        %v2918 = vunpack.c.l.b16 %v836
        %v2919 = vunpack.c.h.b16 %v836
        %v2920 = vunpack.c.l.b16 %v837
        %v2921 = vunpack.c.h.b16 %v837
        %v2922 = vunpack.c.l.b16 %v838
        %v2923 = vunpack.c.h.b16 %v838
        %v2924 = vunpack.c.l.b16 %v839
        %v2925 = vunpack.c.h.b16 %v839
        %v2926 = vunpack.c.l.b16 %v840
        %v2927 = vunpack.c.h.b16 %v840
        %v2928 = vunpack.c.l.b16 %v841
        %v2929 = vunpack.c.l.b16 %v842
        %v2930 = vunpack.c.h.b16 %v842
        %v2931 = vunpack.c.l.b16 %v843
        %v2932 = vunpack.c.h.b16 %v843
        %v2933 = vunpack.c.l.b16 %v844
        %v2934 = vunpack.c.h.b16 %v844
        %v2935 = vunpack.c.l.b16 %v845
        %v2936 = vunpack.c.h.b16 %v845
        %v2937 = vunpack.c.l.b16 %v846
        %v2938 = vunpack.c.h.b16 %v846
        %v2939 = vunpack.c.l.b16 %v847
        %v2940 = vunpack.c.h.b16 %v847
        %v2941 = vunpack.c.l.b16 %v848
        %v2942 = vunpack.c.h.b16 %v848
        %v2943 = vunpack.c.l.b16 %v849
        %v2944 = vunpack.c.l.b16 %v850
        %v2945 = vunpack.c.h.b16 %v850
        %v2946 = vunpack.c.l.b16 %v851
        %v2947 = vunpack.c.h.b16 %v851
        %v2948 = vunpack.c.l.b16 %v852
        %v2949 = vunpack.c.h.b16 %v852
        %v2950 = vunpack.c.l.b16 %v853
        %v2951 = vunpack.c.h.b16 %v853
        %v2952 = vunpack.c.l.b16 %v854
        %v2953 = vunpack.c.h.b16 %v854
        %v2954 = vunpack.c.l.b16 %v855
        %v2955 = vunpack.c.h.b16 %v855
        %v2956 = vunpack.c.l.b16 %v856
        %v2957 = vunpack.c.h.b16 %v856
        %v2958 = vunpack.c.l.b16 %v857
        %v2959 = vunpack.c.l.b16 %v858
        %v2960 = vunpack.c.h.b16 %v858
        %v2961 = vunpack.c.l.b16 %v859
        %v2962 = vunpack.c.h.b16 %v859
        %v2963 = vunpack.c.l.b16 %v860
        %v2964 = vunpack.c.h.b16 %v860
        %v2965 = vunpack.c.l.b16 %v861
        %v2966 = vunpack.c.h.b16 %v861
        %v2967 = vunpack.c.l.b16 %v862
        %v2968 = vunpack.c.h.b16 %v862
        %v2969 = vunpack.c.l.b16 %v863
        %v2970 = vunpack.c.h.b16 %v863
        %v2971 = vunpack.c.l.b16 %v864
        %v2972 = vunpack.c.h.b16 %v864
        %v2973 = vunpack.c.l.b16 %v865
        %v2974 = vunpack.c.l.b16 %v866
        %v2975 = vunpack.c.h.b16 %v866
        %v2976 = vunpack.c.l.b16 %v867
        %v2977 = vunpack.c.h.b16 %v867
        %v2978 = vunpack.c.l.b16 %v868
        %v2979 = vunpack.c.h.b16 %v868
        %v2980 = vunpack.c.l.b16 %v869
        %v2981 = vunpack.c.h.b16 %v869
        %v2982 = vunpack.c.l.b16 %v870
        %v2983 = vunpack.c.h.b16 %v870
        %v2984 = vunpack.c.l.b16 %v871
        %v2985 = vunpack.c.h.b16 %v871
        %v2986 = vunpack.c.l.b16 %v872
        %v2987 = vunpack.c.h.b16 %v872
        %v2988 = vunpack.c.l.b16 %v873
        %v2989 = vunpack.c.l.b16 %v874
        %v2990 = vunpack.c.h.b16 %v874
        %v2991 = vunpack.c.l.b16 %v875
        %v2992 = vunpack.c.h.b16 %v875
        %v2993 = vunpack.c.l.b16 %v876
        %v2994 = vunpack.c.h.b16 %v876
        %v2995 = vunpack.c.l.b16 %v877
        %v2996 = vunpack.c.h.b16 %v877
        %v2997 = vunpack.c.l.b16 %v878
        %v2998 = vunpack.c.h.b16 %v878
        %v2999 = vunpack.c.l.b16 %v879
        %v3000 = vunpack.c.h.b16 %v879
        %v3001 = vunpack.c.l.b16 %v880
        %v3002 = vunpack.c.h.b16 %v880
        %v3003 = vunpack.c.l.b16 %v881
        %v3004 = vunpack.c.l.b16 %v882
        %v3005 = vunpack.c.h.b16 %v882
        %v3006 = vunpack.c.l.b16 %v883
        %v3007 = vunpack.c.h.b16 %v883
        %v3008 = vunpack.c.l.b16 %v884
        %v3009 = vunpack.c.h.b16 %v884
        %v3010 = vunpack.c.l.b16 %v885
        %v3011 = vunpack.c.h.b16 %v885
        %v3012 = vunpack.c.l.b16 %v886
        %v3013 = vunpack.c.h.b16 %v886
        %v3014 = vunpack.c.l.b16 %v887
        %v3015 = vunpack.c.h.b16 %v887
        %v3016 = vunpack.c.l.b16 %v888
        %v3017 = vunpack.c.h.b16 %v888
        %v3018 = vunpack.c.l.b16 %v889
        %v3019 = vunpack.c.l.b16 %v890
        %v3020 = vunpack.c.h.b16 %v890
        %v3021 = vunpack.c.l.b16 %v891
        %v3022 = vunpack.c.h.b16 %v891
        %v3023 = vunpack.c.l.b16 %v892
        %v3024 = vunpack.c.h.b16 %v892
        %v3025 = vunpack.c.l.b16 %v893
        %v3026 = vunpack.c.h.b16 %v893
        %v3027 = vunpack.c.l.b16 %v894
        %v3028 = vunpack.c.h.b16 %v894
        %v3029 = vunpack.c.l.b16 %v895
        %v3030 = vunpack.c.h.b16 %v895
        %v3031 = vunpack.c.l.b16 %v896
        %v3032 = vunpack.c.h.b16 %v896
        %v3033 = vunpack.c.l.b16 %v897
        %v3034 = vunpack.c.l.b16 %v898
        %v3035 = vunpack.c.h.b16 %v898
        %v3036 = vunpack.c.l.b16 %v899
        %v3037 = vunpack.c.h.b16 %v899
        %v3038 = vunpack.c.l.b16 %v900
        %v3039 = vunpack.c.h.b16 %v900
        %v3040 = vunpack.c.l.b16 %v901
        %v3041 = vunpack.c.h.b16 %v901
        %v3042 = vunpack.c.l.b16 %v902
        %v3043 = vunpack.c.h.b16 %v902
        %v3044 = vunpack.c.l.b16 %v903
        %v3045 = vunpack.c.h.b16 %v903
        %v3046 = vunpack.c.l.b16 %v904
        %v3047 = vunpack.c.h.b16 %v904
        %v3048 = vunpack.c.l.b16 %v905
        %v3049 = vunpack.c.l.b16 %v906
        %v3050 = vunpack.c.h.b16 %v906
        %v3051 = vunpack.c.l.b16 %v907
        %v3052 = vunpack.c.h.b16 %v907
        %v3053 = vunpack.c.l.b16 %v908
        %v3054 = vunpack.c.h.b16 %v908
        %v3055 = vunpack.c.l.b16 %v909
        %v3056 = vunpack.c.h.b16 %v909
        %v3057 = vunpack.c.l.b16 %v910
        %v3058 = vunpack.c.h.b16 %v910
        %v3059 = vunpack.c.l.b16 %v911
        %v3060 = vunpack.c.h.b16 %v911
        %v3061 = vunpack.c.l.b16 %v912
        %v3062 = vunpack.c.h.b16 %v912
        %v3063 = vunpack.c.l.b16 %v913
        %v3064 = vunpack.c.l.b16 %v914
        %v3065 = vunpack.c.h.b16 %v914
        %v3066 = vunpack.c.l.b16 %v915
        %v3067 = vunpack.c.h.b16 %v915
        %v3068 = vunpack.c.l.b16 %v916
        %v3069 = vunpack.c.h.b16 %v916
        %v3070 = vunpack.c.l.b16 %v917
        %v3071 = vunpack.c.h.b16 %v917
        %v3072 = vunpack.c.l.b16 %v918
        %v3073 = vunpack.c.h.b16 %v918
        %v3074 = vunpack.c.l.b16 %v919
        %v3075 = vunpack.c.h.b16 %v919
        %v3076 = vunpack.c.l.b16 %v920
        %v3077 = vunpack.c.h.b16 %v920
        %v3078 = vunpack.c.l.b16 %v921
        %v3079 = vunpack.c.l.b16 %v922
        %v3080 = vunpack.c.h.b16 %v922
        %v3081 = vunpack.c.l.b16 %v923
        %v3082 = vunpack.c.h.b16 %v923
        %v3083 = vunpack.c.l.b16 %v924
        %v3084 = vunpack.c.h.b16 %v924
        %v3085 = vunpack.c.l.b16 %v925
        %v3086 = vunpack.c.h.b16 %v925
        %v3087 = vunpack.c.l.b16 %v926
        %v3088 = vunpack.c.h.b16 %v926
        %v3089 = vunpack.c.l.b16 %v927
        %v3090 = vunpack.c.h.b16 %v927
        %v3091 = vunpack.c.l.b16 %v928
        %v3092 = vunpack.c.h.b16 %v928
        %v3093 = vunpack.c.l.b16 %v929
        %v3094 = vunpack.c.l.b16 %v930
        %v3095 = vunpack.c.h.b16 %v930
        %v3096 = vunpack.c.l.b16 %v931
        %v3097 = vunpack.c.h.b16 %v931
        %v3098 = vunpack.c.l.b16 %v932
        %v3099 = vunpack.c.h.b16 %v932
        %v3100 = vunpack.c.l.b16 %v933
        %v3101 = vunpack.c.h.b16 %v933
        %v3102 = vunpack.c.l.b16 %v934
        %v3103 = vunpack.c.h.b16 %v934
        %v3104 = vunpack.c.l.b16 %v935
        %v3105 = vunpack.c.h.b16 %v935
        %v3106 = vunpack.c.l.b16 %v936
        %v3107 = vunpack.c.h.b16 %v936
        %v3108 = vunpack.c.l.b16 %v937
        %v3109 = vunpack.c.l.b16 %v938
        %v3110 = vunpack.c.h.b16 %v938
        %v3111 = vunpack.c.l.b16 %v939
        %v3112 = vunpack.c.h.b16 %v939
        %v3113 = vunpack.c.l.b16 %v940
        %v3114 = vunpack.c.h.b16 %v940
        %v3115 = vunpack.c.l.b16 %v941
        %v3116 = vunpack.c.h.b16 %v941
        %v3117 = vunpack.c.l.b16 %v942
        %v3118 = vunpack.c.h.b16 %v942
        %v3119 = vunpack.c.l.b16 %v943
        %v3120 = vunpack.c.h.b16 %v943
        %v3121 = vunpack.c.l.b16 %v944
        %v3122 = vunpack.c.h.b16 %v944
        %v3123 = vunpack.c.l.b16 %v945
        %v3124 = vunpack.c.l.b16 %v946
        %v3125 = vunpack.c.h.b16 %v946
        %v3126 = vunpack.c.l.b16 %v947
        %v3127 = vunpack.c.h.b16 %v947
        %v3128 = vunpack.c.l.b16 %v948
        %v3129 = vunpack.c.h.b16 %v948
        %v3130 = vunpack.c.l.b16 %v949
        %v3131 = vunpack.c.h.b16 %v949
        %v3132 = vunpack.c.l.b16 %v950
        %v3133 = vunpack.c.h.b16 %v950
        %v3134 = vunpack.c.l.b16 %v951
        %v3135 = vunpack.c.h.b16 %v951
        %v3136 = vunpack.c.l.b16 %v952
        %v3137 = vunpack.c.h.b16 %v952
        %v3138 = vunpack.c.l.b16 %v953
        %v3139 = vunpack.c.l.b16 %v954
        %v3140 = vunpack.c.h.b16 %v954
        %v3141 = vunpack.c.l.b16 %v955
        %v3142 = vunpack.c.h.b16 %v955
        %v3143 = vunpack.c.l.b16 %v956
        %v3144 = vunpack.c.h.b16 %v956
        %v3145 = vunpack.c.l.b16 %v957
        %v3146 = vunpack.c.h.b16 %v957
        %v3147 = vunpack.c.l.b16 %v958
        %v3148 = vunpack.c.h.b16 %v958
        %v3149 = vunpack.c.l.b16 %v959
        %v3150 = vunpack.c.h.b16 %v959
        %v3151 = vunpack.c.l.b16 %v960
        %v3152 = vunpack.c.h.b16 %v960
        %v3153 = vunpack.c.l.b16 %v961
        %v3154 = vunpack.c.l.b16 %v962
        %v3155 = vunpack.c.h.b16 %v962
        %v3156 = vunpack.c.l.b16 %v963
        %v3157 = vunpack.c.h.b16 %v963
        %v3158 = vunpack.c.l.b16 %v964
        %v3159 = vunpack.c.h.b16 %v964
        %v3160 = vunpack.c.l.b16 %v965
        %v3161 = vunpack.c.h.b16 %v965
        %v3162 = vunpack.c.l.b16 %v966
        %v3163 = vunpack.c.h.b16 %v966
        %v3164 = vunpack.c.l.b16 %v967
        %v3165 = vunpack.c.h.b16 %v967
        %v3166 = vunpack.c.l.b16 %v968
        %v3167 = vunpack.c.h.b16 %v968
        %v3168 = vunpack.c.l.b16 %v969
        %v3169 = vunpack.c.l.b16 %v970
        %v3170 = vunpack.c.h.b16 %v970
        %v3171 = vunpack.c.l.b16 %v971
        %v3172 = vunpack.c.h.b16 %v971
        %v3173 = vunpack.c.l.b16 %v972
        %v3174 = vunpack.c.h.b16 %v972
        %v3175 = vunpack.c.l.b16 %v973
        %v3176 = vunpack.c.h.b16 %v973
        %v3177 = vunpack.c.l.b16 %v974
        %v3178 = vunpack.c.h.b16 %v974
        %v3179 = vunpack.c.l.b16 %v975
        %v3180 = vunpack.c.h.b16 %v975
        %v3181 = vunpack.c.l.b16 %v976
        %v3182 = vunpack.c.h.b16 %v976
        %v3183 = vunpack.c.l.b16 %v977
        %v3184 = vunpack.c.l.b16 %v978
        %v3185 = vunpack.c.h.b16 %v978
        %v3186 = vunpack.c.l.b16 %v979
        %v3187 = vunpack.c.h.b16 %v979
        %v3188 = vunpack.c.l.b16 %v980
        %v3189 = vunpack.c.h.b16 %v980
        %v3190 = vunpack.c.l.b16 %v981
        %v3191 = vunpack.c.h.b16 %v981
        %v3192 = vunpack.c.l.b16 %v982
        %v3193 = vunpack.c.h.b16 %v982
        %v3194 = vunpack.c.l.b16 %v983
        %v3195 = vunpack.c.h.b16 %v983
        %v3196 = vunpack.c.l.b16 %v984
        %v3197 = vunpack.c.h.b16 %v984
        %v3198 = vunpack.c.l.b16 %v985
        %v3199 = vunpack.c.l.b16 %v986
        %v3200 = vunpack.c.h.b16 %v986
        %v3201 = vunpack.c.l.b16 %v987
        %v3202 = vunpack.c.h.b16 %v987
        %v3203 = vunpack.c.l.b16 %v988
        %v3204 = vunpack.c.h.b16 %v988
        %v3205 = vunpack.c.l.b16 %v989
        %v3206 = vunpack.c.h.b16 %v989
        %v3207 = vunpack.c.l.b16 %v990
        %v3208 = vunpack.c.h.b16 %v990
        %v3209 = vunpack.c.l.b16 %v991
        %v3210 = vunpack.c.h.b16 %v991
        %v3211 = vunpack.c.l.b16 %v992
        %v3212 = vunpack.c.h.b16 %v992
        %v3213 = vunpack.c.l.b16 %v993
        %v3214 = vunpack.c.l.b16 %v994
        %v3215 = vunpack.c.h.b16 %v994
        %v3216 = vunpack.c.l.b16 %v995
        %v3217 = vunpack.c.h.b16 %v995
        %v3218 = vunpack.c.l.b16 %v996
        %v3219 = vunpack.c.h.b16 %v996
        %v3220 = vunpack.c.l.b16 %v997
        %v3221 = vunpack.c.h.b16 %v997
        %v3222 = vunpack.c.l.b16 %v998
        %v3223 = vunpack.c.h.b16 %v998
        %v3224 = vunpack.c.l.b16 %v999
        %v3225 = vunpack.c.h.b16 %v999
        %v3226 = vunpack.c.l.b16 %v1000
        %v3227 = vunpack.c.h.b16 %v1000
        %v3228 = vunpack.c.l.b16 %v1001
        %v3229 = vunpack.c.l.b16 %v1002
        %v3230 = vunpack.c.h.b16 %v1002
        %v3231 = vunpack.c.l.b16 %v1003
        %v3232 = vunpack.c.h.b16 %v1003
        %v3233 = vunpack.c.l.b16 %v1004
        %v3234 = vunpack.c.h.b16 %v1004
        %v3235 = vunpack.c.l.b16 %v1005
        %v3236 = vunpack.c.h.b16 %v1005
        %v3237 = vunpack.c.l.b16 %v1006
        %v3238 = vunpack.c.h.b16 %v1006
        %v3239 = vunpack.c.l.b16 %v1007
        %v3240 = vunpack.c.h.b16 %v1007
        %v3241 = vunpack.c.l.b16 %v1008
        %v3242 = vunpack.c.h.b16 %v1008
        %v3243 = vunpack.c.l.b16 %v1009
        %v3244 = vunpack.c.l.b16 %v1010
        %v3245 = vunpack.c.h.b16 %v1010
        %v3246 = vunpack.c.l.b16 %v1011
        %v3247 = vunpack.c.h.b16 %v1011
        %v3248 = vunpack.c.l.b16 %v1012
        %v3249 = vunpack.c.h.b16 %v1012
        %v3250 = vunpack.c.l.b16 %v1013
        %v3251 = vunpack.c.h.b16 %v1013
        %v3252 = vunpack.c.l.b16 %v1014
        %v3253 = vunpack.c.h.b16 %v1014
        %v3254 = vunpack.c.l.b16 %v1015
        %v3255 = vunpack.c.h.b16 %v1015
        %v3256 = vunpack.c.l.b16 %v1016
        %v3257 = vunpack.c.h.b16 %v1016
        %v3258 = vunpack.c.l.b16 %v1017
        %v3259 = vunpack.c.l.b16 %v1018
        %v3260 = vunpack.c.h.b16 %v1018
        %v3261 = vunpack.c.l.b16 %v1019
        %v3262 = vunpack.c.h.b16 %v1019
        %v3263 = vunpack.c.l.b16 %v1020
        %v3264 = vunpack.c.h.b16 %v1020
        %v3265 = vunpack.c.l.b16 %v1021
        %v3266 = vunpack.c.h.b16 %v1021
        %v3267 = vunpack.c.l.b16 %v1022
        %v3268 = vunpack.c.h.b16 %v1022
        %v3269 = vunpack.c.l.b16 %v1023
        %v3270 = vunpack.c.h.b16 %v1023
        %v3271 = vunpack.c.l.b16 %v1024
        %v3272 = vunpack.c.h.b16 %v1024
        %v3273 = vunpack.c.l.b16 %v1025
        %v3274 = vunpack.c.l.b16 %v1026
        %v3275 = vunpack.c.h.b16 %v1026
        %v3276 = vunpack.c.l.b16 %v1027
        %v3277 = vunpack.c.h.b16 %v1027
        %v3278 = vunpack.c.l.b16 %v1028
        %v3279 = vunpack.c.h.b16 %v1028
        %v3280 = vunpack.c.l.b16 %v1029
        %v3281 = vunpack.c.h.b16 %v1029
        %v3282 = vunpack.c.l.b16 %v1030
        %v3283 = vunpack.c.h.b16 %v1030
        %v3284 = vunpack.c.l.b16 %v1031
        %v3285 = vunpack.c.h.b16 %v1031
        %v3286 = vunpack.c.l.b16 %v1032
        %v3287 = vunpack.c.h.b16 %v1032
        %v3288 = vunpack.c.l.b16 %v1033
        %v3289 = vunpack.c.l.b16 %v1034
        %v3290 = vunpack.c.h.b16 %v1034
        %v3291 = vunpack.c.l.b16 %v1035
        %v3292 = vunpack.c.h.b16 %v1035
        %v3293 = vunpack.c.l.b16 %v1036
        %v3294 = vunpack.c.h.b16 %v1036
        %v3295 = vunpack.c.l.b16 %v1037
        %v3296 = vunpack.c.h.b16 %v1037
        %v3297 = vunpack.c.l.b16 %v1038
        %v3298 = vunpack.c.h.b16 %v1038
        %v3299 = vunpack.c.l.b16 %v1039
        %v3300 = vunpack.c.h.b16 %v1039
        %v3301 = vunpack.c.l.b16 %v1040
        %v3302 = vunpack.c.h.b16 %v1040
        %v3303 = vunpack.c.l.b16 %v1041
        %v3304 = vunpack.c.l.b16 %v1042
        %v3305 = vunpack.c.h.b16 %v1042
        %v3306 = vunpack.c.l.b16 %v1043
        %v3307 = vunpack.c.h.b16 %v1043
        %v3308 = vunpack.c.l.b16 %v1044
        %v3309 = vunpack.c.h.b16 %v1044
        %v3310 = vunpack.c.l.b16 %v1045
        %v3311 = vunpack.c.h.b16 %v1045
        %v3312 = vunpack.c.l.b16 %v1046
        %v3313 = vunpack.c.h.b16 %v1046
        %v3314 = vunpack.c.l.b16 %v1047
        %v3315 = vunpack.c.h.b16 %v1047
        %v3316 = vunpack.c.l.b16 %v1048
        %v3317 = vunpack.c.h.b16 %v1048
        %v3318 = vunpack.c.l.b16 %v1049
        %v3319 = vunpack.c.l.b16 %v1050
        %v3320 = vunpack.c.h.b16 %v1050
        %v3321 = vunpack.c.l.b16 %v1051
        %v3322 = vunpack.c.h.b16 %v1051
        %v3323 = vunpack.c.l.b16 %v1052
        %v3324 = vunpack.c.h.b16 %v1052
        %v3325 = vunpack.c.l.b16 %v1053
        %v3326 = vunpack.c.h.b16 %v1053
        %v3327 = vunpack.c.l.b16 %v1054
        %v3328 = vunpack.c.h.b16 %v1054
        %v3329 = vunpack.c.l.b16 %v1055
        %v3330 = vunpack.c.h.b16 %v1055
        %v3331 = vunpack.c.l.b16 %v1056
        %v3332 = vunpack.c.h.b16 %v1056
        %v3333 = vunpack.c.l.b16 %v1057
        %v3334 = vunpack.c.l.b16 %v1058
        %v3335 = vunpack.c.h.b16 %v1058
        %v3336 = vunpack.c.l.b16 %v1059
        %v3337 = vunpack.c.h.b16 %v1059
        %v3338 = vunpack.c.l.b16 %v1060
        %v3339 = vunpack.c.h.b16 %v1060
        %v3340 = vunpack.c.l.b16 %v1061
        %v3341 = vunpack.c.h.b16 %v1061
        %v3342 = vunpack.c.l.b16 %v1062
        %v3343 = vunpack.c.h.b16 %v1062
        %v3344 = vunpack.c.l.b16 %v1063
        %v3345 = vunpack.c.h.b16 %v1063
        %v3346 = vunpack.c.l.b16 %v1064
        %v3347 = vunpack.c.h.b16 %v1064
        %v3348 = vunpack.c.l.b16 %v1065
        %v3349 = vunpack.c.l.b16 %v1066
        %v3350 = vunpack.c.h.b16 %v1066
        %v3351 = vunpack.c.l.b16 %v1067
        %v3352 = vunpack.c.h.b16 %v1067
        %v3353 = vunpack.c.l.b16 %v1068
        %v3354 = vunpack.c.h.b16 %v1068
        %v3355 = vunpack.c.l.b16 %v1069
        %v3356 = vunpack.c.h.b16 %v1069
        %v3357 = vunpack.c.l.b16 %v1070
        %v3358 = vunpack.c.h.b16 %v1070
        %v3359 = vunpack.c.l.b16 %v1071
        %v3360 = vunpack.c.h.b16 %v1071
        %v3361 = vunpack.c.l.b16 %v1072
        %v3362 = vunpack.c.h.b16 %v1072
        %v3363 = vunpack.c.l.b16 %v1073
        %v3364 = vunpack.c.l.b16 %v1074
        %v3365 = vunpack.c.h.b16 %v1074
        %v3366 = vunpack.c.l.b16 %v1075
        %v3367 = vunpack.c.h.b16 %v1075
        %v3368 = vunpack.c.l.b16 %v1076
        %v3369 = vunpack.c.h.b16 %v1076
        %v3370 = vunpack.c.l.b16 %v1077
        %v3371 = vunpack.c.h.b16 %v1077
        %v3372 = vunpack.c.l.b16 %v1078
        %v3373 = vunpack.c.h.b16 %v1078
        %v3374 = vunpack.c.l.b16 %v1079
        %v3375 = vunpack.c.h.b16 %v1079
        %v3376 = vunpack.c.l.b16 %v1080
        %v3377 = vunpack.c.h.b16 %v1080
        %v3378 = vunpack.c.l.b16 %v1081
        %v3379 = vunpack.c.l.b16 %v1082
        %v3380 = vunpack.c.h.b16 %v1082
        %v3381 = vunpack.c.l.b16 %v1083
        %v3382 = vunpack.c.h.b16 %v1083
        %v3383 = vunpack.c.l.b16 %v1084
        %v3384 = vunpack.c.h.b16 %v1084
        %v3385 = vunpack.c.l.b16 %v1085
        %v3386 = vunpack.c.h.b16 %v1085
        %v3387 = vunpack.c.l.b16 %v1086
        %v3388 = vunpack.c.h.b16 %v1086
        %v3389 = vunpack.c.l.b16 %v1087
        %v3390 = vunpack.c.h.b16 %v1087
        %v3391 = vunpack.c.l.b16 %v1088
        %v3392 = vunpack.c.h.b16 %v1088
        %v3393 = vunpack.c.l.b16 %v1089
        %v3394 = vunpack.c.l.b16 %v1090
        %v3395 = vunpack.c.h.b16 %v1090
        %v3396 = vunpack.c.l.b16 %v1091
        %v3397 = vunpack.c.h.b16 %v1091
        %v3398 = vunpack.c.l.b16 %v1092
        %v3399 = vunpack.c.h.b16 %v1092
        %v3400 = vunpack.c.l.b16 %v1093
        %v3401 = vunpack.c.h.b16 %v1093
        %v3402 = vunpack.c.l.b16 %v1094
        %v3403 = vunpack.c.h.b16 %v1094
        %v3404 = vunpack.c.l.b16 %v1095
        %v3405 = vunpack.c.h.b16 %v1095
        %v3406 = vunpack.c.l.b16 %v1096
        %v3407 = vunpack.c.h.b16 %v1096
        %v3408 = vunpack.c.l.b16 %v1097
        %v3409 = vunpack.c.l.b16 %v1098
        %v3410 = vunpack.c.h.b16 %v1098
        %v3411 = vunpack.c.l.b16 %v1099
        %v3412 = vunpack.c.h.b16 %v1099
        %v3413 = vunpack.c.l.b16 %v1100
        %v3414 = vunpack.c.h.b16 %v1100
        %v3415 = vunpack.c.l.b16 %v1101
        %v3416 = vunpack.c.h.b16 %v1101
        %v3417 = vunpack.c.l.b16 %v1102
        %v3418 = vunpack.c.h.b16 %v1102
        %v3419 = vunpack.c.l.b16 %v1103
        %v3420 = vunpack.c.h.b16 %v1103
        %v3421 = vunpack.c.l.b16 %v1104
        %v3422 = vunpack.c.h.b16 %v1104
        %v3423 = vunpack.c.l.b16 %v1105
        %v3424 = vunpack.c.l.b16 %v1106
        %v3425 = vunpack.c.h.b16 %v1106
        %v3426 = vunpack.c.l.b16 %v1107
        %v3427 = vunpack.c.h.b16 %v1107
        %v3428 = vunpack.c.l.b16 %v1108
        %v3429 = vunpack.c.h.b16 %v1108
        %v3430 = vunpack.c.l.b16 %v1109
        %v3431 = vunpack.c.h.b16 %v1109
        %v3432 = vunpack.c.l.b16 %v1110
        %v3433 = vunpack.c.h.b16 %v1110
        %v3434 = vunpack.c.l.b16 %v1111
        %v3435 = vunpack.c.h.b16 %v1111
        %v3436 = vunpack.c.l.b16 %v1112
        %v3437 = vunpack.c.h.b16 %v1112
        %v3438 = vunpack.c.l.b16 %v1113
        %v3439 = vunpack.c.l.b16 %v1114
        %v3440 = vunpack.c.h.b16 %v1114
        %v3441 = vunpack.c.l.b16 %v1115
        %v3442 = vunpack.c.h.b16 %v1115
        %v3443 = vunpack.c.l.b16 %v1116
        %v3444 = vunpack.c.h.b16 %v1116
        %v3445 = vunpack.c.l.b16 %v1117
        %v3446 = vunpack.c.h.b16 %v1117
        %v3447 = vunpack.c.l.b16 %v1118
        %v3448 = vunpack.c.h.b16 %v1118
        %v3449 = vunpack.c.l.b16 %v1119
        %v3450 = vunpack.c.h.b16 %v1119
        %v3451 = vunpack.c.l.b16 %v1120
        %v3452 = vunpack.c.h.b16 %v1120
        %v3453 = vunpack.c.l.b16 %v1121
        %v3454 = vunpack.c.l.b16 %v1122
        %v3455 = vunpack.c.h.b16 %v1122
        %v3456 = vunpack.c.l.b16 %v1123
        %v3457 = vunpack.c.h.b16 %v1123
        %v3458 = vunpack.c.l.b16 %v1124
        %v3459 = vunpack.c.h.b16 %v1124
        %v3460 = vunpack.c.l.b16 %v1125
        %v3461 = vunpack.c.h.b16 %v1125
        %v3462 = vunpack.c.l.b16 %v1126
        %v3463 = vunpack.c.h.b16 %v1126
        %v3464 = vunpack.c.l.b16 %v1127
        %v3465 = vunpack.c.h.b16 %v1127
        %v3466 = vunpack.c.l.b16 %v1128
        %v3467 = vunpack.c.h.b16 %v1128
        %v3468 = vunpack.c.l.b16 %v1129
        %v3469 = vunpack.c.l.b16 %v1130
        %v3470 = vunpack.c.h.b16 %v1130
        %v3471 = vunpack.c.l.b16 %v1131
        %v3472 = vunpack.c.h.b16 %v1131
        %v3473 = vunpack.c.l.b16 %v1132
        %v3474 = vunpack.c.h.b16 %v1132
        %v3475 = vunpack.c.l.b16 %v1133
        %v3476 = vunpack.c.h.b16 %v1133
        %v3477 = vunpack.c.l.b16 %v1134
        %v3478 = vunpack.c.h.b16 %v1134
        %v3479 = vunpack.c.l.b16 %v1135
        %v3480 = vunpack.c.h.b16 %v1135
        %v3481 = vunpack.c.l.b16 %v1136
        %v3482 = vunpack.c.h.b16 %v1136
        %v3483 = vunpack.c.l.b16 %v1137
        %v3484 = vunpack.c.l.b16 %v1138
        %v3485 = vunpack.c.h.b16 %v1138
        %v3486 = vunpack.c.l.b16 %v1139
        %v3487 = vunpack.c.h.b16 %v1139
        %v3488 = vunpack.c.l.b16 %v1140
        %v3489 = vunpack.c.h.b16 %v1140
        %v3490 = vunpack.c.l.b16 %v1141
        %v3491 = vunpack.c.h.b16 %v1141
        %v3492 = vunpack.c.l.b16 %v1142
        %v3493 = vunpack.c.h.b16 %v1142
        %v3494 = vunpack.c.l.b16 %v1143
        %v3495 = vunpack.c.h.b16 %v1143
        %v3496 = vunpack.c.l.b16 %v1144
        %v3497 = vunpack.c.h.b16 %v1144
        %v3498 = vunpack.c.l.b16 %v1145
        %v3499 = vunpack.c.l.b16 %v1146
        %v3500 = vunpack.c.h.b16 %v1146
        %v3501 = vunpack.c.l.b16 %v1147
        %v3502 = vunpack.c.h.b16 %v1147
        %v3503 = vunpack.c.l.b16 %v1148
        %v3504 = vunpack.c.h.b16 %v1148
        %v3505 = vunpack.c.l.b16 %v1149
        %v3506 = vunpack.c.h.b16 %v1149
        %v3507 = vunpack.c.l.b16 %v1150
        %v3508 = vunpack.c.h.b16 %v1150
        %v3509 = vunpack.c.l.b16 %v1151
        %v3510 = vunpack.c.h.b16 %v1151
        %v3511 = vunpack.c.l.b16 %v1152
        %v3512 = vunpack.c.h.b16 %v1152
        %v3513 = vunpack.c.l.b16 %v1153
        %v3514 = vunpack.c.l.b16 %v1154
        %v3515 = vunpack.c.h.b16 %v1154
        %v3516 = vunpack.c.l.b16 %v1155
        %v3517 = vunpack.c.h.b16 %v1155
        %v3518 = vunpack.c.l.b16 %v1156
        %v3519 = vunpack.c.h.b16 %v1156
        %v3520 = vunpack.c.l.b16 %v1157
        %v3521 = vunpack.c.h.b16 %v1157
        %v3522 = vunpack.c.l.b16 %v1158
        %v3523 = vunpack.c.h.b16 %v1158
        %v3524 = vunpack.c.l.b16 %v1159
        %v3525 = vunpack.c.h.b16 %v1159
        %v3526 = vunpack.c.l.b16 %v1160
        %v3527 = vunpack.c.h.b16 %v1160
        %v3528 = vunpack.c.l.b16 %v1161
        %v3529 = vunpack.c.l.b16 %v1162
        %v3530 = vunpack.c.h.b16 %v1162
        %v3531 = vunpack.c.l.b16 %v1163
        %v3532 = vunpack.c.h.b16 %v1163
        %v3533 = vunpack.c.l.b16 %v1164
        %v3534 = vunpack.c.h.b16 %v1164
        %v3535 = vunpack.c.l.b16 %v1165
        %v3536 = vunpack.c.h.b16 %v1165
        %v3537 = vunpack.c.l.b16 %v1166
        %v3538 = vunpack.c.h.b16 %v1166
        %v3539 = vunpack.c.l.b16 %v1167
        %v3540 = vunpack.c.h.b16 %v1167
        %v3541 = vunpack.c.l.b16 %v1168
        %v3542 = vunpack.c.h.b16 %v1168
        %v3543 = vunpack.c.l.b16 %v1169
        %v3544 = vunpack.c.l.b16 %v1170
        %v3545 = vunpack.c.h.b16 %v1170
        %v3546 = vunpack.c.l.b16 %v1171
        %v3547 = vunpack.c.h.b16 %v1171
        %v3548 = vunpack.c.l.b16 %v1172
        %v3549 = vunpack.c.h.b16 %v1172
        %v3550 = vunpack.c.l.b16 %v1173
        %v3551 = vunpack.c.h.b16 %v1173
        %v3552 = vunpack.c.l.b16 %v1174
        %v3553 = vunpack.c.h.b16 %v1174
        %v3554 = vunpack.c.l.b16 %v1175
        %v3555 = vunpack.c.h.b16 %v1175
        %v3556 = vunpack.c.l.b16 %v1176
        %v3557 = vunpack.c.h.b16 %v1176
        %v3558 = vunpack.c.l.b16 %v1177
        %v3559 = vunpack.c.l.b16 %v1178
        %v3560 = vunpack.c.h.b16 %v1178
        %v3561 = vunpack.c.l.b16 %v1179
        %v3562 = vunpack.c.h.b16 %v1179
        %v3563 = vunpack.c.l.b16 %v1180
        %v3564 = vunpack.c.h.b16 %v1180
        %v3565 = vunpack.c.l.b16 %v1181
        %v3566 = vunpack.c.h.b16 %v1181
        %v3567 = vunpack.c.l.b16 %v1182
        %v3568 = vunpack.c.h.b16 %v1182
        %v3569 = vunpack.c.l.b16 %v1183
        %v3570 = vunpack.c.h.b16 %v1183
        %v3571 = vunpack.c.l.b16 %v1184
        %v3572 = vunpack.c.h.b16 %v1184
        %v3573 = vunpack.c.l.b16 %v1185
        %v3574 = vunpack.c.l.b16 %v1186
        %v3575 = vunpack.c.h.b16 %v1186
        %v3576 = vunpack.c.l.b16 %v1187
        %v3577 = vunpack.c.h.b16 %v1187
        %v3578 = vunpack.c.l.b16 %v1188
        %v3579 = vunpack.c.h.b16 %v1188
        %v3580 = vunpack.c.l.b16 %v1189
        %v3581 = vunpack.c.h.b16 %v1189
        %v3582 = vunpack.c.l.b16 %v1190
        %v3583 = vunpack.c.h.b16 %v1190
        %v3584 = vunpack.c.l.b16 %v1191
        %v3585 = vunpack.c.h.b16 %v1191
        %v3586 = vunpack.c.l.b16 %v1192
        %v3587 = vunpack.c.h.b16 %v1192
        %v3588 = vunpack.c.l.b16 %v1193
        %v3589 = vunpack.c.l.b16 %v1194
        %v3590 = vunpack.c.h.b16 %v1194
        %v3591 = vunpack.c.l.b16 %v1195
        %v3592 = vunpack.c.h.b16 %v1195
        %v3593 = vunpack.c.l.b16 %v1196
        %v3594 = vunpack.c.h.b16 %v1196
        %v3595 = vunpack.c.l.b16 %v1197
        %v3596 = vunpack.c.h.b16 %v1197
        %v3597 = vunpack.c.l.b16 %v1198
        %v3598 = vunpack.c.h.b16 %v1198
        %v3599 = vunpack.c.l.b16 %v1199
        %v3600 = vunpack.c.h.b16 %v1199
        %v3601 = vunpack.c.l.b16 %v1200
        %v3602 = vunpack.c.h.b16 %v1200
        %v3603 = vunpack.c.l.b16 %v1201
        %v3604 = vunpack.c.l.b16 %v1202
        %v3605 = vunpack.c.h.b16 %v1202
        %v3606 = vunpack.c.l.b16 %v1203
        %v3607 = vunpack.c.h.b16 %v1203
        %v3608 = vunpack.c.l.b16 %v1204
        %v3609 = vunpack.c.h.b16 %v1204
        %v3610 = vunpack.c.l.b16 %v1205
        %v3611 = vunpack.c.h.b16 %v1205
        %v3612 = vunpack.c.l.b16 %v1206
        %v3613 = vunpack.c.h.b16 %v1206
        %v3614 = vunpack.c.l.b16 %v1207
        %v3615 = vunpack.c.h.b16 %v1207
        %v3616 = vunpack.c.l.b16 %v1208
        %v3617 = vunpack.c.h.b16 %v1208
        %v3618 = vunpack.c.l.b16 %v1209
        %v3619 = vunpack.c.l.b16 %v1210
        %v3620 = vunpack.c.h.b16 %v1210
        %v3621 = vunpack.c.l.b16 %v1211
        %v3622 = vunpack.c.h.b16 %v1211
        %v3623 = vunpack.c.l.b16 %v1212
        %v3624 = vunpack.c.h.b16 %v1212
        %v3625 = vunpack.c.l.b16 %v1213
        %v3626 = vunpack.c.h.b16 %v1213
        %v3627 = vunpack.c.l.b16 %v1214
        %v3628 = vunpack.c.h.b16 %v1214
        %v3629 = vunpack.c.l.b16 %v1215
        %v3630 = vunpack.c.h.b16 %v1215
        %v3631 = vunpack.c.l.b16 %v1216
        %v3632 = vunpack.c.h.b16 %v1216
        %v3633 = vunpack.c.l.b16 %v1217
        %v3634 = vunpack.c.l.b16 %v1218
        %v3635 = vunpack.c.h.b16 %v1218
        %v3636 = vunpack.c.l.b16 %v1219
        %v3637 = vunpack.c.h.b16 %v1219
        %v3638 = vunpack.c.l.b16 %v1220
        %v3639 = vunpack.c.h.b16 %v1220
        %v3640 = vunpack.c.l.b16 %v1221
        %v3641 = vunpack.c.h.b16 %v1221
        %v3642 = vunpack.c.l.b16 %v1222
        %v3643 = vunpack.c.h.b16 %v1222
        %v3644 = vunpack.c.l.b16 %v1223
        %v3645 = vunpack.c.h.b16 %v1223
        %v3646 = vunpack.c.l.b16 %v1224
        %v3647 = vunpack.c.h.b16 %v1224
        %v3648 = vunpack.c.l.b16 %v1225
        %v3649 = vunpack.c.l.b16 %v1226
        %v3650 = vunpack.c.h.b16 %v1226
        %v3651 = vunpack.c.l.b16 %v1227
        %v3652 = vunpack.c.h.b16 %v1227
        %v3653 = vunpack.c.l.b16 %v1228
        %v3654 = vunpack.c.h.b16 %v1228
        %v3655 = vunpack.c.l.b16 %v1229
        %v3656 = vunpack.c.h.b16 %v1229
        %v3657 = vunpack.c.l.b16 %v1230
        %v3658 = vunpack.c.h.b16 %v1230
        %v3659 = vunpack.c.l.b16 %v1231
        %v3660 = vunpack.c.h.b16 %v1231
        %v3661 = vunpack.c.l.b16 %v1232
        %v3662 = vunpack.c.h.b16 %v1232
        %v3663 = vunpack.c.l.b16 %v1233
        %v3664 = vunpack.c.l.b16 %v1234
        %v3665 = vunpack.c.h.b16 %v1234
        %v3666 = vunpack.c.l.b16 %v1235
        %v3667 = vunpack.c.h.b16 %v1235
        %v3668 = vunpack.c.l.b16 %v1236
        %v3669 = vunpack.c.h.b16 %v1236
        %v3670 = vunpack.c.l.b16 %v1237
        %v3671 = vunpack.c.h.b16 %v1237
        %v3672 = vunpack.c.l.b16 %v1238
        %v3673 = vunpack.c.h.b16 %v1238
        %v3674 = vunpack.c.l.b16 %v1239
        %v3675 = vunpack.c.h.b16 %v1239
        %v3676 = vunpack.c.l.b16 %v1240
        %v3677 = vunpack.c.h.b16 %v1240
        %v3678 = vunpack.c.l.b16 %v1241
        %v3679 = vunpack.c.l.b16 %v1242
        %v3680 = vunpack.c.h.b16 %v1242
        %v3681 = vunpack.c.l.b16 %v1243
        %v3682 = vunpack.c.h.b16 %v1243
        %v3683 = vunpack.c.l.b16 %v1244
        %v3684 = vunpack.c.h.b16 %v1244
        %v3685 = vunpack.c.l.b16 %v1245
        %v3686 = vunpack.c.h.b16 %v1245
        %v3687 = vunpack.c.l.b16 %v1246
        %v3688 = vunpack.c.h.b16 %v1246
        %v3689 = vunpack.c.l.b16 %v1247
        %v3690 = vunpack.c.h.b16 %v1247
        %v3691 = vunpack.c.l.b16 %v1248
        %v3692 = vunpack.c.h.b16 %v1248
        %v3693 = vunpack.c.l.b16 %v1249
        %v3694 = vunpack.c.l.b16 %v1250
        %v3695 = vunpack.c.h.b16 %v1250
        %v3696 = vunpack.c.l.b16 %v1251
        %v3697 = vunpack.c.h.b16 %v1251
        %v3698 = vunpack.c.l.b16 %v1252
        %v3699 = vunpack.c.h.b16 %v1252
        %v3700 = vunpack.c.l.b16 %v1253
        %v3701 = vunpack.c.h.b16 %v1253
        %v3702 = vunpack.c.l.b16 %v1254
        %v3703 = vunpack.c.h.b16 %v1254
        %v3704 = vunpack.c.l.b16 %v1255
        %v3705 = vunpack.c.h.b16 %v1255
        %v3706 = vunpack.c.l.b16 %v1256
        %v3707 = vunpack.c.h.b16 %v1256
        %v3708 = vunpack.c.l.b16 %v1257
        %v3709 = vunpack.c.l.b16 %v1258
        %v3710 = vunpack.c.h.b16 %v1258
        %v3711 = vunpack.c.l.b16 %v1259
        %v3712 = vunpack.c.h.b16 %v1259
        %v3713 = vunpack.c.l.b16 %v1260
        %v3714 = vunpack.c.h.b16 %v1260
        %v3715 = vunpack.c.l.b16 %v1261
        %v3716 = vunpack.c.h.b16 %v1261
        %v3717 = vunpack.c.l.b16 %v1262
        %v3718 = vunpack.c.h.b16 %v1262
        %v3719 = vunpack.c.l.b16 %v1263
        %v3720 = vunpack.c.h.b16 %v1263
        %v3721 = vunpack.c.l.b16 %v1264
        %v3722 = vunpack.c.h.b16 %v1264
        %v3723 = vunpack.c.l.b16 %v1265
        %v3724 = vunpack.c.l.b16 %v1266
        %v3725 = vunpack.c.h.b16 %v1266
        %v3726 = vunpack.c.l.b16 %v1267
        %v3727 = vunpack.c.h.b16 %v1267
        %v3728 = vunpack.c.l.b16 %v1268
        %v3729 = vunpack.c.h.b16 %v1268
        %v3730 = vunpack.c.l.b16 %v1269
        %v3731 = vunpack.c.h.b16 %v1269
        %v3732 = vunpack.c.l.b16 %v1270
        %v3733 = vunpack.c.h.b16 %v1270
        %v3734 = vunpack.c.l.b16 %v1271
        %v3735 = vunpack.c.h.b16 %v1271
        %v3736 = vunpack.c.l.b16 %v1272
        %v3737 = vunpack.c.h.b16 %v1272
        %v3738 = vunpack.c.l.b16 %v1273
        %v3739 = vunpack.c.l.b16 %v1274
        %v3740 = vunpack.c.h.b16 %v1274
        %v3741 = vunpack.c.l.b16 %v1275
        %v3742 = vunpack.c.h.b16 %v1275
        %v3743 = vunpack.c.l.b16 %v1276
        %v3744 = vunpack.c.h.b16 %v1276
        %v3745 = vunpack.c.l.b16 %v1277
        %v3746 = vunpack.c.h.b16 %v1277
        %v3747 = vunpack.c.l.b16 %v1278
        %v3748 = vunpack.c.h.b16 %v1278
        %v3749 = vunpack.c.l.b16 %v1279
        %v3750 = vunpack.c.h.b16 %v1279
        %v3751 = vunpack.c.l.b16 %v1280
        %v3752 = vunpack.c.h.b16 %v1280
        %v3753 = vunpack.c.l.b16 %v1281
        %v3754 = vunpack.c.l.b16 %v1282
        %v3755 = vunpack.c.h.b16 %v1282
        %v3756 = vunpack.c.l.b16 %v1283
        %v3757 = vunpack.c.h.b16 %v1283
        %v3758 = vunpack.c.l.b16 %v1284
        %v3759 = vunpack.c.h.b16 %v1284
        %v3760 = vunpack.c.l.b16 %v1285
        %v3761 = vunpack.c.h.b16 %v1285
        %v3762 = vunpack.c.l.b16 %v1286
        %v3763 = vunpack.c.h.b16 %v1286
        %v3764 = vunpack.c.l.b16 %v1287
        %v3765 = vunpack.c.h.b16 %v1287
        %v3766 = vunpack.c.l.b16 %v1288
        %v3767 = vunpack.c.h.b16 %v1288
        %v3768 = vunpack.c.l.b16 %v1289
        %v3769 = vunpack.c.l.b16 %v1290
        %v3770 = vunpack.c.h.b16 %v1290
        %v3771 = vunpack.c.l.b16 %v1291
        %v3772 = vunpack.c.h.b16 %v1291
        %v3773 = vunpack.c.l.b16 %v1292
        %v3774 = vunpack.c.h.b16 %v1292
        %v3775 = vunpack.c.l.b16 %v1293
        %v3776 = vunpack.c.h.b16 %v1293
        %v3777 = vunpack.c.l.b16 %v1294
        %v3778 = vunpack.c.h.b16 %v1294
        %v3779 = vunpack.c.l.b16 %v1295
        %v3780 = vunpack.c.h.b16 %v1295
        %v3781 = vunpack.c.l.b16 %v1296
        %v3782 = vunpack.c.h.b16 %v1296
        %v3783 = vunpack.c.l.b16 %v1297
        %v3784 = vunpack.c.l.b16 %v1298
        %v3785 = vunpack.c.h.b16 %v1298
        %v3786 = vunpack.c.l.b16 %v1299
        %v3787 = vunpack.c.h.b16 %v1299
        %v3788 = vunpack.c.l.b16 %v1300
        %v3789 = vunpack.c.h.b16 %v1300
        %v3790 = vunpack.c.l.b16 %v1301
        %v3791 = vunpack.c.h.b16 %v1301
        %v3792 = vunpack.c.l.b16 %v1302
        %v3793 = vunpack.c.h.b16 %v1302
        %v3794 = vunpack.c.l.b16 %v1303
        %v3795 = vunpack.c.h.b16 %v1303
        %v3796 = vunpack.c.l.b16 %v1304
        %v3797 = vunpack.c.h.b16 %v1304
        %v3798 = vunpack.c.l.b16 %v1305
        %v3799 = vunpack.c.l.b16 %v1306
        %v3800 = vunpack.c.h.b16 %v1306
        %v3801 = vunpack.c.l.b16 %v1307
        %v3802 = vunpack.c.h.b16 %v1307
        %v3803 = vunpack.c.l.b16 %v1308
        %v3804 = vunpack.c.h.b16 %v1308
        %v3805 = vunpack.c.l.b16 %v1309
        %v3806 = vunpack.c.h.b16 %v1309
        %v3807 = vunpack.c.l.b16 %v1310
        %v3808 = vunpack.c.h.b16 %v1310
        %v3809 = vunpack.c.l.b16 %v1311
        %v3810 = vunpack.c.h.b16 %v1311
        %v3811 = vunpack.c.l.b16 %v1312
        %v3812 = vunpack.c.h.b16 %v1312
        %v3813 = vunpack.c.l.b16 %v1313
        %v3814 = vunpack.c.l.b16 %v1314
        %v3815 = vunpack.c.h.b16 %v1314
        %v3816 = vunpack.c.l.b16 %v1315
        %v3817 = vunpack.c.h.b16 %v1315
        %v3818 = vunpack.c.l.b16 %v1316
        %v3819 = vunpack.c.h.b16 %v1316
        %v3820 = vunpack.c.l.b16 %v1317
        %v3821 = vunpack.c.h.b16 %v1317
        %v3822 = vunpack.c.l.b16 %v1318
        %v3823 = vunpack.c.h.b16 %v1318
        %v3824 = vunpack.c.l.b16 %v1319
        %v3825 = vunpack.c.h.b16 %v1319
        %v3826 = vunpack.c.l.b16 %v1320
        %v3827 = vunpack.c.h.b16 %v1320
        %v3828 = vunpack.c.l.b16 %v1321
        %v3829 = vunpack.c.l.b16 %v1322
        %v3830 = vunpack.c.h.b16 %v1322
        %v3831 = vunpack.c.l.b16 %v1323
        %v3832 = vunpack.c.h.b16 %v1323
        %v3833 = vunpack.c.l.b16 %v1324
        %v3834 = vunpack.c.h.b16 %v1324
        %v3835 = vunpack.c.l.b16 %v1325
        %v3836 = vunpack.c.h.b16 %v1325
        %v3837 = vunpack.c.l.b16 %v1326
        %v3838 = vunpack.c.h.b16 %v1326
        %v3839 = vunpack.c.l.b16 %v1327
        %v3840 = vunpack.c.h.b16 %v1327
        %v3841 = vunpack.c.l.b16 %v1328
        %v3842 = vunpack.c.h.b16 %v1328
        %v3843 = vunpack.c.l.b16 %v1329
        %v3844 = vunpack.c.l.b16 %v1330
        %v3845 = vunpack.c.h.b16 %v1330
        %v3846 = vunpack.c.l.b16 %v1331
        %v3847 = vunpack.c.h.b16 %v1331
        %v3848 = vunpack.c.l.b16 %v1332
        %v3849 = vunpack.c.h.b16 %v1332
        %v3850 = vunpack.c.l.b16 %v1333
        %v3851 = vunpack.c.h.b16 %v1333
        %v3852 = vunpack.c.l.b16 %v1334
        %v3853 = vunpack.c.h.b16 %v1334
        %v3854 = vunpack.c.l.b16 %v1335
        %v3855 = vunpack.c.h.b16 %v1335
        %v3856 = vunpack.c.l.b16 %v1336
        %v3857 = vunpack.c.h.b16 %v1336
        %v3858 = vunpack.c.l.b16 %v1337
        %v3859 = vunpack.c.l.b16 %v1338
        %v3860 = vunpack.c.h.b16 %v1338
        %v3861 = vunpack.c.l.b16 %v1339
        %v3862 = vunpack.c.h.b16 %v1339
        %v3863 = vunpack.c.l.b16 %v1340
        %v3864 = vunpack.c.h.b16 %v1340
        %v3865 = vunpack.c.l.b16 %v1341
        %v3866 = vunpack.c.h.b16 %v1341
        %v3867 = vunpack.c.l.b16 %v1342
        %v3868 = vunpack.c.h.b16 %v1342
        %v3869 = vunpack.c.l.b16 %v1343
        %v3870 = vunpack.c.h.b16 %v1343
        %v3871 = vunpack.c.l.b16 %v1344
        %v3872 = vunpack.c.h.b16 %v1344
        %v3873 = vunpack.c.l.b16 %v1345
        %v3874 = vunpack.c.l.b16 %v1346
        %v3875 = vunpack.c.h.b16 %v1346
        %v3876 = vunpack.c.l.b16 %v1347
        %v3877 = vunpack.c.h.b16 %v1347
        %v3878 = vunpack.c.l.b16 %v1348
        %v3879 = vunpack.c.h.b16 %v1348
        %v3880 = vunpack.c.l.b16 %v1349
        %v3881 = vunpack.c.h.b16 %v1349
        %v3882 = vunpack.c.l.b16 %v1350
        %v3883 = vunpack.c.h.b16 %v1350
        %v3884 = vunpack.c.l.b16 %v1351
        %v3885 = vunpack.c.h.b16 %v1351
        %v3886 = vunpack.c.l.b16 %v1352
        %v3887 = vunpack.c.h.b16 %v1352
        %v3888 = vunpack.c.l.b16 %v1353
        %v3889 = vunpack.c.l.b16 %v1354
        %v3890 = vunpack.c.h.b16 %v1354
        %v3891 = vunpack.c.l.b16 %v1355
        %v3892 = vunpack.c.h.b16 %v1355
        %v3893 = vunpack.c.l.b16 %v1356
        %v3894 = vunpack.c.h.b16 %v1356
        %v3895 = vunpack.c.l.b16 %v1357
        %v3896 = vunpack.c.h.b16 %v1357
        %v3897 = vunpack.c.l.b16 %v1358
        %v3898 = vunpack.c.h.b16 %v1358
        %v3899 = vunpack.c.l.b16 %v1359
        %v3900 = vunpack.c.h.b16 %v1359
        %v3901 = vunpack.c.l.b16 %v1360
        %v3902 = vunpack.c.h.b16 %v1360
        %v3903 = vunpack.c.l.b16 %v1361
        %v3904 = vunpack.c.l.b16 %v1362
        %v3905 = vunpack.c.h.b16 %v1362
        %v3906 = vunpack.c.l.b16 %v1363
        %v3907 = vunpack.c.h.b16 %v1363
        %v3908 = vunpack.c.l.b16 %v1364
        %v3909 = vunpack.c.h.b16 %v1364
        %v3910 = vunpack.c.l.b16 %v1365
        %v3911 = vunpack.c.h.b16 %v1365
        %v3912 = vunpack.c.l.b16 %v1366
        %v3913 = vunpack.c.h.b16 %v1366
        %v3914 = vunpack.c.l.b16 %v1367
        %v3915 = vunpack.c.h.b16 %v1367
        %v3916 = vunpack.c.l.b16 %v1368
        %v3917 = vunpack.c.h.b16 %v1368
        %v3918 = vunpack.c.l.b16 %v1369
        %v3919 = vunpack.c.l.b16 %v1370
        %v3920 = vunpack.c.h.b16 %v1370
        %v3921 = vunpack.c.l.b16 %v1371
        %v3922 = vunpack.c.h.b16 %v1371
        %v3923 = vunpack.c.l.b16 %v1372
        %v3924 = vunpack.c.h.b16 %v1372
        %v3925 = vunpack.c.l.b16 %v1373
        %v3926 = vunpack.c.h.b16 %v1373
        %v3927 = vunpack.c.l.b16 %v1374
        %v3928 = vunpack.c.h.b16 %v1374
        %v3929 = vunpack.c.l.b16 %v1375
        %v3930 = vunpack.c.h.b16 %v1375
        %v3931 = vunpack.c.l.b16 %v1376
        %v3932 = vunpack.c.h.b16 %v1376
        %v3933 = vunpack.c.l.b16 %v1377
        %v3934 = vunpack.c.l.b16 %v1378
        %v3935 = vunpack.c.h.b16 %v1378
        %v3936 = vunpack.c.l.b16 %v1379
        %v3937 = vunpack.c.h.b16 %v1379
        %v3938 = vunpack.c.l.b16 %v1380
        %v3939 = vunpack.c.h.b16 %v1380
        %v3940 = vunpack.c.l.b16 %v1381
        %v3941 = vunpack.c.h.b16 %v1381
        %v3942 = vunpack.c.l.b16 %v1382
        %v3943 = vunpack.c.h.b16 %v1382
        %v3944 = vunpack.c.l.b16 %v1383
        %v3945 = vunpack.c.h.b16 %v1383
        %v3946 = vunpack.c.l.b16 %v1384
        %v3947 = vunpack.c.h.b16 %v1384
        %v3948 = vunpack.c.l.b16 %v1385
        %v3949 = vunpack.c.l.b16 %v1386
        %v3950 = vunpack.c.h.b16 %v1386
        %v3951 = vunpack.c.l.b16 %v1387
        %v3952 = vunpack.c.h.b16 %v1387
        %v3953 = vunpack.c.l.b16 %v1388
        %v3954 = vunpack.c.h.b16 %v1388
        %v3955 = vunpack.c.l.b16 %v1389
        %v3956 = vunpack.c.h.b16 %v1389
        %v3957 = vunpack.c.l.b16 %v1390
        %v3958 = vunpack.c.h.b16 %v1390
        %v3959 = vunpack.c.l.b16 %v1391
        %v3960 = vunpack.c.h.b16 %v1391
        %v3961 = vunpack.c.l.b16 %v1392
        %v3962 = vunpack.c.h.b16 %v1392
        %v3963 = vunpack.c.l.b16 %v1393
        %v3964 = vunpack.c.l.b16 %v1394
        %v3965 = vunpack.c.h.b16 %v1394
        %v3966 = vunpack.c.l.b16 %v1395
        %v3967 = vunpack.c.h.b16 %v1395
        %v3968 = vunpack.c.l.b16 %v1396
        %v3969 = vunpack.c.h.b16 %v1396
        %v3970 = vunpack.c.l.b16 %v1397
        %v3971 = vunpack.c.h.b16 %v1397
        %v3972 = vunpack.c.l.b16 %v1398
        %v3973 = vunpack.c.h.b16 %v1398
        %v3974 = vunpack.c.l.b16 %v1399
        %v3975 = vunpack.c.h.b16 %v1399
        %v3976 = vunpack.c.l.b16 %v1400
        %v3977 = vunpack.c.h.b16 %v1400
        %v3978 = vunpack.c.l.b16 %v1401
        %v3979 = vunpack.c.l.b16 %v1402
        %v3980 = vunpack.c.h.b16 %v1402
        %v3981 = vunpack.c.l.b16 %v1403
        %v3982 = vunpack.c.h.b16 %v1403
        %v3983 = vunpack.c.l.b16 %v1404
        %v3984 = vunpack.c.h.b16 %v1404
        %v3985 = vunpack.c.l.b16 %v1405
        %v3986 = vunpack.c.h.b16 %v1405
        %v3987 = vunpack.c.l.b16 %v1406
        %v3988 = vunpack.c.h.b16 %v1406
        %v3989 = vunpack.c.l.b16 %v1407
        %v3990 = vunpack.c.h.b16 %v1407
        %v3991 = vunpack.c.l.b16 %v1408
        %v3992 = vunpack.c.h.b16 %v1408
        %v3993 = vunpack.c.l.b16 %v1409
        %v3994 = vunpack.c.l.b16 %v1410
        %v3995 = vunpack.c.h.b16 %v1410
        %v3996 = vunpack.c.l.b16 %v1411
        %v3997 = vunpack.c.h.b16 %v1411
        %v3998 = vunpack.c.l.b16 %v1412
        %v3999 = vunpack.c.h.b16 %v1412
        %v4000 = vunpack.c.l.b16 %v1413
        %v4001 = vunpack.c.h.b16 %v1413
        %v4002 = vunpack.c.l.b16 %v1414
        %v4003 = vunpack.c.h.b16 %v1414
        %v4004 = vunpack.c.l.b16 %v1415
        %v4005 = vunpack.c.h.b16 %v1415
        %v4006 = vunpack.c.l.b16 %v1416
        %v4007 = vunpack.c.h.b16 %v1416
        %v4008 = vunpack.c.l.b16 %v1417
        %v4009 = vunpack.c.l.b16 %v1418
        %v4010 = vunpack.c.h.b16 %v1418
        %v4011 = vunpack.c.l.b16 %v1419
        %v4012 = vunpack.c.h.b16 %v1419
        %v4013 = vunpack.c.l.b16 %v1420
        %v4014 = vunpack.c.h.b16 %v1420
        %v4015 = vunpack.c.l.b16 %v1421
        %v4016 = vunpack.c.h.b16 %v1421
        %v4017 = vunpack.c.l.b16 %v1422
        %v4018 = vunpack.c.h.b16 %v1422
        %v4019 = vunpack.c.l.b16 %v1423
        %v4020 = vunpack.c.h.b16 %v1423
        %v4021 = vunpack.c.l.b16 %v1424
        %v4022 = vunpack.c.h.b16 %v1424
        %v4023 = vunpack.c.l.b16 %v1425
        %v4024 = vunpack.c.l.b16 %v1426
        %v4025 = vunpack.c.h.b16 %v1426
        %v4026 = vunpack.c.l.b16 %v1427
        %v4027 = vunpack.c.h.b16 %v1427
        %v4028 = vunpack.c.l.b16 %v1428
        %v4029 = vunpack.c.h.b16 %v1428
        %v4030 = vunpack.c.l.b16 %v1429
        %v4031 = vunpack.c.h.b16 %v1429
        %v4032 = vunpack.c.l.b16 %v1430
        %v4033 = vunpack.c.h.b16 %v1430
        %v4034 = vunpack.c.l.b16 %v1431
        %v4035 = vunpack.c.h.b16 %v1431
        %v4036 = vunpack.c.l.b16 %v1432
        %v4037 = vunpack.c.h.b16 %v1432
        %v4038 = vunpack.c.l.b16 %v1433
        %v4039 = vunpack.c.l.b16 %v1434
        %v4040 = vunpack.c.h.b16 %v1434
        %v4041 = vunpack.c.l.b16 %v1435
        %v4042 = vunpack.c.h.b16 %v1435
        %v4043 = vunpack.c.l.b16 %v1436
        %v4044 = vunpack.c.h.b16 %v1436
        %v4045 = vunpack.c.l.b16 %v1437
        %v4046 = vunpack.c.h.b16 %v1437
        %v4047 = vunpack.c.l.b16 %v1438
        %v4048 = vunpack.c.h.b16 %v1438
        %v4049 = vunpack.c.l.b16 %v1439
        %v4050 = vunpack.c.h.b16 %v1439
        %v4051 = vunpack.c.l.b16 %v1440
        %v4052 = vunpack.c.h.b16 %v1440
        %v4053 = vunpack.c.l.b16 %v1441
        %v4054 = vunpack.c.l.b16 %v1442
        %v4055 = vunpack.c.h.b16 %v1442
        %v4056 = vunpack.c.l.b16 %v1443
        %v4057 = vunpack.c.h.b16 %v1443
        %v4058 = vunpack.c.l.b16 %v1444
        %v4059 = vunpack.c.h.b16 %v1444
        %v4060 = vunpack.c.l.b16 %v1445
        %v4061 = vunpack.c.h.b16 %v1445
        %v4062 = vunpack.c.l.b16 %v1446
        %v4063 = vunpack.c.h.b16 %v1446
        %v4064 = vunpack.c.l.b16 %v1447
        %v4065 = vunpack.c.h.b16 %v1447
        %v4066 = vunpack.c.l.b16 %v1448
        %v4067 = vunpack.c.h.b16 %v1448
        %v4068 = vunpack.c.l.b16 %v1449
        %v4069 = vunpack.c.l.b16 %v1450
        %v4070 = vunpack.c.h.b16 %v1450
        %v4071 = vunpack.c.l.b16 %v1451
        %v4072 = vunpack.c.h.b16 %v1451
        %v4073 = vunpack.c.l.b16 %v1452
        %v4074 = vunpack.c.h.b16 %v1452
        %v4075 = vunpack.c.l.b16 %v1453
        %v4076 = vunpack.c.h.b16 %v1453
        %v4077 = vunpack.c.l.b16 %v1454
        %v4078 = vunpack.c.h.b16 %v1454
        %v4079 = vunpack.c.l.b16 %v1455
        %v4080 = vunpack.c.h.b16 %v1455
        %v4081 = vunpack.c.l.b16 %v1456
        %v4082 = vunpack.c.h.b16 %v1456
        %v4083 = vunpack.c.l.b16 %v1457
        %v4084 = vunpack.c.l.b16 %v1458
        %v4085 = vunpack.c.h.b16 %v1458
        %v4086 = vunpack.c.l.b16 %v1459
        %v4087 = vunpack.c.h.b16 %v1459
        %v4088 = vunpack.c.l.b16 %v1460
        %v4089 = vunpack.c.h.b16 %v1460
        %v4090 = vunpack.c.l.b16 %v1461
        %v4091 = vunpack.c.h.b16 %v1461
        %v4092 = vunpack.c.l.b16 %v1462
        %v4093 = vunpack.c.h.b16 %v1462
        %v4094 = vunpack.c.l.b16 %v1463
        %v4095 = vunpack.c.h.b16 %v1463
        %v4096 = vunpack.c.l.b16 %v1464
        %v4097 = vunpack.c.h.b16 %v1464
        %v4098 = vunpack.c.l.b16 %v1465
        %v4099 = vunpack.c.l.b16 %v1466
        %v4100 = vunpack.c.h.b16 %v1466
        %v4101 = vunpack.c.l.b16 %v1467
        %v4102 = vunpack.c.h.b16 %v1467
        %v4103 = vunpack.c.l.b16 %v1468
        %v4104 = vunpack.c.h.b16 %v1468
        %v4105 = vunpack.c.l.b16 %v1469
        %v4106 = vunpack.c.h.b16 %v1469
        %v4107 = vunpack.c.l.b16 %v1470
        %v4108 = vunpack.c.h.b16 %v1470
        %v4109 = vunpack.c.l.b16 %v1471
        %v4110 = vunpack.c.h.b16 %v1471
        %v4111 = vunpack.c.l.b16 %v1472
        %v4112 = vunpack.c.h.b16 %v1472
        %v4113 = vunpack.c.l.b16 %v1473
        %v4114 = vunpack.c.l.b16 %v1474
        %v4115 = vunpack.c.h.b16 %v1474
        %v4116 = vunpack.c.l.b16 %v1475
        %v4117 = vunpack.c.h.b16 %v1475
        %v4118 = vunpack.c.l.b16 %v1476
        %v4119 = vunpack.c.h.b16 %v1476
        %v4120 = vunpack.c.l.b16 %v1477
        %v4121 = vunpack.c.h.b16 %v1477
        %v4122 = vunpack.c.l.b16 %v1478
        %v4123 = vunpack.c.h.b16 %v1478
        %v4124 = vunpack.c.l.b16 %v1479
        %v4125 = vunpack.c.h.b16 %v1479
        %v4126 = vunpack.c.l.b16 %v1480
        %v4127 = vunpack.c.h.b16 %v1480
        %v4128 = vunpack.c.l.b16 %v1481
        %v4129 = vunpack.c.l.b16 %v1482
        %v4130 = vunpack.c.h.b16 %v1482
        %v4131 = vunpack.c.l.b16 %v1483
        %v4132 = vunpack.c.h.b16 %v1483
        %v4133 = vunpack.c.l.b16 %v1484
        %v4134 = vunpack.c.h.b16 %v1484
        %v4135 = vunpack.c.l.b16 %v1485
        %v4136 = vunpack.c.h.b16 %v1485
        %v4137 = vunpack.c.l.b16 %v1486
        %v4138 = vunpack.c.h.b16 %v1486
        %v4139 = vunpack.c.l.b16 %v1487
        %v4140 = vunpack.c.h.b16 %v1487
        %v4141 = vunpack.c.l.b16 %v1488
        %v4142 = vunpack.c.h.b16 %v1488
        %v4143 = vunpack.c.l.b16 %v1489
        %v4144 = vunpack.c.l.b16 %v1490
        %v4145 = vunpack.c.h.b16 %v1490
        %v4146 = vunpack.c.l.b16 %v1491
        %v4147 = vunpack.c.h.b16 %v1491
        %v4148 = vunpack.c.l.b16 %v1492
        %v4149 = vunpack.c.h.b16 %v1492
        %v4150 = vunpack.c.l.b16 %v1493
        %v4151 = vunpack.c.h.b16 %v1493
        %v4152 = vunpack.c.l.b16 %v1494
        %v4153 = vunpack.c.h.b16 %v1494
        %v4154 = vunpack.c.l.b16 %v1495
        %v4155 = vunpack.c.h.b16 %v1495
        %v4156 = vunpack.c.l.b16 %v1496
        %v4157 = vunpack.c.h.b16 %v1496
        %v4158 = vunpack.c.l.b16 %v1497
        %v4159 = vunpack.c.l.b16 %v1498
        %v4160 = vunpack.c.h.b16 %v1498
        %v4161 = vunpack.c.l.b16 %v1499
        %v4162 = vunpack.c.h.b16 %v1499
        %v4163 = vunpack.c.l.b16 %v1500
        %v4164 = vunpack.c.h.b16 %v1500
        %v4165 = vunpack.c.l.b16 %v1501
        %v4166 = vunpack.c.h.b16 %v1501
        %v4167 = vunpack.c.l.b16 %v1502
        %v4168 = vunpack.c.h.b16 %v1502
        %v4169 = vunpack.c.l.b16 %v1503
        %v4170 = vunpack.c.h.b16 %v1503
        %v4171 = vunpack.c.l.b16 %v1504
        %v4172 = vunpack.c.h.b16 %v1504
        %v4173 = vunpack.c.l.b16 %v1505
        %v4174 = vunpack.c.l.b16 %v1506
        %v4175 = vunpack.c.h.b16 %v1506
        %v4176 = vunpack.c.l.b16 %v1507
        %v4177 = vunpack.c.h.b16 %v1507
        %v4178 = vunpack.c.l.b16 %v1508
        %v4179 = vunpack.c.h.b16 %v1508
        %v4180 = vunpack.c.l.b16 %v1509
        %v4181 = vunpack.c.h.b16 %v1509
        %v4182 = vunpack.c.l.b16 %v1510
        %v4183 = vunpack.c.h.b16 %v1510
        %v4184 = vunpack.c.l.b16 %v1511
        %v4185 = vunpack.c.h.b16 %v1511
        %v4186 = vunpack.c.l.b16 %v1512
        %v4187 = vunpack.c.h.b16 %v1512
        %v4188 = vunpack.c.l.b16 %v1513
        %v4189 = vunpack.c.l.b16 %v1514
        %v4190 = vunpack.c.h.b16 %v1514
        %v4191 = vunpack.c.l.b16 %v1515
        %v4192 = vunpack.c.h.b16 %v1515
        %v4193 = vunpack.c.l.b16 %v1516
        %v4194 = vunpack.c.h.b16 %v1516
        %v4195 = vunpack.c.l.b16 %v1517
        %v4196 = vunpack.c.h.b16 %v1517
        %v4197 = vunpack.c.l.b16 %v1518
        %v4198 = vunpack.c.h.b16 %v1518
        %v4199 = vunpack.c.l.b16 %v1519
        %v4200 = vunpack.c.h.b16 %v1519
        %v4201 = vunpack.c.l.b16 %v1520
        %v4202 = vunpack.c.h.b16 %v1520
        %v4203 = vunpack.c.l.b16 %v1521
        %v4204 = vunpack.c.l.b16 %v1522
        %v4205 = vunpack.c.h.b16 %v1522
        %v4206 = vunpack.c.l.b16 %v1523
        %v4207 = vunpack.c.h.b16 %v1523
        %v4208 = vunpack.c.l.b16 %v1524
        %v4209 = vunpack.c.h.b16 %v1524
        %v4210 = vunpack.c.l.b16 %v1525
        %v4211 = vunpack.c.h.b16 %v1525
        %v4212 = vunpack.c.l.b16 %v1526
        %v4213 = vunpack.c.h.b16 %v1526
        %v4214 = vunpack.c.l.b16 %v1527
        %v4215 = vunpack.c.h.b16 %v1527
        %v4216 = vunpack.c.l.b16 %v1528
        %v4217 = vunpack.c.h.b16 %v1528
        %v4218 = vunpack.c.l.b16 %v1529
        %v4219 = vunpack.c.l.b16 %v1530
        %v4220 = vunpack.c.h.b16 %v1530
        %v4221 = vunpack.c.l.b16 %v1531
        %v4222 = vunpack.c.h.b16 %v1531
        %v4223 = vunpack.c.l.b16 %v1532
        %v4224 = vunpack.c.h.b16 %v1532
        %v4225 = vunpack.c.l.b16 %v1533
        %v4226 = vunpack.c.h.b16 %v1533
        %v4227 = vunpack.c.l.b16 %v1534
        %v4228 = vunpack.c.h.b16 %v1534
        %v4229 = vunpack.c.l.b16 %v1535
        %v4230 = vunpack.c.h.b16 %v1535
        %v4231 = vunpack.c.l.b16 %v1536
        %v4232 = vunpack.c.h.b16 %v1536
        %v4233 = vunpack.c.l.b16 %v1537
        %v4234 = vunpack.c.l.b16 %v1538
        %v4235 = vunpack.c.h.b16 %v1538
        %v4236 = vunpack.c.l.b16 %v1539
        %v4237 = vunpack.c.h.b16 %v1539
        %v4238 = vunpack.c.l.b16 %v1540
        %v4239 = vunpack.c.h.b16 %v1540
        %v4240 = vunpack.c.l.b16 %v1541
        %v4241 = vunpack.c.h.b16 %v1541
        %v4242 = vunpack.c.l.b16 %v1542
        %v4243 = vunpack.c.h.b16 %v1542
        %v4244 = vunpack.c.l.b16 %v1543
        %v4245 = vunpack.c.h.b16 %v1543
        %v4246 = vunpack.c.l.b16 %v1544
        %v4247 = vunpack.c.h.b16 %v1544
        %v4248 = vunpack.c.l.b16 %v1545
        %v4249 = vunpack.c.l.b16 %v1546
        %v4250 = vunpack.c.h.b16 %v1546
        %v4251 = vunpack.c.l.b16 %v1547
        %v4252 = vunpack.c.h.b16 %v1547
        %v4253 = vunpack.c.l.b16 %v1548
        %v4254 = vunpack.c.h.b16 %v1548
        %v4255 = vunpack.c.l.b16 %v1549
        %v4256 = vunpack.c.h.b16 %v1549
        %v4257 = vunpack.c.l.b16 %v1550
        %v4258 = vunpack.c.h.b16 %v1550
        %v4259 = vunpack.c.l.b16 %v1551
        %v4260 = vunpack.c.h.b16 %v1551
        %v4261 = vunpack.c.l.b16 %v1552
        %v4262 = vunpack.c.h.b16 %v1552
        %v4263 = vunpack.c.l.b16 %v1553
        %v4264 = vunpack.c.l.b16 %v1554
        %v4265 = vunpack.c.h.b16 %v1554
        %v4266 = vunpack.c.l.b16 %v1555
        %v4267 = vunpack.c.h.b16 %v1555
        %v4268 = vunpack.c.l.b16 %v1556
        %v4269 = vunpack.c.h.b16 %v1556
        %v4270 = vunpack.c.l.b16 %v1557
        %v4271 = vunpack.c.h.b16 %v1557
        %v4272 = vunpack.c.l.b16 %v1558
        %v4273 = vunpack.c.h.b16 %v1558
        %v4274 = vunpack.c.l.b16 %v1559
        %v4275 = vunpack.c.h.b16 %v1559
        %v4276 = vunpack.c.l.b16 %v1560
        %v4277 = vunpack.c.h.b16 %v1560
        %v4278 = vunpack.c.l.b16 %v1561
        %v4279 = vunpack.c.l.b16 %v1562
        %v4280 = vunpack.c.h.b16 %v1562
        %v4281 = vunpack.c.l.b16 %v1563
        %v4282 = vunpack.c.h.b16 %v1563
        %v4283 = vunpack.c.l.b16 %v1564
        %v4284 = vunpack.c.h.b16 %v1564
        %v4285 = vunpack.c.l.b16 %v1565
        %v4286 = vunpack.c.h.b16 %v1565
        %v4287 = vunpack.c.l.b16 %v1566
        %v4288 = vunpack.c.h.b16 %v1566
        %v4289 = vunpack.c.l.b16 %v1567
        %v4290 = vunpack.c.h.b16 %v1567
        %v4291 = vunpack.c.l.b16 %v1568
        %v4292 = vunpack.c.h.b16 %v1568
        %v4293 = vunpack.c.l.b16 %v1569
        %v4294 = vunpack.c.l.b16 %v1570
        %v4295 = vunpack.c.h.b16 %v1570
        %v4296 = vunpack.c.l.b16 %v1571
        %v4297 = vunpack.c.h.b16 %v1571
        %v4298 = vunpack.c.l.b16 %v1572
        %v4299 = vunpack.c.h.b16 %v1572
        %v4300 = vunpack.c.l.b16 %v1573
        %v4301 = vunpack.c.h.b16 %v1573
        %v4302 = vunpack.c.l.b16 %v1574
        %v4303 = vunpack.c.h.b16 %v1574
        %v4304 = vunpack.c.l.b16 %v1575
        %v4305 = vunpack.c.h.b16 %v1575
        %v4306 = vunpack.c.l.b16 %v1576
        %v4307 = vunpack.c.h.b16 %v1576
        %v4308 = vunpack.c.l.b16 %v1577
        %v4309 = vunpack.c.l.b16 %v1578
        %v4310 = vunpack.c.h.b16 %v1578
        %v4311 = vunpack.c.l.b16 %v1579
        %v4312 = vunpack.c.h.b16 %v1579
        %v4313 = vunpack.c.l.b16 %v1580
        %v4314 = vunpack.c.h.b16 %v1580
        %v4315 = vunpack.c.l.b16 %v1581
        %v4316 = vunpack.c.h.b16 %v1581
        %v4317 = vunpack.c.l.b16 %v1582
        %v4318 = vunpack.c.h.b16 %v1582
        %v4319 = vunpack.c.l.b16 %v1583
        %v4320 = vunpack.c.h.b16 %v1583
        %v4321 = vunpack.c.l.b16 %v1584
        %v4322 = vunpack.c.h.b16 %v1584
        %v4323 = vunpack.c.l.b16 %v1585
        %v4324 = vunpack.c.l.b16 %v1586
        %v4325 = vunpack.c.h.b16 %v1586
        %v4326 = vunpack.c.l.b16 %v1587
        %v4327 = vunpack.c.h.b16 %v1587
        %v4328 = vunpack.c.l.b16 %v1588
        %v4329 = vunpack.c.h.b16 %v1588
        %v4330 = vunpack.c.l.b16 %v1589
        %v4331 = vunpack.c.h.b16 %v1589
        %v4332 = vunpack.c.l.b16 %v1590
        %v4333 = vunpack.c.h.b16 %v1590
        %v4334 = vunpack.c.l.b16 %v1591
        %v4335 = vunpack.c.h.b16 %v1591
        %v4336 = vunpack.c.l.b16 %v1592
        %v4337 = vunpack.c.h.b16 %v1592
        %v4338 = vunpack.c.l.b16 %v1593
        %v4339 = vunpack.c.l.b16 %v1594
        %v4340 = vunpack.c.h.b16 %v1594
        %v4341 = vunpack.c.l.b16 %v1595
        %v4342 = vunpack.c.h.b16 %v1595
        %v4343 = vunpack.c.l.b16 %v1596
        %v4344 = vunpack.c.h.b16 %v1596
        %v4345 = vunpack.c.l.b16 %v1597
        %v4346 = vunpack.c.h.b16 %v1597
        %v4347 = vunpack.c.l.b16 %v1598
        %v4348 = vunpack.c.h.b16 %v1598
        %v4349 = vunpack.c.l.b16 %v1599
        %v4350 = vunpack.c.h.b16 %v1599
        %v4351 = vunpack.c.l.b16 %v1600
        %v4352 = vunpack.c.h.b16 %v1600
        %v4353 = vunpack.c.l.b16 %v1601
        %v4354 = vunpack.c.l.b16 %v1602
        %v4355 = vunpack.c.h.b16 %v1602
        %v4356 = vunpack.c.l.b16 %v1603
        %v4357 = vunpack.c.h.b16 %v1603
        %v4358 = vunpack.c.l.b16 %v1604
        %v4359 = vunpack.c.h.b16 %v1604
        %v4360 = vunpack.c.l.b16 %v1605
        %v4361 = vunpack.c.h.b16 %v1605
        %v4362 = vunpack.c.l.b16 %v1606
        %v4363 = vunpack.c.h.b16 %v1606
        %v4364 = vunpack.c.l.b16 %v1607
        %v4365 = vunpack.c.h.b16 %v1607
        %v4366 = vunpack.c.l.b16 %v1608
        %v4367 = vunpack.c.h.b16 %v1608
        %v4368 = vunpack.c.l.b16 %v1609
        %v4369 = vunpack.c.l.b16 %v1610
        %v4370 = vunpack.c.h.b16 %v1610
        %v4371 = vunpack.c.l.b16 %v1611
        %v4372 = vunpack.c.h.b16 %v1611
        %v4373 = vunpack.c.l.b16 %v1612
        %v4374 = vunpack.c.h.b16 %v1612
        %v4375 = vunpack.c.l.b16 %v1613
        %v4376 = vunpack.c.h.b16 %v1613
        %v4377 = vunpack.c.l.b16 %v1614
        %v4378 = vunpack.c.h.b16 %v1614
        %v4379 = vunpack.c.l.b16 %v1615
        %v4380 = vunpack.c.h.b16 %v1615
        %v4381 = vunpack.c.l.b16 %v1616
        %v4382 = vunpack.c.h.b16 %v1616
        %v4383 = vunpack.c.l.b16 %v1617
        %v4384 = vunpack.c.l.b16 %v1618
        %v4385 = vunpack.c.h.b16 %v1618
        %v4386 = vunpack.c.l.b16 %v1619
        %v4387 = vunpack.c.h.b16 %v1619
        %v4388 = vunpack.c.l.b16 %v1620
        %v4389 = vunpack.c.h.b16 %v1620
        %v4390 = vunpack.c.l.b16 %v1621
        %v4391 = vunpack.c.h.b16 %v1621
        %v4392 = vunpack.c.l.b16 %v1622
        %v4393 = vunpack.c.h.b16 %v1622
        %v4394 = vunpack.c.l.b16 %v1623
        %v4395 = vunpack.c.h.b16 %v1623
        %v4396 = vunpack.c.l.b16 %v1624
        %v4397 = vunpack.c.h.b16 %v1624
        %v4398 = vunpack.c.l.b16 %v1625
        %v4399 = vunpack.c.l.b16 %v1626
        %v4400 = vunpack.c.h.b16 %v1626
        %v4401 = vunpack.c.l.b16 %v1627
        %v4402 = vunpack.c.h.b16 %v1627
        %v4403 = vunpack.c.l.b16 %v1628
        %v4404 = vunpack.c.h.b16 %v1628
        %v4405 = vunpack.c.l.b16 %v1629
        %v4406 = vunpack.c.h.b16 %v1629
        %v4407 = vunpack.c.l.b16 %v1630
        %v4408 = vunpack.c.h.b16 %v1630
        %v4409 = vunpack.c.l.b16 %v1631
        %v4410 = vunpack.c.h.b16 %v1631
        %v4411 = vunpack.c.l.b16 %v1632
        %v4412 = vunpack.c.h.b16 %v1632
        %v4413 = vunpack.c.l.b16 %v1633
        %v4414 = vunpack.c.l.b16 %v1634
        %v4415 = vunpack.c.h.b16 %v1634
        %v4416 = vunpack.c.l.b16 %v1635
        %v4417 = vunpack.c.h.b16 %v1635
        %v4418 = vunpack.c.l.b16 %v1636
        %v4419 = vunpack.c.h.b16 %v1636
        %v4420 = vunpack.c.l.b16 %v1637
        %v4421 = vunpack.c.h.b16 %v1637
        %v4422 = vunpack.c.l.b16 %v1638
        %v4423 = vunpack.c.h.b16 %v1638
        %v4424 = vunpack.c.l.b16 %v1639
        %v4425 = vunpack.c.h.b16 %v1639
        %v4426 = vunpack.c.l.b16 %v1640
        %v4427 = vunpack.c.h.b16 %v1640
        %v4428 = vunpack.c.l.b16 %v1641
        %v4429 = vunpack.c.l.b16 %v1642
        %v4430 = vunpack.c.h.b16 %v1642
        %v4431 = vunpack.c.l.b16 %v1643
        %v4432 = vunpack.c.h.b16 %v1643
        %v4433 = vunpack.c.l.b16 %v1644
        %v4434 = vunpack.c.h.b16 %v1644
        %v4435 = vunpack.c.l.b16 %v1645
        %v4436 = vunpack.c.h.b16 %v1645
        %v4437 = vunpack.c.l.b16 %v1646
        %v4438 = vunpack.c.h.b16 %v1646
        %v4439 = vunpack.c.l.b16 %v1647
        %v4440 = vunpack.c.h.b16 %v1647
        %v4441 = vunpack.c.l.b16 %v1648
        %v4442 = vunpack.c.h.b16 %v1648
        %v4443 = vunpack.c.l.b16 %v1649
        %v4444 = vunpack.c.l.b16 %v1650
        %v4445 = vunpack.c.h.b16 %v1650
        %v4446 = vunpack.c.l.b16 %v1651
        %v4447 = vunpack.c.h.b16 %v1651
        %v4448 = vunpack.c.l.b16 %v1652
        %v4449 = vunpack.c.h.b16 %v1652
        %v4450 = vunpack.c.l.b16 %v1653
        %v4451 = vunpack.c.h.b16 %v1653
        %v4452 = vunpack.c.l.b16 %v1654
        %v4453 = vunpack.c.h.b16 %v1654
        %v4454 = vunpack.c.l.b16 %v1655
        %v4455 = vunpack.c.h.b16 %v1655
        %v4456 = vunpack.c.l.b16 %v1656
        %v4457 = vunpack.c.h.b16 %v1656
        %v4458 = vunpack.c.l.b16 %v1657
        %v4459 = vunpack.c.l.b16 %v1658
        %v4460 = vunpack.c.h.b16 %v1658
        %v4461 = vunpack.c.l.b16 %v1659
        %v4462 = vunpack.c.h.b16 %v1659
        %v4463 = vunpack.c.l.b16 %v1660
        %v4464 = vunpack.c.h.b16 %v1660
        %v4465 = vunpack.c.l.b16 %v1661
        %v4466 = vunpack.c.h.b16 %v1661
        %v4467 = vunpack.c.l.b16 %v1662
        %v4468 = vunpack.c.h.b16 %v1662
        %v4469 = vunpack.c.l.b16 %v1663
        %v4470 = vunpack.c.h.b16 %v1663
        %v4471 = vunpack.c.l.b16 %v1664
        %v4472 = vunpack.c.h.b16 %v1664
        %v4473 = vunpack.c.l.b16 %v1665
        %v4474 = vunpack.c.l.b16 %v1666
        %v4475 = vunpack.c.h.b16 %v1666
        %v4476 = vunpack.c.l.b16 %v1667
        %v4477 = vunpack.c.h.b16 %v1667
        %v4478 = vunpack.c.l.b16 %v1668
        %v4479 = vunpack.c.h.b16 %v1668
        %v4480 = vunpack.c.l.b16 %v1669
        %v4481 = vunpack.c.h.b16 %v1669
        %v4482 = vunpack.c.l.b16 %v1670
        %v4483 = vunpack.c.h.b16 %v1670
        %v4484 = vunpack.c.l.b16 %v1671
        %v4485 = vunpack.c.h.b16 %v1671
        %v4486 = vunpack.c.l.b16 %v1672
        %v4487 = vunpack.c.h.b16 %v1672
        %v4488 = vunpack.c.l.b16 %v1673
        %v4489 = vunpack.c.l.b16 %v1674
        %v4490 = vunpack.c.h.b16 %v1674
        %v4491 = vunpack.c.l.b16 %v1675
        %v4492 = vunpack.c.h.b16 %v1675
        %v4493 = vunpack.c.l.b16 %v1676
        %v4494 = vunpack.c.h.b16 %v1676
        %v4495 = vunpack.c.l.b16 %v1677
        %v4496 = vunpack.c.h.b16 %v1677
        %v4497 = vunpack.c.l.b16 %v1678
        %v4498 = vunpack.c.h.b16 %v1678
        %v4499 = vunpack.c.l.b16 %v1679
        %v4500 = vunpack.c.h.b16 %v1679
        %v4501 = vunpack.c.l.b16 %v1680
        %v4502 = vunpack.c.h.b16 %v1680
        %v4503 = vunpack.c.l.b16 %v1681
        %v4504 = vunpack.c.l.b16 %v1682
        %v4505 = vunpack.c.h.b16 %v1682
        %v4506 = vunpack.c.l.b16 %v1683
        %v4507 = vunpack.c.h.b16 %v1683
        %v4508 = vunpack.c.l.b16 %v1684
        %v4509 = vunpack.c.h.b16 %v1684
        %v4510 = vunpack.c.l.b16 %v1685
        %v4511 = vunpack.c.h.b16 %v1685
        %v4512 = vunpack.c.l.b16 %v1686
        %v4513 = vunpack.c.h.b16 %v1686
        %v4514 = vunpack.c.l.b16 %v1687
        %v4515 = vunpack.c.h.b16 %v1687
        %v4516 = vunpack.c.l.b16 %v1688
        %v4517 = vunpack.c.h.b16 %v1688
        %v4518 = vunpack.c.l.b16 %v1689
        %v4519 = vunpack.c.l.b16 %v1690
        %v4520 = vunpack.c.h.b16 %v1690
        %v4521 = vunpack.c.l.b16 %v1691
        %v4522 = vunpack.c.h.b16 %v1691
        %v4523 = vunpack.c.l.b16 %v1692
        %v4524 = vunpack.c.h.b16 %v1692
        %v4525 = vunpack.c.l.b16 %v1693
        %v4526 = vunpack.c.h.b16 %v1693
        %v4527 = vunpack.c.l.b16 %v1694
        %v4528 = vunpack.c.h.b16 %v1694
        %v4529 = vunpack.c.l.b16 %v1695
        %v4530 = vunpack.c.h.b16 %v1695
        %v4531 = vunpack.c.l.b16 %v1696
        %v4532 = vunpack.c.h.b16 %v1696
        %v4533 = vunpack.c.l.b16 %v1697
        %v4534 = vunpack.c.l.b16 %v1698
        %v4535 = vunpack.c.h.b16 %v1698
        %v4536 = vunpack.c.l.b16 %v1699
        %v4537 = vunpack.c.h.b16 %v1699
        %v4538 = vunpack.c.l.b16 %v1700
        %v4539 = vunpack.c.h.b16 %v1700
        %v4540 = vunpack.c.l.b16 %v1701
        %v4541 = vunpack.c.h.b16 %v1701
        %v4542 = vunpack.c.l.b16 %v1702
        %v4543 = vunpack.c.h.b16 %v1702
        %v4544 = vunpack.c.l.b16 %v1703
        %v4545 = vunpack.c.h.b16 %v1703
        %v4546 = vunpack.c.l.b16 %v1704
        %v4547 = vunpack.c.h.b16 %v1704
        %v4548 = vunpack.c.l.b16 %v1705
        %v4549 = vunpack.c.l.b16 %v1706
        %v4550 = vunpack.c.h.b16 %v1706
        %v4551 = vunpack.c.l.b16 %v1707
        %v4552 = vunpack.c.h.b16 %v1707
        %v4553 = vunpack.c.l.b16 %v1708
        %v4554 = vunpack.c.h.b16 %v1708
        %v4555 = vunpack.c.l.b16 %v1709
        %v4556 = vunpack.c.h.b16 %v1709
        %v4557 = vunpack.c.l.b16 %v1710
        %v4558 = vunpack.c.h.b16 %v1710
        %v4559 = vunpack.c.l.b16 %v1711
        %v4560 = vunpack.c.h.b16 %v1711
        %v4561 = vunpack.c.l.b16 %v1712
        %v4562 = vunpack.c.h.b16 %v1712
        %v4563 = vunpack.c.l.b16 %v1713
        %v4564 = vunpack.c.l.b16 %v1714
        %v4565 = vunpack.c.h.b16 %v1714
        %v4566 = vunpack.c.l.b16 %v1715
        %v4567 = vunpack.c.h.b16 %v1715
        %v4568 = vunpack.c.l.b16 %v1716
        %v4569 = vunpack.c.h.b16 %v1716
        %v4570 = vunpack.c.l.b16 %v1717
        %v4571 = vunpack.c.h.b16 %v1717
        %v4572 = vunpack.c.l.b16 %v1718
        %v4573 = vunpack.c.h.b16 %v1718
        %v4574 = vunpack.c.l.b16 %v1719
        %v4575 = vunpack.c.h.b16 %v1719
        %v4576 = vunpack.c.l.b16 %v1720
        %v4577 = vunpack.c.h.b16 %v1720
        %v4578 = vunpack.c.l.b16 %v1721
        %v4579 = vunpack.c.l.b16 %v1722
        %v4580 = vunpack.c.h.b16 %v1722
        %v4581 = vunpack.c.l.b16 %v1723
        %v4582 = vunpack.c.h.b16 %v1723
        %v4583 = vunpack.c.l.b16 %v1724
        %v4584 = vunpack.c.h.b16 %v1724
        %v4585 = vunpack.c.l.b16 %v1725
        %v4586 = vunpack.c.h.b16 %v1725
        %v4587 = vunpack.c.l.b16 %v1726
        %v4588 = vunpack.c.h.b16 %v1726
        %v4589 = vunpack.c.l.b16 %v1727
        %v4590 = vunpack.c.h.b16 %v1727
        %v4591 = vunpack.c.l.b16 %v1728
        %v4592 = vunpack.c.h.b16 %v1728
        %v4593 = vunpack.c.l.b16 %v1729
        %v4594 = vunpack.c.l.b16 %v1730
        %v4595 = vunpack.c.h.b16 %v1730
        %v4596 = vunpack.c.l.b16 %v1731
        %v4597 = vunpack.c.h.b16 %v1731
        %v4598 = vunpack.c.l.b16 %v1732
        %v4599 = vunpack.c.h.b16 %v1732
        %v4600 = vunpack.c.l.b16 %v1733
        %v4601 = vunpack.c.h.b16 %v1733
        %v4602 = vunpack.c.l.b16 %v1734
        %v4603 = vunpack.c.h.b16 %v1734
        %v4604 = vunpack.c.l.b16 %v1735
        %v4605 = vunpack.c.h.b16 %v1735
        %v4606 = vunpack.c.l.b16 %v1736
        %v4607 = vunpack.c.h.b16 %v1736
        %v4608 = vunpack.c.l.b16 %v1737
        %v4609 = vunpack.c.l.b16 %v1738
        %v4610 = vunpack.c.h.b16 %v1738
        %v4611 = vunpack.c.l.b16 %v1739
        %v4612 = vunpack.c.h.b16 %v1739
        %v4613 = vunpack.c.l.b16 %v1740
        %v4614 = vunpack.c.h.b16 %v1740
        %v4615 = vunpack.c.l.b16 %v1741
        %v4616 = vunpack.c.h.b16 %v1741
        %v4617 = vunpack.c.l.b16 %v1742
        %v4618 = vunpack.c.h.b16 %v1742
        %v4619 = vunpack.c.l.b16 %v1743
        %v4620 = vunpack.c.h.b16 %v1743
        %v4621 = vunpack.c.l.b16 %v1744
        %v4622 = vunpack.c.h.b16 %v1744
        %v4623 = vunpack.c.l.b16 %v1745
        %v4624 = vunpack.c.l.b16 %v1746
        %v4625 = vunpack.c.h.b16 %v1746
        %v4626 = vunpack.c.l.b16 %v1747
        %v4627 = vunpack.c.h.b16 %v1747
        %v4628 = vunpack.c.l.b16 %v1748
        %v4629 = vunpack.c.h.b16 %v1748
        %v4630 = vunpack.c.l.b16 %v1749
        %v4631 = vunpack.c.h.b16 %v1749
        %v4632 = vunpack.c.l.b16 %v1750
        %v4633 = vunpack.c.h.b16 %v1750
        %v4634 = vunpack.c.l.b16 %v1751
        %v4635 = vunpack.c.h.b16 %v1751
        %v4636 = vunpack.c.l.b16 %v1752
        %v4637 = vunpack.c.h.b16 %v1752
        %v4638 = vunpack.c.l.b16 %v1753
        %v4639 = vunpack.c.l.b16 %v1754
        %v4640 = vunpack.c.h.b16 %v1754
        %v4641 = vunpack.c.l.b16 %v1755
        %v4642 = vunpack.c.h.b16 %v1755
        %v4643 = vunpack.c.l.b16 %v1756
        %v4644 = vunpack.c.h.b16 %v1756
        %v4645 = vunpack.c.l.b16 %v1757
        %v4646 = vunpack.c.h.b16 %v1757
        %v4647 = vunpack.c.l.b16 %v1758
        %v4648 = vunpack.c.h.b16 %v1758
        %v4649 = vunpack.c.l.b16 %v1759
        %v4650 = vunpack.c.h.b16 %v1759
        %v4651 = vunpack.c.l.b16 %v1760
        %v4652 = vunpack.c.h.b16 %v1760
        %v4653 = vunpack.c.l.b16 %v1761
        %v4654 = vunpack.c.l.b16 %v1762
        %v4655 = vunpack.c.h.b16 %v1762
        %v4656 = vunpack.c.l.b16 %v1763
        %v4657 = vunpack.c.h.b16 %v1763
        %v4658 = vunpack.c.l.b16 %v1764
        %v4659 = vunpack.c.h.b16 %v1764
        %v4660 = vunpack.c.l.b16 %v1765
        %v4661 = vunpack.c.h.b16 %v1765
        %v4662 = vunpack.c.l.b16 %v1766
        %v4663 = vunpack.c.h.b16 %v1766
        %v4664 = vunpack.c.l.b16 %v1767
        %v4665 = vunpack.c.h.b16 %v1767
        %v4666 = vunpack.c.l.b16 %v1768
        %v4667 = vunpack.c.h.b16 %v1768
        %v4668 = vunpack.c.l.b16 %v1769
        %v4669 = vunpack.c.l.b16 %v1770
        %v4670 = vunpack.c.h.b16 %v1770
        %v4671 = vunpack.c.l.b16 %v1771
        %v4672 = vunpack.c.h.b16 %v1771
        %v4673 = vunpack.c.l.b16 %v1772
        %v4674 = vunpack.c.h.b16 %v1772
        %v4675 = vunpack.c.l.b16 %v1773
        %v4676 = vunpack.c.h.b16 %v1773
        %v4677 = vunpack.c.l.b16 %v1774
        %v4678 = vunpack.c.h.b16 %v1774
        %v4679 = vunpack.c.l.b16 %v1775
        %v4680 = vunpack.c.h.b16 %v1775
        %v4681 = vunpack.c.l.b16 %v1776
        %v4682 = vunpack.c.h.b16 %v1776
        %v4683 = vunpack.c.l.b16 %v1777
        %v4684 = vunpack.c.l.b16 %v1778
        %v4685 = vunpack.c.h.b16 %v1778
        %v4686 = vunpack.c.l.b16 %v1779
        %v4687 = vunpack.c.h.b16 %v1779
        %v4688 = vunpack.c.l.b16 %v1780
        %v4689 = vunpack.c.h.b16 %v1780
        %v4690 = vunpack.c.l.b16 %v1781
        %v4691 = vunpack.c.h.b16 %v1781
        %v4692 = vunpack.c.l.b16 %v1782
        %v4693 = vunpack.c.h.b16 %v1782
        %v4694 = vunpack.c.l.b16 %v1783
        %v4695 = vunpack.c.h.b16 %v1783
        %v4696 = vunpack.c.l.b16 %v1784
        %v4697 = vunpack.c.h.b16 %v1784
        %v4698 = vunpack.c.l.b16 %v1785
        %v4699 = vunpack.c.l.b16 %v1786
        %v4700 = vunpack.c.h.b16 %v1786
        %v4701 = vunpack.c.l.b16 %v1787
        %v4702 = vunpack.c.h.b16 %v1787
        %v4703 = vunpack.c.l.b16 %v1788
        %v4704 = vunpack.c.h.b16 %v1788
        %v4705 = vunpack.c.l.b16 %v1789
        %v4706 = vunpack.c.h.b16 %v1789
        %v4707 = vunpack.c.l.b16 %v1790
        %v4708 = vunpack.c.h.b16 %v1790
        %v4709 = vunpack.c.l.b16 %v1791
        %v4710 = vunpack.c.h.b16 %v1791
        %v4711 = vunpack.c.l.b16 %v1792
        %v4712 = vunpack.c.h.b16 %v1792
        %v4713 = vunpack.c.l.b16 %v1793
        %v4714 = vunpack.c.l.b16 %v1794
        %v4715 = vunpack.c.h.b16 %v1794
        %v4716 = vunpack.c.l.b16 %v1795
        %v4717 = vunpack.c.h.b16 %v1795
        %v4718 = vunpack.c.l.b16 %v1796
        %v4719 = vunpack.c.h.b16 %v1796
        %v4720 = vunpack.c.l.b16 %v1797
        %v4721 = vunpack.c.h.b16 %v1797
        %v4722 = vunpack.c.l.b16 %v1798
        %v4723 = vunpack.c.h.b16 %v1798
        %v4724 = vunpack.c.l.b16 %v1799
        %v4725 = vunpack.c.h.b16 %v1799
        %v4726 = vunpack.c.l.b16 %v1800
        %v4727 = vunpack.c.h.b16 %v1800
        %v4728 = vunpack.c.l.b16 %v1801
        %v4729 = vunpack.c.l.b16 %v1802
        %v4730 = vunpack.c.h.b16 %v1802
        %v4731 = vunpack.c.l.b16 %v1803
        %v4732 = vunpack.c.h.b16 %v1803
        %v4733 = vunpack.c.l.b16 %v1804
        %v4734 = vunpack.c.h.b16 %v1804
        %v4735 = vunpack.c.l.b16 %v1805
        %v4736 = vunpack.c.h.b16 %v1805
        %v4737 = vunpack.c.l.b16 %v1806
        %v4738 = vunpack.c.h.b16 %v1806
        %v4739 = vunpack.c.l.b16 %v1807
        %v4740 = vunpack.c.h.b16 %v1807
        %v4741 = vunpack.c.l.b16 %v1808
        %v4742 = vunpack.c.h.b16 %v1808
        %v4743 = vunpack.c.l.b16 %v1809
        %v4744 = vunpack.c.l.b16 %v1810
        %v4745 = vunpack.c.h.b16 %v1810
        %v4746 = vunpack.c.l.b16 %v1811
        %v4747 = vunpack.c.h.b16 %v1811
        %v4748 = vunpack.c.l.b16 %v1812
        %v4749 = vunpack.c.h.b16 %v1812
        %v4750 = vunpack.c.l.b16 %v1813
        %v4751 = vunpack.c.h.b16 %v1813
        %v4752 = vunpack.c.l.b16 %v1814
        %v4753 = vunpack.c.h.b16 %v1814
        %v4754 = vunpack.c.l.b16 %v1815
        %v4755 = vunpack.c.h.b16 %v1815
        %v4756 = vunpack.c.l.b16 %v1816
        %v4757 = vunpack.c.h.b16 %v1816
        %v4758 = vunpack.c.l.b16 %v1817
        %v4759 = vpack.c.b16 %v2899, %v2884
        %v4760 = vpack.c.b16 %v2900, %v2885
        %v4761 = vpack.c.b16 %v2901, %v2886
        %v4762 = vpack.c.b16 %v2902, %v2887
        %v4763 = vpack.c.b16 %v2903, %v2888
        %v4764 = vpack.c.b16 %v2904, %v2889
        %v4765 = vpack.c.b16 %v2905, %v2890
        %v4766 = vpack.c.b16 %v2906, %v2891
        %v4767 = vpack.c.b16 %v2907, %v2892
        %v4768 = vpack.c.b16 %v2908, %v2893
        %v4769 = vpack.c.b16 %v2909, %v2894
        %v4770 = vpack.c.b16 %v2910, %v2895
        %v4771 = vpack.c.b16 %v2911, %v2896
        %v4772 = vpack.c.b16 %v2912, %v2897
        %v4773 = vpack.c.b16 %v2913, %v2898
        %v4774 = vpack.c.b16 %v2929, %v2914
        %v4775 = vpack.c.b16 %v2930, %v2915
        %v4776 = vpack.c.b16 %v2931, %v2916
        %v4777 = vpack.c.b16 %v2932, %v2917
        %v4778 = vpack.c.b16 %v2933, %v2918
        %v4779 = vpack.c.b16 %v2934, %v2919
        %v4780 = vpack.c.b16 %v2935, %v2920
        %v4781 = vpack.c.b16 %v2936, %v2921
        %v4782 = vpack.c.b16 %v2937, %v2922
        %v4783 = vpack.c.b16 %v2938, %v2923
        %v4784 = vpack.c.b16 %v2939, %v2924
        %v4785 = vpack.c.b16 %v2940, %v2925
        %v4786 = vpack.c.b16 %v2941, %v2926
        %v4787 = vpack.c.b16 %v2942, %v2927
        %v4788 = vpack.c.b16 %v2943, %v2928
        %v4789 = vpack.c.b16 %v2959, %v2944
        %v4790 = vpack.c.b16 %v2960, %v2945
        %v4791 = vpack.c.b16 %v2961, %v2946
        %v4792 = vpack.c.b16 %v2962, %v2947
        %v4793 = vpack.c.b16 %v2963, %v2948
        %v4794 = vpack.c.b16 %v2964, %v2949
        %v4795 = vpack.c.b16 %v2965, %v2950
        %v4796 = vpack.c.b16 %v2966, %v2951
        %v4797 = vpack.c.b16 %v2967, %v2952
        %v4798 = vpack.c.b16 %v2968, %v2953
        %v4799 = vpack.c.b16 %v2969, %v2954
        %v4800 = vpack.c.b16 %v2970, %v2955
        %v4801 = vpack.c.b16 %v2971, %v2956
        %v4802 = vpack.c.b16 %v2972, %v2957
        %v4803 = vpack.c.b16 %v2973, %v2958
        %v4804 = vpack.c.b16 %v2989, %v2974
        %v4805 = vpack.c.b16 %v2990, %v2975
        %v4806 = vpack.c.b16 %v2991, %v2976
        %v4807 = vpack.c.b16 %v2992, %v2977
        %v4808 = vpack.c.b16 %v2993, %v2978
        %v4809 = vpack.c.b16 %v2994, %v2979
        %v4810 = vpack.c.b16 %v2995, %v2980
        %v4811 = vpack.c.b16 %v2996, %v2981
        %v4812 = vpack.c.b16 %v2997, %v2982
        %v4813 = vpack.c.b16 %v2998, %v2983
        %v4814 = vpack.c.b16 %v2999, %v2984
        %v4815 = vpack.c.b16 %v3000, %v2985
        %v4816 = vpack.c.b16 %v3001, %v2986
        %v4817 = vpack.c.b16 %v3002, %v2987
        %v4818 = vpack.c.b16 %v3003, %v2988
        %v4819 = vpack.c.b16 %v3019, %v3004
        %v4820 = vpack.c.b16 %v3020, %v3005
        %v4821 = vpack.c.b16 %v3021, %v3006
        %v4822 = vpack.c.b16 %v3022, %v3007
        %v4823 = vpack.c.b16 %v3023, %v3008
        %v4824 = vpack.c.b16 %v3024, %v3009
        %v4825 = vpack.c.b16 %v3025, %v3010
        %v4826 = vpack.c.b16 %v3026, %v3011
        %v4827 = vpack.c.b16 %v3027, %v3012
        %v4828 = vpack.c.b16 %v3028, %v3013
        %v4829 = vpack.c.b16 %v3029, %v3014
        %v4830 = vpack.c.b16 %v3030, %v3015
        %v4831 = vpack.c.b16 %v3031, %v3016
        %v4832 = vpack.c.b16 %v3032, %v3017
        %v4833 = vpack.c.b16 %v3033, %v3018
        %v4834 = vpack.c.b16 %v3049, %v3034
        %v4835 = vpack.c.b16 %v3050, %v3035
        %v4836 = vpack.c.b16 %v3051, %v3036
        %v4837 = vpack.c.b16 %v3052, %v3037
        %v4838 = vpack.c.b16 %v3053, %v3038
        %v4839 = vpack.c.b16 %v3054, %v3039
        %v4840 = vpack.c.b16 %v3055, %v3040
        %v4841 = vpack.c.b16 %v3056, %v3041
        %v4842 = vpack.c.b16 %v3057, %v3042
        %v4843 = vpack.c.b16 %v3058, %v3043
        %v4844 = vpack.c.b16 %v3059, %v3044
        %v4845 = vpack.c.b16 %v3060, %v3045
        %v4846 = vpack.c.b16 %v3061, %v3046
        %v4847 = vpack.c.b16 %v3062, %v3047
        %v4848 = vpack.c.b16 %v3063, %v3048
        %v4849 = vpack.c.b16 %v3079, %v3064
        %v4850 = vpack.c.b16 %v3080, %v3065
        %v4851 = vpack.c.b16 %v3081, %v3066
        %v4852 = vpack.c.b16 %v3082, %v3067
        %v4853 = vpack.c.b16 %v3083, %v3068
        %v4854 = vpack.c.b16 %v3084, %v3069
        %v4855 = vpack.c.b16 %v3085, %v3070
        %v4856 = vpack.c.b16 %v3086, %v3071
        %v4857 = vpack.c.b16 %v3087, %v3072
        %v4858 = vpack.c.b16 %v3088, %v3073
        %v4859 = vpack.c.b16 %v3089, %v3074
        %v4860 = vpack.c.b16 %v3090, %v3075
        %v4861 = vpack.c.b16 %v3091, %v3076
        %v4862 = vpack.c.b16 %v3092, %v3077
        %v4863 = vpack.c.b16 %v3093, %v3078
        %v4864 = vpack.c.b16 %v3109, %v3094
        %v4865 = vpack.c.b16 %v3110, %v3095
        %v4866 = vpack.c.b16 %v3111, %v3096
        %v4867 = vpack.c.b16 %v3112, %v3097
        %v4868 = vpack.c.b16 %v3113, %v3098
        %v4869 = vpack.c.b16 %v3114, %v3099
        %v4870 = vpack.c.b16 %v3115, %v3100
        %v4871 = vpack.c.b16 %v3116, %v3101
        %v4872 = vpack.c.b16 %v3117, %v3102
        %v4873 = vpack.c.b16 %v3118, %v3103
        %v4874 = vpack.c.b16 %v3119, %v3104
        %v4875 = vpack.c.b16 %v3120, %v3105
        %v4876 = vpack.c.b16 %v3121, %v3106
        %v4877 = vpack.c.b16 %v3122, %v3107
        %v4878 = vpack.c.b16 %v3123, %v3108
        %v4879 = vpack.c.b16 %v3139, %v3124
        %v4880 = vpack.c.b16 %v3140, %v3125
        %v4881 = vpack.c.b16 %v3141, %v3126
        %v4882 = vpack.c.b16 %v3142, %v3127
        %v4883 = vpack.c.b16 %v3143, %v3128
        %v4884 = vpack.c.b16 %v3144, %v3129
        %v4885 = vpack.c.b16 %v3145, %v3130
        %v4886 = vpack.c.b16 %v3146, %v3131
        %v4887 = vpack.c.b16 %v3147, %v3132
        %v4888 = vpack.c.b16 %v3148, %v3133
        %v4889 = vpack.c.b16 %v3149, %v3134
        %v4890 = vpack.c.b16 %v3150, %v3135
        %v4891 = vpack.c.b16 %v3151, %v3136
        %v4892 = vpack.c.b16 %v3152, %v3137
        %v4893 = vpack.c.b16 %v3153, %v3138
        %v4894 = vpack.c.b16 %v3169, %v3154
        %v4895 = vpack.c.b16 %v3170, %v3155
        %v4896 = vpack.c.b16 %v3171, %v3156
        %v4897 = vpack.c.b16 %v3172, %v3157
        %v4898 = vpack.c.b16 %v3173, %v3158
        %v4899 = vpack.c.b16 %v3174, %v3159
        %v4900 = vpack.c.b16 %v3175, %v3160
        %v4901 = vpack.c.b16 %v3176, %v3161
        %v4902 = vpack.c.b16 %v3177, %v3162
        %v4903 = vpack.c.b16 %v3178, %v3163
        %v4904 = vpack.c.b16 %v3179, %v3164
        %v4905 = vpack.c.b16 %v3180, %v3165
        %v4906 = vpack.c.b16 %v3181, %v3166
        %v4907 = vpack.c.b16 %v3182, %v3167
        %v4908 = vpack.c.b16 %v3183, %v3168
        %v4909 = vpack.c.b16 %v3199, %v3184
        %v4910 = vpack.c.b16 %v3200, %v3185
        %v4911 = vpack.c.b16 %v3201, %v3186
        %v4912 = vpack.c.b16 %v3202, %v3187
        %v4913 = vpack.c.b16 %v3203, %v3188
        %v4914 = vpack.c.b16 %v3204, %v3189
        %v4915 = vpack.c.b16 %v3205, %v3190
        %v4916 = vpack.c.b16 %v3206, %v3191
        %v4917 = vpack.c.b16 %v3207, %v3192
        %v4918 = vpack.c.b16 %v3208, %v3193
        %v4919 = vpack.c.b16 %v3209, %v3194
        %v4920 = vpack.c.b16 %v3210, %v3195
        %v4921 = vpack.c.b16 %v3211, %v3196
        %v4922 = vpack.c.b16 %v3212, %v3197
        %v4923 = vpack.c.b16 %v3213, %v3198
        %v4924 = vpack.c.b16 %v3229, %v3214
        %v4925 = vpack.c.b16 %v3230, %v3215
        %v4926 = vpack.c.b16 %v3231, %v3216
        %v4927 = vpack.c.b16 %v3232, %v3217
        %v4928 = vpack.c.b16 %v3233, %v3218
        %v4929 = vpack.c.b16 %v3234, %v3219
        %v4930 = vpack.c.b16 %v3235, %v3220
        %v4931 = vpack.c.b16 %v3236, %v3221
        %v4932 = vpack.c.b16 %v3237, %v3222
        %v4933 = vpack.c.b16 %v3238, %v3223
        %v4934 = vpack.c.b16 %v3239, %v3224
        %v4935 = vpack.c.b16 %v3240, %v3225
        %v4936 = vpack.c.b16 %v3241, %v3226
        %v4937 = vpack.c.b16 %v3242, %v3227
        %v4938 = vpack.c.b16 %v3243, %v3228
        %v4939 = vpack.c.b16 %v3259, %v3244
        %v4940 = vpack.c.b16 %v3260, %v3245
        %v4941 = vpack.c.b16 %v3261, %v3246
        %v4942 = vpack.c.b16 %v3262, %v3247
        %v4943 = vpack.c.b16 %v3263, %v3248
        %v4944 = vpack.c.b16 %v3264, %v3249
        %v4945 = vpack.c.b16 %v3265, %v3250
        %v4946 = vpack.c.b16 %v3266, %v3251
        %v4947 = vpack.c.b16 %v3267, %v3252
        %v4948 = vpack.c.b16 %v3268, %v3253
        %v4949 = vpack.c.b16 %v3269, %v3254
        %v4950 = vpack.c.b16 %v3270, %v3255
        %v4951 = vpack.c.b16 %v3271, %v3256
        %v4952 = vpack.c.b16 %v3272, %v3257
        %v4953 = vpack.c.b16 %v3273, %v3258
        %v4954 = vpack.c.b16 %v3289, %v3274
        %v4955 = vpack.c.b16 %v3290, %v3275
        %v4956 = vpack.c.b16 %v3291, %v3276
        %v4957 = vpack.c.b16 %v3292, %v3277
        %v4958 = vpack.c.b16 %v3293, %v3278
        %v4959 = vpack.c.b16 %v3294, %v3279
        %v4960 = vpack.c.b16 %v3295, %v3280
        %v4961 = vpack.c.b16 %v3296, %v3281
        %v4962 = vpack.c.b16 %v3297, %v3282
        %v4963 = vpack.c.b16 %v3298, %v3283
        %v4964 = vpack.c.b16 %v3299, %v3284
        %v4965 = vpack.c.b16 %v3300, %v3285
        %v4966 = vpack.c.b16 %v3301, %v3286
        %v4967 = vpack.c.b16 %v3302, %v3287
        %v4968 = vpack.c.b16 %v3303, %v3288
        %v4969 = vpack.c.b16 %v3319, %v3304
        %v4970 = vpack.c.b16 %v3320, %v3305
        %v4971 = vpack.c.b16 %v3321, %v3306
        %v4972 = vpack.c.b16 %v3322, %v3307
        %v4973 = vpack.c.b16 %v3323, %v3308
        %v4974 = vpack.c.b16 %v3324, %v3309
        %v4975 = vpack.c.b16 %v3325, %v3310
        %v4976 = vpack.c.b16 %v3326, %v3311
        %v4977 = vpack.c.b16 %v3327, %v3312
        %v4978 = vpack.c.b16 %v3328, %v3313
        %v4979 = vpack.c.b16 %v3329, %v3314
        %v4980 = vpack.c.b16 %v3330, %v3315
        %v4981 = vpack.c.b16 %v3331, %v3316
        %v4982 = vpack.c.b16 %v3332, %v3317
        %v4983 = vpack.c.b16 %v3333, %v3318
        %v4984 = vpack.c.b16 %v3349, %v3334
        %v4985 = vpack.c.b16 %v3350, %v3335
        %v4986 = vpack.c.b16 %v3351, %v3336
        %v4987 = vpack.c.b16 %v3352, %v3337
        %v4988 = vpack.c.b16 %v3353, %v3338
        %v4989 = vpack.c.b16 %v3354, %v3339
        %v4990 = vpack.c.b16 %v3355, %v3340
        %v4991 = vpack.c.b16 %v3356, %v3341
        %v4992 = vpack.c.b16 %v3357, %v3342
        %v4993 = vpack.c.b16 %v3358, %v3343
        %v4994 = vpack.c.b16 %v3359, %v3344
        %v4995 = vpack.c.b16 %v3360, %v3345
        %v4996 = vpack.c.b16 %v3361, %v3346
        %v4997 = vpack.c.b16 %v3362, %v3347
        %v4998 = vpack.c.b16 %v3363, %v3348
        %v4999 = vpack.c.b16 %v3379, %v3364
        %v5000 = vpack.c.b16 %v3380, %v3365
        %v5001 = vpack.c.b16 %v3381, %v3366
        %v5002 = vpack.c.b16 %v3382, %v3367
        %v5003 = vpack.c.b16 %v3383, %v3368
        %v5004 = vpack.c.b16 %v3384, %v3369
        %v5005 = vpack.c.b16 %v3385, %v3370
        %v5006 = vpack.c.b16 %v3386, %v3371
        %v5007 = vpack.c.b16 %v3387, %v3372
        %v5008 = vpack.c.b16 %v3388, %v3373
        %v5009 = vpack.c.b16 %v3389, %v3374
        %v5010 = vpack.c.b16 %v3390, %v3375
        %v5011 = vpack.c.b16 %v3391, %v3376
        %v5012 = vpack.c.b16 %v3392, %v3377
        %v5013 = vpack.c.b16 %v3393, %v3378
        %v5014 = vpack.c.b16 %v3409, %v3394
        %v5015 = vpack.c.b16 %v3410, %v3395
        %v5016 = vpack.c.b16 %v3411, %v3396
        %v5017 = vpack.c.b16 %v3412, %v3397
        %v5018 = vpack.c.b16 %v3413, %v3398
        %v5019 = vpack.c.b16 %v3414, %v3399
        %v5020 = vpack.c.b16 %v3415, %v3400
        %v5021 = vpack.c.b16 %v3416, %v3401
        %v5022 = vpack.c.b16 %v3417, %v3402
        %v5023 = vpack.c.b16 %v3418, %v3403
        %v5024 = vpack.c.b16 %v3419, %v3404
        %v5025 = vpack.c.b16 %v3420, %v3405
        %v5026 = vpack.c.b16 %v3421, %v3406
        %v5027 = vpack.c.b16 %v3422, %v3407
        %v5028 = vpack.c.b16 %v3423, %v3408
        %v5029 = vpack.c.b16 %v3439, %v3424
        %v5030 = vpack.c.b16 %v3440, %v3425
        %v5031 = vpack.c.b16 %v3441, %v3426
        %v5032 = vpack.c.b16 %v3442, %v3427
        %v5033 = vpack.c.b16 %v3443, %v3428
        %v5034 = vpack.c.b16 %v3444, %v3429
        %v5035 = vpack.c.b16 %v3445, %v3430
        %v5036 = vpack.c.b16 %v3446, %v3431
        %v5037 = vpack.c.b16 %v3447, %v3432
        %v5038 = vpack.c.b16 %v3448, %v3433
        %v5039 = vpack.c.b16 %v3449, %v3434
        %v5040 = vpack.c.b16 %v3450, %v3435
        %v5041 = vpack.c.b16 %v3451, %v3436
        %v5042 = vpack.c.b16 %v3452, %v3437
        %v5043 = vpack.c.b16 %v3453, %v3438
        %v5044 = vpack.c.b16 %v3469, %v3454
        %v5045 = vpack.c.b16 %v3470, %v3455
        %v5046 = vpack.c.b16 %v3471, %v3456
        %v5047 = vpack.c.b16 %v3472, %v3457
        %v5048 = vpack.c.b16 %v3473, %v3458
        %v5049 = vpack.c.b16 %v3474, %v3459
        %v5050 = vpack.c.b16 %v3475, %v3460
        %v5051 = vpack.c.b16 %v3476, %v3461
        %v5052 = vpack.c.b16 %v3477, %v3462
        %v5053 = vpack.c.b16 %v3478, %v3463
        %v5054 = vpack.c.b16 %v3479, %v3464
        %v5055 = vpack.c.b16 %v3480, %v3465
        %v5056 = vpack.c.b16 %v3481, %v3466
        %v5057 = vpack.c.b16 %v3482, %v3467
        %v5058 = vpack.c.b16 %v3483, %v3468
        %v5059 = vpack.c.b16 %v3499, %v3484
        %v5060 = vpack.c.b16 %v3500, %v3485
        %v5061 = vpack.c.b16 %v3501, %v3486
        %v5062 = vpack.c.b16 %v3502, %v3487
        %v5063 = vpack.c.b16 %v3503, %v3488
        %v5064 = vpack.c.b16 %v3504, %v3489
        %v5065 = vpack.c.b16 %v3505, %v3490
        %v5066 = vpack.c.b16 %v3506, %v3491
        %v5067 = vpack.c.b16 %v3507, %v3492
        %v5068 = vpack.c.b16 %v3508, %v3493
        %v5069 = vpack.c.b16 %v3509, %v3494
        %v5070 = vpack.c.b16 %v3510, %v3495
        %v5071 = vpack.c.b16 %v3511, %v3496
        %v5072 = vpack.c.b16 %v3512, %v3497
        %v5073 = vpack.c.b16 %v3513, %v3498
        %v5074 = vpack.c.b16 %v3529, %v3514
        %v5075 = vpack.c.b16 %v3530, %v3515
        %v5076 = vpack.c.b16 %v3531, %v3516
        %v5077 = vpack.c.b16 %v3532, %v3517
        %v5078 = vpack.c.b16 %v3533, %v3518
        %v5079 = vpack.c.b16 %v3534, %v3519
        %v5080 = vpack.c.b16 %v3535, %v3520
        %v5081 = vpack.c.b16 %v3536, %v3521
        %v5082 = vpack.c.b16 %v3537, %v3522
        %v5083 = vpack.c.b16 %v3538, %v3523
        %v5084 = vpack.c.b16 %v3539, %v3524
        %v5085 = vpack.c.b16 %v3540, %v3525
        %v5086 = vpack.c.b16 %v3541, %v3526
        %v5087 = vpack.c.b16 %v3542, %v3527
        %v5088 = vpack.c.b16 %v3543, %v3528
        %v5089 = vpack.c.b16 %v3559, %v3544
        %v5090 = vpack.c.b16 %v3560, %v3545
        %v5091 = vpack.c.b16 %v3561, %v3546
        %v5092 = vpack.c.b16 %v3562, %v3547
        %v5093 = vpack.c.b16 %v3563, %v3548
        %v5094 = vpack.c.b16 %v3564, %v3549
        %v5095 = vpack.c.b16 %v3565, %v3550
        %v5096 = vpack.c.b16 %v3566, %v3551
        %v5097 = vpack.c.b16 %v3567, %v3552
        %v5098 = vpack.c.b16 %v3568, %v3553
        %v5099 = vpack.c.b16 %v3569, %v3554
        %v5100 = vpack.c.b16 %v3570, %v3555
        %v5101 = vpack.c.b16 %v3571, %v3556
        %v5102 = vpack.c.b16 %v3572, %v3557
        %v5103 = vpack.c.b16 %v3573, %v3558
        %v5104 = vpack.c.b16 %v3589, %v3574
        %v5105 = vpack.c.b16 %v3590, %v3575
        %v5106 = vpack.c.b16 %v3591, %v3576
        %v5107 = vpack.c.b16 %v3592, %v3577
        %v5108 = vpack.c.b16 %v3593, %v3578
        %v5109 = vpack.c.b16 %v3594, %v3579
        %v5110 = vpack.c.b16 %v3595, %v3580
        %v5111 = vpack.c.b16 %v3596, %v3581
        %v5112 = vpack.c.b16 %v3597, %v3582
        %v5113 = vpack.c.b16 %v3598, %v3583
        %v5114 = vpack.c.b16 %v3599, %v3584
        %v5115 = vpack.c.b16 %v3600, %v3585
        %v5116 = vpack.c.b16 %v3601, %v3586
        %v5117 = vpack.c.b16 %v3602, %v3587
        %v5118 = vpack.c.b16 %v3603, %v3588
        %v5119 = vpack.c.b16 %v3619, %v3604
        %v5120 = vpack.c.b16 %v3620, %v3605
        %v5121 = vpack.c.b16 %v3621, %v3606
        %v5122 = vpack.c.b16 %v3622, %v3607
        %v5123 = vpack.c.b16 %v3623, %v3608
        %v5124 = vpack.c.b16 %v3624, %v3609
        %v5125 = vpack.c.b16 %v3625, %v3610
        %v5126 = vpack.c.b16 %v3626, %v3611
        %v5127 = vpack.c.b16 %v3627, %v3612
        %v5128 = vpack.c.b16 %v3628, %v3613
        %v5129 = vpack.c.b16 %v3629, %v3614
        %v5130 = vpack.c.b16 %v3630, %v3615
        %v5131 = vpack.c.b16 %v3631, %v3616
        %v5132 = vpack.c.b16 %v3632, %v3617
        %v5133 = vpack.c.b16 %v3633, %v3618
        %v5134 = vpack.c.b16 %v3649, %v3634
        %v5135 = vpack.c.b16 %v3650, %v3635
        %v5136 = vpack.c.b16 %v3651, %v3636
        %v5137 = vpack.c.b16 %v3652, %v3637
        %v5138 = vpack.c.b16 %v3653, %v3638
        %v5139 = vpack.c.b16 %v3654, %v3639
        %v5140 = vpack.c.b16 %v3655, %v3640
        %v5141 = vpack.c.b16 %v3656, %v3641
        %v5142 = vpack.c.b16 %v3657, %v3642
        %v5143 = vpack.c.b16 %v3658, %v3643
        %v5144 = vpack.c.b16 %v3659, %v3644
        %v5145 = vpack.c.b16 %v3660, %v3645
        %v5146 = vpack.c.b16 %v3661, %v3646
        %v5147 = vpack.c.b16 %v3662, %v3647
        %v5148 = vpack.c.b16 %v3663, %v3648
        %v5149 = vpack.c.b16 %v3679, %v3664
        %v5150 = vpack.c.b16 %v3680, %v3665
        %v5151 = vpack.c.b16 %v3681, %v3666
        %v5152 = vpack.c.b16 %v3682, %v3667
        %v5153 = vpack.c.b16 %v3683, %v3668
        %v5154 = vpack.c.b16 %v3684, %v3669
        %v5155 = vpack.c.b16 %v3685, %v3670
        %v5156 = vpack.c.b16 %v3686, %v3671
        %v5157 = vpack.c.b16 %v3687, %v3672
        %v5158 = vpack.c.b16 %v3688, %v3673
        %v5159 = vpack.c.b16 %v3689, %v3674
        %v5160 = vpack.c.b16 %v3690, %v3675
        %v5161 = vpack.c.b16 %v3691, %v3676
        %v5162 = vpack.c.b16 %v3692, %v3677
        %v5163 = vpack.c.b16 %v3693, %v3678
        %v5164 = vpack.c.b16 %v3709, %v3694
        %v5165 = vpack.c.b16 %v3710, %v3695
        %v5166 = vpack.c.b16 %v3711, %v3696
        %v5167 = vpack.c.b16 %v3712, %v3697
        %v5168 = vpack.c.b16 %v3713, %v3698
        %v5169 = vpack.c.b16 %v3714, %v3699
        %v5170 = vpack.c.b16 %v3715, %v3700
        %v5171 = vpack.c.b16 %v3716, %v3701
        %v5172 = vpack.c.b16 %v3717, %v3702
        %v5173 = vpack.c.b16 %v3718, %v3703
        %v5174 = vpack.c.b16 %v3719, %v3704
        %v5175 = vpack.c.b16 %v3720, %v3705
        %v5176 = vpack.c.b16 %v3721, %v3706
        %v5177 = vpack.c.b16 %v3722, %v3707
        %v5178 = vpack.c.b16 %v3723, %v3708
        %v5179 = vpack.c.b16 %v3739, %v3724
        %v5180 = vpack.c.b16 %v3740, %v3725
        %v5181 = vpack.c.b16 %v3741, %v3726
        %v5182 = vpack.c.b16 %v3742, %v3727
        %v5183 = vpack.c.b16 %v3743, %v3728
        %v5184 = vpack.c.b16 %v3744, %v3729
        %v5185 = vpack.c.b16 %v3745, %v3730
        %v5186 = vpack.c.b16 %v3746, %v3731
        %v5187 = vpack.c.b16 %v3747, %v3732
        %v5188 = vpack.c.b16 %v3748, %v3733
        %v5189 = vpack.c.b16 %v3749, %v3734
        %v5190 = vpack.c.b16 %v3750, %v3735
        %v5191 = vpack.c.b16 %v3751, %v3736
        %v5192 = vpack.c.b16 %v3752, %v3737
        %v5193 = vpack.c.b16 %v3753, %v3738
        %v5194 = vpack.c.b16 %v3769, %v3754
        %v5195 = vpack.c.b16 %v3770, %v3755
        %v5196 = vpack.c.b16 %v3771, %v3756
        %v5197 = vpack.c.b16 %v3772, %v3757
        %v5198 = vpack.c.b16 %v3773, %v3758
        %v5199 = vpack.c.b16 %v3774, %v3759
        %v5200 = vpack.c.b16 %v3775, %v3760
        %v5201 = vpack.c.b16 %v3776, %v3761
        %v5202 = vpack.c.b16 %v3777, %v3762
        %v5203 = vpack.c.b16 %v3778, %v3763
        %v5204 = vpack.c.b16 %v3779, %v3764
        %v5205 = vpack.c.b16 %v3780, %v3765
        %v5206 = vpack.c.b16 %v3781, %v3766
        %v5207 = vpack.c.b16 %v3782, %v3767
        %v5208 = vpack.c.b16 %v3783, %v3768
        %v5209 = vpack.c.b16 %v3799, %v3784
        %v5210 = vpack.c.b16 %v3800, %v3785
        %v5211 = vpack.c.b16 %v3801, %v3786
        %v5212 = vpack.c.b16 %v3802, %v3787
        %v5213 = vpack.c.b16 %v3803, %v3788
        %v5214 = vpack.c.b16 %v3804, %v3789
        %v5215 = vpack.c.b16 %v3805, %v3790
        %v5216 = vpack.c.b16 %v3806, %v3791
        %v5217 = vpack.c.b16 %v3807, %v3792
        %v5218 = vpack.c.b16 %v3808, %v3793
        %v5219 = vpack.c.b16 %v3809, %v3794
        %v5220 = vpack.c.b16 %v3810, %v3795
        %v5221 = vpack.c.b16 %v3811, %v3796
        %v5222 = vpack.c.b16 %v3812, %v3797
        %v5223 = vpack.c.b16 %v3813, %v3798
        %v5224 = vpack.c.b16 %v3829, %v3814
        %v5225 = vpack.c.b16 %v3830, %v3815
        %v5226 = vpack.c.b16 %v3831, %v3816
        %v5227 = vpack.c.b16 %v3832, %v3817
        %v5228 = vpack.c.b16 %v3833, %v3818
        %v5229 = vpack.c.b16 %v3834, %v3819
        %v5230 = vpack.c.b16 %v3835, %v3820
        %v5231 = vpack.c.b16 %v3836, %v3821
        %v5232 = vpack.c.b16 %v3837, %v3822
        %v5233 = vpack.c.b16 %v3838, %v3823
        %v5234 = vpack.c.b16 %v3839, %v3824
        %v5235 = vpack.c.b16 %v3840, %v3825
        %v5236 = vpack.c.b16 %v3841, %v3826
        %v5237 = vpack.c.b16 %v3842, %v3827
        %v5238 = vpack.c.b16 %v3843, %v3828
        %v5239 = vpack.c.b16 %v3859, %v3844
        %v5240 = vpack.c.b16 %v3860, %v3845
        %v5241 = vpack.c.b16 %v3861, %v3846
        %v5242 = vpack.c.b16 %v3862, %v3847
        %v5243 = vpack.c.b16 %v3863, %v3848
        %v5244 = vpack.c.b16 %v3864, %v3849
        %v5245 = vpack.c.b16 %v3865, %v3850
        %v5246 = vpack.c.b16 %v3866, %v3851
        %v5247 = vpack.c.b16 %v3867, %v3852
        %v5248 = vpack.c.b16 %v3868, %v3853
        %v5249 = vpack.c.b16 %v3869, %v3854
        %v5250 = vpack.c.b16 %v3870, %v3855
        %v5251 = vpack.c.b16 %v3871, %v3856
        %v5252 = vpack.c.b16 %v3872, %v3857
        %v5253 = vpack.c.b16 %v3873, %v3858
        %v5254 = vpack.c.b16 %v3889, %v3874
        %v5255 = vpack.c.b16 %v3890, %v3875
        %v5256 = vpack.c.b16 %v3891, %v3876
        %v5257 = vpack.c.b16 %v3892, %v3877
        %v5258 = vpack.c.b16 %v3893, %v3878
        %v5259 = vpack.c.b16 %v3894, %v3879
        %v5260 = vpack.c.b16 %v3895, %v3880
        %v5261 = vpack.c.b16 %v3896, %v3881
        %v5262 = vpack.c.b16 %v3897, %v3882
        %v5263 = vpack.c.b16 %v3898, %v3883
        %v5264 = vpack.c.b16 %v3899, %v3884
        %v5265 = vpack.c.b16 %v3900, %v3885
        %v5266 = vpack.c.b16 %v3901, %v3886
        %v5267 = vpack.c.b16 %v3902, %v3887
        %v5268 = vpack.c.b16 %v3903, %v3888
        %v5269 = vpack.c.b16 %v3919, %v3904
        %v5270 = vpack.c.b16 %v3920, %v3905
        %v5271 = vpack.c.b16 %v3921, %v3906
        %v5272 = vpack.c.b16 %v3922, %v3907
        %v5273 = vpack.c.b16 %v3923, %v3908
        %v5274 = vpack.c.b16 %v3924, %v3909
        %v5275 = vpack.c.b16 %v3925, %v3910
        %v5276 = vpack.c.b16 %v3926, %v3911
        %v5277 = vpack.c.b16 %v3927, %v3912
        %v5278 = vpack.c.b16 %v3928, %v3913
        %v5279 = vpack.c.b16 %v3929, %v3914
        %v5280 = vpack.c.b16 %v3930, %v3915
        %v5281 = vpack.c.b16 %v3931, %v3916
        %v5282 = vpack.c.b16 %v3932, %v3917
        %v5283 = vpack.c.b16 %v3933, %v3918
        %v5284 = vpack.c.b16 %v3949, %v3934
        %v5285 = vpack.c.b16 %v3950, %v3935
        %v5286 = vpack.c.b16 %v3951, %v3936
        %v5287 = vpack.c.b16 %v3952, %v3937
        %v5288 = vpack.c.b16 %v3953, %v3938
        %v5289 = vpack.c.b16 %v3954, %v3939
        %v5290 = vpack.c.b16 %v3955, %v3940
        %v5291 = vpack.c.b16 %v3956, %v3941
        %v5292 = vpack.c.b16 %v3957, %v3942
        %v5293 = vpack.c.b16 %v3958, %v3943
        %v5294 = vpack.c.b16 %v3959, %v3944
        %v5295 = vpack.c.b16 %v3960, %v3945
        %v5296 = vpack.c.b16 %v3961, %v3946
        %v5297 = vpack.c.b16 %v3962, %v3947
        %v5298 = vpack.c.b16 %v3963, %v3948
        %v5299 = vpack.c.b16 %v3979, %v3964
        %v5300 = vpack.c.b16 %v3980, %v3965
        %v5301 = vpack.c.b16 %v3981, %v3966
        %v5302 = vpack.c.b16 %v3982, %v3967
        %v5303 = vpack.c.b16 %v3983, %v3968
        %v5304 = vpack.c.b16 %v3984, %v3969
        %v5305 = vpack.c.b16 %v3985, %v3970
        %v5306 = vpack.c.b16 %v3986, %v3971
        %v5307 = vpack.c.b16 %v3987, %v3972
        %v5308 = vpack.c.b16 %v3988, %v3973
        %v5309 = vpack.c.b16 %v3989, %v3974
        %v5310 = vpack.c.b16 %v3990, %v3975
        %v5311 = vpack.c.b16 %v3991, %v3976
        %v5312 = vpack.c.b16 %v3992, %v3977
        %v5313 = vpack.c.b16 %v3993, %v3978
        %v5314 = vpack.c.b16 %v4009, %v3994
        %v5315 = vpack.c.b16 %v4010, %v3995
        %v5316 = vpack.c.b16 %v4011, %v3996
        %v5317 = vpack.c.b16 %v4012, %v3997
        %v5318 = vpack.c.b16 %v4013, %v3998
        %v5319 = vpack.c.b16 %v4014, %v3999
        %v5320 = vpack.c.b16 %v4015, %v4000
        %v5321 = vpack.c.b16 %v4016, %v4001
        %v5322 = vpack.c.b16 %v4017, %v4002
        %v5323 = vpack.c.b16 %v4018, %v4003
        %v5324 = vpack.c.b16 %v4019, %v4004
        %v5325 = vpack.c.b16 %v4020, %v4005
        %v5326 = vpack.c.b16 %v4021, %v4006
        %v5327 = vpack.c.b16 %v4022, %v4007
        %v5328 = vpack.c.b16 %v4023, %v4008
        %v5329 = vpack.c.b16 %v4039, %v4024
        %v5330 = vpack.c.b16 %v4040, %v4025
        %v5331 = vpack.c.b16 %v4041, %v4026
        %v5332 = vpack.c.b16 %v4042, %v4027
        %v5333 = vpack.c.b16 %v4043, %v4028
        %v5334 = vpack.c.b16 %v4044, %v4029
        %v5335 = vpack.c.b16 %v4045, %v4030
        %v5336 = vpack.c.b16 %v4046, %v4031
        %v5337 = vpack.c.b16 %v4047, %v4032
        %v5338 = vpack.c.b16 %v4048, %v4033
        %v5339 = vpack.c.b16 %v4049, %v4034
        %v5340 = vpack.c.b16 %v4050, %v4035
        %v5341 = vpack.c.b16 %v4051, %v4036
        %v5342 = vpack.c.b16 %v4052, %v4037
        %v5343 = vpack.c.b16 %v4053, %v4038
        %v5344 = vpack.c.b16 %v4069, %v4054
        %v5345 = vpack.c.b16 %v4070, %v4055
        %v5346 = vpack.c.b16 %v4071, %v4056
        %v5347 = vpack.c.b16 %v4072, %v4057
        %v5348 = vpack.c.b16 %v4073, %v4058
        %v5349 = vpack.c.b16 %v4074, %v4059
        %v5350 = vpack.c.b16 %v4075, %v4060
        %v5351 = vpack.c.b16 %v4076, %v4061
        %v5352 = vpack.c.b16 %v4077, %v4062
        %v5353 = vpack.c.b16 %v4078, %v4063
        %v5354 = vpack.c.b16 %v4079, %v4064
        %v5355 = vpack.c.b16 %v4080, %v4065
        %v5356 = vpack.c.b16 %v4081, %v4066
        %v5357 = vpack.c.b16 %v4082, %v4067
        %v5358 = vpack.c.b16 %v4083, %v4068
        %v5359 = vpack.c.b16 %v4099, %v4084
        %v5360 = vpack.c.b16 %v4100, %v4085
        %v5361 = vpack.c.b16 %v4101, %v4086
        %v5362 = vpack.c.b16 %v4102, %v4087
        %v5363 = vpack.c.b16 %v4103, %v4088
        %v5364 = vpack.c.b16 %v4104, %v4089
        %v5365 = vpack.c.b16 %v4105, %v4090
        %v5366 = vpack.c.b16 %v4106, %v4091
        %v5367 = vpack.c.b16 %v4107, %v4092
        %v5368 = vpack.c.b16 %v4108, %v4093
        %v5369 = vpack.c.b16 %v4109, %v4094
        %v5370 = vpack.c.b16 %v4110, %v4095
        %v5371 = vpack.c.b16 %v4111, %v4096
        %v5372 = vpack.c.b16 %v4112, %v4097
        %v5373 = vpack.c.b16 %v4113, %v4098
        %v5374 = vpack.c.b16 %v4129, %v4114
        %v5375 = vpack.c.b16 %v4130, %v4115
        %v5376 = vpack.c.b16 %v4131, %v4116
        %v5377 = vpack.c.b16 %v4132, %v4117
        %v5378 = vpack.c.b16 %v4133, %v4118
        %v5379 = vpack.c.b16 %v4134, %v4119
        %v5380 = vpack.c.b16 %v4135, %v4120
        %v5381 = vpack.c.b16 %v4136, %v4121
        %v5382 = vpack.c.b16 %v4137, %v4122
        %v5383 = vpack.c.b16 %v4138, %v4123
        %v5384 = vpack.c.b16 %v4139, %v4124
        %v5385 = vpack.c.b16 %v4140, %v4125
        %v5386 = vpack.c.b16 %v4141, %v4126
        %v5387 = vpack.c.b16 %v4142, %v4127
        %v5388 = vpack.c.b16 %v4143, %v4128
        %v5389 = vpack.c.b16 %v4159, %v4144
        %v5390 = vpack.c.b16 %v4160, %v4145
        %v5391 = vpack.c.b16 %v4161, %v4146
        %v5392 = vpack.c.b16 %v4162, %v4147
        %v5393 = vpack.c.b16 %v4163, %v4148
        %v5394 = vpack.c.b16 %v4164, %v4149
        %v5395 = vpack.c.b16 %v4165, %v4150
        %v5396 = vpack.c.b16 %v4166, %v4151
        %v5397 = vpack.c.b16 %v4167, %v4152
        %v5398 = vpack.c.b16 %v4168, %v4153
        %v5399 = vpack.c.b16 %v4169, %v4154
        %v5400 = vpack.c.b16 %v4170, %v4155
        %v5401 = vpack.c.b16 %v4171, %v4156
        %v5402 = vpack.c.b16 %v4172, %v4157
        %v5403 = vpack.c.b16 %v4173, %v4158
        %v5404 = vpack.c.b16 %v4189, %v4174
        %v5405 = vpack.c.b16 %v4190, %v4175
        %v5406 = vpack.c.b16 %v4191, %v4176
        %v5407 = vpack.c.b16 %v4192, %v4177
        %v5408 = vpack.c.b16 %v4193, %v4178
        %v5409 = vpack.c.b16 %v4194, %v4179
        %v5410 = vpack.c.b16 %v4195, %v4180
        %v5411 = vpack.c.b16 %v4196, %v4181
        %v5412 = vpack.c.b16 %v4197, %v4182
        %v5413 = vpack.c.b16 %v4198, %v4183
        %v5414 = vpack.c.b16 %v4199, %v4184
        %v5415 = vpack.c.b16 %v4200, %v4185
        %v5416 = vpack.c.b16 %v4201, %v4186
        %v5417 = vpack.c.b16 %v4202, %v4187
        %v5418 = vpack.c.b16 %v4203, %v4188
        %v5419 = vpack.c.b16 %v4219, %v4204
        %v5420 = vpack.c.b16 %v4220, %v4205
        %v5421 = vpack.c.b16 %v4221, %v4206
        %v5422 = vpack.c.b16 %v4222, %v4207
        %v5423 = vpack.c.b16 %v4223, %v4208
        %v5424 = vpack.c.b16 %v4224, %v4209
        %v5425 = vpack.c.b16 %v4225, %v4210
        %v5426 = vpack.c.b16 %v4226, %v4211
        %v5427 = vpack.c.b16 %v4227, %v4212
        %v5428 = vpack.c.b16 %v4228, %v4213
        %v5429 = vpack.c.b16 %v4229, %v4214
        %v5430 = vpack.c.b16 %v4230, %v4215
        %v5431 = vpack.c.b16 %v4231, %v4216
        %v5432 = vpack.c.b16 %v4232, %v4217
        %v5433 = vpack.c.b16 %v4233, %v4218
        %v5434 = vpack.c.b16 %v4249, %v4234
        %v5435 = vpack.c.b16 %v4250, %v4235
        %v5436 = vpack.c.b16 %v4251, %v4236
        %v5437 = vpack.c.b16 %v4252, %v4237
        %v5438 = vpack.c.b16 %v4253, %v4238
        %v5439 = vpack.c.b16 %v4254, %v4239
        %v5440 = vpack.c.b16 %v4255, %v4240
        %v5441 = vpack.c.b16 %v4256, %v4241
        %v5442 = vpack.c.b16 %v4257, %v4242
        %v5443 = vpack.c.b16 %v4258, %v4243
        %v5444 = vpack.c.b16 %v4259, %v4244
        %v5445 = vpack.c.b16 %v4260, %v4245
        %v5446 = vpack.c.b16 %v4261, %v4246
        %v5447 = vpack.c.b16 %v4262, %v4247
        %v5448 = vpack.c.b16 %v4263, %v4248
        %v5449 = vpack.c.b16 %v4279, %v4264
        %v5450 = vpack.c.b16 %v4280, %v4265
        %v5451 = vpack.c.b16 %v4281, %v4266
        %v5452 = vpack.c.b16 %v4282, %v4267
        %v5453 = vpack.c.b16 %v4283, %v4268
        %v5454 = vpack.c.b16 %v4284, %v4269
        %v5455 = vpack.c.b16 %v4285, %v4270
        %v5456 = vpack.c.b16 %v4286, %v4271
        %v5457 = vpack.c.b16 %v4287, %v4272
        %v5458 = vpack.c.b16 %v4288, %v4273
        %v5459 = vpack.c.b16 %v4289, %v4274
        %v5460 = vpack.c.b16 %v4290, %v4275
        %v5461 = vpack.c.b16 %v4291, %v4276
        %v5462 = vpack.c.b16 %v4292, %v4277
        %v5463 = vpack.c.b16 %v4293, %v4278
        %v5464 = vpack.c.b16 %v4309, %v4294
        %v5465 = vpack.c.b16 %v4310, %v4295
        %v5466 = vpack.c.b16 %v4311, %v4296
        %v5467 = vpack.c.b16 %v4312, %v4297
        %v5468 = vpack.c.b16 %v4313, %v4298
        %v5469 = vpack.c.b16 %v4314, %v4299
        %v5470 = vpack.c.b16 %v4315, %v4300
        %v5471 = vpack.c.b16 %v4316, %v4301
        %v5472 = vpack.c.b16 %v4317, %v4302
        %v5473 = vpack.c.b16 %v4318, %v4303
        %v5474 = vpack.c.b16 %v4319, %v4304
        %v5475 = vpack.c.b16 %v4320, %v4305
        %v5476 = vpack.c.b16 %v4321, %v4306
        %v5477 = vpack.c.b16 %v4322, %v4307
        %v5478 = vpack.c.b16 %v4323, %v4308
        %v5479 = vpack.c.b16 %v4339, %v4324
        %v5480 = vpack.c.b16 %v4340, %v4325
        %v5481 = vpack.c.b16 %v4341, %v4326
        %v5482 = vpack.c.b16 %v4342, %v4327
        %v5483 = vpack.c.b16 %v4343, %v4328
        %v5484 = vpack.c.b16 %v4344, %v4329
        %v5485 = vpack.c.b16 %v4345, %v4330
        %v5486 = vpack.c.b16 %v4346, %v4331
        %v5487 = vpack.c.b16 %v4347, %v4332
        %v5488 = vpack.c.b16 %v4348, %v4333
        %v5489 = vpack.c.b16 %v4349, %v4334
        %v5490 = vpack.c.b16 %v4350, %v4335
        %v5491 = vpack.c.b16 %v4351, %v4336
        %v5492 = vpack.c.b16 %v4352, %v4337
        %v5493 = vpack.c.b16 %v4353, %v4338
        %v5494 = vpack.c.b16 %v4369, %v4354
        %v5495 = vpack.c.b16 %v4370, %v4355
        %v5496 = vpack.c.b16 %v4371, %v4356
        %v5497 = vpack.c.b16 %v4372, %v4357
        %v5498 = vpack.c.b16 %v4373, %v4358
        %v5499 = vpack.c.b16 %v4374, %v4359
        %v5500 = vpack.c.b16 %v4375, %v4360
        %v5501 = vpack.c.b16 %v4376, %v4361
        %v5502 = vpack.c.b16 %v4377, %v4362
        %v5503 = vpack.c.b16 %v4378, %v4363
        %v5504 = vpack.c.b16 %v4379, %v4364
        %v5505 = vpack.c.b16 %v4380, %v4365
        %v5506 = vpack.c.b16 %v4381, %v4366
        %v5507 = vpack.c.b16 %v4382, %v4367
        %v5508 = vpack.c.b16 %v4383, %v4368
        %v5509 = vpack.c.b16 %v4399, %v4384
        %v5510 = vpack.c.b16 %v4400, %v4385
        %v5511 = vpack.c.b16 %v4401, %v4386
        %v5512 = vpack.c.b16 %v4402, %v4387
        %v5513 = vpack.c.b16 %v4403, %v4388
        %v5514 = vpack.c.b16 %v4404, %v4389
        %v5515 = vpack.c.b16 %v4405, %v4390
        %v5516 = vpack.c.b16 %v4406, %v4391
        %v5517 = vpack.c.b16 %v4407, %v4392
        %v5518 = vpack.c.b16 %v4408, %v4393
        %v5519 = vpack.c.b16 %v4409, %v4394
        %v5520 = vpack.c.b16 %v4410, %v4395
        %v5521 = vpack.c.b16 %v4411, %v4396
        %v5522 = vpack.c.b16 %v4412, %v4397
        %v5523 = vpack.c.b16 %v4413, %v4398
        %v5524 = vpack.c.b16 %v4429, %v4414
        %v5525 = vpack.c.b16 %v4430, %v4415
        %v5526 = vpack.c.b16 %v4431, %v4416
        %v5527 = vpack.c.b16 %v4432, %v4417
        %v5528 = vpack.c.b16 %v4433, %v4418
        %v5529 = vpack.c.b16 %v4434, %v4419
        %v5530 = vpack.c.b16 %v4435, %v4420
        %v5531 = vpack.c.b16 %v4436, %v4421
        %v5532 = vpack.c.b16 %v4437, %v4422
        %v5533 = vpack.c.b16 %v4438, %v4423
        %v5534 = vpack.c.b16 %v4439, %v4424
        %v5535 = vpack.c.b16 %v4440, %v4425
        %v5536 = vpack.c.b16 %v4441, %v4426
        %v5537 = vpack.c.b16 %v4442, %v4427
        %v5538 = vpack.c.b16 %v4443, %v4428
        %v5539 = vpack.c.b16 %v4459, %v4444
        %v5540 = vpack.c.b16 %v4460, %v4445
        %v5541 = vpack.c.b16 %v4461, %v4446
        %v5542 = vpack.c.b16 %v4462, %v4447
        %v5543 = vpack.c.b16 %v4463, %v4448
        %v5544 = vpack.c.b16 %v4464, %v4449
        %v5545 = vpack.c.b16 %v4465, %v4450
        %v5546 = vpack.c.b16 %v4466, %v4451
        %v5547 = vpack.c.b16 %v4467, %v4452
        %v5548 = vpack.c.b16 %v4468, %v4453
        %v5549 = vpack.c.b16 %v4469, %v4454
        %v5550 = vpack.c.b16 %v4470, %v4455
        %v5551 = vpack.c.b16 %v4471, %v4456
        %v5552 = vpack.c.b16 %v4472, %v4457
        %v5553 = vpack.c.b16 %v4473, %v4458
        %v5554 = vpack.c.b16 %v4489, %v4474
        %v5555 = vpack.c.b16 %v4490, %v4475
        %v5556 = vpack.c.b16 %v4491, %v4476
        %v5557 = vpack.c.b16 %v4492, %v4477
        %v5558 = vpack.c.b16 %v4493, %v4478
        %v5559 = vpack.c.b16 %v4494, %v4479
        %v5560 = vpack.c.b16 %v4495, %v4480
        %v5561 = vpack.c.b16 %v4496, %v4481
        %v5562 = vpack.c.b16 %v4497, %v4482
        %v5563 = vpack.c.b16 %v4498, %v4483
        %v5564 = vpack.c.b16 %v4499, %v4484
        %v5565 = vpack.c.b16 %v4500, %v4485
        %v5566 = vpack.c.b16 %v4501, %v4486
        %v5567 = vpack.c.b16 %v4502, %v4487
        %v5568 = vpack.c.b16 %v4503, %v4488
        %v5569 = vpack.c.b16 %v4519, %v4504
        %v5570 = vpack.c.b16 %v4520, %v4505
        %v5571 = vpack.c.b16 %v4521, %v4506
        %v5572 = vpack.c.b16 %v4522, %v4507
        %v5573 = vpack.c.b16 %v4523, %v4508
        %v5574 = vpack.c.b16 %v4524, %v4509
        %v5575 = vpack.c.b16 %v4525, %v4510
        %v5576 = vpack.c.b16 %v4526, %v4511
        %v5577 = vpack.c.b16 %v4527, %v4512
        %v5578 = vpack.c.b16 %v4528, %v4513
        %v5579 = vpack.c.b16 %v4529, %v4514
        %v5580 = vpack.c.b16 %v4530, %v4515
        %v5581 = vpack.c.b16 %v4531, %v4516
        %v5582 = vpack.c.b16 %v4532, %v4517
        %v5583 = vpack.c.b16 %v4533, %v4518
        %v5584 = vpack.c.b16 %v4549, %v4534
        %v5585 = vpack.c.b16 %v4550, %v4535
        %v5586 = vpack.c.b16 %v4551, %v4536
        %v5587 = vpack.c.b16 %v4552, %v4537
        %v5588 = vpack.c.b16 %v4553, %v4538
        %v5589 = vpack.c.b16 %v4554, %v4539
        %v5590 = vpack.c.b16 %v4555, %v4540
        %v5591 = vpack.c.b16 %v4556, %v4541
        %v5592 = vpack.c.b16 %v4557, %v4542
        %v5593 = vpack.c.b16 %v4558, %v4543
        %v5594 = vpack.c.b16 %v4559, %v4544
        %v5595 = vpack.c.b16 %v4560, %v4545
        %v5596 = vpack.c.b16 %v4561, %v4546
        %v5597 = vpack.c.b16 %v4562, %v4547
        %v5598 = vpack.c.b16 %v4563, %v4548
        %v5599 = vpack.c.b16 %v4579, %v4564
        %v5600 = vpack.c.b16 %v4580, %v4565
        %v5601 = vpack.c.b16 %v4581, %v4566
        %v5602 = vpack.c.b16 %v4582, %v4567
        %v5603 = vpack.c.b16 %v4583, %v4568
        %v5604 = vpack.c.b16 %v4584, %v4569
        %v5605 = vpack.c.b16 %v4585, %v4570
        %v5606 = vpack.c.b16 %v4586, %v4571
        %v5607 = vpack.c.b16 %v4587, %v4572
        %v5608 = vpack.c.b16 %v4588, %v4573
        %v5609 = vpack.c.b16 %v4589, %v4574
        %v5610 = vpack.c.b16 %v4590, %v4575
        %v5611 = vpack.c.b16 %v4591, %v4576
        %v5612 = vpack.c.b16 %v4592, %v4577
        %v5613 = vpack.c.b16 %v4593, %v4578
        %v5614 = vpack.c.b16 %v4609, %v4594
        %v5615 = vpack.c.b16 %v4610, %v4595
        %v5616 = vpack.c.b16 %v4611, %v4596
        %v5617 = vpack.c.b16 %v4612, %v4597
        %v5618 = vpack.c.b16 %v4613, %v4598
        %v5619 = vpack.c.b16 %v4614, %v4599
        %v5620 = vpack.c.b16 %v4615, %v4600
        %v5621 = vpack.c.b16 %v4616, %v4601
        %v5622 = vpack.c.b16 %v4617, %v4602
        %v5623 = vpack.c.b16 %v4618, %v4603
        %v5624 = vpack.c.b16 %v4619, %v4604
        %v5625 = vpack.c.b16 %v4620, %v4605
        %v5626 = vpack.c.b16 %v4621, %v4606
        %v5627 = vpack.c.b16 %v4622, %v4607
        %v5628 = vpack.c.b16 %v4623, %v4608
        %v5629 = vpack.c.b16 %v4639, %v4624
        %v5630 = vpack.c.b16 %v4640, %v4625
        %v5631 = vpack.c.b16 %v4641, %v4626
        %v5632 = vpack.c.b16 %v4642, %v4627
        %v5633 = vpack.c.b16 %v4643, %v4628
        %v5634 = vpack.c.b16 %v4644, %v4629
        %v5635 = vpack.c.b16 %v4645, %v4630
        %v5636 = vpack.c.b16 %v4646, %v4631
        %v5637 = vpack.c.b16 %v4647, %v4632
        %v5638 = vpack.c.b16 %v4648, %v4633
        %v5639 = vpack.c.b16 %v4649, %v4634
        %v5640 = vpack.c.b16 %v4650, %v4635
        %v5641 = vpack.c.b16 %v4651, %v4636
        %v5642 = vpack.c.b16 %v4652, %v4637
        %v5643 = vpack.c.b16 %v4653, %v4638
        %v5644 = vpack.c.b16 %v4669, %v4654
        %v5645 = vpack.c.b16 %v4670, %v4655
        %v5646 = vpack.c.b16 %v4671, %v4656
        %v5647 = vpack.c.b16 %v4672, %v4657
        %v5648 = vpack.c.b16 %v4673, %v4658
        %v5649 = vpack.c.b16 %v4674, %v4659
        %v5650 = vpack.c.b16 %v4675, %v4660
        %v5651 = vpack.c.b16 %v4676, %v4661
        %v5652 = vpack.c.b16 %v4677, %v4662
        %v5653 = vpack.c.b16 %v4678, %v4663
        %v5654 = vpack.c.b16 %v4679, %v4664
        %v5655 = vpack.c.b16 %v4680, %v4665
        %v5656 = vpack.c.b16 %v4681, %v4666
        %v5657 = vpack.c.b16 %v4682, %v4667
        %v5658 = vpack.c.b16 %v4683, %v4668
        %v5659 = vpack.c.b16 %v4699, %v4684
        %v5660 = vpack.c.b16 %v4700, %v4685
        %v5661 = vpack.c.b16 %v4701, %v4686
        %v5662 = vpack.c.b16 %v4702, %v4687
        %v5663 = vpack.c.b16 %v4703, %v4688
        %v5664 = vpack.c.b16 %v4704, %v4689
        %v5665 = vpack.c.b16 %v4705, %v4690
        %v5666 = vpack.c.b16 %v4706, %v4691
        %v5667 = vpack.c.b16 %v4707, %v4692
        %v5668 = vpack.c.b16 %v4708, %v4693
        %v5669 = vpack.c.b16 %v4709, %v4694
        %v5670 = vpack.c.b16 %v4710, %v4695
        %v5671 = vpack.c.b16 %v4711, %v4696
        %v5672 = vpack.c.b16 %v4712, %v4697
        %v5673 = vpack.c.b16 %v4713, %v4698
        %v5674 = vpack.c.b16 %v4729, %v4714
        %v5675 = vpack.c.b16 %v4730, %v4715
        %v5676 = vpack.c.b16 %v4731, %v4716
        %v5677 = vpack.c.b16 %v4732, %v4717
        %v5678 = vpack.c.b16 %v4733, %v4718
        %v5679 = vpack.c.b16 %v4734, %v4719
        %v5680 = vpack.c.b16 %v4735, %v4720
        %v5681 = vpack.c.b16 %v4736, %v4721
        %v5682 = vpack.c.b16 %v4737, %v4722
        %v5683 = vpack.c.b16 %v4738, %v4723
        %v5684 = vpack.c.b16 %v4739, %v4724
        %v5685 = vpack.c.b16 %v4740, %v4725
        %v5686 = vpack.c.b16 %v4741, %v4726
        %v5687 = vpack.c.b16 %v4742, %v4727
        %v5688 = vpack.c.b16 %v4743, %v4728
        %v5689 = vpack.c.b16 %v4744, %v4744
        %v5690 = vpack.c.b16 %v4745, %v4745
        %v5691 = vpack.c.b16 %v4746, %v4746
        %v5692 = vpack.c.b16 %v4747, %v4747
        %v5693 = vpack.c.b16 %v4748, %v4748
        %v5694 = vpack.c.b16 %v4749, %v4749
        %v5695 = vpack.c.b16 %v4750, %v4750
        %v5696 = vpack.c.b16 %v4751, %v4751
        %v5697 = vpack.c.b16 %v4752, %v4752
        %v5698 = vpack.c.b16 %v4753, %v4753
        %v5699 = vpack.c.b16 %v4754, %v4754
        %v5700 = vpack.c.b16 %v4755, %v4755
        %v5701 = vpack.c.b16 %v4756, %v4756
        %v5702 = vpack.c.b16 %v4757, %v4757
        %v5703 = vpack.c.b16 %v4758, %v4758
        %vm6634 = vcmask 850944
        %v6636 = vsel %vm6634, %v1861, 0
        %v6639 = vsel %vm6634, %v1869, 0
        %v6642 = vsel %vm750, %v5689, 0
        %v6645 = vsel %vm750, %v5690, 0
        %v6648 = vsel %vm750, %v5691, 0
        %v6651 = vsel %vm750, %v5692, 0
        %v6654 = vsel %vm750, %v5693, 0
        %v6657 = vsel %vm750, %v5694, 0
        %v6660 = vsel %vm750, %v5695, 0
        %v6663 = vsel %vm750, %v5696, 0
        %v6666 = vsel %vm750, %v5697, 0
        %v6669 = vsel %vm750, %v5698, 0
        %v6672 = vsel %vm750, %v5699, 0
        %v6675 = vsel %vm750, %v5700, 0
        %v6678 = vsel %vm750, %v5701, 0
        %v6681 = vsel %vm750, %v5702, 0
        %v6684 = vsel %vm750, %v5703, 0
        %6686 = vmatprep.subr.bf16.mxu0 %v4865
        %6687 = vmatpush1.bf16.msra.mxu0 %v4864
        %6688 = vmatprep.subr.bf16.mxu0 %v4850
        %6689 = vmatpush1.bf16.msra.mxu0 %v4849
        %6690 = vmatprep.subr.bf16.mxu0 %v4835
        %6691 = vmatpush1.bf16.msra.mxu0 %v4834
        %6692 = vmatprep.subr.bf16.mxu0 %v4820
        %6693 = vmatpush1.bf16.msra.mxu0 %v4819
        %6694 = vmatprep.subr.bf16.mxu0 %v4805
        %6695 = vmatpush1.bf16.msra.mxu0 %v4804
        %6696 = vmatprep.subr.bf16.mxu0 %v4790
        %6697 = vmatpush1.bf16.msra.mxu0 %v4789
        %6698 = vmatprep.subr.bf16.mxu0 %v4775
        %6699 = vmatpush1.bf16.msra.mxu0 %v4774
        %6700 = vmatprep.subr.bf16.mxu0 %v4760
        %6701 = vmatpush1.bf16.msra.mxu0 %v4759
        %6702 = vmatprep.subr.bf16.mxu0 %v4985
        %6703 = vmatpush2.bf16.msra.mxu0 %v4984
        %6704 = vmatprep.subr.bf16.mxu0 %v4970
        %6705 = vmatpush2.bf16.msra.mxu0 %v4969
        %6706 = vmatprep.subr.bf16.mxu0 %v4955
        %6707 = vmatpush2.bf16.msra.mxu0 %v4954
        %6708 = vmatprep.subr.bf16.mxu0 %v4940
        %6709 = vmatpush2.bf16.msra.mxu0 %v4939
        %6710 = vmatprep.subr.bf16.mxu0 %v4925
        %6711 = vmatpush2.bf16.msra.mxu0 %v4924
        %6712 = vmatprep.subr.bf16.mxu0 %v4910
        %6713 = vmatpush2.bf16.msra.mxu0 %v4909
        %6714 = vmatprep.subr.bf16.mxu0 %v4895
        %6715 = vmatpush2.bf16.msra.mxu0 %v4894
        %6716 = vmatprep.subr.bf16.mxu0 %v4880
        %6717 = vmatpush2.bf16.msra.mxu0 %v4879
        %6718 = vmatprep.mubr.bf16.mxu0 %v1855
        %6719 = vmatmul.mubr.bf16.gmra.mxu0 %v1854
        %v6720 = vpop.f32.mrf.mxu0
        %v6721 = vadd.f32 0.0, %v6720
        %v6722 = vpop.f32.mrf.mxu0
        %v6723 = vadd.f32 0.0, %v6722
        %v6724 = vpop.f32.mrf.mxu0
        %v6725 = vadd.f32 0.0, %v6724
        %v6726 = vpop.f32.mrf.mxu0
        %v6727 = vadd.f32 0.0, %v6726
        %6728 = vmatprep.mubr.bf16.mxu0 %v1863
        %6729 = vmatmul.mubr.bf16.gmra.mxu0 %v1862
        %v6730 = vpop.f32.mrf.mxu0
        %v6731 = vpop.f32.mrf.mxu0
        %v6732 = vpop.f32.mrf.mxu0
        %v6733 = vpop.f32.mrf.mxu0
        %6734 = vdwg.mxu0
        %6735 = vmatprep.subr.bf16.mxu0 %v5105
        %6736 = vmatpush1.bf16.msra.mxu0 %v5104
        %6737 = vmatprep.subr.bf16.mxu0 %v5090
        %6738 = vmatpush1.bf16.msra.mxu0 %v5089
        %6739 = vmatprep.subr.bf16.mxu0 %v5075
        %6740 = vmatpush1.bf16.msra.mxu0 %v5074
        %6741 = vmatprep.subr.bf16.mxu0 %v5060
        %6742 = vmatpush1.bf16.msra.mxu0 %v5059
        %6743 = vmatprep.subr.bf16.mxu0 %v5045
        %6744 = vmatpush1.bf16.msra.mxu0 %v5044
        %6745 = vmatprep.subr.bf16.mxu0 %v5030
        %6746 = vmatpush1.bf16.msra.mxu0 %v5029
        %6747 = vmatprep.subr.bf16.mxu0 %v5015
        %6748 = vmatpush1.bf16.msra.mxu0 %v5014
        %6749 = vmatprep.subr.bf16.mxu0 %v5000
        %6750 = vmatpush1.bf16.msra.mxu0 %v4999
        %6751 = vmatprep.subr.bf16.mxu0 %v5225
        %6752 = vmatpush2.bf16.msra.mxu0 %v5224
        %6753 = vmatprep.subr.bf16.mxu0 %v5210
        %6754 = vmatpush2.bf16.msra.mxu0 %v5209
        %6755 = vmatprep.subr.bf16.mxu0 %v5195
        %6756 = vmatpush2.bf16.msra.mxu0 %v5194
        %6757 = vmatprep.subr.bf16.mxu0 %v5180
        %6758 = vmatpush2.bf16.msra.mxu0 %v5179
        %6759 = vmatprep.subr.bf16.mxu0 %v5165
        %6760 = vmatpush2.bf16.msra.mxu0 %v5164
        %6761 = vmatprep.subr.bf16.mxu0 %v5150
        %6762 = vmatpush2.bf16.msra.mxu0 %v5149
        %6763 = vmatprep.subr.bf16.mxu0 %v5135
        %6764 = vmatpush2.bf16.msra.mxu0 %v5134
        %6765 = vmatprep.subr.bf16.mxu0 %v5120
        %6766 = vmatpush2.bf16.msra.mxu0 %v5119
        %6767 = vmatprep.mubr.bf16.mxu0 %v1857
        %6768 = vmatmul.mubr.bf16.gmra.mxu0 %v1856
        %v6769 = vpop.f32.mrf.mxu0
        %v6770 = vadd.f32 %v6721, %v6769
        %v6771 = vpop.f32.mrf.mxu0
        %v6772 = vadd.f32 %v6723, %v6771
        %v6773 = vpop.f32.mrf.mxu0
        %v6774 = vadd.f32 %v6725, %v6773
        %v6775 = vpop.f32.mrf.mxu0
        %v6776 = vadd.f32 %v6727, %v6775
        %6777 = vmatprep.mubr.bf16.mxu0 %v1865
        %6778 = vmatmul.mubr.bf16.gmra.mxu0 %v1864
        %v6779 = vpop.f32.mrf.mxu0
        %v6780 = vpop.f32.mrf.mxu0
        %v6781 = vpop.f32.mrf.mxu0
        %v6782 = vpop.f32.mrf.mxu0
        %6783 = vdwg.mxu0
        %6784 = vmatprep.subr.bf16.mxu0 %v5345
        %6785 = vmatpush1.bf16.msra.mxu0 %v5344
        %6786 = vmatprep.subr.bf16.mxu0 %v5330
        %6787 = vmatpush1.bf16.msra.mxu0 %v5329
        %6788 = vmatprep.subr.bf16.mxu0 %v5315
        %6789 = vmatpush1.bf16.msra.mxu0 %v5314
        %6790 = vmatprep.subr.bf16.mxu0 %v5300
        %6791 = vmatpush1.bf16.msra.mxu0 %v5299
        %6792 = vmatprep.subr.bf16.mxu0 %v5285
        %6793 = vmatpush1.bf16.msra.mxu0 %v5284
        %6794 = vmatprep.subr.bf16.mxu0 %v5270
        %6795 = vmatpush1.bf16.msra.mxu0 %v5269
        %6796 = vmatprep.subr.bf16.mxu0 %v5255
        %6797 = vmatpush1.bf16.msra.mxu0 %v5254
        %6798 = vmatprep.subr.bf16.mxu0 %v5240
        %6799 = vmatpush1.bf16.msra.mxu0 %v5239
        %6800 = vmatprep.subr.bf16.mxu0 %v5465
        %6801 = vmatpush2.bf16.msra.mxu0 %v5464
        %6802 = vmatprep.subr.bf16.mxu0 %v5450
        %6803 = vmatpush2.bf16.msra.mxu0 %v5449
        %6804 = vmatprep.subr.bf16.mxu0 %v5435
        %6805 = vmatpush2.bf16.msra.mxu0 %v5434
        %6806 = vmatprep.subr.bf16.mxu0 %v5420
        %6807 = vmatpush2.bf16.msra.mxu0 %v5419
        %6808 = vmatprep.subr.bf16.mxu0 %v5405
        %6809 = vmatpush2.bf16.msra.mxu0 %v5404
        %6810 = vmatprep.subr.bf16.mxu0 %v5390
        %6811 = vmatpush2.bf16.msra.mxu0 %v5389
        %6812 = vmatprep.subr.bf16.mxu0 %v5375
        %6813 = vmatpush2.bf16.msra.mxu0 %v5374
        %6814 = vmatprep.subr.bf16.mxu0 %v5360
        %6815 = vmatpush2.bf16.msra.mxu0 %v5359
        %6816 = vmatprep.mubr.bf16.mxu0 %v1859
        %6817 = vmatmul.mubr.bf16.gmra.mxu0 %v1858
        %v6818 = vpop.f32.mrf.mxu0
        %v6819 = vadd.f32 %v6770, %v6818
        %v6820 = vpop.f32.mrf.mxu0
        %v6821 = vadd.f32 %v6772, %v6820
        %v6822 = vpop.f32.mrf.mxu0
        %v6823 = vadd.f32 %v6774, %v6822
        %v6824 = vpop.f32.mrf.mxu0
        %v6825 = vadd.f32 %v6776, %v6824
        %6826 = vmatprep.mubr.bf16.mxu0 %v1867
        %6827 = vmatmul.mubr.bf16.gmra.mxu0 %v1866
        %v6828 = vpop.f32.mrf.mxu0
        %v6829 = vpop.f32.mrf.mxu0
        %v6830 = vpop.f32.mrf.mxu0
        %v6831 = vpop.f32.mrf.mxu0
        %6832 = vdwg.mxu0
        %6833 = vmatprep.subr.bf16.mxu0 %v5585
        %6834 = vmatpush1.bf16.msra.mxu0 %v5584
        %6835 = vmatprep.subr.bf16.mxu0 %v5570
        %6836 = vmatpush1.bf16.msra.mxu0 %v5569
        %6837 = vmatprep.subr.bf16.mxu0 %v5555
        %6838 = vmatpush1.bf16.msra.mxu0 %v5554
        %6839 = vmatprep.subr.bf16.mxu0 %v5540
        %6840 = vmatpush1.bf16.msra.mxu0 %v5539
        %6841 = vmatprep.subr.bf16.mxu0 %v5525
        %6842 = vmatpush1.bf16.msra.mxu0 %v5524
        %6843 = vmatprep.subr.bf16.mxu0 %v5510
        %6844 = vmatpush1.bf16.msra.mxu0 %v5509
        %6845 = vmatprep.subr.bf16.mxu0 %v5495
        %6846 = vmatpush1.bf16.msra.mxu0 %v5494
        %6847 = vmatprep.subr.bf16.mxu0 %v5480
        %6848 = vmatpush1.bf16.msra.mxu0 %v5479
        %6849 = vmatprep.subr.bf16.mxu0 0
        %6850 = vmatpush2.bf16.msra.mxu0 0
        %6851 = vmatprep.subr.bf16.mxu0 %v6645
        %6852 = vmatpush2.bf16.msra.mxu0 %v6642
        %6853 = vmatprep.subr.bf16.mxu0 %v5675
        %6854 = vmatpush2.bf16.msra.mxu0 %v5674
        %6855 = vmatprep.subr.bf16.mxu0 %v5660
        %6856 = vmatpush2.bf16.msra.mxu0 %v5659
        %6857 = vmatprep.subr.bf16.mxu0 %v5645
        %6858 = vmatpush2.bf16.msra.mxu0 %v5644
        %6859 = vmatprep.subr.bf16.mxu0 %v5630
        %6860 = vmatpush2.bf16.msra.mxu0 %v5629
        %6861 = vmatprep.subr.bf16.mxu0 %v5615
        %6862 = vmatpush2.bf16.msra.mxu0 %v5614
        %6863 = vmatprep.subr.bf16.mxu0 %v5600
        %6864 = vmatpush2.bf16.msra.mxu0 %v5599
        %6865 = vmatprep.mubr.bf16.mxu0 %v6636
        %6866 = vmatmul.mubr.bf16.gmra.mxu0 %v1860
        %v6867 = vpop.f32.mrf.mxu0
        %v6868 = vadd.f32 %v6819, %v6867
        %v6869 = vpop.f32.mrf.mxu0
        %v6870 = vadd.f32 %v6821, %v6869
        %v6871 = vpop.f32.mrf.mxu0
        %v6872 = vadd.f32 %v6823, %v6871
        %v6873 = vpop.f32.mrf.mxu0
        %v6874 = vadd.f32 %v6825, %v6873
        %6875 = vmatprep.mubr.bf16.mxu0 %v6639
        %6876 = vmatmul.mubr.bf16.gmra.mxu0 %v1868
        %v6877 = vpop.f32.mrf.mxu0
        %v6878 = vpop.f32.mrf.mxu0
        %v6879 = vpop.f32.mrf.mxu0
        %v6880 = vpop.f32.mrf.mxu0
        %6881 = vdwg.mxu0
        %6882 = vmatprep.subr.bf16.mxu0 %v4867
        %6883 = vmatpush1.bf16.msra.mxu0 %v4866
        %6884 = vmatprep.subr.bf16.mxu0 %v4852
        %6885 = vmatpush1.bf16.msra.mxu0 %v4851
        %6886 = vmatprep.subr.bf16.mxu0 %v4837
        %6887 = vmatpush1.bf16.msra.mxu0 %v4836
        %6888 = vmatprep.subr.bf16.mxu0 %v4822
        %6889 = vmatpush1.bf16.msra.mxu0 %v4821
        %6890 = vmatprep.subr.bf16.mxu0 %v4807
        %6891 = vmatpush1.bf16.msra.mxu0 %v4806
        %6892 = vmatprep.subr.bf16.mxu0 %v4792
        %6893 = vmatpush1.bf16.msra.mxu0 %v4791
        %6894 = vmatprep.subr.bf16.mxu0 %v4777
        %6895 = vmatpush1.bf16.msra.mxu0 %v4776
        %6896 = vmatprep.subr.bf16.mxu0 %v4762
        %6897 = vmatpush1.bf16.msra.mxu0 %v4761
        %6898 = vmatprep.subr.bf16.mxu0 %v4987
        %6899 = vmatpush2.bf16.msra.mxu0 %v4986
        %6900 = vmatprep.subr.bf16.mxu0 %v4972
        %6901 = vmatpush2.bf16.msra.mxu0 %v4971
        %6902 = vmatprep.subr.bf16.mxu0 %v4957
        %6903 = vmatpush2.bf16.msra.mxu0 %v4956
        %6904 = vmatprep.subr.bf16.mxu0 %v4942
        %6905 = vmatpush2.bf16.msra.mxu0 %v4941
        %6906 = vmatprep.subr.bf16.mxu0 %v4927
        %6907 = vmatpush2.bf16.msra.mxu0 %v4926
        %6908 = vmatprep.subr.bf16.mxu0 %v4912
        %6909 = vmatpush2.bf16.msra.mxu0 %v4911
        %6910 = vmatprep.subr.bf16.mxu0 %v4897
        %6911 = vmatpush2.bf16.msra.mxu0 %v4896
        %6912 = vmatprep.subr.bf16.mxu0 %v4882
        %6913 = vmatpush2.bf16.msra.mxu0 %v4881
        %6914 = vmatprep.mubr.bf16.mxu0 %v1855
        %6915 = vmatmul.mubr.bf16.gmra.mxu0 %v1854
        %v6916 = vpop.f32.mrf.mxu0
        %v6917 = vadd.f32 0.0, %v6916
        %v6918 = vpop.f32.mrf.mxu0
        %v6919 = vadd.f32 0.0, %v6918
        %v6920 = vpop.f32.mrf.mxu0
        %v6921 = vadd.f32 0.0, %v6920
        %v6922 = vpop.f32.mrf.mxu0
        %v6923 = vadd.f32 0.0, %v6922
        %6924 = vmatprep.mubr.bf16.mxu0 %v1863
        %6925 = vmatmul.mubr.bf16.gmra.mxu0 %v1862
        %v6926 = vpop.f32.mrf.mxu0
        %v6927 = vpop.f32.mrf.mxu0
        %v6928 = vpop.f32.mrf.mxu0
        %v6929 = vpop.f32.mrf.mxu0
        %6930 = vdwg.mxu0
        %6931 = vmatprep.subr.bf16.mxu0 %v5107
        %6932 = vmatpush1.bf16.msra.mxu0 %v5106
        %6933 = vmatprep.subr.bf16.mxu0 %v5092
        %6934 = vmatpush1.bf16.msra.mxu0 %v5091
        %6935 = vmatprep.subr.bf16.mxu0 %v5077
        %6936 = vmatpush1.bf16.msra.mxu0 %v5076
        %6937 = vmatprep.subr.bf16.mxu0 %v5062
        %6938 = vmatpush1.bf16.msra.mxu0 %v5061
        %6939 = vmatprep.subr.bf16.mxu0 %v5047
        %6940 = vmatpush1.bf16.msra.mxu0 %v5046
        %6941 = vmatprep.subr.bf16.mxu0 %v5032
        %6942 = vmatpush1.bf16.msra.mxu0 %v5031
        %6943 = vmatprep.subr.bf16.mxu0 %v5017
        %6944 = vmatpush1.bf16.msra.mxu0 %v5016
        %6945 = vmatprep.subr.bf16.mxu0 %v5002
        %6946 = vmatpush1.bf16.msra.mxu0 %v5001
        %6947 = vmatprep.subr.bf16.mxu0 %v5227
        %6948 = vmatpush2.bf16.msra.mxu0 %v5226
        %6949 = vmatprep.subr.bf16.mxu0 %v5212
        %6950 = vmatpush2.bf16.msra.mxu0 %v5211
        %6951 = vmatprep.subr.bf16.mxu0 %v5197
        %6952 = vmatpush2.bf16.msra.mxu0 %v5196
        %6953 = vmatprep.subr.bf16.mxu0 %v5182
        %6954 = vmatpush2.bf16.msra.mxu0 %v5181
        %6955 = vmatprep.subr.bf16.mxu0 %v5167
        %6956 = vmatpush2.bf16.msra.mxu0 %v5166
        %6957 = vmatprep.subr.bf16.mxu0 %v5152
        %6958 = vmatpush2.bf16.msra.mxu0 %v5151
        %6959 = vmatprep.subr.bf16.mxu0 %v5137
        %6960 = vmatpush2.bf16.msra.mxu0 %v5136
        %6961 = vmatprep.subr.bf16.mxu0 %v5122
        %6962 = vmatpush2.bf16.msra.mxu0 %v5121
        %6963 = vmatprep.mubr.bf16.mxu0 %v1857
        %6964 = vmatmul.mubr.bf16.gmra.mxu0 %v1856
        %v6965 = vpop.f32.mrf.mxu0
        %v6966 = vadd.f32 %v6917, %v6965
        %v6967 = vpop.f32.mrf.mxu0
        %v6968 = vadd.f32 %v6919, %v6967
        %v6969 = vpop.f32.mrf.mxu0
        %v6970 = vadd.f32 %v6921, %v6969
        %v6971 = vpop.f32.mrf.mxu0
        %v6972 = vadd.f32 %v6923, %v6971
        %6973 = vmatprep.mubr.bf16.mxu0 %v1865
        %6974 = vmatmul.mubr.bf16.gmra.mxu0 %v1864
        %v6975 = vpop.f32.mrf.mxu0
        %v6976 = vpop.f32.mrf.mxu0
        %v6977 = vpop.f32.mrf.mxu0
        %v6978 = vpop.f32.mrf.mxu0
        %6979 = vdwg.mxu0
        %6980 = vmatprep.subr.bf16.mxu0 %v5347
        %6981 = vmatpush1.bf16.msra.mxu0 %v5346
        %6982 = vmatprep.subr.bf16.mxu0 %v5332
        %6983 = vmatpush1.bf16.msra.mxu0 %v5331
        %6984 = vmatprep.subr.bf16.mxu0 %v5317
        %6985 = vmatpush1.bf16.msra.mxu0 %v5316
        %6986 = vmatprep.subr.bf16.mxu0 %v5302
        %6987 = vmatpush1.bf16.msra.mxu0 %v5301
        %6988 = vmatprep.subr.bf16.mxu0 %v5287
        %6989 = vmatpush1.bf16.msra.mxu0 %v5286
        %6990 = vmatprep.subr.bf16.mxu0 %v5272
        %6991 = vmatpush1.bf16.msra.mxu0 %v5271
        %6992 = vmatprep.subr.bf16.mxu0 %v5257
        %6993 = vmatpush1.bf16.msra.mxu0 %v5256
        %6994 = vmatprep.subr.bf16.mxu0 %v5242
        %6995 = vmatpush1.bf16.msra.mxu0 %v5241
        %6996 = vmatprep.subr.bf16.mxu0 %v5467
        %6997 = vmatpush2.bf16.msra.mxu0 %v5466
        %6998 = vmatprep.subr.bf16.mxu0 %v5452
        %6999 = vmatpush2.bf16.msra.mxu0 %v5451
        %7000 = vmatprep.subr.bf16.mxu0 %v5437
        %7001 = vmatpush2.bf16.msra.mxu0 %v5436
        %7002 = vmatprep.subr.bf16.mxu0 %v5422
        %7003 = vmatpush2.bf16.msra.mxu0 %v5421
        %7004 = vmatprep.subr.bf16.mxu0 %v5407
        %7005 = vmatpush2.bf16.msra.mxu0 %v5406
        %7006 = vmatprep.subr.bf16.mxu0 %v5392
        %7007 = vmatpush2.bf16.msra.mxu0 %v5391
        %7008 = vmatprep.subr.bf16.mxu0 %v5377
        %7009 = vmatpush2.bf16.msra.mxu0 %v5376
        %7010 = vmatprep.subr.bf16.mxu0 %v5362
        %7011 = vmatpush2.bf16.msra.mxu0 %v5361
        %7012 = vmatprep.mubr.bf16.mxu0 %v1859
        %7013 = vmatmul.mubr.bf16.gmra.mxu0 %v1858
        %v7014 = vpop.f32.mrf.mxu0
        %v7015 = vadd.f32 %v6966, %v7014
        %v7016 = vpop.f32.mrf.mxu0
        %v7017 = vadd.f32 %v6968, %v7016
        %v7018 = vpop.f32.mrf.mxu0
        %v7019 = vadd.f32 %v6970, %v7018
        %v7020 = vpop.f32.mrf.mxu0
        %v7021 = vadd.f32 %v6972, %v7020
        %7022 = vmatprep.mubr.bf16.mxu0 %v1867
        %7023 = vmatmul.mubr.bf16.gmra.mxu0 %v1866
        %v7024 = vpop.f32.mrf.mxu0
        %v7025 = vpop.f32.mrf.mxu0
        %v7026 = vpop.f32.mrf.mxu0
        %v7027 = vpop.f32.mrf.mxu0
        %7028 = vdwg.mxu0
        %7029 = vmatprep.subr.bf16.mxu0 %v5587
        %7030 = vmatpush1.bf16.msra.mxu0 %v5586
        %7031 = vmatprep.subr.bf16.mxu0 %v5572
        %7032 = vmatpush1.bf16.msra.mxu0 %v5571
        %7033 = vmatprep.subr.bf16.mxu0 %v5557
        %7034 = vmatpush1.bf16.msra.mxu0 %v5556
        %7035 = vmatprep.subr.bf16.mxu0 %v5542
        %7036 = vmatpush1.bf16.msra.mxu0 %v5541
        %7037 = vmatprep.subr.bf16.mxu0 %v5527
        %7038 = vmatpush1.bf16.msra.mxu0 %v5526
        %7039 = vmatprep.subr.bf16.mxu0 %v5512
        %7040 = vmatpush1.bf16.msra.mxu0 %v5511
        %7041 = vmatprep.subr.bf16.mxu0 %v5497
        %7042 = vmatpush1.bf16.msra.mxu0 %v5496
        %7043 = vmatprep.subr.bf16.mxu0 %v5482
        %7044 = vmatpush1.bf16.msra.mxu0 %v5481
        %7045 = vmatprep.subr.bf16.mxu0 0
        %7046 = vmatpush2.bf16.msra.mxu0 0
        %7047 = vmatprep.subr.bf16.mxu0 %v6651
        %7048 = vmatpush2.bf16.msra.mxu0 %v6648
        %7049 = vmatprep.subr.bf16.mxu0 %v5677
        %7050 = vmatpush2.bf16.msra.mxu0 %v5676
        %7051 = vmatprep.subr.bf16.mxu0 %v5662
        %7052 = vmatpush2.bf16.msra.mxu0 %v5661
        %7053 = vmatprep.subr.bf16.mxu0 %v5647
        %7054 = vmatpush2.bf16.msra.mxu0 %v5646
        %7055 = vmatprep.subr.bf16.mxu0 %v5632
        %7056 = vmatpush2.bf16.msra.mxu0 %v5631
        %7057 = vmatprep.subr.bf16.mxu0 %v5617
        %7058 = vmatpush2.bf16.msra.mxu0 %v5616
        %7059 = vmatprep.subr.bf16.mxu0 %v5602
        %7060 = vmatpush2.bf16.msra.mxu0 %v5601
        %7061 = vmatprep.mubr.bf16.mxu0 %v6636
        %7062 = vmatmul.mubr.bf16.gmra.mxu0 %v1860
        %v7063 = vpop.f32.mrf.mxu0
        %v7064 = vadd.f32 %v7015, %v7063
        %v7065 = vpop.f32.mrf.mxu0
        %v7066 = vadd.f32 %v7017, %v7065
        %v7067 = vpop.f32.mrf.mxu0
        %v7068 = vadd.f32 %v7019, %v7067
        %v7069 = vpop.f32.mrf.mxu0
        %v7070 = vadd.f32 %v7021, %v7069
        %7071 = vmatprep.mubr.bf16.mxu0 %v6639
        %7072 = vmatmul.mubr.bf16.gmra.mxu0 %v1868
        %v7073 = vpop.f32.mrf.mxu0
        %v7074 = vpop.f32.mrf.mxu0
        %v7075 = vpop.f32.mrf.mxu0
        %v7076 = vpop.f32.mrf.mxu0
        %7077 = vdwg.mxu0
        %7078 = vmatprep.subr.bf16.mxu0 %v4869
        %7079 = vmatpush1.bf16.msra.mxu0 %v4868
        %7080 = vmatprep.subr.bf16.mxu0 %v4854
        %7081 = vmatpush1.bf16.msra.mxu0 %v4853
        %7082 = vmatprep.subr.bf16.mxu0 %v4839
        %7083 = vmatpush1.bf16.msra.mxu0 %v4838
        %7084 = vmatprep.subr.bf16.mxu0 %v4824
        %7085 = vmatpush1.bf16.msra.mxu0 %v4823
        %7086 = vmatprep.subr.bf16.mxu0 %v4809
        %7087 = vmatpush1.bf16.msra.mxu0 %v4808
        %7088 = vmatprep.subr.bf16.mxu0 %v4794
        %7089 = vmatpush1.bf16.msra.mxu0 %v4793
        %7090 = vmatprep.subr.bf16.mxu0 %v4779
        %7091 = vmatpush1.bf16.msra.mxu0 %v4778
        %7092 = vmatprep.subr.bf16.mxu0 %v4764
        %7093 = vmatpush1.bf16.msra.mxu0 %v4763
        %7094 = vmatprep.subr.bf16.mxu0 %v4989
        %7095 = vmatpush2.bf16.msra.mxu0 %v4988
        %7096 = vmatprep.subr.bf16.mxu0 %v4974
        %7097 = vmatpush2.bf16.msra.mxu0 %v4973
        %7098 = vmatprep.subr.bf16.mxu0 %v4959
        %7099 = vmatpush2.bf16.msra.mxu0 %v4958
        %7100 = vmatprep.subr.bf16.mxu0 %v4944
        %7101 = vmatpush2.bf16.msra.mxu0 %v4943
        %7102 = vmatprep.subr.bf16.mxu0 %v4929
        %7103 = vmatpush2.bf16.msra.mxu0 %v4928
        %7104 = vmatprep.subr.bf16.mxu0 %v4914
        %7105 = vmatpush2.bf16.msra.mxu0 %v4913
        %7106 = vmatprep.subr.bf16.mxu0 %v4899
        %7107 = vmatpush2.bf16.msra.mxu0 %v4898
        %7108 = vmatprep.subr.bf16.mxu0 %v4884
        %7109 = vmatpush2.bf16.msra.mxu0 %v4883
        %7110 = vmatprep.mubr.bf16.mxu0 %v1855
        %7111 = vmatmul.mubr.bf16.gmra.mxu0 %v1854
        %v7112 = vpop.f32.mrf.mxu0
        %v7113 = vadd.f32 0.0, %v7112
        %v7114 = vpop.f32.mrf.mxu0
        %v7115 = vadd.f32 0.0, %v7114
        %v7116 = vpop.f32.mrf.mxu0
        %v7117 = vadd.f32 0.0, %v7116
        %v7118 = vpop.f32.mrf.mxu0
        %v7119 = vadd.f32 0.0, %v7118
        %7120 = vmatprep.mubr.bf16.mxu0 %v1863
        %7121 = vmatmul.mubr.bf16.gmra.mxu0 %v1862
        %v7122 = vpop.f32.mrf.mxu0
        %v7123 = vpop.f32.mrf.mxu0
        %v7124 = vpop.f32.mrf.mxu0
        %v7125 = vpop.f32.mrf.mxu0
        %7126 = vdwg.mxu0
        %7127 = vmatprep.subr.bf16.mxu0 %v5109
        %7128 = vmatpush1.bf16.msra.mxu0 %v5108
        %7129 = vmatprep.subr.bf16.mxu0 %v5094
        %7130 = vmatpush1.bf16.msra.mxu0 %v5093
        %7131 = vmatprep.subr.bf16.mxu0 %v5079
        %7132 = vmatpush1.bf16.msra.mxu0 %v5078
        %7133 = vmatprep.subr.bf16.mxu0 %v5064
        %7134 = vmatpush1.bf16.msra.mxu0 %v5063
        %7135 = vmatprep.subr.bf16.mxu0 %v5049
        %7136 = vmatpush1.bf16.msra.mxu0 %v5048
        %7137 = vmatprep.subr.bf16.mxu0 %v5034
        %7138 = vmatpush1.bf16.msra.mxu0 %v5033
        %7139 = vmatprep.subr.bf16.mxu0 %v5019
        %7140 = vmatpush1.bf16.msra.mxu0 %v5018
        %7141 = vmatprep.subr.bf16.mxu0 %v5004
        %7142 = vmatpush1.bf16.msra.mxu0 %v5003
        %7143 = vmatprep.subr.bf16.mxu0 %v5229
        %7144 = vmatpush2.bf16.msra.mxu0 %v5228
        %7145 = vmatprep.subr.bf16.mxu0 %v5214
        %7146 = vmatpush2.bf16.msra.mxu0 %v5213
        %7147 = vmatprep.subr.bf16.mxu0 %v5199
        %7148 = vmatpush2.bf16.msra.mxu0 %v5198
        %7149 = vmatprep.subr.bf16.mxu0 %v5184
        %7150 = vmatpush2.bf16.msra.mxu0 %v5183
        %7151 = vmatprep.subr.bf16.mxu0 %v5169
        %7152 = vmatpush2.bf16.msra.mxu0 %v5168
        %7153 = vmatprep.subr.bf16.mxu0 %v5154
        %7154 = vmatpush2.bf16.msra.mxu0 %v5153
        %7155 = vmatprep.subr.bf16.mxu0 %v5139
        %7156 = vmatpush2.bf16.msra.mxu0 %v5138
        %7157 = vmatprep.subr.bf16.mxu0 %v5124
        %7158 = vmatpush2.bf16.msra.mxu0 %v5123
        %7159 = vmatprep.mubr.bf16.mxu0 %v1857
        %7160 = vmatmul.mubr.bf16.gmra.mxu0 %v1856
        %v7161 = vpop.f32.mrf.mxu0
        %v7162 = vadd.f32 %v7113, %v7161
        %v7163 = vpop.f32.mrf.mxu0
        %v7164 = vadd.f32 %v7115, %v7163
        %v7165 = vpop.f32.mrf.mxu0
        %v7166 = vadd.f32 %v7117, %v7165
        %v7167 = vpop.f32.mrf.mxu0
        %v7168 = vadd.f32 %v7119, %v7167
        %7169 = vmatprep.mubr.bf16.mxu0 %v1865
        %7170 = vmatmul.mubr.bf16.gmra.mxu0 %v1864
        %v7171 = vpop.f32.mrf.mxu0
        %v7172 = vpop.f32.mrf.mxu0
        %v7173 = vpop.f32.mrf.mxu0
        %v7174 = vpop.f32.mrf.mxu0
        %7175 = vdwg.mxu0
        %7176 = vmatprep.subr.bf16.mxu0 %v5349
        %7177 = vmatpush1.bf16.msra.mxu0 %v5348
        %7178 = vmatprep.subr.bf16.mxu0 %v5334
        %7179 = vmatpush1.bf16.msra.mxu0 %v5333
        %7180 = vmatprep.subr.bf16.mxu0 %v5319
        %7181 = vmatpush1.bf16.msra.mxu0 %v5318
        %7182 = vmatprep.subr.bf16.mxu0 %v5304
        %7183 = vmatpush1.bf16.msra.mxu0 %v5303
        %7184 = vmatprep.subr.bf16.mxu0 %v5289
        %7185 = vmatpush1.bf16.msra.mxu0 %v5288
        %7186 = vmatprep.subr.bf16.mxu0 %v5274
        %7187 = vmatpush1.bf16.msra.mxu0 %v5273
        %7188 = vmatprep.subr.bf16.mxu0 %v5259
        %7189 = vmatpush1.bf16.msra.mxu0 %v5258
        %7190 = vmatprep.subr.bf16.mxu0 %v5244
        %7191 = vmatpush1.bf16.msra.mxu0 %v5243
        %7192 = vmatprep.subr.bf16.mxu0 %v5469
        %7193 = vmatpush2.bf16.msra.mxu0 %v5468
        %7194 = vmatprep.subr.bf16.mxu0 %v5454
        %7195 = vmatpush2.bf16.msra.mxu0 %v5453
        %7196 = vmatprep.subr.bf16.mxu0 %v5439
        %7197 = vmatpush2.bf16.msra.mxu0 %v5438
        %7198 = vmatprep.subr.bf16.mxu0 %v5424
        %7199 = vmatpush2.bf16.msra.mxu0 %v5423
        %7200 = vmatprep.subr.bf16.mxu0 %v5409
        %7201 = vmatpush2.bf16.msra.mxu0 %v5408
        %7202 = vmatprep.subr.bf16.mxu0 %v5394
        %7203 = vmatpush2.bf16.msra.mxu0 %v5393
        %7204 = vmatprep.subr.bf16.mxu0 %v5379
        %7205 = vmatpush2.bf16.msra.mxu0 %v5378
        %7206 = vmatprep.subr.bf16.mxu0 %v5364
        %7207 = vmatpush2.bf16.msra.mxu0 %v5363
        %7208 = vmatprep.mubr.bf16.mxu0 %v1859
        %7209 = vmatmul.mubr.bf16.gmra.mxu0 %v1858
        %v7210 = vpop.f32.mrf.mxu0
        %v7211 = vadd.f32 %v7162, %v7210
        %v7212 = vpop.f32.mrf.mxu0
        %v7213 = vadd.f32 %v7164, %v7212
        %v7214 = vpop.f32.mrf.mxu0
        %v7215 = vadd.f32 %v7166, %v7214
        %v7216 = vpop.f32.mrf.mxu0
        %v7217 = vadd.f32 %v7168, %v7216
        %7218 = vmatprep.mubr.bf16.mxu0 %v1867
        %7219 = vmatmul.mubr.bf16.gmra.mxu0 %v1866
        %v7220 = vpop.f32.mrf.mxu0
        %v7221 = vpop.f32.mrf.mxu0
        %v7222 = vpop.f32.mrf.mxu0
        %v7223 = vpop.f32.mrf.mxu0
        %7224 = vdwg.mxu0
        %7225 = vmatprep.subr.bf16.mxu0 %v5589
        %7226 = vmatpush1.bf16.msra.mxu0 %v5588
        %7227 = vmatprep.subr.bf16.mxu0 %v5574
        %7228 = vmatpush1.bf16.msra.mxu0 %v5573
        %7229 = vmatprep.subr.bf16.mxu0 %v5559
        %7230 = vmatpush1.bf16.msra.mxu0 %v5558
        %7231 = vmatprep.subr.bf16.mxu0 %v5544
        %7232 = vmatpush1.bf16.msra.mxu0 %v5543
        %7233 = vmatprep.subr.bf16.mxu0 %v5529
        %7234 = vmatpush1.bf16.msra.mxu0 %v5528
        %7235 = vmatprep.subr.bf16.mxu0 %v5514
        %7236 = vmatpush1.bf16.msra.mxu0 %v5513
        %7237 = vmatprep.subr.bf16.mxu0 %v5499
        %7238 = vmatpush1.bf16.msra.mxu0 %v5498
        %7239 = vmatprep.subr.bf16.mxu0 %v5484
        %7240 = vmatpush1.bf16.msra.mxu0 %v5483
        %7241 = vmatprep.subr.bf16.mxu0 0
        %7242 = vmatpush2.bf16.msra.mxu0 0
        %7243 = vmatprep.subr.bf16.mxu0 %v6657
        %7244 = vmatpush2.bf16.msra.mxu0 %v6654
        %7245 = vmatprep.subr.bf16.mxu0 %v5679
        %7246 = vmatpush2.bf16.msra.mxu0 %v5678
        %7247 = vmatprep.subr.bf16.mxu0 %v5664
        %7248 = vmatpush2.bf16.msra.mxu0 %v5663
        %7249 = vmatprep.subr.bf16.mxu0 %v5649
        %7250 = vmatpush2.bf16.msra.mxu0 %v5648
        %7251 = vmatprep.subr.bf16.mxu0 %v5634
        %7252 = vmatpush2.bf16.msra.mxu0 %v5633
        %7253 = vmatprep.subr.bf16.mxu0 %v5619
        %7254 = vmatpush2.bf16.msra.mxu0 %v5618
        %7255 = vmatprep.subr.bf16.mxu0 %v5604
        %7256 = vmatpush2.bf16.msra.mxu0 %v5603
        %7257 = vmatprep.mubr.bf16.mxu0 %v6636
        %7258 = vmatmul.mubr.bf16.gmra.mxu0 %v1860
        %v7259 = vpop.f32.mrf.mxu0
        %v7260 = vadd.f32 %v7211, %v7259
        %v7261 = vpop.f32.mrf.mxu0
        %v7262 = vadd.f32 %v7213, %v7261
        %v7263 = vpop.f32.mrf.mxu0
        %v7264 = vadd.f32 %v7215, %v7263
        %v7265 = vpop.f32.mrf.mxu0
        %v7266 = vadd.f32 %v7217, %v7265
        %7267 = vmatprep.mubr.bf16.mxu0 %v6639
        %7268 = vmatmul.mubr.bf16.gmra.mxu0 %v1868
        %v7269 = vpop.f32.mrf.mxu0
        %v7270 = vpop.f32.mrf.mxu0
        %v7271 = vpop.f32.mrf.mxu0
        %v7272 = vpop.f32.mrf.mxu0
        %7273 = vdwg.mxu0
        %7274 = vmatprep.subr.bf16.mxu0 %v4871
        %7275 = vmatpush1.bf16.msra.mxu0 %v4870
        %7276 = vmatprep.subr.bf16.mxu0 %v4856
        %7277 = vmatpush1.bf16.msra.mxu0 %v4855
        %7278 = vmatprep.subr.bf16.mxu0 %v4841
        %7279 = vmatpush1.bf16.msra.mxu0 %v4840
        %7280 = vmatprep.subr.bf16.mxu0 %v4826
        %7281 = vmatpush1.bf16.msra.mxu0 %v4825
        %7282 = vmatprep.subr.bf16.mxu0 %v4811
        %7283 = vmatpush1.bf16.msra.mxu0 %v4810
        %7284 = vmatprep.subr.bf16.mxu0 %v4796
        %7285 = vmatpush1.bf16.msra.mxu0 %v4795
        %7286 = vmatprep.subr.bf16.mxu0 %v4781
        %7287 = vmatpush1.bf16.msra.mxu0 %v4780
        %7288 = vmatprep.subr.bf16.mxu0 %v4766
        %7289 = vmatpush1.bf16.msra.mxu0 %v4765
        %7290 = vmatprep.subr.bf16.mxu0 %v4991
        %7291 = vmatpush2.bf16.msra.mxu0 %v4990
        %7292 = vmatprep.subr.bf16.mxu0 %v4976
        %7293 = vmatpush2.bf16.msra.mxu0 %v4975
        %7294 = vmatprep.subr.bf16.mxu0 %v4961
        %7295 = vmatpush2.bf16.msra.mxu0 %v4960
        %7296 = vmatprep.subr.bf16.mxu0 %v4946
        %7297 = vmatpush2.bf16.msra.mxu0 %v4945
        %7298 = vmatprep.subr.bf16.mxu0 %v4931
        %7299 = vmatpush2.bf16.msra.mxu0 %v4930
        %7300 = vmatprep.subr.bf16.mxu0 %v4916
        %7301 = vmatpush2.bf16.msra.mxu0 %v4915
        %7302 = vmatprep.subr.bf16.mxu0 %v4901
        %7303 = vmatpush2.bf16.msra.mxu0 %v4900
        %7304 = vmatprep.subr.bf16.mxu0 %v4886
        %7305 = vmatpush2.bf16.msra.mxu0 %v4885
        %7306 = vmatprep.mubr.bf16.mxu0 %v1855
        %7307 = vmatmul.mubr.bf16.gmra.mxu0 %v1854
        %v7308 = vpop.f32.mrf.mxu0
        %v7309 = vadd.f32 0.0, %v7308
        %v7310 = vpop.f32.mrf.mxu0
        %v7311 = vpop.f32.mrf.mxu0
        %v7312 = vadd.f32 0.0, %v7311
        %v7313 = vpop.f32.mrf.mxu0
        %v7314 = vadd.f32 0.0, %v7313
        %7315 = vmatprep.mubr.bf16.mxu0 %v1863
        %7316 = vmatmul.mubr.bf16.gmra.mxu0 %v1862
        %v7317 = vpop.f32.mrf.mxu0
        %v7318 = vpop.f32.mrf.mxu0
        %v7319 = vpop.f32.mrf.mxu0
        %v7320 = vpop.f32.mrf.mxu0
        %7321 = vdwg.mxu0
        %7322 = vmatprep.subr.bf16.mxu0 %v5111
        %7323 = vmatpush1.bf16.msra.mxu0 %v5110
        %7324 = vmatprep.subr.bf16.mxu0 %v5096
        %7325 = vmatpush1.bf16.msra.mxu0 %v5095
        %7326 = vmatprep.subr.bf16.mxu0 %v5081
        %7327 = vmatpush1.bf16.msra.mxu0 %v5080
        %7328 = vmatprep.subr.bf16.mxu0 %v5066
        %7329 = vmatpush1.bf16.msra.mxu0 %v5065
        %7330 = vmatprep.subr.bf16.mxu0 %v5051
        %7331 = vmatpush1.bf16.msra.mxu0 %v5050
        %7332 = vmatprep.subr.bf16.mxu0 %v5036
        %7333 = vmatpush1.bf16.msra.mxu0 %v5035
        %7334 = vmatprep.subr.bf16.mxu0 %v5021
        %7335 = vmatpush1.bf16.msra.mxu0 %v5020
        %7336 = vmatprep.subr.bf16.mxu0 %v5006
        %7337 = vmatpush1.bf16.msra.mxu0 %v5005
        %7338 = vmatprep.subr.bf16.mxu0 %v5231
        %7339 = vmatpush2.bf16.msra.mxu0 %v5230
        %7340 = vmatprep.subr.bf16.mxu0 %v5216
        %7341 = vmatpush2.bf16.msra.mxu0 %v5215
        %7342 = vmatprep.subr.bf16.mxu0 %v5201
        %7343 = vmatpush2.bf16.msra.mxu0 %v5200
        %7344 = vmatprep.subr.bf16.mxu0 %v5186
        %7345 = vmatpush2.bf16.msra.mxu0 %v5185
        %7346 = vmatprep.subr.bf16.mxu0 %v5171
        %7347 = vmatpush2.bf16.msra.mxu0 %v5170
        %7348 = vmatprep.subr.bf16.mxu0 %v5156
        %7349 = vmatpush2.bf16.msra.mxu0 %v5155
        %7350 = vmatprep.subr.bf16.mxu0 %v5141
        %7351 = vmatpush2.bf16.msra.mxu0 %v5140
        %7352 = vmatprep.subr.bf16.mxu0 %v5126
        %7353 = vmatpush2.bf16.msra.mxu0 %v5125
        %7354 = vmatprep.mubr.bf16.mxu0 %v1857
        %7355 = vmatmul.mubr.bf16.gmra.mxu0 %v1856
        %v7356 = vpop.f32.mrf.mxu0
        %v7357 = vadd.f32 %v7309, %v7356
        %v7358 = vpop.f32.mrf.mxu0
        %v7359 = vpop.f32.mrf.mxu0
        %v7360 = vadd.f32 %v7312, %v7359
        %v7361 = vpop.f32.mrf.mxu0
        %v7362 = vadd.f32 %v7314, %v7361
        %7363 = vmatprep.mubr.bf16.mxu0 %v1865
        %7364 = vmatmul.mubr.bf16.gmra.mxu0 %v1864
        %v7365 = vpop.f32.mrf.mxu0
        %v7366 = vpop.f32.mrf.mxu0
        %v7367 = vpop.f32.mrf.mxu0
        %v7368 = vpop.f32.mrf.mxu0
        %7369 = vdwg.mxu0
        %7370 = vmatprep.subr.bf16.mxu0 %v5351
        %7371 = vmatpush1.bf16.msra.mxu0 %v5350
        %7372 = vmatprep.subr.bf16.mxu0 %v5336
        %7373 = vmatpush1.bf16.msra.mxu0 %v5335
        %7374 = vmatprep.subr.bf16.mxu0 %v5321
        %7375 = vmatpush1.bf16.msra.mxu0 %v5320
        %7376 = vmatprep.subr.bf16.mxu0 %v5306
        %7377 = vmatpush1.bf16.msra.mxu0 %v5305
        %7378 = vmatprep.subr.bf16.mxu0 %v5291
        %7379 = vmatpush1.bf16.msra.mxu0 %v5290
        %7380 = vmatprep.subr.bf16.mxu0 %v5276
        %7381 = vmatpush1.bf16.msra.mxu0 %v5275
        %7382 = vmatprep.subr.bf16.mxu0 %v5261
        %7383 = vmatpush1.bf16.msra.mxu0 %v5260
        %7384 = vmatprep.subr.bf16.mxu0 %v5246
        %7385 = vmatpush1.bf16.msra.mxu0 %v5245
        %7386 = vmatprep.subr.bf16.mxu0 %v5471
        %7387 = vmatpush2.bf16.msra.mxu0 %v5470
        %7388 = vmatprep.subr.bf16.mxu0 %v5456
        %7389 = vmatpush2.bf16.msra.mxu0 %v5455
        %7390 = vmatprep.subr.bf16.mxu0 %v5441
        %7391 = vmatpush2.bf16.msra.mxu0 %v5440
        %7392 = vmatprep.subr.bf16.mxu0 %v5426
        %7393 = vmatpush2.bf16.msra.mxu0 %v5425
        %7394 = vmatprep.subr.bf16.mxu0 %v5411
        %7395 = vmatpush2.bf16.msra.mxu0 %v5410
        %7396 = vmatprep.subr.bf16.mxu0 %v5396
        %7397 = vmatpush2.bf16.msra.mxu0 %v5395
        %7398 = vmatprep.subr.bf16.mxu0 %v5381
        %7399 = vmatpush2.bf16.msra.mxu0 %v5380
        %7400 = vmatprep.subr.bf16.mxu0 %v5366
        %7401 = vmatpush2.bf16.msra.mxu0 %v5365
        %7402 = vmatprep.mubr.bf16.mxu0 %v1859
        %7403 = vmatmul.mubr.bf16.gmra.mxu0 %v1858
        %v7404 = vpop.f32.mrf.mxu0
        %v7405 = vadd.f32 %v7357, %v7404
        %v7406 = vpop.f32.mrf.mxu0
        %v7407 = vpop.f32.mrf.mxu0
        %v7408 = vadd.f32 %v7360, %v7407
        %v7409 = vpop.f32.mrf.mxu0
        %v7410 = vadd.f32 %v7362, %v7409
        %7411 = vmatprep.mubr.bf16.mxu0 %v1867
        %7412 = vmatmul.mubr.bf16.gmra.mxu0 %v1866
        %v7413 = vpop.f32.mrf.mxu0
        %v7414 = vpop.f32.mrf.mxu0
        %v7415 = vpop.f32.mrf.mxu0
        %v7416 = vpop.f32.mrf.mxu0
        %7417 = vdwg.mxu0
        %7418 = vmatprep.subr.bf16.mxu0 %v5591
        %7419 = vmatpush1.bf16.msra.mxu0 %v5590
        %7420 = vmatprep.subr.bf16.mxu0 %v5576
        %7421 = vmatpush1.bf16.msra.mxu0 %v5575
        %7422 = vmatprep.subr.bf16.mxu0 %v5561
        %7423 = vmatpush1.bf16.msra.mxu0 %v5560
        %7424 = vmatprep.subr.bf16.mxu0 %v5546
        %7425 = vmatpush1.bf16.msra.mxu0 %v5545
        %7426 = vmatprep.subr.bf16.mxu0 %v5531
        %7427 = vmatpush1.bf16.msra.mxu0 %v5530
        %7428 = vmatprep.subr.bf16.mxu0 %v5516
        %7429 = vmatpush1.bf16.msra.mxu0 %v5515
        %7430 = vmatprep.subr.bf16.mxu0 %v5501
        %7431 = vmatpush1.bf16.msra.mxu0 %v5500
        %7432 = vmatprep.subr.bf16.mxu0 %v5486
        %7433 = vmatpush1.bf16.msra.mxu0 %v5485
        %7434 = vmatprep.subr.bf16.mxu0 0
        %7435 = vmatpush2.bf16.msra.mxu0 0
        %7436 = vmatprep.subr.bf16.mxu0 %v6663
        %7437 = vmatpush2.bf16.msra.mxu0 %v6660
        %7438 = vmatprep.subr.bf16.mxu0 %v5681
        %7439 = vmatpush2.bf16.msra.mxu0 %v5680
        %7440 = vmatprep.subr.bf16.mxu0 %v5666
        %7441 = vmatpush2.bf16.msra.mxu0 %v5665
        %7442 = vmatprep.subr.bf16.mxu0 %v5651
        %7443 = vmatpush2.bf16.msra.mxu0 %v5650
        %7444 = vmatprep.subr.bf16.mxu0 %v5636
        %7445 = vmatpush2.bf16.msra.mxu0 %v5635
        %7446 = vmatprep.subr.bf16.mxu0 %v5621
        %7447 = vmatpush2.bf16.msra.mxu0 %v5620
        %7448 = vmatprep.subr.bf16.mxu0 %v5606
        %7449 = vmatpush2.bf16.msra.mxu0 %v5605
        %7450 = vmatprep.mubr.bf16.mxu0 %v6636
        %7451 = vmatmul.mubr.bf16.gmra.mxu0 %v1860
        %v7452 = vpop.f32.mrf.mxu0
        %v7453 = vadd.f32 %v7405, %v7452
        %v7454 = vpop.f32.mrf.mxu0
        %v7455 = vpop.f32.mrf.mxu0
        %v7456 = vadd.f32 %v7408, %v7455
        %v7457 = vpop.f32.mrf.mxu0
        %v7458 = vadd.f32 %v7410, %v7457
        %7459 = vmatprep.mubr.bf16.mxu0 %v6639
        %7460 = vmatmul.mubr.bf16.gmra.mxu0 %v1868
        %v7461 = vpop.f32.mrf.mxu0
        %v7462 = vpop.f32.mrf.mxu0
        %v7463 = vpop.f32.mrf.mxu0
        %v7464 = vpop.f32.mrf.mxu0
        %7465 = vdwg.mxu0
        %7466 = vmatprep.subr.bf16.mxu0 %v4873
        %7467 = vmatpush1.bf16.msra.mxu0 %v4872
        %7468 = vmatprep.subr.bf16.mxu0 %v4858
        %7469 = vmatpush1.bf16.msra.mxu0 %v4857
        %7470 = vmatprep.subr.bf16.mxu0 %v4843
        %7471 = vmatpush1.bf16.msra.mxu0 %v4842
        %7472 = vmatprep.subr.bf16.mxu0 %v4828
        %7473 = vmatpush1.bf16.msra.mxu0 %v4827
        %7474 = vmatprep.subr.bf16.mxu0 %v4813
        %7475 = vmatpush1.bf16.msra.mxu0 %v4812
        %7476 = vmatprep.subr.bf16.mxu0 %v4798
        %7477 = vmatpush1.bf16.msra.mxu0 %v4797
        %7478 = vmatprep.subr.bf16.mxu0 %v4783
        %7479 = vmatpush1.bf16.msra.mxu0 %v4782
        %7480 = vmatprep.subr.bf16.mxu0 %v4768
        %7481 = vmatpush1.bf16.msra.mxu0 %v4767
        %7482 = vmatprep.subr.bf16.mxu0 %v4993
        %7483 = vmatpush2.bf16.msra.mxu0 %v4992
        %7484 = vmatprep.subr.bf16.mxu0 %v4978
        %7485 = vmatpush2.bf16.msra.mxu0 %v4977
        %7486 = vmatprep.subr.bf16.mxu0 %v4963
        %7487 = vmatpush2.bf16.msra.mxu0 %v4962
        %7488 = vmatprep.subr.bf16.mxu0 %v4948
        %7489 = vmatpush2.bf16.msra.mxu0 %v4947
        %7490 = vmatprep.subr.bf16.mxu0 %v4933
        %7491 = vmatpush2.bf16.msra.mxu0 %v4932
        %7492 = vmatprep.subr.bf16.mxu0 %v4918
        %7493 = vmatpush2.bf16.msra.mxu0 %v4917
        %7494 = vmatprep.subr.bf16.mxu0 %v4903
        %7495 = vmatpush2.bf16.msra.mxu0 %v4902
        %7496 = vmatprep.subr.bf16.mxu0 %v4888
        %7497 = vmatpush2.bf16.msra.mxu0 %v4887
        %7498 = vmatprep.mubr.bf16.mxu0 %v1855
        %7499 = vmatmul.mubr.bf16.gmra.mxu0 %v1854
        %v7500 = vpop.f32.mrf.mxu0
        %v7501 = vpop.f32.mrf.mxu0
        %v7502 = vpop.f32.mrf.mxu0
        %v7503 = vadd.f32 0.0, %v7502
        %v7504 = vpop.f32.mrf.mxu0
        %v7505 = vadd.f32 0.0, %v7504
        %7506 = vmatprep.mubr.bf16.mxu0 %v1863
        %7507 = vmatmul.mubr.bf16.gmra.mxu0 %v1862
        %v7508 = vpop.f32.mrf.mxu0
        %v7509 = vadd.f32 0.0, %v7508
        %v7510 = vpop.f32.mrf.mxu0
        %v7511 = vadd.f32 0.0, %v7510
        %v7512 = vpop.f32.mrf.mxu0
        %v7513 = vpop.f32.mrf.mxu0
        %7514 = vdwg.mxu0
        %7515 = vmatprep.subr.bf16.mxu0 %v5113
        %7516 = vmatpush1.bf16.msra.mxu0 %v5112
        %7517 = vmatprep.subr.bf16.mxu0 %v5098
        %7518 = vmatpush1.bf16.msra.mxu0 %v5097
        %7519 = vmatprep.subr.bf16.mxu0 %v5083
        %7520 = vmatpush1.bf16.msra.mxu0 %v5082
        %7521 = vmatprep.subr.bf16.mxu0 %v5068
        %7522 = vmatpush1.bf16.msra.mxu0 %v5067
        %7523 = vmatprep.subr.bf16.mxu0 %v5053
        %7524 = vmatpush1.bf16.msra.mxu0 %v5052
        %7525 = vmatprep.subr.bf16.mxu0 %v5038
        %7526 = vmatpush1.bf16.msra.mxu0 %v5037
        %7527 = vmatprep.subr.bf16.mxu0 %v5023
        %7528 = vmatpush1.bf16.msra.mxu0 %v5022
        %7529 = vmatprep.subr.bf16.mxu0 %v5008
        %7530 = vmatpush1.bf16.msra.mxu0 %v5007
        %7531 = vmatprep.subr.bf16.mxu0 %v5233
        %7532 = vmatpush2.bf16.msra.mxu0 %v5232
        %7533 = vmatprep.subr.bf16.mxu0 %v5218
        %7534 = vmatpush2.bf16.msra.mxu0 %v5217
        %7535 = vmatprep.subr.bf16.mxu0 %v5203
        %7536 = vmatpush2.bf16.msra.mxu0 %v5202
        %7537 = vmatprep.subr.bf16.mxu0 %v5188
        %7538 = vmatpush2.bf16.msra.mxu0 %v5187
        %7539 = vmatprep.subr.bf16.mxu0 %v5173
        %7540 = vmatpush2.bf16.msra.mxu0 %v5172
        %7541 = vmatprep.subr.bf16.mxu0 %v5158
        %7542 = vmatpush2.bf16.msra.mxu0 %v5157
        %7543 = vmatprep.subr.bf16.mxu0 %v5143
        %7544 = vmatpush2.bf16.msra.mxu0 %v5142
        %7545 = vmatprep.subr.bf16.mxu0 %v5128
        %7546 = vmatpush2.bf16.msra.mxu0 %v5127
        %7547 = vmatprep.mubr.bf16.mxu0 %v1857
        %7548 = vmatmul.mubr.bf16.gmra.mxu0 %v1856
        %v7549 = vpop.f32.mrf.mxu0
        %v7550 = vpop.f32.mrf.mxu0
        %v7551 = vpop.f32.mrf.mxu0
        %v7552 = vadd.f32 %v7503, %v7551
        %v7553 = vpop.f32.mrf.mxu0
        %v7554 = vadd.f32 %v7505, %v7553
        %7555 = vmatprep.mubr.bf16.mxu0 %v1865
        %7556 = vmatmul.mubr.bf16.gmra.mxu0 %v1864
        %v7557 = vpop.f32.mrf.mxu0
        %v7558 = vadd.f32 %v7509, %v7557
        %v7559 = vpop.f32.mrf.mxu0
        %v7560 = vadd.f32 %v7511, %v7559
        %v7561 = vpop.f32.mrf.mxu0
        %v7562 = vpop.f32.mrf.mxu0
        %7563 = vdwg.mxu0
        %7564 = vmatprep.subr.bf16.mxu0 %v5353
        %7565 = vmatpush1.bf16.msra.mxu0 %v5352
        %7566 = vmatprep.subr.bf16.mxu0 %v5338
        %7567 = vmatpush1.bf16.msra.mxu0 %v5337
        %7568 = vmatprep.subr.bf16.mxu0 %v5323
        %7569 = vmatpush1.bf16.msra.mxu0 %v5322
        %7570 = vmatprep.subr.bf16.mxu0 %v5308
        %7571 = vmatpush1.bf16.msra.mxu0 %v5307
        %7572 = vmatprep.subr.bf16.mxu0 %v5293
        %7573 = vmatpush1.bf16.msra.mxu0 %v5292
        %7574 = vmatprep.subr.bf16.mxu0 %v5278
        %7575 = vmatpush1.bf16.msra.mxu0 %v5277
        %7576 = vmatprep.subr.bf16.mxu0 %v5263
        %7577 = vmatpush1.bf16.msra.mxu0 %v5262
        %7578 = vmatprep.subr.bf16.mxu0 %v5248
        %7579 = vmatpush1.bf16.msra.mxu0 %v5247
        %7580 = vmatprep.subr.bf16.mxu0 %v5473
        %7581 = vmatpush2.bf16.msra.mxu0 %v5472
        %7582 = vmatprep.subr.bf16.mxu0 %v5458
        %7583 = vmatpush2.bf16.msra.mxu0 %v5457
        %7584 = vmatprep.subr.bf16.mxu0 %v5443
        %7585 = vmatpush2.bf16.msra.mxu0 %v5442
        %7586 = vmatprep.subr.bf16.mxu0 %v5428
        %7587 = vmatpush2.bf16.msra.mxu0 %v5427
        %7588 = vmatprep.subr.bf16.mxu0 %v5413
        %7589 = vmatpush2.bf16.msra.mxu0 %v5412
        %7590 = vmatprep.subr.bf16.mxu0 %v5398
        %7591 = vmatpush2.bf16.msra.mxu0 %v5397
        %7592 = vmatprep.subr.bf16.mxu0 %v5383
        %7593 = vmatpush2.bf16.msra.mxu0 %v5382
        %7594 = vmatprep.subr.bf16.mxu0 %v5368
        %7595 = vmatpush2.bf16.msra.mxu0 %v5367
        %7596 = vmatprep.mubr.bf16.mxu0 %v1859
        %7597 = vmatmul.mubr.bf16.gmra.mxu0 %v1858
        %v7598 = vpop.f32.mrf.mxu0
        %v7599 = vpop.f32.mrf.mxu0
        %v7600 = vpop.f32.mrf.mxu0
        %v7601 = vadd.f32 %v7552, %v7600
        %v7602 = vpop.f32.mrf.mxu0
        %v7603 = vadd.f32 %v7554, %v7602
        %7604 = vmatprep.mubr.bf16.mxu0 %v1867
        %7605 = vmatmul.mubr.bf16.gmra.mxu0 %v1866
        %v7606 = vpop.f32.mrf.mxu0
        %v7607 = vadd.f32 %v7558, %v7606
        %v7608 = vpop.f32.mrf.mxu0
        %v7609 = vadd.f32 %v7560, %v7608
        %v7610 = vpop.f32.mrf.mxu0
        %v7611 = vpop.f32.mrf.mxu0
        %7612 = vdwg.mxu0
        %7613 = vmatprep.subr.bf16.mxu0 %v5593
        %7614 = vmatpush1.bf16.msra.mxu0 %v5592
        %7615 = vmatprep.subr.bf16.mxu0 %v5578
        %7616 = vmatpush1.bf16.msra.mxu0 %v5577
        %7617 = vmatprep.subr.bf16.mxu0 %v5563
        %7618 = vmatpush1.bf16.msra.mxu0 %v5562
        %7619 = vmatprep.subr.bf16.mxu0 %v5548
        %7620 = vmatpush1.bf16.msra.mxu0 %v5547
        %7621 = vmatprep.subr.bf16.mxu0 %v5533
        %7622 = vmatpush1.bf16.msra.mxu0 %v5532
        %7623 = vmatprep.subr.bf16.mxu0 %v5518
        %7624 = vmatpush1.bf16.msra.mxu0 %v5517
        %7625 = vmatprep.subr.bf16.mxu0 %v5503
        %7626 = vmatpush1.bf16.msra.mxu0 %v5502
        %7627 = vmatprep.subr.bf16.mxu0 %v5488
        %7628 = vmatpush1.bf16.msra.mxu0 %v5487
        %7629 = vmatprep.subr.bf16.mxu0 0
        %7630 = vmatpush2.bf16.msra.mxu0 0
        %7631 = vmatprep.subr.bf16.mxu0 %v6669
        %7632 = vmatpush2.bf16.msra.mxu0 %v6666
        %7633 = vmatprep.subr.bf16.mxu0 %v5683
        %7634 = vmatpush2.bf16.msra.mxu0 %v5682
        %7635 = vmatprep.subr.bf16.mxu0 %v5668
        %7636 = vmatpush2.bf16.msra.mxu0 %v5667
        %7637 = vmatprep.subr.bf16.mxu0 %v5653
        %7638 = vmatpush2.bf16.msra.mxu0 %v5652
        %7639 = vmatprep.subr.bf16.mxu0 %v5638
        %7640 = vmatpush2.bf16.msra.mxu0 %v5637
        %7641 = vmatprep.subr.bf16.mxu0 %v5623
        %7642 = vmatpush2.bf16.msra.mxu0 %v5622
        %7643 = vmatprep.subr.bf16.mxu0 %v5608
        %7644 = vmatpush2.bf16.msra.mxu0 %v5607
        %7645 = vmatprep.mubr.bf16.mxu0 %v6636
        %7646 = vmatmul.mubr.bf16.gmra.mxu0 %v1860
        %v7647 = vpop.f32.mrf.mxu0
        %v7648 = vpop.f32.mrf.mxu0
        %v7649 = vpop.f32.mrf.mxu0
        %v7650 = vadd.f32 %v7601, %v7649
        %v7651 = vpop.f32.mrf.mxu0
        %v7652 = vadd.f32 %v7603, %v7651
        %7653 = vmatprep.mubr.bf16.mxu0 %v6639
        %7654 = vmatmul.mubr.bf16.gmra.mxu0 %v1868
        %v7655 = vpop.f32.mrf.mxu0
        %v7656 = vadd.f32 %v7607, %v7655
        %v7657 = vpop.f32.mrf.mxu0
        %v7658 = vadd.f32 %v7609, %v7657
        %v7659 = vpop.f32.mrf.mxu0
        %v7660 = vpop.f32.mrf.mxu0
        %7661 = vdwg.mxu0
        %7662 = vmatprep.subr.bf16.mxu0 %v4875
        %7663 = vmatpush1.bf16.msra.mxu0 %v4874
        %7664 = vmatprep.subr.bf16.mxu0 %v4860
        %7665 = vmatpush1.bf16.msra.mxu0 %v4859
        %7666 = vmatprep.subr.bf16.mxu0 %v4845
        %7667 = vmatpush1.bf16.msra.mxu0 %v4844
        %7668 = vmatprep.subr.bf16.mxu0 %v4830
        %7669 = vmatpush1.bf16.msra.mxu0 %v4829
        %7670 = vmatprep.subr.bf16.mxu0 %v4815
        %7671 = vmatpush1.bf16.msra.mxu0 %v4814
        %7672 = vmatprep.subr.bf16.mxu0 %v4800
        %7673 = vmatpush1.bf16.msra.mxu0 %v4799
        %7674 = vmatprep.subr.bf16.mxu0 %v4785
        %7675 = vmatpush1.bf16.msra.mxu0 %v4784
        %7676 = vmatprep.subr.bf16.mxu0 %v4770
        %7677 = vmatpush1.bf16.msra.mxu0 %v4769
        %7678 = vmatprep.subr.bf16.mxu0 %v4995
        %7679 = vmatpush2.bf16.msra.mxu0 %v4994
        %7680 = vmatprep.subr.bf16.mxu0 %v4980
        %7681 = vmatpush2.bf16.msra.mxu0 %v4979
        %7682 = vmatprep.subr.bf16.mxu0 %v4965
        %7683 = vmatpush2.bf16.msra.mxu0 %v4964
        %7684 = vmatprep.subr.bf16.mxu0 %v4950
        %7685 = vmatpush2.bf16.msra.mxu0 %v4949
        %7686 = vmatprep.subr.bf16.mxu0 %v4935
        %7687 = vmatpush2.bf16.msra.mxu0 %v4934
        %7688 = vmatprep.subr.bf16.mxu0 %v4920
        %7689 = vmatpush2.bf16.msra.mxu0 %v4919
        %7690 = vmatprep.subr.bf16.mxu0 %v4905
        %7691 = vmatpush2.bf16.msra.mxu0 %v4904
        %7692 = vmatprep.subr.bf16.mxu0 %v4890
        %7693 = vmatpush2.bf16.msra.mxu0 %v4889
        %7694 = vmatprep.mubr.bf16.mxu0 %v1855
        %7695 = vmatmul.mubr.bf16.gmra.mxu0 %v1854
        %v7696 = vpop.f32.mrf.mxu0
        %v7697 = vpop.f32.mrf.mxu0
        %v7698 = vpop.f32.mrf.mxu0
        %v7699 = vadd.f32 0.0, %v7698
        %v7700 = vpop.f32.mrf.mxu0
        %v7701 = vadd.f32 0.0, %v7700
        %7702 = vmatprep.mubr.bf16.mxu0 %v1863
        %7703 = vmatmul.mubr.bf16.gmra.mxu0 %v1862
        %v7704 = vpop.f32.mrf.mxu0
        %v7705 = vadd.f32 0.0, %v7704
        %v7706 = vpop.f32.mrf.mxu0
        %v7707 = vadd.f32 0.0, %v7706
        %v7708 = vpop.f32.mrf.mxu0
        %v7709 = vpop.f32.mrf.mxu0
        %7710 = vdwg.mxu0
        %7711 = vmatprep.subr.bf16.mxu0 %v5115
        %7712 = vmatpush1.bf16.msra.mxu0 %v5114
        %7713 = vmatprep.subr.bf16.mxu0 %v5100
        %7714 = vmatpush1.bf16.msra.mxu0 %v5099
        %7715 = vmatprep.subr.bf16.mxu0 %v5085
        %7716 = vmatpush1.bf16.msra.mxu0 %v5084
        %7717 = vmatprep.subr.bf16.mxu0 %v5070
        %7718 = vmatpush1.bf16.msra.mxu0 %v5069
        %7719 = vmatprep.subr.bf16.mxu0 %v5055
        %7720 = vmatpush1.bf16.msra.mxu0 %v5054
        %7721 = vmatprep.subr.bf16.mxu0 %v5040
        %7722 = vmatpush1.bf16.msra.mxu0 %v5039
        %7723 = vmatprep.subr.bf16.mxu0 %v5025
        %7724 = vmatpush1.bf16.msra.mxu0 %v5024
        %7725 = vmatprep.subr.bf16.mxu0 %v5010
        %7726 = vmatpush1.bf16.msra.mxu0 %v5009
        %7727 = vmatprep.subr.bf16.mxu0 %v5235
        %7728 = vmatpush2.bf16.msra.mxu0 %v5234
        %7729 = vmatprep.subr.bf16.mxu0 %v5220
        %7730 = vmatpush2.bf16.msra.mxu0 %v5219
        %7731 = vmatprep.subr.bf16.mxu0 %v5205
        %7732 = vmatpush2.bf16.msra.mxu0 %v5204
        %7733 = vmatprep.subr.bf16.mxu0 %v5190
        %7734 = vmatpush2.bf16.msra.mxu0 %v5189
        %7735 = vmatprep.subr.bf16.mxu0 %v5175
        %7736 = vmatpush2.bf16.msra.mxu0 %v5174
        %7737 = vmatprep.subr.bf16.mxu0 %v5160
        %7738 = vmatpush2.bf16.msra.mxu0 %v5159
        %7739 = vmatprep.subr.bf16.mxu0 %v5145
        %7740 = vmatpush2.bf16.msra.mxu0 %v5144
        %7741 = vmatprep.subr.bf16.mxu0 %v5130
        %7742 = vmatpush2.bf16.msra.mxu0 %v5129
        %7743 = vmatprep.mubr.bf16.mxu0 %v1857
        %7744 = vmatmul.mubr.bf16.gmra.mxu0 %v1856
        %v7745 = vpop.f32.mrf.mxu0
        %v7746 = vpop.f32.mrf.mxu0
        %v7747 = vpop.f32.mrf.mxu0
        %v7748 = vadd.f32 %v7699, %v7747
        %v7749 = vpop.f32.mrf.mxu0
        %v7750 = vadd.f32 %v7701, %v7749
        %7751 = vmatprep.mubr.bf16.mxu0 %v1865
        %7752 = vmatmul.mubr.bf16.gmra.mxu0 %v1864
        %v7753 = vpop.f32.mrf.mxu0
        %v7754 = vadd.f32 %v7705, %v7753
        %v7755 = vpop.f32.mrf.mxu0
        %v7756 = vadd.f32 %v7707, %v7755
        %v7757 = vpop.f32.mrf.mxu0
        %v7758 = vpop.f32.mrf.mxu0
        %7759 = vdwg.mxu0
        %7760 = vmatprep.subr.bf16.mxu0 %v5355
        %7761 = vmatpush1.bf16.msra.mxu0 %v5354
        %7762 = vmatprep.subr.bf16.mxu0 %v5340
        %7763 = vmatpush1.bf16.msra.mxu0 %v5339
        %7764 = vmatprep.subr.bf16.mxu0 %v5325
        %7765 = vmatpush1.bf16.msra.mxu0 %v5324
        %7766 = vmatprep.subr.bf16.mxu0 %v5310
        %7767 = vmatpush1.bf16.msra.mxu0 %v5309
        %7768 = vmatprep.subr.bf16.mxu0 %v5295
        %7769 = vmatpush1.bf16.msra.mxu0 %v5294
        %7770 = vmatprep.subr.bf16.mxu0 %v5280
        %7771 = vmatpush1.bf16.msra.mxu0 %v5279
        %7772 = vmatprep.subr.bf16.mxu0 %v5265
        %7773 = vmatpush1.bf16.msra.mxu0 %v5264
        %7774 = vmatprep.subr.bf16.mxu0 %v5250
        %7775 = vmatpush1.bf16.msra.mxu0 %v5249
        %7776 = vmatprep.subr.bf16.mxu0 %v5475
        %7777 = vmatpush2.bf16.msra.mxu0 %v5474
        %7778 = vmatprep.subr.bf16.mxu0 %v5460
        %7779 = vmatpush2.bf16.msra.mxu0 %v5459
        %7780 = vmatprep.subr.bf16.mxu0 %v5445
        %7781 = vmatpush2.bf16.msra.mxu0 %v5444
        %7782 = vmatprep.subr.bf16.mxu0 %v5430
        %7783 = vmatpush2.bf16.msra.mxu0 %v5429
        %7784 = vmatprep.subr.bf16.mxu0 %v5415
        %7785 = vmatpush2.bf16.msra.mxu0 %v5414
        %7786 = vmatprep.subr.bf16.mxu0 %v5400
        %7787 = vmatpush2.bf16.msra.mxu0 %v5399
        %7788 = vmatprep.subr.bf16.mxu0 %v5385
        %7789 = vmatpush2.bf16.msra.mxu0 %v5384
        %7790 = vmatprep.subr.bf16.mxu0 %v5370
        %7791 = vmatpush2.bf16.msra.mxu0 %v5369
        %7792 = vmatprep.mubr.bf16.mxu0 %v1859
        %7793 = vmatmul.mubr.bf16.gmra.mxu0 %v1858
        %v7794 = vpop.f32.mrf.mxu0
        %v7795 = vpop.f32.mrf.mxu0
        %v7796 = vpop.f32.mrf.mxu0
        %v7797 = vadd.f32 %v7748, %v7796
        %v7798 = vpop.f32.mrf.mxu0
        %v7799 = vadd.f32 %v7750, %v7798
        %7800 = vmatprep.mubr.bf16.mxu0 %v1867
        %7801 = vmatmul.mubr.bf16.gmra.mxu0 %v1866
        %v7802 = vpop.f32.mrf.mxu0
        %v7803 = vadd.f32 %v7754, %v7802
        %v7804 = vpop.f32.mrf.mxu0
        %v7805 = vadd.f32 %v7756, %v7804
        %v7806 = vpop.f32.mrf.mxu0
        %v7807 = vpop.f32.mrf.mxu0
        %7808 = vdwg.mxu0
        %7809 = vmatprep.subr.bf16.mxu0 %v5595
        %7810 = vmatpush1.bf16.msra.mxu0 %v5594
        %7811 = vmatprep.subr.bf16.mxu0 %v5580
        %7812 = vmatpush1.bf16.msra.mxu0 %v5579
        %7813 = vmatprep.subr.bf16.mxu0 %v5565
        %7814 = vmatpush1.bf16.msra.mxu0 %v5564
        %7815 = vmatprep.subr.bf16.mxu0 %v5550
        %7816 = vmatpush1.bf16.msra.mxu0 %v5549
        %7817 = vmatprep.subr.bf16.mxu0 %v5535
        %7818 = vmatpush1.bf16.msra.mxu0 %v5534
        %7819 = vmatprep.subr.bf16.mxu0 %v5520
        %7820 = vmatpush1.bf16.msra.mxu0 %v5519
        %7821 = vmatprep.subr.bf16.mxu0 %v5505
        %7822 = vmatpush1.bf16.msra.mxu0 %v5504
        %7823 = vmatprep.subr.bf16.mxu0 %v5490
        %7824 = vmatpush1.bf16.msra.mxu0 %v5489
        %7825 = vmatprep.subr.bf16.mxu0 0
        %7826 = vmatpush2.bf16.msra.mxu0 0
        %7827 = vmatprep.subr.bf16.mxu0 %v6675
        %7828 = vmatpush2.bf16.msra.mxu0 %v6672
        %7829 = vmatprep.subr.bf16.mxu0 %v5685
        %7830 = vmatpush2.bf16.msra.mxu0 %v5684
        %7831 = vmatprep.subr.bf16.mxu0 %v5670
        %7832 = vmatpush2.bf16.msra.mxu0 %v5669
        %7833 = vmatprep.subr.bf16.mxu0 %v5655
        %7834 = vmatpush2.bf16.msra.mxu0 %v5654
        %7835 = vmatprep.subr.bf16.mxu0 %v5640
        %7836 = vmatpush2.bf16.msra.mxu0 %v5639
        %7837 = vmatprep.subr.bf16.mxu0 %v5625
        %7838 = vmatpush2.bf16.msra.mxu0 %v5624
        %7839 = vmatprep.subr.bf16.mxu0 %v5610
        %7840 = vmatpush2.bf16.msra.mxu0 %v5609
        %7841 = vmatprep.mubr.bf16.mxu0 %v6636
        %7842 = vmatmul.mubr.bf16.gmra.mxu0 %v1860
        %v7843 = vpop.f32.mrf.mxu0
        %v7844 = vpop.f32.mrf.mxu0
        %v7845 = vpop.f32.mrf.mxu0
        %v7846 = vadd.f32 %v7797, %v7845
        %v7847 = vpop.f32.mrf.mxu0
        %v7848 = vadd.f32 %v7799, %v7847
        %7849 = vmatprep.mubr.bf16.mxu0 %v6639
        %7850 = vmatmul.mubr.bf16.gmra.mxu0 %v1868
        %v7851 = vpop.f32.mrf.mxu0
        %v7852 = vadd.f32 %v7803, %v7851
        %v7853 = vpop.f32.mrf.mxu0
        %v7854 = vadd.f32 %v7805, %v7853
        %v7855 = vpop.f32.mrf.mxu0
        %v7856 = vpop.f32.mrf.mxu0
        %7857 = vdwg.mxu0
        %7858 = vmatprep.subr.bf16.mxu0 %v4877
        %7859 = vmatpush1.bf16.msra.mxu0 %v4876
        %7860 = vmatprep.subr.bf16.mxu0 %v4862
        %7861 = vmatpush1.bf16.msra.mxu0 %v4861
        %7862 = vmatprep.subr.bf16.mxu0 %v4847
        %7863 = vmatpush1.bf16.msra.mxu0 %v4846
        %7864 = vmatprep.subr.bf16.mxu0 %v4832
        %7865 = vmatpush1.bf16.msra.mxu0 %v4831
        %7866 = vmatprep.subr.bf16.mxu0 %v4817
        %7867 = vmatpush1.bf16.msra.mxu0 %v4816
        %7868 = vmatprep.subr.bf16.mxu0 %v4802
        %7869 = vmatpush1.bf16.msra.mxu0 %v4801
        %7870 = vmatprep.subr.bf16.mxu0 %v4787
        %7871 = vmatpush1.bf16.msra.mxu0 %v4786
        %7872 = vmatprep.subr.bf16.mxu0 %v4772
        %7873 = vmatpush1.bf16.msra.mxu0 %v4771
        %7874 = vmatprep.subr.bf16.mxu0 %v4997
        %7875 = vmatpush2.bf16.msra.mxu0 %v4996
        %7876 = vmatprep.subr.bf16.mxu0 %v4982
        %7877 = vmatpush2.bf16.msra.mxu0 %v4981
        %7878 = vmatprep.subr.bf16.mxu0 %v4967
        %7879 = vmatpush2.bf16.msra.mxu0 %v4966
        %7880 = vmatprep.subr.bf16.mxu0 %v4952
        %7881 = vmatpush2.bf16.msra.mxu0 %v4951
        %7882 = vmatprep.subr.bf16.mxu0 %v4937
        %7883 = vmatpush2.bf16.msra.mxu0 %v4936
        %7884 = vmatprep.subr.bf16.mxu0 %v4922
        %7885 = vmatpush2.bf16.msra.mxu0 %v4921
        %7886 = vmatprep.subr.bf16.mxu0 %v4907
        %7887 = vmatpush2.bf16.msra.mxu0 %v4906
        %7888 = vmatprep.subr.bf16.mxu0 %v4892
        %7889 = vmatpush2.bf16.msra.mxu0 %v4891
        %7890 = vmatprep.mubr.bf16.mxu0 %v1855
        %7891 = vmatmul.mubr.bf16.gmra.mxu0 %v1854
        %v7892 = vpop.f32.mrf.mxu0
        %v7893 = vpop.f32.mrf.mxu0
        %v7894 = vpop.f32.mrf.mxu0
        %v7895 = vadd.f32 0.0, %v7894
        %v7896 = vpop.f32.mrf.mxu0
        %v7897 = vadd.f32 0.0, %v7896
        %7898 = vmatprep.mubr.bf16.mxu0 %v1863
        %7899 = vmatmul.mubr.bf16.gmra.mxu0 %v1862
        %v7900 = vpop.f32.mrf.mxu0
        %v7901 = vadd.f32 0.0, %v7900
        %v7902 = vpop.f32.mrf.mxu0
        %v7903 = vadd.f32 0.0, %v7902
        %v7904 = vpop.f32.mrf.mxu0
        %v7905 = vpop.f32.mrf.mxu0
        %7906 = vdwg.mxu0
        %7907 = vmatprep.subr.bf16.mxu0 %v5117
        %7908 = vmatpush1.bf16.msra.mxu0 %v5116
        %7909 = vmatprep.subr.bf16.mxu0 %v5102
        %7910 = vmatpush1.bf16.msra.mxu0 %v5101
        %7911 = vmatprep.subr.bf16.mxu0 %v5087
        %7912 = vmatpush1.bf16.msra.mxu0 %v5086
        %7913 = vmatprep.subr.bf16.mxu0 %v5072
        %7914 = vmatpush1.bf16.msra.mxu0 %v5071
        %7915 = vmatprep.subr.bf16.mxu0 %v5057
        %7916 = vmatpush1.bf16.msra.mxu0 %v5056
        %7917 = vmatprep.subr.bf16.mxu0 %v5042
        %7918 = vmatpush1.bf16.msra.mxu0 %v5041
        %7919 = vmatprep.subr.bf16.mxu0 %v5027
        %7920 = vmatpush1.bf16.msra.mxu0 %v5026
        %7921 = vmatprep.subr.bf16.mxu0 %v5012
        %7922 = vmatpush1.bf16.msra.mxu0 %v5011
        %7923 = vmatprep.subr.bf16.mxu0 %v5237
        %7924 = vmatpush2.bf16.msra.mxu0 %v5236
        %7925 = vmatprep.subr.bf16.mxu0 %v5222
        %7926 = vmatpush2.bf16.msra.mxu0 %v5221
        %7927 = vmatprep.subr.bf16.mxu0 %v5207
        %7928 = vmatpush2.bf16.msra.mxu0 %v5206
        %7929 = vmatprep.subr.bf16.mxu0 %v5192
        %7930 = vmatpush2.bf16.msra.mxu0 %v5191
        %7931 = vmatprep.subr.bf16.mxu0 %v5177
        %7932 = vmatpush2.bf16.msra.mxu0 %v5176
        %7933 = vmatprep.subr.bf16.mxu0 %v5162
        %7934 = vmatpush2.bf16.msra.mxu0 %v5161
        %7935 = vmatprep.subr.bf16.mxu0 %v5147
        %7936 = vmatpush2.bf16.msra.mxu0 %v5146
        %7937 = vmatprep.subr.bf16.mxu0 %v5132
        %7938 = vmatpush2.bf16.msra.mxu0 %v5131
        %7939 = vmatprep.mubr.bf16.mxu0 %v1857
        %7940 = vmatmul.mubr.bf16.gmra.mxu0 %v1856
        %v7941 = vpop.f32.mrf.mxu0
        %v7942 = vpop.f32.mrf.mxu0
        %v7943 = vpop.f32.mrf.mxu0
        %v7944 = vadd.f32 %v7895, %v7943
        %v7945 = vpop.f32.mrf.mxu0
        %v7946 = vadd.f32 %v7897, %v7945
        %7947 = vmatprep.mubr.bf16.mxu0 %v1865
        %7948 = vmatmul.mubr.bf16.gmra.mxu0 %v1864
        %v7949 = vpop.f32.mrf.mxu0
        %v7950 = vadd.f32 %v7901, %v7949
        %v7951 = vpop.f32.mrf.mxu0
        %v7952 = vadd.f32 %v7903, %v7951
        %v7953 = vpop.f32.mrf.mxu0
        %v7954 = vpop.f32.mrf.mxu0
        %7955 = vdwg.mxu0
        %7956 = vmatprep.subr.bf16.mxu0 %v5357
        %7957 = vmatpush1.bf16.msra.mxu0 %v5356
        %7958 = vmatprep.subr.bf16.mxu0 %v5342
        %7959 = vmatpush1.bf16.msra.mxu0 %v5341
        %7960 = vmatprep.subr.bf16.mxu0 %v5327
        %7961 = vmatpush1.bf16.msra.mxu0 %v5326
        %7962 = vmatprep.subr.bf16.mxu0 %v5312
        %7963 = vmatpush1.bf16.msra.mxu0 %v5311
        %7964 = vmatprep.subr.bf16.mxu0 %v5297
        %7965 = vmatpush1.bf16.msra.mxu0 %v5296
        %7966 = vmatprep.subr.bf16.mxu0 %v5282
        %7967 = vmatpush1.bf16.msra.mxu0 %v5281
        %7968 = vmatprep.subr.bf16.mxu0 %v5267
        %7969 = vmatpush1.bf16.msra.mxu0 %v5266
        %7970 = vmatprep.subr.bf16.mxu0 %v5252
        %7971 = vmatpush1.bf16.msra.mxu0 %v5251
        %7972 = vmatprep.subr.bf16.mxu0 %v5477
        %7973 = vmatpush2.bf16.msra.mxu0 %v5476
        %7974 = vmatprep.subr.bf16.mxu0 %v5462
        %7975 = vmatpush2.bf16.msra.mxu0 %v5461
        %7976 = vmatprep.subr.bf16.mxu0 %v5447
        %7977 = vmatpush2.bf16.msra.mxu0 %v5446
        %7978 = vmatprep.subr.bf16.mxu0 %v5432
        %7979 = vmatpush2.bf16.msra.mxu0 %v5431
        %7980 = vmatprep.subr.bf16.mxu0 %v5417
        %7981 = vmatpush2.bf16.msra.mxu0 %v5416
        %7982 = vmatprep.subr.bf16.mxu0 %v5402
        %7983 = vmatpush2.bf16.msra.mxu0 %v5401
        %7984 = vmatprep.subr.bf16.mxu0 %v5387
        %7985 = vmatpush2.bf16.msra.mxu0 %v5386
        %7986 = vmatprep.subr.bf16.mxu0 %v5372
        %7987 = vmatpush2.bf16.msra.mxu0 %v5371
        %7988 = vmatprep.mubr.bf16.mxu0 %v1859
        %7989 = vmatmul.mubr.bf16.gmra.mxu0 %v1858
        %v7990 = vpop.f32.mrf.mxu0
        %v7991 = vpop.f32.mrf.mxu0
        %v7992 = vpop.f32.mrf.mxu0
        %v7993 = vadd.f32 %v7944, %v7992
        %v7994 = vpop.f32.mrf.mxu0
        %v7995 = vadd.f32 %v7946, %v7994
        %7996 = vmatprep.mubr.bf16.mxu0 %v1867
        %7997 = vmatmul.mubr.bf16.gmra.mxu0 %v1866
        %v7998 = vpop.f32.mrf.mxu0
        %v7999 = vadd.f32 %v7950, %v7998
        %v8000 = vpop.f32.mrf.mxu0
        %v8001 = vadd.f32 %v7952, %v8000
        %v8002 = vpop.f32.mrf.mxu0
        %v8003 = vpop.f32.mrf.mxu0
        %8004 = vdwg.mxu0
        %8005 = vmatprep.subr.bf16.mxu0 %v5597
        %8006 = vmatpush1.bf16.msra.mxu0 %v5596
        %8007 = vmatprep.subr.bf16.mxu0 %v5582
        %8008 = vmatpush1.bf16.msra.mxu0 %v5581
        %8009 = vmatprep.subr.bf16.mxu0 %v5567
        %8010 = vmatpush1.bf16.msra.mxu0 %v5566
        %8011 = vmatprep.subr.bf16.mxu0 %v5552
        %8012 = vmatpush1.bf16.msra.mxu0 %v5551
        %8013 = vmatprep.subr.bf16.mxu0 %v5537
        %8014 = vmatpush1.bf16.msra.mxu0 %v5536
        %8015 = vmatprep.subr.bf16.mxu0 %v5522
        %8016 = vmatpush1.bf16.msra.mxu0 %v5521
        %8017 = vmatprep.subr.bf16.mxu0 %v5507
        %8018 = vmatpush1.bf16.msra.mxu0 %v5506
        %8019 = vmatprep.subr.bf16.mxu0 %v5492
        %8020 = vmatpush1.bf16.msra.mxu0 %v5491
        %8021 = vmatprep.subr.bf16.mxu0 0
        %8022 = vmatpush2.bf16.msra.mxu0 0
        %8023 = vmatprep.subr.bf16.mxu0 %v6681
        %8024 = vmatpush2.bf16.msra.mxu0 %v6678
        %8025 = vmatprep.subr.bf16.mxu0 %v5687
        %8026 = vmatpush2.bf16.msra.mxu0 %v5686
        %8027 = vmatprep.subr.bf16.mxu0 %v5672
        %8028 = vmatpush2.bf16.msra.mxu0 %v5671
        %8029 = vmatprep.subr.bf16.mxu0 %v5657
        %8030 = vmatpush2.bf16.msra.mxu0 %v5656
        %8031 = vmatprep.subr.bf16.mxu0 %v5642
        %8032 = vmatpush2.bf16.msra.mxu0 %v5641
        %8033 = vmatprep.subr.bf16.mxu0 %v5627
        %8034 = vmatpush2.bf16.msra.mxu0 %v5626
        %8035 = vmatprep.subr.bf16.mxu0 %v5612
        %8036 = vmatpush2.bf16.msra.mxu0 %v5611
        %8037 = vmatprep.mubr.bf16.mxu0 %v6636
        %8038 = vmatmul.mubr.bf16.gmra.mxu0 %v1860
        %v8039 = vpop.f32.mrf.mxu0
        %v8040 = vpop.f32.mrf.mxu0
        %v8041 = vpop.f32.mrf.mxu0
        %v8042 = vadd.f32 %v7993, %v8041
        %v8043 = vpop.f32.mrf.mxu0
        %v8044 = vadd.f32 %v7995, %v8043
        %8045 = vmatprep.mubr.bf16.mxu0 %v6639
        %8046 = vmatmul.mubr.bf16.gmra.mxu0 %v1868
        %v8047 = vpop.f32.mrf.mxu0
        %v8048 = vadd.f32 %v7999, %v8047
        %v8049 = vpop.f32.mrf.mxu0
        %v8050 = vadd.f32 %v8001, %v8049
        %v8051 = vpop.f32.mrf.mxu0
        %v8052 = vpop.f32.mrf.mxu0
        %8053 = vdwg.mxu0
        %8054 = vmatprep.subr.bf16.mxu0 0
        %8055 = vmatpush1.bf16.msra.mxu0 %v4878
        %8056 = vmatprep.subr.bf16.mxu0 0
        %8057 = vmatpush1.bf16.msra.mxu0 %v4863
        %8058 = vmatprep.subr.bf16.mxu0 0
        %8059 = vmatpush1.bf16.msra.mxu0 %v4848
        %8060 = vmatprep.subr.bf16.mxu0 0
        %8061 = vmatpush1.bf16.msra.mxu0 %v4833
        %8062 = vmatprep.subr.bf16.mxu0 0
        %8063 = vmatpush1.bf16.msra.mxu0 %v4818
        %8064 = vmatprep.subr.bf16.mxu0 0
        %8065 = vmatpush1.bf16.msra.mxu0 %v4803
        %8066 = vmatprep.subr.bf16.mxu0 0
        %8067 = vmatpush1.bf16.msra.mxu0 %v4788
        %8068 = vmatprep.subr.bf16.mxu0 0
        %8069 = vmatpush1.bf16.msra.mxu0 %v4773
        %8070 = vmatprep.subr.bf16.mxu0 0
        %8071 = vmatpush2.bf16.msra.mxu0 %v4998
        %8072 = vmatprep.subr.bf16.mxu0 0
        %8073 = vmatpush2.bf16.msra.mxu0 %v4983
        %8074 = vmatprep.subr.bf16.mxu0 0
        %8075 = vmatpush2.bf16.msra.mxu0 %v4968
        %8076 = vmatprep.subr.bf16.mxu0 0
        %8077 = vmatpush2.bf16.msra.mxu0 %v4953
        %8078 = vmatprep.subr.bf16.mxu0 0
        %8079 = vmatpush2.bf16.msra.mxu0 %v4938
        %8080 = vmatprep.subr.bf16.mxu0 0
        %8081 = vmatpush2.bf16.msra.mxu0 %v4923
        %8082 = vmatprep.subr.bf16.mxu0 0
        %8083 = vmatpush2.bf16.msra.mxu0 %v4908
        %8084 = vmatprep.subr.bf16.mxu0 0
        %8085 = vmatpush2.bf16.msra.mxu0 %v4893
        %8086 = vmatprep.mubr.bf16.mxu0 %v1855
        %8087 = vmatmul.mubr.bf16.gmra.mxu0 %v1854
        %v8088 = vpop.f32.mrf.mxu0
        %v8089 = vpop.f32.mrf.mxu0
        %v8090 = vpop.f32.mrf.mxu0
        %v8091 = vadd.f32 0.0, %v8090
        %v8092 = vpop.f32.mrf.mxu0
        %8093 = vmatprep.mubr.bf16.mxu0 %v1863
        %8094 = vmatmul.mubr.bf16.gmra.mxu0 %v1862
        %v8095 = vpop.f32.mrf.mxu0
        %v8096 = vadd.f32 0.0, %v8095
        %v8097 = vpop.f32.mrf.mxu0
        %v8098 = vpop.f32.mrf.mxu0
        %v8099 = vpop.f32.mrf.mxu0
        %8100 = vdwg.mxu0
        %8101 = vmatprep.subr.bf16.mxu0 0
        %8102 = vmatpush1.bf16.msra.mxu0 %v5118
        %8103 = vmatprep.subr.bf16.mxu0 0
        %8104 = vmatpush1.bf16.msra.mxu0 %v5103
        %8105 = vmatprep.subr.bf16.mxu0 0
        %8106 = vmatpush1.bf16.msra.mxu0 %v5088
        %8107 = vmatprep.subr.bf16.mxu0 0
        %8108 = vmatpush1.bf16.msra.mxu0 %v5073
        %8109 = vmatprep.subr.bf16.mxu0 0
        %8110 = vmatpush1.bf16.msra.mxu0 %v5058
        %8111 = vmatprep.subr.bf16.mxu0 0
        %8112 = vmatpush1.bf16.msra.mxu0 %v5043
        %8113 = vmatprep.subr.bf16.mxu0 0
        %8114 = vmatpush1.bf16.msra.mxu0 %v5028
        %8115 = vmatprep.subr.bf16.mxu0 0
        %8116 = vmatpush1.bf16.msra.mxu0 %v5013
        %8117 = vmatprep.subr.bf16.mxu0 0
        %8118 = vmatpush2.bf16.msra.mxu0 %v5238
        %8119 = vmatprep.subr.bf16.mxu0 0
        %8120 = vmatpush2.bf16.msra.mxu0 %v5223
        %8121 = vmatprep.subr.bf16.mxu0 0
        %8122 = vmatpush2.bf16.msra.mxu0 %v5208
        %8123 = vmatprep.subr.bf16.mxu0 0
        %8124 = vmatpush2.bf16.msra.mxu0 %v5193
        %8125 = vmatprep.subr.bf16.mxu0 0
        %8126 = vmatpush2.bf16.msra.mxu0 %v5178
        %8127 = vmatprep.subr.bf16.mxu0 0
        %8128 = vmatpush2.bf16.msra.mxu0 %v5163
        %8129 = vmatprep.subr.bf16.mxu0 0
        %8130 = vmatpush2.bf16.msra.mxu0 %v5148
        %8131 = vmatprep.subr.bf16.mxu0 0
        %8132 = vmatpush2.bf16.msra.mxu0 %v5133
        %8133 = vmatprep.mubr.bf16.mxu0 %v1857
        %8134 = vmatmul.mubr.bf16.gmra.mxu0 %v1856
        %v8135 = vpop.f32.mrf.mxu0
        %v8136 = vpop.f32.mrf.mxu0
        %v8137 = vpop.f32.mrf.mxu0
        %v8138 = vadd.f32 %v8091, %v8137
        %v8139 = vpop.f32.mrf.mxu0
        %8140 = vmatprep.mubr.bf16.mxu0 %v1865
        %8141 = vmatmul.mubr.bf16.gmra.mxu0 %v1864
        %v8142 = vpop.f32.mrf.mxu0
        %v8143 = vadd.f32 %v8096, %v8142
        %v8144 = vpop.f32.mrf.mxu0
        %v8145 = vpop.f32.mrf.mxu0
        %v8146 = vpop.f32.mrf.mxu0
        %8147 = vdwg.mxu0
        %8148 = vmatprep.subr.bf16.mxu0 0
        %8149 = vmatpush1.bf16.msra.mxu0 %v5358
        %8150 = vmatprep.subr.bf16.mxu0 0
        %8151 = vmatpush1.bf16.msra.mxu0 %v5343
        %8152 = vmatprep.subr.bf16.mxu0 0
        %8153 = vmatpush1.bf16.msra.mxu0 %v5328
        %8154 = vmatprep.subr.bf16.mxu0 0
        %8155 = vmatpush1.bf16.msra.mxu0 %v5313
        %8156 = vmatprep.subr.bf16.mxu0 0
        %8157 = vmatpush1.bf16.msra.mxu0 %v5298
        %8158 = vmatprep.subr.bf16.mxu0 0
        %8159 = vmatpush1.bf16.msra.mxu0 %v5283
        %8160 = vmatprep.subr.bf16.mxu0 0
        %8161 = vmatpush1.bf16.msra.mxu0 %v5268
        %8162 = vmatprep.subr.bf16.mxu0 0
        %8163 = vmatpush1.bf16.msra.mxu0 %v5253
        %8164 = vmatprep.subr.bf16.mxu0 0
        %8165 = vmatpush2.bf16.msra.mxu0 %v5478
        %8166 = vmatprep.subr.bf16.mxu0 0
        %8167 = vmatpush2.bf16.msra.mxu0 %v5463
        %8168 = vmatprep.subr.bf16.mxu0 0
        %8169 = vmatpush2.bf16.msra.mxu0 %v5448
        %8170 = vmatprep.subr.bf16.mxu0 0
        %8171 = vmatpush2.bf16.msra.mxu0 %v5433
        %8172 = vmatprep.subr.bf16.mxu0 0
        %8173 = vmatpush2.bf16.msra.mxu0 %v5418
        %8174 = vmatprep.subr.bf16.mxu0 0
        %8175 = vmatpush2.bf16.msra.mxu0 %v5403
        %8176 = vmatprep.subr.bf16.mxu0 0
        %8177 = vmatpush2.bf16.msra.mxu0 %v5388
        %8178 = vmatprep.subr.bf16.mxu0 0
        %8179 = vmatpush2.bf16.msra.mxu0 %v5373
        %8180 = vmatprep.mubr.bf16.mxu0 %v1859
        %8181 = vmatmul.mubr.bf16.gmra.mxu0 %v1858
        %v8182 = vpop.f32.mrf.mxu0
        %v8183 = vpop.f32.mrf.mxu0
        %v8184 = vpop.f32.mrf.mxu0
        %v8185 = vadd.f32 %v8138, %v8184
        %v8186 = vpop.f32.mrf.mxu0
        %8187 = vmatprep.mubr.bf16.mxu0 %v1867
        %8188 = vmatmul.mubr.bf16.gmra.mxu0 %v1866
        %v8189 = vpop.f32.mrf.mxu0
        %v8190 = vadd.f32 %v8143, %v8189
        %v8191 = vpop.f32.mrf.mxu0
        %v8192 = vpop.f32.mrf.mxu0
        %v8193 = vpop.f32.mrf.mxu0
        %8194 = vdwg.mxu0
        %8195 = vmatprep.subr.bf16.mxu0 0
        %8196 = vmatpush1.bf16.msra.mxu0 %v5598
        %8197 = vmatprep.subr.bf16.mxu0 0
        %8198 = vmatpush1.bf16.msra.mxu0 %v5583
        %8199 = vmatprep.subr.bf16.mxu0 0
        %8200 = vmatpush1.bf16.msra.mxu0 %v5568
        %8201 = vmatprep.subr.bf16.mxu0 0
        %8202 = vmatpush1.bf16.msra.mxu0 %v5553
        %8203 = vmatprep.subr.bf16.mxu0 0
        %8204 = vmatpush1.bf16.msra.mxu0 %v5538
        %8205 = vmatprep.subr.bf16.mxu0 0
        %8206 = vmatpush1.bf16.msra.mxu0 %v5523
        %8207 = vmatprep.subr.bf16.mxu0 0
        %8208 = vmatpush1.bf16.msra.mxu0 %v5508
        %8209 = vmatprep.subr.bf16.mxu0 0
        %8210 = vmatpush1.bf16.msra.mxu0 %v5493
        %8211 = vmatprep.subr.bf16.mxu0 0
        %8212 = vmatpush2.bf16.msra.mxu0 0
        %8213 = vmatprep.subr.bf16.mxu0 0
        %8214 = vmatpush2.bf16.msra.mxu0 %v6684
        %8215 = vmatprep.subr.bf16.mxu0 0
        %8216 = vmatpush2.bf16.msra.mxu0 %v5688
        %8217 = vmatprep.subr.bf16.mxu0 0
        %8218 = vmatpush2.bf16.msra.mxu0 %v5673
        %8219 = vmatprep.subr.bf16.mxu0 0
        %8220 = vmatpush2.bf16.msra.mxu0 %v5658
        %8221 = vmatprep.subr.bf16.mxu0 0
        %8222 = vmatpush2.bf16.msra.mxu0 %v5643
        %8223 = vmatprep.subr.bf16.mxu0 0
        %8224 = vmatpush2.bf16.msra.mxu0 %v5628
        %8225 = vmatprep.subr.bf16.mxu0 0
        %8226 = vmatpush2.bf16.msra.mxu0 %v5613
        %8227 = vmatprep.mubr.bf16.mxu0 %v6636
        %8228 = vmatmul.mubr.bf16.gmra.mxu0 %v1860
        %v8229 = vpop.f32.mrf.mxu0
        %v8230 = vpop.f32.mrf.mxu0
        %v8231 = vpop.f32.mrf.mxu0
        %v8232 = vadd.f32 %v8185, %v8231
        %v8233 = vpop.f32.mrf.mxu0
        %8234 = vmatprep.mubr.bf16.mxu0 %v6639
        %8235 = vmatmul.mubr.bf16.gmra.mxu0 %v1868
        %v8236 = vpop.f32.mrf.mxu0
        %v8237 = vadd.f32 %v8190, %v8236
        %v8238 = vpop.f32.mrf.mxu0
        %v8239 = vpop.f32.mrf.mxu0
        %v8240 = vpop.f32.mrf.mxu0
        %8241 = vdwg.mxu0
        %v8242 = vadd.f32 %v6868, 0.0
        %v8243 = vadd.f32 %v6872, 0.0
        %vm8246 = vcmask 1046528
        %v8247 = vrot.slane %v6870, 1
        %v8248 = vrot.slane %v6874, 1
        %v8249 = vsel %vm8246, %v8247, %v8248
        %v8252 = vadd.f32 %v8242, %v8249
        %v8253 = vadd.f32 %v8243, %v8248
        %vm8256 = vcmask 1045504
        %v8257 = vrot.slane %v7064, 2
        %v8258 = vrot.slane %v7068, 2
        %v8259 = vsel %vm8256, %v8257, %v8258
        %v8262 = vadd.f32 %v8252, %v8259
        %v8263 = vadd.f32 %v8253, %v8258
        %vm8266 = vcmask 1044480
        %v8267 = vrot.slane %v7066, 3
        %v8268 = vrot.slane %v7070, 3
        %v8269 = vsel %vm8266, %v8267, %v8268
        %v8272 = vadd.f32 %v8262, %v8269
        %v8273 = vadd.f32 %v8263, %v8268
        %v8276 = vrot.slane %v7260, 4
        %v8277 = vrot.slane %v7264, 4
        %v8278 = vsel %vm750, %v8276, %v8277
        %v8281 = vadd.f32 %v8272, %v8278
        %v8282 = vadd.f32 %v8273, %v8277
        %vm8285 = vcmask 1042432
        %v8286 = vrot.slane %v7262, 5
        %v8287 = vrot.slane %v7266, 5
        %v8288 = vsel %vm8285, %v8286, %v8287
        %v8291 = vadd.f32 %v8281, %v8288
        %v8292 = vadd.f32 %v8282, %v8287
        %vm8295 = vcmask 1041408
        %v8296 = vrot.slane %v7453, 6
        %v8297 = vrot.slane %v7456, 6
        %v8298 = vsel %vm8295, %v8296, %v8297
        %v8301 = vadd.f32 %v8291, %v8298
        %v8302 = vadd.f32 %v8292, %v8297
        %v8304 = vrot.slane %v7458, 7
        %v8306 = vadd.f32 %v8301, %v8304
        %v8307 = vadd.f32 %v8302, %v8304
        %v8308 = vadd.f32 %v8306, %v7650
        %v8309 = vadd.f32 %v8307, %v7656
        %v8312 = vrot.slane %v7652, 1
        %v8313 = vrot.slane %v7658, 1
        %v8314 = vsel %vm8246, %v8312, %v8313
        %v8317 = vadd.f32 %v8308, %v8314
        %v8318 = vadd.f32 %v8309, %v8313
        %v8321 = vrot.slane %v7846, 2
        %v8322 = vrot.slane %v7852, 2
        %v8323 = vsel %vm8256, %v8321, %v8322
        %v8326 = vadd.f32 %v8317, %v8323
        %v8327 = vadd.f32 %v8318, %v8322
        %v8330 = vrot.slane %v7848, 3
        %v8331 = vrot.slane %v7854, 3
        %v8332 = vsel %vm8266, %v8330, %v8331
        %v8335 = vadd.f32 %v8326, %v8332
        %v8336 = vadd.f32 %v8327, %v8331
        %v8339 = vrot.slane %v8042, 4
        %v8340 = vrot.slane %v8048, 4
        %v8341 = vsel %vm750, %v8339, %v8340
        %v8344 = vadd.f32 %v8335, %v8341
        %v8345 = vadd.f32 %v8336, %v8340
        %v8348 = vrot.slane %v8044, 5
        %v8349 = vrot.slane %v8050, 5
        %v8350 = vsel %vm8285, %v8348, %v8349
        %v8353 = vadd.f32 %v8344, %v8350
        %v8354 = vadd.f32 %v8345, %v8349
        %v8357 = vrot.slane %v8232, 6
        %v8358 = vrot.slane %v8237, 6
        %v8359 = vsel %vm8295, %v8357, %v8358
        %v8362 = vadd.f32 %v8353, %v8359
        %v8363 = vadd.f32 %v8354, %v8358
        %v8364 = vld [vmem:[#allocation7] sm:$0x1]
        %v8366 = vlaneseq
        %v8367 = vshrl.u32 %v8366, 7
        %v8368 = vsub.s32 0, %v8367
        %v8369 = vrot.slane %v8364, %v8368
        %v8371 = vadd.f32 %v8362, %v8369
        %v8372 = vadd.f32 %v8363, %v8369
        %v8373 = vmax.f32 %v8371, 0.0
        %v8374 = vmax.f32 %v8372, 0.0
        %v8375 = vpack.c.bf16 %v8374, %v8373
        %v8376 = vld [vmem:[#allocation8] sm:$0xff]
        %v8377 = vld [vmem:[#allocation8 + $0x8] sm:$0xff]
        %v8378 = vld [vmem:[#allocation8 + $0x10] sm:$0xff]
        %v8379 = vld [vmem:[#allocation8 + $0x18] sm:$0xff]
        %v8380 = vld [vmem:[#allocation8 + $0x20] sm:$0xff]
        %v8381 = vld [vmem:[#allocation8 + $0x28] sm:$0xff]
        %v8382 = vld [vmem:[#allocation8 + $0x30] sm:$0xff]
        %v8383 = vld [vmem:[#allocation8 + $0x38] sm:$0xff]
        %v8384 = vld [vmem:[#allocation8 + $0x40] sm:$0xff]
        %v8385 = vld [vmem:[#allocation8 + $0x48] sm:$0xff]
        %v8386 = vld [vmem:[#allocation8 + $0x50] sm:$0xff]
        %v8387 = vld [vmem:[#allocation8 + $0x58] sm:$0xff]
        %v8388 = vld [vmem:[#allocation8 + $0x60] sm:$0xff]
        %v8389 = vld [vmem:[#allocation8 + $0x68] sm:$0xff]
        %v8390 = vld [vmem:[#allocation8 + $0x70] sm:$0xff]
        %v8391 = vld [vmem:[#allocation8 + $0x78] sm:$0xff]
        %v8392 = vld [vmem:[#allocation8 + $0x80] sm:$0xff]
        %v8393 = vld [vmem:[#allocation8 + $0x88] sm:$0xff]
        %v8394 = vld [vmem:[#allocation8 + $0x90] sm:$0xff]
        %v8395 = vld [vmem:[#allocation8 + $0x98] sm:$0xff]
        %v8396 = vld [vmem:[#allocation8 + $0xa0] sm:$0xff]
        %v8397 = vld [vmem:[#allocation8 + $0xa8] sm:$0xff]
        %v8398 = vld [vmem:[#allocation8 + $0xb0] sm:$0xff]
        %v8399 = vld [vmem:[#allocation8 + $0xb8] sm:$0xff]
        %v8400 = vld [vmem:[#allocation8 + $0xc0] sm:$0xff]
        %v8401 = vld [vmem:[#allocation8 + $0xc8] sm:$0xff]
        %v8402 = vld [vmem:[#allocation8 + $0xd0] sm:$0xff]
        %v8403 = vld [vmem:[#allocation8 + $0xd8] sm:$0xff]
        %v8404 = vld [vmem:[#allocation8 + $0xe0] sm:$0xff]
        %v8405 = vld [vmem:[#allocation8 + $0xe8] sm:$0xff]
        %v8406 = vld [vmem:[#allocation8 + $0xf0] sm:$0xff]
        %v8407 = vld [vmem:[#allocation8 + $0xf8] sm:$0xff]
        %v8408 = vld [vmem:[#allocation11] sm:$0xf]
        %v8410 = vlaneseq
        %v8411 = vshrl.u32 %v8410, 7
        %v8412 = vsub.s32 0, %v8411
        %v8413 = vrot.slane %v8408, %v8412
        %v8414 = vlaneseq
        %v8415 = vshrl.u32 %v8414, 7
        %v8416 = vsub.s32 1, %v8415
        %v8417 = vrot.slane %v8408, %v8416
        %v8418 = vlaneseq
        %v8419 = vshrl.u32 %v8418, 7
        %v8420 = vsub.s32 2, %v8419
        %v8421 = vrot.slane %v8408, %v8420
        %v8422 = vlaneseq
        %v8423 = vshrl.u32 %v8422, 7
        %v8424 = vsub.s32 3, %v8423
        %v8425 = vrot.slane %v8408, %v8424
        %v8431 = vshrl.u32 %v8375, 16
        %v8433 = vshll.u32 %v8375, 16
        %v8435 = vrot.slane %v8433, 1
        %v8436 = vor.u32 %v8431, %v8435
        %v8470 = vunpack.c.l.b16 %v8376
        %v8471 = vunpack.c.h.b16 %v8376
        %v8472 = vunpack.c.l.b16 %v8377
        %v8473 = vunpack.c.h.b16 %v8377
        %v8474 = vunpack.c.l.b16 %v8378
        %v8475 = vunpack.c.h.b16 %v8378
        %v8476 = vunpack.c.l.b16 %v8379
        %v8477 = vunpack.c.h.b16 %v8379
        %v8478 = vunpack.c.l.b16 %v8380
        %v8479 = vunpack.c.h.b16 %v8380
        %v8480 = vunpack.c.l.b16 %v8381
        %v8481 = vunpack.c.h.b16 %v8381
        %v8482 = vunpack.c.l.b16 %v8382
        %v8483 = vunpack.c.h.b16 %v8382
        %v8484 = vunpack.c.l.b16 %v8383
        %v8485 = vunpack.c.h.b16 %v8383
        %v8486 = vunpack.c.l.b16 %v8384
        %v8487 = vunpack.c.h.b16 %v8384
        %v8488 = vunpack.c.l.b16 %v8385
        %v8489 = vunpack.c.h.b16 %v8385
        %v8490 = vunpack.c.l.b16 %v8386
        %v8491 = vunpack.c.h.b16 %v8386
        %v8492 = vunpack.c.l.b16 %v8387
        %v8493 = vunpack.c.h.b16 %v8387
        %v8494 = vunpack.c.l.b16 %v8388
        %v8495 = vunpack.c.h.b16 %v8388
        %v8496 = vunpack.c.l.b16 %v8389
        %v8497 = vunpack.c.h.b16 %v8389
        %v8498 = vunpack.c.l.b16 %v8390
        %v8499 = vunpack.c.h.b16 %v8390
        %v8500 = vunpack.c.l.b16 %v8391
        %v8501 = vunpack.c.h.b16 %v8391
        %v8502 = vunpack.c.l.b16 %v8392
        %v8503 = vunpack.c.h.b16 %v8392
        %v8504 = vunpack.c.l.b16 %v8393
        %v8505 = vunpack.c.h.b16 %v8393
        %v8506 = vunpack.c.l.b16 %v8394
        %v8507 = vunpack.c.h.b16 %v8394
        %v8508 = vunpack.c.l.b16 %v8395
        %v8509 = vunpack.c.h.b16 %v8395
        %v8510 = vunpack.c.l.b16 %v8396
        %v8511 = vunpack.c.h.b16 %v8396
        %v8512 = vunpack.c.l.b16 %v8397
        %v8513 = vunpack.c.h.b16 %v8397
        %v8514 = vunpack.c.l.b16 %v8398
        %v8515 = vunpack.c.h.b16 %v8398
        %v8516 = vunpack.c.l.b16 %v8399
        %v8517 = vunpack.c.h.b16 %v8399
        %v8518 = vunpack.c.l.b16 %v8400
        %v8519 = vunpack.c.h.b16 %v8400
        %v8520 = vunpack.c.l.b16 %v8401
        %v8521 = vunpack.c.h.b16 %v8401
        %v8522 = vunpack.c.l.b16 %v8402
        %v8523 = vunpack.c.h.b16 %v8402
        %v8524 = vunpack.c.l.b16 %v8403
        %v8525 = vunpack.c.h.b16 %v8403
        %v8526 = vunpack.c.l.b16 %v8404
        %v8527 = vunpack.c.h.b16 %v8404
        %v8528 = vunpack.c.l.b16 %v8405
        %v8529 = vunpack.c.h.b16 %v8405
        %v8530 = vunpack.c.l.b16 %v8406
        %v8531 = vunpack.c.h.b16 %v8406
        %v8532 = vunpack.c.l.b16 %v8407
        %v8533 = vunpack.c.h.b16 %v8407
        %v8534 = vpack.c.b16 %v8474, %v8470
        %v8535 = vpack.c.b16 %v8475, %v8471
        %v8536 = vpack.c.b16 %v8476, %v8472
        %v8537 = vpack.c.b16 %v8477, %v8473
        %v8538 = vpack.c.b16 %v8482, %v8478
        %v8539 = vpack.c.b16 %v8483, %v8479
        %v8540 = vpack.c.b16 %v8484, %v8480
        %v8541 = vpack.c.b16 %v8485, %v8481
        %v8542 = vpack.c.b16 %v8490, %v8486
        %v8543 = vpack.c.b16 %v8491, %v8487
        %v8544 = vpack.c.b16 %v8492, %v8488
        %v8545 = vpack.c.b16 %v8493, %v8489
        %v8546 = vpack.c.b16 %v8498, %v8494
        %v8547 = vpack.c.b16 %v8499, %v8495
        %v8548 = vpack.c.b16 %v8500, %v8496
        %v8549 = vpack.c.b16 %v8501, %v8497
        %v8550 = vpack.c.b16 %v8506, %v8502
        %v8551 = vpack.c.b16 %v8507, %v8503
        %v8552 = vpack.c.b16 %v8508, %v8504
        %v8553 = vpack.c.b16 %v8509, %v8505
        %v8554 = vpack.c.b16 %v8514, %v8510
        %v8555 = vpack.c.b16 %v8515, %v8511
        %v8556 = vpack.c.b16 %v8516, %v8512
        %v8557 = vpack.c.b16 %v8517, %v8513
        %v8558 = vpack.c.b16 %v8522, %v8518
        %v8559 = vpack.c.b16 %v8523, %v8519
        %v8560 = vpack.c.b16 %v8524, %v8520
        %v8561 = vpack.c.b16 %v8525, %v8521
        %v8562 = vpack.c.b16 %v8530, %v8526
        %v8563 = vpack.c.b16 %v8531, %v8527
        %v8564 = vpack.c.b16 %v8532, %v8528
        %v8565 = vpack.c.b16 %v8533, %v8529
        %8598 = vmatprep.subr.bf16.mxu0 %v8563
        %8599 = vmatpush1.bf16.msra.mxu0 %v8562
        %8600 = vmatprep.subr.bf16.mxu0 %v8559
        %8601 = vmatpush1.bf16.msra.mxu0 %v8558
        %8602 = vmatprep.subr.bf16.mxu0 %v8555
        %8603 = vmatpush1.bf16.msra.mxu0 %v8554
        %8604 = vmatprep.subr.bf16.mxu0 %v8551
        %8605 = vmatpush1.bf16.msra.mxu0 %v8550
        %8606 = vmatprep.subr.bf16.mxu0 %v8547
        %8607 = vmatpush1.bf16.msra.mxu0 %v8546
        %8608 = vmatprep.subr.bf16.mxu0 %v8543
        %8609 = vmatpush1.bf16.msra.mxu0 %v8542
        %8610 = vmatprep.subr.bf16.mxu0 %v8539
        %8611 = vmatpush1.bf16.msra.mxu0 %v8538
        %8612 = vmatprep.subr.bf16.mxu0 %v8535
        %8613 = vmatpush1.bf16.msra.mxu0 %v8534
        %8614 = vmatprep.subr.bf16.mxu0 0
        %8615 = vmatpush2.bf16.msra.mxu0 0
        %8616 = vmatprep.subr.bf16.mxu0 0
        %8617 = vmatpush2.bf16.msra.mxu0 0
        %8618 = vmatprep.subr.bf16.mxu0 0
        %8619 = vmatpush2.bf16.msra.mxu0 0
        %8620 = vmatprep.subr.bf16.mxu0 0
        %8621 = vmatpush2.bf16.msra.mxu0 0
        %8622 = vmatprep.subr.bf16.mxu0 0
        %8623 = vmatpush2.bf16.msra.mxu0 0
        %8624 = vmatprep.subr.bf16.mxu0 0
        %8625 = vmatpush2.bf16.msra.mxu0 0
        %8626 = vmatprep.subr.bf16.mxu0 0
        %8627 = vmatpush2.bf16.msra.mxu0 0
        %8628 = vmatprep.subr.bf16.mxu0 0
        %8629 = vmatpush2.bf16.msra.mxu0 0
        %8630 = vmatprep.mubr.bf16.mxu0 0
        %8631 = vmatmul.mubr.bf16.gmra.mxu0 %v8436
        %v8632 = vpop.f32.mrf.mxu0
        %v8633 = vadd.f32 %v8413, %v8632
        %v8634 = vpop.f32.mrf.mxu0
        %v8635 = vadd.f32 %v8417, %v8634
        %v8636 = vpop.f32.mrf.mxu0
        %v8637 = vpop.f32.mrf.mxu0
        %8638 = vdwg.mxu0
        %8639 = vmatprep.subr.bf16.mxu0 %v8565
        %8640 = vmatpush1.bf16.msra.mxu0 %v8564
        %8641 = vmatprep.subr.bf16.mxu0 %v8561
        %8642 = vmatpush1.bf16.msra.mxu0 %v8560
        %8643 = vmatprep.subr.bf16.mxu0 %v8557
        %8644 = vmatpush1.bf16.msra.mxu0 %v8556
        %8645 = vmatprep.subr.bf16.mxu0 %v8553
        %8646 = vmatpush1.bf16.msra.mxu0 %v8552
        %8647 = vmatprep.subr.bf16.mxu0 %v8549
        %8648 = vmatpush1.bf16.msra.mxu0 %v8548
        %8649 = vmatprep.subr.bf16.mxu0 %v8545
        %8650 = vmatpush1.bf16.msra.mxu0 %v8544
        %8651 = vmatprep.subr.bf16.mxu0 %v8541
        %8652 = vmatpush1.bf16.msra.mxu0 %v8540
        %8653 = vmatprep.subr.bf16.mxu0 %v8537
        %8654 = vmatpush1.bf16.msra.mxu0 %v8536
        %8655 = vmatprep.subr.bf16.mxu0 0
        %8656 = vmatpush2.bf16.msra.mxu0 0
        %8657 = vmatprep.subr.bf16.mxu0 0
        %8658 = vmatpush2.bf16.msra.mxu0 0
        %8659 = vmatprep.subr.bf16.mxu0 0
        %8660 = vmatpush2.bf16.msra.mxu0 0
        %8661 = vmatprep.subr.bf16.mxu0 0
        %8662 = vmatpush2.bf16.msra.mxu0 0
        %8663 = vmatprep.subr.bf16.mxu0 0
        %8664 = vmatpush2.bf16.msra.mxu0 0
        %8665 = vmatprep.subr.bf16.mxu0 0
        %8666 = vmatpush2.bf16.msra.mxu0 0
        %8667 = vmatprep.subr.bf16.mxu0 0
        %8668 = vmatpush2.bf16.msra.mxu0 0
        %8669 = vmatprep.subr.bf16.mxu0 0
        %8670 = vmatpush2.bf16.msra.mxu0 0
        %8671 = vmatprep.mubr.bf16.mxu0 0
        %8672 = vmatmul.mubr.bf16.gmra.mxu0 %v8436
        %v8673 = vpop.f32.mrf.mxu0
        %v8674 = vadd.f32 %v8421, %v8673
        %v8675 = vpop.f32.mrf.mxu0
        %v8676 = vadd.f32 %v8425, %v8675
        %v8677 = vpop.f32.mrf.mxu0
        %v8678 = vpop.f32.mrf.mxu0
        %8679 = vdwg.mxu0
        %v8680 = vld [vmem:[%s661] sm:$0x1]
        %v8681 = vld [vmem:[%s670] sm:$0x1]
        %v8682 = vpack.c.bf16 %v8680, %v8680
        %v8683 = vld [vmem:[#allocation10] sm:$0xff]
        %v8684 = vld [vmem:[#allocation10 + $0x8] sm:$0xff]
        %v8685 = vld [vmem:[#allocation10 + $0x10] sm:$0xff]
        %v8686 = vld [vmem:[#allocation10 + $0x18] sm:$0xff]
        %v8687 = vld [vmem:[#allocation10 + $0x20] sm:$0xff]
        %v8688 = vld [vmem:[#allocation10 + $0x28] sm:$0xff]
        %v8689 = vld [vmem:[#allocation10 + $0x30] sm:$0xff]
        %v8690 = vld [vmem:[#allocation10 + $0x38] sm:$0xff]
        %v8691 = vld [vmem:[#allocation10 + $0x40] sm:$0xff]
        %v8692 = vld [vmem:[#allocation10 + $0x48] sm:$0xff]
        %v8693 = vld [vmem:[#allocation10 + $0x50] sm:$0xff]
        %v8694 = vld [vmem:[#allocation10 + $0x58] sm:$0xff]
        %v8695 = vld [vmem:[#allocation10 + $0x60] sm:$0xff]
        %v8696 = vld [vmem:[#allocation10 + $0x68] sm:$0xff]
        %v8697 = vld [vmem:[#allocation10 + $0x70] sm:$0xff]
        %v8698 = vld [vmem:[#allocation10 + $0x78] sm:$0xff]
        %v8699 = vld [vmem:[#allocation10 + $0x80] sm:$0xff]
        %v8700 = vld [vmem:[#allocation10 + $0x88] sm:$0xff]
        %v8701 = vld [vmem:[#allocation10 + $0x90] sm:$0xff]
        %v8702 = vld [vmem:[#allocation10 + $0x98] sm:$0xff]
        %v8703 = vld [vmem:[#allocation10 + $0xa0] sm:$0xff]
        %v8704 = vld [vmem:[#allocation10 + $0xa8] sm:$0xff]
        %v8705 = vld [vmem:[#allocation10 + $0xb0] sm:$0xff]
        %v8706 = vld [vmem:[#allocation10 + $0xb8] sm:$0xff]
        %v8707 = vld [vmem:[#allocation10 + $0xc0] sm:$0xff]
        %v8708 = vld [vmem:[#allocation10 + $0xc8] sm:$0xff]
        %v8709 = vld [vmem:[#allocation10 + $0xd0] sm:$0xff]
        %v8710 = vld [vmem:[#allocation10 + $0xd8] sm:$0xff]
        %v8711 = vld [vmem:[#allocation10 + $0xe0] sm:$0xff]
        %v8712 = vld [vmem:[#allocation10 + $0xe8] sm:$0xff]
        %v8713 = vld [vmem:[#allocation10 + $0xf0] sm:$0xff]
        %v8714 = vld [vmem:[#allocation10 + $0xf8] sm:$0xff]
        %v8747 = vunpack.c.l.b16 %v8683
        %v8748 = vunpack.c.h.b16 %v8683
        %v8749 = vunpack.c.l.b16 %v8684
        %v8750 = vunpack.c.h.b16 %v8684
        %v8751 = vunpack.c.l.b16 %v8685
        %v8752 = vunpack.c.h.b16 %v8685
        %v8753 = vunpack.c.l.b16 %v8686
        %v8754 = vunpack.c.h.b16 %v8686
        %v8755 = vunpack.c.l.b16 %v8687
        %v8756 = vunpack.c.h.b16 %v8687
        %v8757 = vunpack.c.l.b16 %v8688
        %v8758 = vunpack.c.h.b16 %v8688
        %v8759 = vunpack.c.l.b16 %v8689
        %v8760 = vunpack.c.h.b16 %v8689
        %v8761 = vunpack.c.l.b16 %v8690
        %v8762 = vunpack.c.h.b16 %v8690
        %v8763 = vunpack.c.l.b16 %v8691
        %v8764 = vunpack.c.h.b16 %v8691
        %v8765 = vunpack.c.l.b16 %v8692
        %v8766 = vunpack.c.h.b16 %v8692
        %v8767 = vunpack.c.l.b16 %v8693
        %v8768 = vunpack.c.h.b16 %v8693
        %v8769 = vunpack.c.l.b16 %v8694
        %v8770 = vunpack.c.h.b16 %v8694
        %v8771 = vunpack.c.l.b16 %v8695
        %v8772 = vunpack.c.h.b16 %v8695
        %v8773 = vunpack.c.l.b16 %v8696
        %v8774 = vunpack.c.h.b16 %v8696
        %v8775 = vunpack.c.l.b16 %v8697
        %v8776 = vunpack.c.h.b16 %v8697
        %v8777 = vunpack.c.l.b16 %v8698
        %v8778 = vunpack.c.h.b16 %v8698
        %v8779 = vunpack.c.l.b16 %v8699
        %v8780 = vunpack.c.h.b16 %v8699
        %v8781 = vunpack.c.l.b16 %v8700
        %v8782 = vunpack.c.h.b16 %v8700
        %v8783 = vunpack.c.l.b16 %v8701
        %v8784 = vunpack.c.h.b16 %v8701
        %v8785 = vunpack.c.l.b16 %v8702
        %v8786 = vunpack.c.h.b16 %v8702
        %v8787 = vunpack.c.l.b16 %v8703
        %v8788 = vunpack.c.h.b16 %v8703
        %v8789 = vunpack.c.l.b16 %v8704
        %v8790 = vunpack.c.h.b16 %v8704
        %v8791 = vunpack.c.l.b16 %v8705
        %v8792 = vunpack.c.h.b16 %v8705
        %v8793 = vunpack.c.l.b16 %v8706
        %v8794 = vunpack.c.h.b16 %v8706
        %v8795 = vunpack.c.l.b16 %v8707
        %v8796 = vunpack.c.h.b16 %v8707
        %v8797 = vunpack.c.l.b16 %v8708
        %v8798 = vunpack.c.h.b16 %v8708
        %v8799 = vunpack.c.l.b16 %v8709
        %v8800 = vunpack.c.h.b16 %v8709
        %v8801 = vunpack.c.l.b16 %v8710
        %v8802 = vunpack.c.h.b16 %v8710
        %v8803 = vunpack.c.l.b16 %v8711
        %v8804 = vunpack.c.h.b16 %v8711
        %v8805 = vunpack.c.l.b16 %v8712
        %v8806 = vunpack.c.h.b16 %v8712
        %v8807 = vunpack.c.l.b16 %v8713
        %v8808 = vunpack.c.h.b16 %v8713
        %v8809 = vunpack.c.l.b16 %v8714
        %v8810 = vunpack.c.h.b16 %v8714
        %v8811 = vpack.c.b16 %v8751, %v8747
        %v8812 = vpack.c.b16 %v8752, %v8748
        %v8813 = vpack.c.b16 %v8753, %v8749
        %v8814 = vpack.c.b16 %v8754, %v8750
        %v8815 = vpack.c.b16 %v8759, %v8755
        %v8816 = vpack.c.b16 %v8760, %v8756
        %v8817 = vpack.c.b16 %v8761, %v8757
        %v8818 = vpack.c.b16 %v8762, %v8758
        %v8819 = vpack.c.b16 %v8767, %v8763
        %v8820 = vpack.c.b16 %v8768, %v8764
        %v8821 = vpack.c.b16 %v8769, %v8765
        %v8822 = vpack.c.b16 %v8770, %v8766
        %v8823 = vpack.c.b16 %v8775, %v8771
        %v8824 = vpack.c.b16 %v8776, %v8772
        %v8825 = vpack.c.b16 %v8777, %v8773
        %v8826 = vpack.c.b16 %v8778, %v8774
        %v8827 = vpack.c.b16 %v8783, %v8779
        %v8828 = vpack.c.b16 %v8784, %v8780
        %v8829 = vpack.c.b16 %v8785, %v8781
        %v8830 = vpack.c.b16 %v8786, %v8782
        %v8831 = vpack.c.b16 %v8791, %v8787
        %v8832 = vpack.c.b16 %v8792, %v8788
        %v8833 = vpack.c.b16 %v8793, %v8789
        %v8834 = vpack.c.b16 %v8794, %v8790
        %v8835 = vpack.c.b16 %v8799, %v8795
        %v8836 = vpack.c.b16 %v8800, %v8796
        %v8837 = vpack.c.b16 %v8801, %v8797
        %v8838 = vpack.c.b16 %v8802, %v8798
        %v8839 = vpack.c.b16 %v8807, %v8803
        %v8840 = vpack.c.b16 %v8808, %v8804
        %v8841 = vpack.c.b16 %v8809, %v8805
        %v8842 = vpack.c.b16 %v8810, %v8806
        %8875 = vmatprep.subr.bf16.mxu0 %v8840
        %8876 = vmatpush1.bf16.msra.mxu0 %v8839
        %8877 = vmatprep.subr.bf16.mxu0 %v8836
        %8878 = vmatpush1.bf16.msra.mxu0 %v8835
        %8879 = vmatprep.subr.bf16.mxu0 %v8832
        %8880 = vmatpush1.bf16.msra.mxu0 %v8831
        %8881 = vmatprep.subr.bf16.mxu0 %v8828
        %8882 = vmatpush1.bf16.msra.mxu0 %v8827
        %8883 = vmatprep.subr.bf16.mxu0 %v8824
        %8884 = vmatpush1.bf16.msra.mxu0 %v8823
        %8885 = vmatprep.subr.bf16.mxu0 %v8820
        %8886 = vmatpush1.bf16.msra.mxu0 %v8819
        %8887 = vmatprep.subr.bf16.mxu0 %v8816
        %8888 = vmatpush1.bf16.msra.mxu0 %v8815
        %8889 = vmatprep.subr.bf16.mxu0 %v8812
        %8890 = vmatpush1.bf16.msra.mxu0 %v8811
        %8891 = vmatprep.subr.bf16.mxu0 0
        %8892 = vmatpush2.bf16.msra.mxu0 0
        %8893 = vmatprep.subr.bf16.mxu0 0
        %8894 = vmatpush2.bf16.msra.mxu0 0
        %8895 = vmatprep.subr.bf16.mxu0 0
        %8896 = vmatpush2.bf16.msra.mxu0 0
        %8897 = vmatprep.subr.bf16.mxu0 0
        %8898 = vmatpush2.bf16.msra.mxu0 0
        %8899 = vmatprep.subr.bf16.mxu0 0
        %8900 = vmatpush2.bf16.msra.mxu0 0
        %8901 = vmatprep.subr.bf16.mxu0 0
        %8902 = vmatpush2.bf16.msra.mxu0 0
        %8903 = vmatprep.subr.bf16.mxu0 0
        %8904 = vmatpush2.bf16.msra.mxu0 0
        %8905 = vmatprep.subr.bf16.mxu0 0
        %8906 = vmatpush2.bf16.msra.mxu0 0
        %8907 = vmatprep.mubr.bf16.mxu0 0
        %8908 = vmatmul.mubr.bf16.gmra.mxu0 %v8682
        %v8909 = vpop.f32.mrf.mxu0
        %v8910 = vadd.f32 0.0, %v8909
        %v8911 = vpop.f32.mrf.mxu0
        %v8912 = vadd.f32 0.0, %v8911
        %v8913 = vpop.f32.mrf.mxu0
        %v8914 = vpop.f32.mrf.mxu0
        %8915 = vdwg.mxu0
        %8916 = vmatprep.subr.bf16.mxu0 %v8842
        %8917 = vmatpush1.bf16.msra.mxu0 %v8841
        %8918 = vmatprep.subr.bf16.mxu0 %v8838
        %8919 = vmatpush1.bf16.msra.mxu0 %v8837
        %8920 = vmatprep.subr.bf16.mxu0 %v8834
        %8921 = vmatpush1.bf16.msra.mxu0 %v8833
        %8922 = vmatprep.subr.bf16.mxu0 %v8830
        %8923 = vmatpush1.bf16.msra.mxu0 %v8829
        %8924 = vmatprep.subr.bf16.mxu0 %v8826
        %8925 = vmatpush1.bf16.msra.mxu0 %v8825
        %8926 = vmatprep.subr.bf16.mxu0 %v8822
        %8927 = vmatpush1.bf16.msra.mxu0 %v8821
        %8928 = vmatprep.subr.bf16.mxu0 %v8818
        %8929 = vmatpush1.bf16.msra.mxu0 %v8817
        %8930 = vmatprep.subr.bf16.mxu0 %v8814
        %8931 = vmatpush1.bf16.msra.mxu0 %v8813
        %8932 = vmatprep.subr.bf16.mxu0 0
        %8933 = vmatpush2.bf16.msra.mxu0 0
        %8934 = vmatprep.subr.bf16.mxu0 0
        %8935 = vmatpush2.bf16.msra.mxu0 0
        %8936 = vmatprep.subr.bf16.mxu0 0
        %8937 = vmatpush2.bf16.msra.mxu0 0
        %8938 = vmatprep.subr.bf16.mxu0 0
        %8939 = vmatpush2.bf16.msra.mxu0 0
        %8940 = vmatprep.subr.bf16.mxu0 0
        %8941 = vmatpush2.bf16.msra.mxu0 0
        %8942 = vmatprep.subr.bf16.mxu0 0
        %8943 = vmatpush2.bf16.msra.mxu0 0
        %8944 = vmatprep.subr.bf16.mxu0 0
        %8945 = vmatpush2.bf16.msra.mxu0 0
        %8946 = vmatprep.subr.bf16.mxu0 0
        %8947 = vmatpush2.bf16.msra.mxu0 0
        %8948 = vmatprep.mubr.bf16.mxu0 0
        %8949 = vmatmul.mubr.bf16.gmra.mxu0 %v8682
        %v8950 = vpop.f32.mrf.mxu0
        %v8951 = vadd.f32 0.0, %v8950
        %v8952 = vpop.f32.mrf.mxu0
        %v8953 = vadd.f32 0.0, %v8952
        %v8954 = vpop.f32.mrf.mxu0
        %v8955 = vpop.f32.mrf.mxu0
        %8956 = vdwg.mxu0
        %v8957 = vadd.f32 %v8633, %v8910
        %v8958 = vadd.f32 %v8635, %v8912
        %v8959 = vadd.f32 %v8674, %v8951
        %v8960 = vadd.f32 %v8676, %v8953
        %v8961 = vxor.u32 %v8957, 2147483648
        %v8962 = vmul.f32 %v8961, 1.442695
        %v8963 = vpow.pop %v8962
        %v8964 = vadd.f32 %v8963, 1.0
        %v8965 = vrcp.pop %v8964
        %v8966 = vmul.f32 1.0, %v8965
        %v8967 = vxor.u32 %v8958, 2147483648
        %v8968 = vmul.f32 %v8967, 1.442695
        %v8969 = vpow.pop %v8968
        %v8970 = vadd.f32 %v8969, 1.0
        %v8971 = vrcp.pop %v8970
        %v8972 = vmul.f32 1.0, %v8971
        %v8973 = vtanh.pop %v8959
        %v8974 = vxor.u32 %v8960, 2147483648
        %v8975 = vmul.f32 %v8974, 1.442695
        %v8976 = vpow.pop %v8975
        %v8977 = vadd.f32 %v8976, 1.0
        %v8978 = vrcp.pop %v8977
        %v8979 = vmul.f32 1.0, %v8978
        %v8980 = vmul.f32 %v8972, %v8681
        %v8981 = vmul.f32 %v8966, %v8973
        %v8982 = vadd.f32 %v8980, %v8981
        %v8983 = vtanh.pop %v8982
        %v8984 = vmul.f32 %v8979, %v8983
        %v8985 = vpack.c.bf16 %v8984, %v8984
        %8986 = vmatprep.subr.bf16.mxu0 %v8840
        %8987 = vmatpush1.bf16.msra.mxu0 %v8839
        %8988 = vmatprep.subr.bf16.mxu0 %v8836
        %8989 = vmatpush1.bf16.msra.mxu0 %v8835
        %8990 = vmatprep.subr.bf16.mxu0 %v8832
        %8991 = vmatpush1.bf16.msra.mxu0 %v8831
        %8992 = vmatprep.subr.bf16.mxu0 %v8828
        %8993 = vmatpush1.bf16.msra.mxu0 %v8827
        %8994 = vmatprep.subr.bf16.mxu0 %v8824
        %8995 = vmatpush1.bf16.msra.mxu0 %v8823
        %8996 = vmatprep.subr.bf16.mxu0 %v8820
        %8997 = vmatpush1.bf16.msra.mxu0 %v8819
        %8998 = vmatprep.subr.bf16.mxu0 %v8816
        %8999 = vmatpush1.bf16.msra.mxu0 %v8815
        %9000 = vmatprep.subr.bf16.mxu0 %v8812
        %9001 = vmatpush1.bf16.msra.mxu0 %v8811
        %9002 = vmatprep.subr.bf16.mxu0 0
        %9003 = vmatpush2.bf16.msra.mxu0 0
        %9004 = vmatprep.subr.bf16.mxu0 0
        %9005 = vmatpush2.bf16.msra.mxu0 0
        %9006 = vmatprep.subr.bf16.mxu0 0
        %9007 = vmatpush2.bf16.msra.mxu0 0
        %9008 = vmatprep.subr.bf16.mxu0 0
        %9009 = vmatpush2.bf16.msra.mxu0 0
        %9010 = vmatprep.subr.bf16.mxu0 0
        %9011 = vmatpush2.bf16.msra.mxu0 0
        %9012 = vmatprep.subr.bf16.mxu0 0
        %9013 = vmatpush2.bf16.msra.mxu0 0
        %9014 = vmatprep.subr.bf16.mxu0 0
        %9015 = vmatpush2.bf16.msra.mxu0 0
        %9016 = vmatprep.subr.bf16.mxu0 0
        %9017 = vmatpush2.bf16.msra.mxu0 0
        %9018 = vmatprep.mubr.bf16.mxu0 0
        %9019 = vmatmul.mubr.bf16.gmra.mxu0 %v8985
        %v9020 = vpop.f32.mrf.mxu0
        %v9021 = vadd.f32 0.0, %v9020
        %v9022 = vpop.f32.mrf.mxu0
        %v9023 = vadd.f32 0.0, %v9022
        %v9024 = vpop.f32.mrf.mxu0
        %v9025 = vpop.f32.mrf.mxu0
        %9026 = vdwg.mxu0
        %9027 = vmatprep.subr.bf16.mxu0 %v8842
        %9028 = vmatpush1.bf16.msra.mxu0 %v8841
        %9029 = vmatprep.subr.bf16.mxu0 %v8838
        %9030 = vmatpush1.bf16.msra.mxu0 %v8837
        %9031 = vmatprep.subr.bf16.mxu0 %v8834
        %9032 = vmatpush1.bf16.msra.mxu0 %v8833
        %9033 = vmatprep.subr.bf16.mxu0 %v8830
        %9034 = vmatpush1.bf16.msra.mxu0 %v8829
        %9035 = vmatprep.subr.bf16.mxu0 %v8826
        %9036 = vmatpush1.bf16.msra.mxu0 %v8825
        %9037 = vmatprep.subr.bf16.mxu0 %v8822
        %9038 = vmatpush1.bf16.msra.mxu0 %v8821
        %9039 = vmatprep.subr.bf16.mxu0 %v8818
        %9040 = vmatpush1.bf16.msra.mxu0 %v8817
        %9041 = vmatprep.subr.bf16.mxu0 %v8814
        %9042 = vmatpush1.bf16.msra.mxu0 %v8813
        %9043 = vmatprep.subr.bf16.mxu0 0
        %9044 = vmatpush2.bf16.msra.mxu0 0
        %9045 = vmatprep.subr.bf16.mxu0 0
        %9046 = vmatpush2.bf16.msra.mxu0 0
        %9047 = vmatprep.subr.bf16.mxu0 0
        %9048 = vmatpush2.bf16.msra.mxu0 0
        %9049 = vmatprep.subr.bf16.mxu0 0
        %9050 = vmatpush2.bf16.msra.mxu0 0
        %9051 = vmatprep.subr.bf16.mxu0 0
        %9052 = vmatpush2.bf16.msra.mxu0 0
        %9053 = vmatprep.subr.bf16.mxu0 0
        %9054 = vmatpush2.bf16.msra.mxu0 0
        %9055 = vmatprep.subr.bf16.mxu0 0
        %9056 = vmatpush2.bf16.msra.mxu0 0
        %9057 = vmatprep.subr.bf16.mxu0 0
        %9058 = vmatpush2.bf16.msra.mxu0 0
        %9059 = vmatprep.mubr.bf16.mxu0 0
        %9060 = vmatmul.mubr.bf16.gmra.mxu0 %v8985
        %v9061 = vpop.f32.mrf.mxu0
        %v9062 = vadd.f32 0.0, %v9061
        %v9063 = vpop.f32.mrf.mxu0
        %v9064 = vadd.f32 0.0, %v9063
        %v9065 = vpop.f32.mrf.mxu0
        %v9066 = vpop.f32.mrf.mxu0
        %9067 = vdwg.mxu0
        %v9072 = vrot.slane %v9021, 7
        %v9073 = vrot.slane %v9023, 7
        %v9074 = vrot.slane %v9062, 7
        %v9075 = vrot.slane %v9064, 7
        %v9080 = vadd.f32 %v8633, %v9072
        %v9081 = vadd.f32 %v8635, %v9073
        %v9082 = vadd.f32 %v8674, %v9074
        %v9083 = vadd.f32 %v8676, %v9075
        %v9084 = vxor.u32 %v9080, 2147483648
        %v9085 = vmul.f32 %v9084, 1.442695
        %v9086 = vpow.pop %v9085
        %v9087 = vadd.f32 %v9086, 1.0
        %v9088 = vrcp.pop %v9087
        %v9089 = vmul.f32 1.0, %v9088
        %v9090 = vxor.u32 %v9081, 2147483648
        %v9091 = vmul.f32 %v9090, 1.442695
        %v9092 = vpow.pop %v9091
        %v9093 = vadd.f32 %v9092, 1.0
        %v9094 = vrcp.pop %v9093
        %v9095 = vmul.f32 1.0, %v9094
        %v9096 = vtanh.pop %v9082
        %v9097 = vxor.u32 %v9083, 2147483648
        %v9098 = vmul.f32 %v9097, 1.442695
        %v9099 = vpow.pop %v9098
        %v9100 = vadd.f32 %v9099, 1.0
        %v9101 = vrcp.pop %v9100
        %v9102 = vmul.f32 1.0, %v9101
        %v9104 = vrot.slane %v8982, 7
        %v9106 = vmul.f32 %v9095, %v9104
        %v9107 = vmul.f32 %v9089, %v9096
        %v9108 = vadd.f32 %v9106, %v9107
        %v9109 = vtanh.pop %v9108
        %v9110 = vmul.f32 %v9102, %v9109
        %v9111 = vpack.c.bf16 %v9110, %v9110
        %v9113 = vshrl.u32 %v9111, 16
        %9116 = vmatprep.subr.bf16.mxu0 %v8840
        %9117 = vmatpush1.bf16.msra.mxu0 %v8839
        %9118 = vmatprep.subr.bf16.mxu0 %v8836
        %9119 = vmatpush1.bf16.msra.mxu0 %v8835
        %9120 = vmatprep.subr.bf16.mxu0 %v8832
        %9121 = vmatpush1.bf16.msra.mxu0 %v8831
        %9122 = vmatprep.subr.bf16.mxu0 %v8828
        %9123 = vmatpush1.bf16.msra.mxu0 %v8827
        %9124 = vmatprep.subr.bf16.mxu0 %v8824
        %9125 = vmatpush1.bf16.msra.mxu0 %v8823
        %9126 = vmatprep.subr.bf16.mxu0 %v8820
        %9127 = vmatpush1.bf16.msra.mxu0 %v8819
        %9128 = vmatprep.subr.bf16.mxu0 %v8816
        %9129 = vmatpush1.bf16.msra.mxu0 %v8815
        %9130 = vmatprep.subr.bf16.mxu0 %v8812
        %9131 = vmatpush1.bf16.msra.mxu0 %v8811
        %9132 = vmatprep.subr.bf16.mxu0 0
        %9133 = vmatpush2.bf16.msra.mxu0 0
        %9134 = vmatprep.subr.bf16.mxu0 0
        %9135 = vmatpush2.bf16.msra.mxu0 0
        %9136 = vmatprep.subr.bf16.mxu0 0
        %9137 = vmatpush2.bf16.msra.mxu0 0
        %9138 = vmatprep.subr.bf16.mxu0 0
        %9139 = vmatpush2.bf16.msra.mxu0 0
        %9140 = vmatprep.subr.bf16.mxu0 0
        %9141 = vmatpush2.bf16.msra.mxu0 0
        %9142 = vmatprep.subr.bf16.mxu0 0
        %9143 = vmatpush2.bf16.msra.mxu0 0
        %9144 = vmatprep.subr.bf16.mxu0 0
        %9145 = vmatpush2.bf16.msra.mxu0 0
        %9146 = vmatprep.subr.bf16.mxu0 0
        %9147 = vmatpush2.bf16.msra.mxu0 0
        %9148 = vmatprep.mubr.bf16.mxu0 0
        %9149 = vmatmul.mubr.bf16.gmra.mxu0 %v9113
        %v9150 = vpop.f32.mrf.mxu0
        %v9151 = vadd.f32 0.0, %v9150
        %v9152 = vpop.f32.mrf.mxu0
        %v9153 = vadd.f32 0.0, %v9152
        %v9154 = vpop.f32.mrf.mxu0
        %v9155 = vpop.f32.mrf.mxu0
        %9156 = vdwg.mxu0
        %9157 = vmatprep.subr.bf16.mxu0 %v8842
        %9158 = vmatpush1.bf16.msra.mxu0 %v8841
        %9159 = vmatprep.subr.bf16.mxu0 %v8838
        %9160 = vmatpush1.bf16.msra.mxu0 %v8837
        %9161 = vmatprep.subr.bf16.mxu0 %v8834
        %9162 = vmatpush1.bf16.msra.mxu0 %v8833
        %9163 = vmatprep.subr.bf16.mxu0 %v8830
        %9164 = vmatpush1.bf16.msra.mxu0 %v8829
        %9165 = vmatprep.subr.bf16.mxu0 %v8826
        %9166 = vmatpush1.bf16.msra.mxu0 %v8825
        %9167 = vmatprep.subr.bf16.mxu0 %v8822
        %9168 = vmatpush1.bf16.msra.mxu0 %v8821
        %9169 = vmatprep.subr.bf16.mxu0 %v8818
        %9170 = vmatpush1.bf16.msra.mxu0 %v8817
        %9171 = vmatprep.subr.bf16.mxu0 %v8814
        %9172 = vmatpush1.bf16.msra.mxu0 %v8813
        %9173 = vmatprep.subr.bf16.mxu0 0
        %9174 = vmatpush2.bf16.msra.mxu0 0
        %9175 = vmatprep.subr.bf16.mxu0 0
        %9176 = vmatpush2.bf16.msra.mxu0 0
        %9177 = vmatprep.subr.bf16.mxu0 0
        %9178 = vmatpush2.bf16.msra.mxu0 0
        %9179 = vmatprep.subr.bf16.mxu0 0
        %9180 = vmatpush2.bf16.msra.mxu0 0
        %9181 = vmatprep.subr.bf16.mxu0 0
        %9182 = vmatpush2.bf16.msra.mxu0 0
        %9183 = vmatprep.subr.bf16.mxu0 0
        %9184 = vmatpush2.bf16.msra.mxu0 0
        %9185 = vmatprep.subr.bf16.mxu0 0
        %9186 = vmatpush2.bf16.msra.mxu0 0
        %9187 = vmatprep.subr.bf16.mxu0 0
        %9188 = vmatpush2.bf16.msra.mxu0 0
        %9189 = vmatprep.mubr.bf16.mxu0 0
        %9190 = vmatmul.mubr.bf16.gmra.mxu0 %v9113
        %v9191 = vpop.f32.mrf.mxu0
        %v9192 = vadd.f32 0.0, %v9191
        %v9193 = vpop.f32.mrf.mxu0
        %v9194 = vadd.f32 0.0, %v9193
        %v9195 = vpop.f32.mrf.mxu0
        %v9196 = vpop.f32.mrf.mxu0
        %9197 = vdwg.mxu0
        %v9202 = vrot.slane %v9151, 6
        %v9203 = vrot.slane %v9153, 6
        %v9204 = vrot.slane %v9192, 6
        %v9205 = vrot.slane %v9194, 6
        %v9210 = vadd.f32 %v8633, %v9202
        %v9211 = vadd.f32 %v8635, %v9203
        %v9212 = vadd.f32 %v8674, %v9204
        %v9213 = vadd.f32 %v8676, %v9205
        %v9214 = vxor.u32 %v9210, 2147483648
        %v9215 = vmul.f32 %v9214, 1.442695
        %v9216 = vpow.pop %v9215
        %v9217 = vadd.f32 %v9216, 1.0
        %v9218 = vrcp.pop %v9217
        %v9219 = vmul.f32 1.0, %v9218
        %v9220 = vxor.u32 %v9211, 2147483648
        %v9221 = vmul.f32 %v9220, 1.442695
        %v9222 = vpow.pop %v9221
        %v9223 = vadd.f32 %v9222, 1.0
        %v9224 = vrcp.pop %v9223
        %v9225 = vmul.f32 1.0, %v9224
        %v9226 = vtanh.pop %v9212
        %v9227 = vxor.u32 %v9213, 2147483648
        %v9228 = vmul.f32 %v9227, 1.442695
        %v9229 = vpow.pop %v9228
        %v9230 = vadd.f32 %v9229, 1.0
        %v9231 = vrcp.pop %v9230
        %v9232 = vmul.f32 1.0, %v9231
        %v9234 = vrot.slane %v9108, 7
        %v9236 = vmul.f32 %v9225, %v9234
        %v9237 = vmul.f32 %v9219, %v9226
        %v9238 = vadd.f32 %v9236, %v9237
        %v9239 = vtanh.pop %v9238
        %v9240 = vmul.f32 %v9232, %v9239
        %v9241 = vpack.c.bf16 %v9240, %v9240
        %v9243 = vrot.slane %v9241, 1
        %9245 = vmatprep.subr.bf16.mxu0 %v8840
        %9246 = vmatpush1.bf16.msra.mxu0 %v8839
        %9247 = vmatprep.subr.bf16.mxu0 %v8836
        %9248 = vmatpush1.bf16.msra.mxu0 %v8835
        %9249 = vmatprep.subr.bf16.mxu0 %v8832
        %9250 = vmatpush1.bf16.msra.mxu0 %v8831
        %9251 = vmatprep.subr.bf16.mxu0 %v8828
        %9252 = vmatpush1.bf16.msra.mxu0 %v8827
        %9253 = vmatprep.subr.bf16.mxu0 %v8824
        %9254 = vmatpush1.bf16.msra.mxu0 %v8823
        %9255 = vmatprep.subr.bf16.mxu0 %v8820
        %9256 = vmatpush1.bf16.msra.mxu0 %v8819
        %9257 = vmatprep.subr.bf16.mxu0 %v8816
        %9258 = vmatpush1.bf16.msra.mxu0 %v8815
        %9259 = vmatprep.subr.bf16.mxu0 %v8812
        %9260 = vmatpush1.bf16.msra.mxu0 %v8811
        %9261 = vmatprep.subr.bf16.mxu0 0
        %9262 = vmatpush2.bf16.msra.mxu0 0
        %9263 = vmatprep.subr.bf16.mxu0 0
        %9264 = vmatpush2.bf16.msra.mxu0 0
        %9265 = vmatprep.subr.bf16.mxu0 0
        %9266 = vmatpush2.bf16.msra.mxu0 0
        %9267 = vmatprep.subr.bf16.mxu0 0
        %9268 = vmatpush2.bf16.msra.mxu0 0
        %9269 = vmatprep.subr.bf16.mxu0 0
        %9270 = vmatpush2.bf16.msra.mxu0 0
        %9271 = vmatprep.subr.bf16.mxu0 0
        %9272 = vmatpush2.bf16.msra.mxu0 0
        %9273 = vmatprep.subr.bf16.mxu0 0
        %9274 = vmatpush2.bf16.msra.mxu0 0
        %9275 = vmatprep.subr.bf16.mxu0 0
        %9276 = vmatpush2.bf16.msra.mxu0 0
        %9277 = vmatprep.mubr.bf16.mxu0 0
        %9278 = vmatmul.mubr.bf16.gmra.mxu0 %v9243
        %v9279 = vpop.f32.mrf.mxu0
        %v9280 = vadd.f32 0.0, %v9279
        %v9281 = vpop.f32.mrf.mxu0
        %v9282 = vadd.f32 0.0, %v9281
        %v9283 = vpop.f32.mrf.mxu0
        %v9284 = vpop.f32.mrf.mxu0
        %9285 = vdwg.mxu0
        %9286 = vmatprep.subr.bf16.mxu0 %v8842
        %9287 = vmatpush1.bf16.msra.mxu0 %v8841
        %9288 = vmatprep.subr.bf16.mxu0 %v8838
        %9289 = vmatpush1.bf16.msra.mxu0 %v8837
        %9290 = vmatprep.subr.bf16.mxu0 %v8834
        %9291 = vmatpush1.bf16.msra.mxu0 %v8833
        %9292 = vmatprep.subr.bf16.mxu0 %v8830
        %9293 = vmatpush1.bf16.msra.mxu0 %v8829
        %9294 = vmatprep.subr.bf16.mxu0 %v8826
        %9295 = vmatpush1.bf16.msra.mxu0 %v8825
        %9296 = vmatprep.subr.bf16.mxu0 %v8822
        %9297 = vmatpush1.bf16.msra.mxu0 %v8821
        %9298 = vmatprep.subr.bf16.mxu0 %v8818
        %9299 = vmatpush1.bf16.msra.mxu0 %v8817
        %9300 = vmatprep.subr.bf16.mxu0 %v8814
        %9301 = vmatpush1.bf16.msra.mxu0 %v8813
        %9302 = vmatprep.subr.bf16.mxu0 0
        %9303 = vmatpush2.bf16.msra.mxu0 0
        %9304 = vmatprep.subr.bf16.mxu0 0
        %9305 = vmatpush2.bf16.msra.mxu0 0
        %9306 = vmatprep.subr.bf16.mxu0 0
        %9307 = vmatpush2.bf16.msra.mxu0 0
        %9308 = vmatprep.subr.bf16.mxu0 0
        %9309 = vmatpush2.bf16.msra.mxu0 0
        %9310 = vmatprep.subr.bf16.mxu0 0
        %9311 = vmatpush2.bf16.msra.mxu0 0
        %9312 = vmatprep.subr.bf16.mxu0 0
        %9313 = vmatpush2.bf16.msra.mxu0 0
        %9314 = vmatprep.subr.bf16.mxu0 0
        %9315 = vmatpush2.bf16.msra.mxu0 0
        %9316 = vmatprep.subr.bf16.mxu0 0
        %9317 = vmatpush2.bf16.msra.mxu0 0
        %9318 = vmatprep.mubr.bf16.mxu0 0
        %9319 = vmatmul.mubr.bf16.gmra.mxu0 %v9243
        %v9320 = vpop.f32.mrf.mxu0
        %v9321 = vadd.f32 0.0, %v9320
        %v9322 = vpop.f32.mrf.mxu0
        %v9323 = vadd.f32 0.0, %v9322
        %v9324 = vpop.f32.mrf.mxu0
        %v9325 = vpop.f32.mrf.mxu0
        %9326 = vdwg.mxu0
        %v9331 = vrot.slane %v9280, 5
        %v9332 = vrot.slane %v9282, 5
        %v9333 = vrot.slane %v9321, 5
        %v9334 = vrot.slane %v9323, 5
        %v9339 = vadd.f32 %v8633, %v9331
        %v9340 = vadd.f32 %v8635, %v9332
        %v9341 = vadd.f32 %v8674, %v9333
        %v9342 = vadd.f32 %v8676, %v9334
        %v9343 = vxor.u32 %v9339, 2147483648
        %v9344 = vmul.f32 %v9343, 1.442695
        %v9345 = vpow.pop %v9344
        %v9346 = vadd.f32 %v9345, 1.0
        %v9347 = vrcp.pop %v9346
        %v9348 = vmul.f32 1.0, %v9347
        %v9349 = vxor.u32 %v9340, 2147483648
        %v9350 = vmul.f32 %v9349, 1.442695
        %v9351 = vpow.pop %v9350
        %v9352 = vadd.f32 %v9351, 1.0
        %v9353 = vrcp.pop %v9352
        %v9354 = vmul.f32 1.0, %v9353
        %v9355 = vtanh.pop %v9341
        %v9356 = vxor.u32 %v9342, 2147483648
        %v9357 = vmul.f32 %v9356, 1.442695
        %v9358 = vpow.pop %v9357
        %v9359 = vadd.f32 %v9358, 1.0
        %v9360 = vrcp.pop %v9359
        %v9361 = vmul.f32 1.0, %v9360
        %v9363 = vrot.slane %v9238, 7
        %v9365 = vmul.f32 %v9354, %v9363
        %v9366 = vmul.f32 %v9348, %v9355
        %v9367 = vadd.f32 %v9365, %v9366
        %v9368 = vtanh.pop %v9367
        %v9369 = vmul.f32 %v9361, %v9368
        %v9370 = vpack.c.bf16 %v9369, %v9369
        %v9372 = vshrl.u32 %v9370, 16
        %v9374 = vrot.slane %v9372, 1
        %9376 = vmatprep.subr.bf16.mxu0 %v8840
        %9377 = vmatpush1.bf16.msra.mxu0 %v8839
        %9378 = vmatprep.subr.bf16.mxu0 %v8836
        %9379 = vmatpush1.bf16.msra.mxu0 %v8835
        %9380 = vmatprep.subr.bf16.mxu0 %v8832
        %9381 = vmatpush1.bf16.msra.mxu0 %v8831
        %9382 = vmatprep.subr.bf16.mxu0 %v8828
        %9383 = vmatpush1.bf16.msra.mxu0 %v8827
        %9384 = vmatprep.subr.bf16.mxu0 %v8824
        %9385 = vmatpush1.bf16.msra.mxu0 %v8823
        %9386 = vmatprep.subr.bf16.mxu0 %v8820
        %9387 = vmatpush1.bf16.msra.mxu0 %v8819
        %9388 = vmatprep.subr.bf16.mxu0 %v8816
        %9389 = vmatpush1.bf16.msra.mxu0 %v8815
        %9390 = vmatprep.subr.bf16.mxu0 %v8812
        %9391 = vmatpush1.bf16.msra.mxu0 %v8811
        %9392 = vmatprep.subr.bf16.mxu0 0
        %9393 = vmatpush2.bf16.msra.mxu0 0
        %9394 = vmatprep.subr.bf16.mxu0 0
        %9395 = vmatpush2.bf16.msra.mxu0 0
        %9396 = vmatprep.subr.bf16.mxu0 0
        %9397 = vmatpush2.bf16.msra.mxu0 0
        %9398 = vmatprep.subr.bf16.mxu0 0
        %9399 = vmatpush2.bf16.msra.mxu0 0
        %9400 = vmatprep.subr.bf16.mxu0 0
        %9401 = vmatpush2.bf16.msra.mxu0 0
        %9402 = vmatprep.subr.bf16.mxu0 0
        %9403 = vmatpush2.bf16.msra.mxu0 0
        %9404 = vmatprep.subr.bf16.mxu0 0
        %9405 = vmatpush2.bf16.msra.mxu0 0
        %9406 = vmatprep.subr.bf16.mxu0 0
        %9407 = vmatpush2.bf16.msra.mxu0 0
        %9408 = vmatprep.mubr.bf16.mxu0 0
        %9409 = vmatmul.mubr.bf16.gmra.mxu0 %v9374
        %v9410 = vpop.f32.mrf.mxu0
        %v9411 = vadd.f32 0.0, %v9410
        %v9412 = vpop.f32.mrf.mxu0
        %v9413 = vadd.f32 0.0, %v9412
        %v9414 = vpop.f32.mrf.mxu0
        %v9415 = vpop.f32.mrf.mxu0
        %9416 = vdwg.mxu0
        %9417 = vmatprep.subr.bf16.mxu0 %v8842
        %9418 = vmatpush1.bf16.msra.mxu0 %v8841
        %9419 = vmatprep.subr.bf16.mxu0 %v8838
        %9420 = vmatpush1.bf16.msra.mxu0 %v8837
        %9421 = vmatprep.subr.bf16.mxu0 %v8834
        %9422 = vmatpush1.bf16.msra.mxu0 %v8833
        %9423 = vmatprep.subr.bf16.mxu0 %v8830
        %9424 = vmatpush1.bf16.msra.mxu0 %v8829
        %9425 = vmatprep.subr.bf16.mxu0 %v8826
        %9426 = vmatpush1.bf16.msra.mxu0 %v8825
        %9427 = vmatprep.subr.bf16.mxu0 %v8822
        %9428 = vmatpush1.bf16.msra.mxu0 %v8821
        %9429 = vmatprep.subr.bf16.mxu0 %v8818
        %9430 = vmatpush1.bf16.msra.mxu0 %v8817
        %9431 = vmatprep.subr.bf16.mxu0 %v8814
        %9432 = vmatpush1.bf16.msra.mxu0 %v8813
        %9433 = vmatprep.subr.bf16.mxu0 0
        %9434 = vmatpush2.bf16.msra.mxu0 0
        %9435 = vmatprep.subr.bf16.mxu0 0
        %9436 = vmatpush2.bf16.msra.mxu0 0
        %9437 = vmatprep.subr.bf16.mxu0 0
        %9438 = vmatpush2.bf16.msra.mxu0 0
        %9439 = vmatprep.subr.bf16.mxu0 0
        %9440 = vmatpush2.bf16.msra.mxu0 0
        %9441 = vmatprep.subr.bf16.mxu0 0
        %9442 = vmatpush2.bf16.msra.mxu0 0
        %9443 = vmatprep.subr.bf16.mxu0 0
        %9444 = vmatpush2.bf16.msra.mxu0 0
        %9445 = vmatprep.subr.bf16.mxu0 0
        %9446 = vmatpush2.bf16.msra.mxu0 0
        %9447 = vmatprep.subr.bf16.mxu0 0
        %9448 = vmatpush2.bf16.msra.mxu0 0
        %9449 = vmatprep.mubr.bf16.mxu0 0
        %9450 = vmatmul.mubr.bf16.gmra.mxu0 %v9374
        %v9451 = vpop.f32.mrf.mxu0
        %v9452 = vadd.f32 0.0, %v9451
        %v9453 = vpop.f32.mrf.mxu0
        %v9454 = vadd.f32 0.0, %v9453
        %v9455 = vpop.f32.mrf.mxu0
        %v9456 = vpop.f32.mrf.mxu0
        %9457 = vdwg.mxu0
        %v9462 = vrot.slane %v9411, 4
        %v9463 = vrot.slane %v9413, 4
        %v9464 = vrot.slane %v9452, 4
        %v9465 = vrot.slane %v9454, 4
        %v9470 = vadd.f32 %v8633, %v9462
        %v9471 = vadd.f32 %v8635, %v9463
        %v9472 = vadd.f32 %v8674, %v9464
        %v9473 = vadd.f32 %v8676, %v9465
        %v9474 = vxor.u32 %v9470, 2147483648
        %v9475 = vmul.f32 %v9474, 1.442695
        %v9476 = vpow.pop %v9475
        %v9477 = vadd.f32 %v9476, 1.0
        %v9478 = vrcp.pop %v9477
        %v9479 = vmul.f32 1.0, %v9478
        %v9480 = vxor.u32 %v9471, 2147483648
        %v9481 = vmul.f32 %v9480, 1.442695
        %v9482 = vpow.pop %v9481
        %v9483 = vadd.f32 %v9482, 1.0
        %v9484 = vrcp.pop %v9483
        %v9485 = vmul.f32 1.0, %v9484
        %v9486 = vtanh.pop %v9472
        %v9487 = vxor.u32 %v9473, 2147483648
        %v9488 = vmul.f32 %v9487, 1.442695
        %v9489 = vpow.pop %v9488
        %v9490 = vadd.f32 %v9489, 1.0
        %v9491 = vrcp.pop %v9490
        %v9492 = vmul.f32 1.0, %v9491
        %v9494 = vrot.slane %v9367, 7
        %v9496 = vmul.f32 %v9485, %v9494
        %v9497 = vmul.f32 %v9479, %v9486
        %v9498 = vadd.f32 %v9496, %v9497
        %v9499 = vtanh.pop %v9498
        %v9500 = vmul.f32 %v9492, %v9499
        %v9501 = vpack.c.bf16 %v9500, %v9500
        %v9503 = vrot.slane %v9501, 2
        %9505 = vmatprep.subr.bf16.mxu0 %v8840
        %9506 = vmatpush1.bf16.msra.mxu0 %v8839
        %9507 = vmatprep.subr.bf16.mxu0 %v8836
        %9508 = vmatpush1.bf16.msra.mxu0 %v8835
        %9509 = vmatprep.subr.bf16.mxu0 %v8832
        %9510 = vmatpush1.bf16.msra.mxu0 %v8831
        %9511 = vmatprep.subr.bf16.mxu0 %v8828
        %9512 = vmatpush1.bf16.msra.mxu0 %v8827
        %9513 = vmatprep.subr.bf16.mxu0 %v8824
        %9514 = vmatpush1.bf16.msra.mxu0 %v8823
        %9515 = vmatprep.subr.bf16.mxu0 %v8820
        %9516 = vmatpush1.bf16.msra.mxu0 %v8819
        %9517 = vmatprep.subr.bf16.mxu0 %v8816
        %9518 = vmatpush1.bf16.msra.mxu0 %v8815
        %9519 = vmatprep.subr.bf16.mxu0 %v8812
        %9520 = vmatpush1.bf16.msra.mxu0 %v8811
        %9521 = vmatprep.subr.bf16.mxu0 0
        %9522 = vmatpush2.bf16.msra.mxu0 0
        %9523 = vmatprep.subr.bf16.mxu0 0
        %9524 = vmatpush2.bf16.msra.mxu0 0
        %9525 = vmatprep.subr.bf16.mxu0 0
        %9526 = vmatpush2.bf16.msra.mxu0 0
        %9527 = vmatprep.subr.bf16.mxu0 0
        %9528 = vmatpush2.bf16.msra.mxu0 0
        %9529 = vmatprep.subr.bf16.mxu0 0
        %9530 = vmatpush2.bf16.msra.mxu0 0
        %9531 = vmatprep.subr.bf16.mxu0 0
        %9532 = vmatpush2.bf16.msra.mxu0 0
        %9533 = vmatprep.subr.bf16.mxu0 0
        %9534 = vmatpush2.bf16.msra.mxu0 0
        %9535 = vmatprep.subr.bf16.mxu0 0
        %9536 = vmatpush2.bf16.msra.mxu0 0
        %9537 = vmatprep.mubr.bf16.mxu0 0
        %9538 = vmatmul.mubr.bf16.gmra.mxu0 %v9503
        %v9539 = vpop.f32.mrf.mxu0
        %v9540 = vadd.f32 0.0, %v9539
        %v9541 = vpop.f32.mrf.mxu0
        %v9542 = vadd.f32 0.0, %v9541
        %v9543 = vpop.f32.mrf.mxu0
        %v9544 = vpop.f32.mrf.mxu0
        %9545 = vdwg.mxu0
        %9546 = vmatprep.subr.bf16.mxu0 %v8842
        %9547 = vmatpush1.bf16.msra.mxu0 %v8841
        %9548 = vmatprep.subr.bf16.mxu0 %v8838
        %9549 = vmatpush1.bf16.msra.mxu0 %v8837
        %9550 = vmatprep.subr.bf16.mxu0 %v8834
        %9551 = vmatpush1.bf16.msra.mxu0 %v8833
        %9552 = vmatprep.subr.bf16.mxu0 %v8830
        %9553 = vmatpush1.bf16.msra.mxu0 %v8829
        %9554 = vmatprep.subr.bf16.mxu0 %v8826
        %9555 = vmatpush1.bf16.msra.mxu0 %v8825
        %9556 = vmatprep.subr.bf16.mxu0 %v8822
        %9557 = vmatpush1.bf16.msra.mxu0 %v8821
        %9558 = vmatprep.subr.bf16.mxu0 %v8818
        %9559 = vmatpush1.bf16.msra.mxu0 %v8817
        %9560 = vmatprep.subr.bf16.mxu0 %v8814
        %9561 = vmatpush1.bf16.msra.mxu0 %v8813
        %9562 = vmatprep.subr.bf16.mxu0 0
        %9563 = vmatpush2.bf16.msra.mxu0 0
        %9564 = vmatprep.subr.bf16.mxu0 0
        %9565 = vmatpush2.bf16.msra.mxu0 0
        %9566 = vmatprep.subr.bf16.mxu0 0
        %9567 = vmatpush2.bf16.msra.mxu0 0
        %9568 = vmatprep.subr.bf16.mxu0 0
        %9569 = vmatpush2.bf16.msra.mxu0 0
        %9570 = vmatprep.subr.bf16.mxu0 0
        %9571 = vmatpush2.bf16.msra.mxu0 0
        %9572 = vmatprep.subr.bf16.mxu0 0
        %9573 = vmatpush2.bf16.msra.mxu0 0
        %9574 = vmatprep.subr.bf16.mxu0 0
        %9575 = vmatpush2.bf16.msra.mxu0 0
        %9576 = vmatprep.subr.bf16.mxu0 0
        %9577 = vmatpush2.bf16.msra.mxu0 0
        %9578 = vmatprep.mubr.bf16.mxu0 0
        %9579 = vmatmul.mubr.bf16.gmra.mxu0 %v9503
        %v9580 = vpop.f32.mrf.mxu0
        %v9581 = vadd.f32 0.0, %v9580
        %v9582 = vpop.f32.mrf.mxu0
        %v9583 = vadd.f32 0.0, %v9582
        %v9584 = vpop.f32.mrf.mxu0
        %v9585 = vpop.f32.mrf.mxu0
        %9586 = vdwg.mxu0
        %v9591 = vrot.slane %v9540, 3
        %v9592 = vrot.slane %v9542, 3
        %v9593 = vrot.slane %v9581, 3
        %v9594 = vrot.slane %v9583, 3
        %v9599 = vadd.f32 %v8633, %v9591
        %v9600 = vadd.f32 %v8635, %v9592
        %v9601 = vadd.f32 %v8674, %v9593
        %v9602 = vadd.f32 %v8676, %v9594
        %v9603 = vxor.u32 %v9599, 2147483648
        %v9604 = vmul.f32 %v9603, 1.442695
        %v9605 = vpow.pop %v9604
        %v9606 = vadd.f32 %v9605, 1.0
        %v9607 = vrcp.pop %v9606
        %v9608 = vmul.f32 1.0, %v9607
        %v9609 = vxor.u32 %v9600, 2147483648
        %v9610 = vmul.f32 %v9609, 1.442695
        %v9611 = vpow.pop %v9610
        %v9612 = vadd.f32 %v9611, 1.0
        %v9613 = vrcp.pop %v9612
        %v9614 = vmul.f32 1.0, %v9613
        %v9615 = vtanh.pop %v9601
        %v9616 = vxor.u32 %v9602, 2147483648
        %v9617 = vmul.f32 %v9616, 1.442695
        %v9618 = vpow.pop %v9617
        %v9619 = vadd.f32 %v9618, 1.0
        %v9620 = vrcp.pop %v9619
        %v9621 = vmul.f32 1.0, %v9620
        %v9623 = vrot.slane %v9498, 7
        %v9625 = vmul.f32 %v9614, %v9623
        %v9626 = vmul.f32 %v9608, %v9615
        %v9627 = vadd.f32 %v9625, %v9626
        %v9628 = vtanh.pop %v9627
        %v9629 = vmul.f32 %v9621, %v9628
        %v9630 = vpack.c.bf16 %v9629, %v9629
        %v9632 = vshrl.u32 %v9630, 16
        %v9634 = vrot.slane %v9632, 2
        %9636 = vmatprep.subr.bf16.mxu0 %v8840
        %9637 = vmatpush1.bf16.msra.mxu0 %v8839
        %9638 = vmatprep.subr.bf16.mxu0 %v8836
        %9639 = vmatpush1.bf16.msra.mxu0 %v8835
        %9640 = vmatprep.subr.bf16.mxu0 %v8832
        %9641 = vmatpush1.bf16.msra.mxu0 %v8831
        %9642 = vmatprep.subr.bf16.mxu0 %v8828
        %9643 = vmatpush1.bf16.msra.mxu0 %v8827
        %9644 = vmatprep.subr.bf16.mxu0 %v8824
        %9645 = vmatpush1.bf16.msra.mxu0 %v8823
        %9646 = vmatprep.subr.bf16.mxu0 %v8820
        %9647 = vmatpush1.bf16.msra.mxu0 %v8819
        %9648 = vmatprep.subr.bf16.mxu0 %v8816
        %9649 = vmatpush1.bf16.msra.mxu0 %v8815
        %9650 = vmatprep.subr.bf16.mxu0 %v8812
        %9651 = vmatpush1.bf16.msra.mxu0 %v8811
        %9652 = vmatprep.subr.bf16.mxu0 0
        %9653 = vmatpush2.bf16.msra.mxu0 0
        %9654 = vmatprep.subr.bf16.mxu0 0
        %9655 = vmatpush2.bf16.msra.mxu0 0
        %9656 = vmatprep.subr.bf16.mxu0 0
        %9657 = vmatpush2.bf16.msra.mxu0 0
        %9658 = vmatprep.subr.bf16.mxu0 0
        %9659 = vmatpush2.bf16.msra.mxu0 0
        %9660 = vmatprep.subr.bf16.mxu0 0
        %9661 = vmatpush2.bf16.msra.mxu0 0
        %9662 = vmatprep.subr.bf16.mxu0 0
        %9663 = vmatpush2.bf16.msra.mxu0 0
        %9664 = vmatprep.subr.bf16.mxu0 0
        %9665 = vmatpush2.bf16.msra.mxu0 0
        %9666 = vmatprep.subr.bf16.mxu0 0
        %9667 = vmatpush2.bf16.msra.mxu0 0
        %9668 = vmatprep.mubr.bf16.mxu0 0
        %9669 = vmatmul.mubr.bf16.gmra.mxu0 %v9634
        %v9670 = vpop.f32.mrf.mxu0
        %v9671 = vadd.f32 0.0, %v9670
        %v9672 = vpop.f32.mrf.mxu0
        %v9673 = vadd.f32 0.0, %v9672
        %v9674 = vpop.f32.mrf.mxu0
        %v9675 = vpop.f32.mrf.mxu0
        %9676 = vdwg.mxu0
        %9677 = vmatprep.subr.bf16.mxu0 %v8842
        %9678 = vmatpush1.bf16.msra.mxu0 %v8841
        %9679 = vmatprep.subr.bf16.mxu0 %v8838
        %9680 = vmatpush1.bf16.msra.mxu0 %v8837
        %9681 = vmatprep.subr.bf16.mxu0 %v8834
        %9682 = vmatpush1.bf16.msra.mxu0 %v8833
        %9683 = vmatprep.subr.bf16.mxu0 %v8830
        %9684 = vmatpush1.bf16.msra.mxu0 %v8829
        %9685 = vmatprep.subr.bf16.mxu0 %v8826
        %9686 = vmatpush1.bf16.msra.mxu0 %v8825
        %9687 = vmatprep.subr.bf16.mxu0 %v8822
        %9688 = vmatpush1.bf16.msra.mxu0 %v8821
        %9689 = vmatprep.subr.bf16.mxu0 %v8818
        %9690 = vmatpush1.bf16.msra.mxu0 %v8817
        %9691 = vmatprep.subr.bf16.mxu0 %v8814
        %9692 = vmatpush1.bf16.msra.mxu0 %v8813
        %9693 = vmatprep.subr.bf16.mxu0 0
        %9694 = vmatpush2.bf16.msra.mxu0 0
        %9695 = vmatprep.subr.bf16.mxu0 0
        %9696 = vmatpush2.bf16.msra.mxu0 0
        %9697 = vmatprep.subr.bf16.mxu0 0
        %9698 = vmatpush2.bf16.msra.mxu0 0
        %9699 = vmatprep.subr.bf16.mxu0 0
        %9700 = vmatpush2.bf16.msra.mxu0 0
        %9701 = vmatprep.subr.bf16.mxu0 0
        %9702 = vmatpush2.bf16.msra.mxu0 0
        %9703 = vmatprep.subr.bf16.mxu0 0
        %9704 = vmatpush2.bf16.msra.mxu0 0
        %9705 = vmatprep.subr.bf16.mxu0 0
        %9706 = vmatpush2.bf16.msra.mxu0 0
        %9707 = vmatprep.subr.bf16.mxu0 0
        %9708 = vmatpush2.bf16.msra.mxu0 0
        %9709 = vmatprep.mubr.bf16.mxu0 0
        %9710 = vmatmul.mubr.bf16.gmra.mxu0 %v9634
        %v9711 = vpop.f32.mrf.mxu0
        %v9712 = vadd.f32 0.0, %v9711
        %v9713 = vpop.f32.mrf.mxu0
        %v9714 = vadd.f32 0.0, %v9713
        %v9715 = vpop.f32.mrf.mxu0
        %v9716 = vpop.f32.mrf.mxu0
        %9717 = vdwg.mxu0
        %v9722 = vrot.slane %v9671, 2
        %v9723 = vrot.slane %v9673, 2
        %v9724 = vrot.slane %v9712, 2
        %v9725 = vrot.slane %v9714, 2
        %v9730 = vadd.f32 %v8633, %v9722
        %v9731 = vadd.f32 %v8635, %v9723
        %v9732 = vadd.f32 %v8674, %v9724
        %v9733 = vadd.f32 %v8676, %v9725
        %v9734 = vxor.u32 %v9730, 2147483648
        %v9735 = vmul.f32 %v9734, 1.442695
        %v9736 = vpow.pop %v9735
        %v9737 = vadd.f32 %v9736, 1.0
        %v9738 = vrcp.pop %v9737
        %v9739 = vmul.f32 1.0, %v9738
        %v9740 = vxor.u32 %v9731, 2147483648
        %v9741 = vmul.f32 %v9740, 1.442695
        %v9742 = vpow.pop %v9741
        %v9743 = vadd.f32 %v9742, 1.0
        %v9744 = vrcp.pop %v9743
        %v9745 = vmul.f32 1.0, %v9744
        %v9746 = vtanh.pop %v9732
        %v9747 = vxor.u32 %v9733, 2147483648
        %v9748 = vmul.f32 %v9747, 1.442695
        %v9749 = vpow.pop %v9748
        %v9750 = vadd.f32 %v9749, 1.0
        %v9751 = vrcp.pop %v9750
        %v9752 = vmul.f32 1.0, %v9751
        %v9754 = vrot.slane %v9627, 7
        %v9756 = vmul.f32 %v9745, %v9754
        %v9757 = vmul.f32 %v9739, %v9746
        %v9758 = vadd.f32 %v9756, %v9757
        %v9759 = vtanh.pop %v9758
        %v9760 = vmul.f32 %v9752, %v9759
        %v9761 = vpack.c.bf16 %v9760, %v9760
        %v9763 = vrot.slane %v9761, 3
        %9765 = vmatprep.subr.bf16.mxu0 %v8840
        %9766 = vmatpush1.bf16.msra.mxu0 %v8839
        %9767 = vmatprep.subr.bf16.mxu0 %v8836
        %9768 = vmatpush1.bf16.msra.mxu0 %v8835
        %9769 = vmatprep.subr.bf16.mxu0 %v8832
        %9770 = vmatpush1.bf16.msra.mxu0 %v8831
        %9771 = vmatprep.subr.bf16.mxu0 %v8828
        %9772 = vmatpush1.bf16.msra.mxu0 %v8827
        %9773 = vmatprep.subr.bf16.mxu0 %v8824
        %9774 = vmatpush1.bf16.msra.mxu0 %v8823
        %9775 = vmatprep.subr.bf16.mxu0 %v8820
        %9776 = vmatpush1.bf16.msra.mxu0 %v8819
        %9777 = vmatprep.subr.bf16.mxu0 %v8816
        %9778 = vmatpush1.bf16.msra.mxu0 %v8815
        %9779 = vmatprep.subr.bf16.mxu0 %v8812
        %9780 = vmatpush1.bf16.msra.mxu0 %v8811
        %9781 = vmatprep.subr.bf16.mxu0 0
        %9782 = vmatpush2.bf16.msra.mxu0 0
        %9783 = vmatprep.subr.bf16.mxu0 0
        %9784 = vmatpush2.bf16.msra.mxu0 0
        %9785 = vmatprep.subr.bf16.mxu0 0
        %9786 = vmatpush2.bf16.msra.mxu0 0
        %9787 = vmatprep.subr.bf16.mxu0 0
        %9788 = vmatpush2.bf16.msra.mxu0 0
        %9789 = vmatprep.subr.bf16.mxu0 0
        %9790 = vmatpush2.bf16.msra.mxu0 0
        %9791 = vmatprep.subr.bf16.mxu0 0
        %9792 = vmatpush2.bf16.msra.mxu0 0
        %9793 = vmatprep.subr.bf16.mxu0 0
        %9794 = vmatpush2.bf16.msra.mxu0 0
        %9795 = vmatprep.subr.bf16.mxu0 0
        %9796 = vmatpush2.bf16.msra.mxu0 0
        %9797 = vmatprep.mubr.bf16.mxu0 0
        %9798 = vmatmul.mubr.bf16.gmra.mxu0 %v9763
        %v9799 = vpop.f32.mrf.mxu0
        %v9800 = vadd.f32 0.0, %v9799
        %v9801 = vpop.f32.mrf.mxu0
        %v9802 = vadd.f32 0.0, %v9801
        %v9803 = vpop.f32.mrf.mxu0
        %v9804 = vpop.f32.mrf.mxu0
        %9805 = vdwg.mxu0
        %9806 = vmatprep.subr.bf16.mxu0 %v8842
        %9807 = vmatpush1.bf16.msra.mxu0 %v8841
        %9808 = vmatprep.subr.bf16.mxu0 %v8838
        %9809 = vmatpush1.bf16.msra.mxu0 %v8837
        %9810 = vmatprep.subr.bf16.mxu0 %v8834
        %9811 = vmatpush1.bf16.msra.mxu0 %v8833
        %9812 = vmatprep.subr.bf16.mxu0 %v8830
        %9813 = vmatpush1.bf16.msra.mxu0 %v8829
        %9814 = vmatprep.subr.bf16.mxu0 %v8826
        %9815 = vmatpush1.bf16.msra.mxu0 %v8825
        %9816 = vmatprep.subr.bf16.mxu0 %v8822
        %9817 = vmatpush1.bf16.msra.mxu0 %v8821
        %9818 = vmatprep.subr.bf16.mxu0 %v8818
        %9819 = vmatpush1.bf16.msra.mxu0 %v8817
        %9820 = vmatprep.subr.bf16.mxu0 %v8814
        %9821 = vmatpush1.bf16.msra.mxu0 %v8813
        %9822 = vmatprep.subr.bf16.mxu0 0
        %9823 = vmatpush2.bf16.msra.mxu0 0
        %9824 = vmatprep.subr.bf16.mxu0 0
        %9825 = vmatpush2.bf16.msra.mxu0 0
        %9826 = vmatprep.subr.bf16.mxu0 0
        %9827 = vmatpush2.bf16.msra.mxu0 0
        %9828 = vmatprep.subr.bf16.mxu0 0
        %9829 = vmatpush2.bf16.msra.mxu0 0
        %9830 = vmatprep.subr.bf16.mxu0 0
        %9831 = vmatpush2.bf16.msra.mxu0 0
        %9832 = vmatprep.subr.bf16.mxu0 0
        %9833 = vmatpush2.bf16.msra.mxu0 0
        %9834 = vmatprep.subr.bf16.mxu0 0
        %9835 = vmatpush2.bf16.msra.mxu0 0
        %9836 = vmatprep.subr.bf16.mxu0 0
        %9837 = vmatpush2.bf16.msra.mxu0 0
        %9838 = vmatprep.mubr.bf16.mxu0 0
        %9839 = vmatmul.mubr.bf16.gmra.mxu0 %v9763
        %v9840 = vpop.f32.mrf.mxu0
        %v9841 = vadd.f32 0.0, %v9840
        %v9842 = vpop.f32.mrf.mxu0
        %v9843 = vadd.f32 0.0, %v9842
        %v9844 = vpop.f32.mrf.mxu0
        %v9845 = vpop.f32.mrf.mxu0
        %9846 = vdwg.mxu0
        %v9851 = vrot.slane %v9800, 1
        %v9852 = vrot.slane %v9802, 1
        %v9853 = vrot.slane %v9841, 1
        %v9854 = vrot.slane %v9843, 1
        %v9859 = vadd.f32 %v8633, %v9851
        %v9860 = vadd.f32 %v8635, %v9852
        %v9861 = vadd.f32 %v8674, %v9853
        %v9862 = vadd.f32 %v8676, %v9854
        %v9863 = vxor.u32 %v9859, 2147483648
        %v9864 = vmul.f32 %v9863, 1.442695
        %v9865 = vpow.pop %v9864
        %v9866 = vadd.f32 %v9865, 1.0
        %v9867 = vrcp.pop %v9866
        %v9868 = vmul.f32 1.0, %v9867
        %v9869 = vxor.u32 %v9860, 2147483648
        %v9870 = vmul.f32 %v9869, 1.442695
        %v9871 = vpow.pop %v9870
        %v9872 = vadd.f32 %v9871, 1.0
        %v9873 = vrcp.pop %v9872
        %v9874 = vmul.f32 1.0, %v9873
        %v9875 = vtanh.pop %v9861
        %v9876 = vxor.u32 %v9862, 2147483648
        %v9877 = vmul.f32 %v9876, 1.442695
        %v9878 = vpow.pop %v9877
        %v9879 = vadd.f32 %v9878, 1.0
        %v9880 = vrcp.pop %v9879
        %v9881 = vmul.f32 1.0, %v9880
        %v9883 = vrot.slane %v9758, 7
        %v9885 = vmul.f32 %v9874, %v9883
        %v9886 = vmul.f32 %v9868, %v9875
        %v9887 = vadd.f32 %v9885, %v9886
        %v9888 = vtanh.pop %v9887
        %v9889 = vmul.f32 %v9881, %v9888
        %vm9890 = vcmask 1040384
        %v9891 = vsel %vm9890, %v8984, %v9110
        %v9892 = vsel %vm8295, %v9891, %v9240
        %v9893 = vsel %vm8285, %v9892, %v9369
        %v9894 = vsel %vm750, %v9893, %v9500
        %v9895 = vsel %vm8266, %v9894, %v9629
        %v9896 = vsel %vm8256, %v9895, %v9760
        %v9897 = vsel %vm8246, %v9896, %v9889
        %v9898 = vpack.c.bf16 %v9897, %v9897
        %v9899 = vld [vmem:[#allocation13] sm:$0xff]
        %v9900 = vld [vmem:[#allocation13 + $0x8] sm:$0xff]
        %v9901 = vld [vmem:[#allocation13 + $0x10] sm:$0xff]
        %v9902 = vld [vmem:[#allocation13 + $0x18] sm:$0xff]
        %v9903 = vld [vmem:[#allocation13 + $0x20] sm:$0xff]
        %v9904 = vld [vmem:[#allocation13 + $0x28] sm:$0xff]
        %v9905 = vld [vmem:[#allocation13 + $0x30] sm:$0xff]
        %v9906 = vld [vmem:[#allocation13 + $0x38] sm:$0xff]
        %v9907 = vld [vmem:[#allocation13 + $0x40] sm:$0xff]
        %v9908 = vld [vmem:[#allocation13 + $0x48] sm:$0xff]
        %v9909 = vld [vmem:[#allocation13 + $0x50] sm:$0xff]
        %v9910 = vld [vmem:[#allocation13 + $0x58] sm:$0xff]
        %v9911 = vld [vmem:[#allocation13 + $0x60] sm:$0xff]
        %v9912 = vld [vmem:[#allocation13 + $0x68] sm:$0xff]
        %v9913 = vld [vmem:[#allocation13 + $0x70] sm:$0xff]
        %v9914 = vld [vmem:[#allocation13 + $0x78] sm:$0xff]
        %v9915 = vld [vmem:[#allocation13 + $0x80] sm:$0xff]
        %v9916 = vld [vmem:[#allocation13 + $0x88] sm:$0xff]
        %v9917 = vld [vmem:[#allocation13 + $0x90] sm:$0xff]
        %v9918 = vld [vmem:[#allocation13 + $0x98] sm:$0xff]
        %v9919 = vld [vmem:[#allocation13 + $0xa0] sm:$0xff]
        %v9920 = vld [vmem:[#allocation13 + $0xa8] sm:$0xff]
        %v9921 = vld [vmem:[#allocation13 + $0xb0] sm:$0xff]
        %v9922 = vld [vmem:[#allocation13 + $0xb8] sm:$0xff]
        %v9923 = vld [vmem:[#allocation13 + $0xc0] sm:$0xff]
        %v9924 = vld [vmem:[#allocation13 + $0xc8] sm:$0xff]
        %v9925 = vld [vmem:[#allocation13 + $0xd0] sm:$0xff]
        %v9926 = vld [vmem:[#allocation13 + $0xd8] sm:$0xff]
        %v9927 = vld [vmem:[#allocation13 + $0xe0] sm:$0xff]
        %v9928 = vld [vmem:[#allocation13 + $0xe8] sm:$0xff]
        %v9929 = vld [vmem:[#allocation13 + $0xf0] sm:$0xff]
        %v9930 = vld [vmem:[#allocation13 + $0xf8] sm:$0xff]
        %v9931 = vld [vmem:[#allocation16] sm:$0xf]
        %v9933 = vlaneseq
        %v9934 = vshrl.u32 %v9933, 7
        %v9935 = vsub.s32 0, %v9934
        %v9936 = vrot.slane %v9931, %v9935
        %v9937 = vlaneseq
        %v9938 = vshrl.u32 %v9937, 7
        %v9939 = vsub.s32 1, %v9938
        %v9940 = vrot.slane %v9931, %v9939
        %v9941 = vlaneseq
        %v9942 = vshrl.u32 %v9941, 7
        %v9943 = vsub.s32 2, %v9942
        %v9944 = vrot.slane %v9931, %v9943
        %v9945 = vlaneseq
        %v9946 = vshrl.u32 %v9945, 7
        %v9947 = vsub.s32 3, %v9946
        %v9948 = vrot.slane %v9931, %v9947
        %v9985 = vunpack.c.l.b16 %v9899
        %v9986 = vunpack.c.h.b16 %v9899
        %v9987 = vunpack.c.l.b16 %v9900
        %v9988 = vunpack.c.h.b16 %v9900
        %v9989 = vunpack.c.l.b16 %v9901
        %v9990 = vunpack.c.h.b16 %v9901
        %v9991 = vunpack.c.l.b16 %v9902
        %v9992 = vunpack.c.h.b16 %v9902
        %v9993 = vunpack.c.l.b16 %v9903
        %v9994 = vunpack.c.h.b16 %v9903
        %v9995 = vunpack.c.l.b16 %v9904
        %v9996 = vunpack.c.h.b16 %v9904
        %v9997 = vunpack.c.l.b16 %v9905
        %v9998 = vunpack.c.h.b16 %v9905
        %v9999 = vunpack.c.l.b16 %v9906
        %v10000 = vunpack.c.h.b16 %v9906
        %v10001 = vunpack.c.l.b16 %v9907
        %v10002 = vunpack.c.h.b16 %v9907
        %v10003 = vunpack.c.l.b16 %v9908
        %v10004 = vunpack.c.h.b16 %v9908
        %v10005 = vunpack.c.l.b16 %v9909
        %v10006 = vunpack.c.h.b16 %v9909
        %v10007 = vunpack.c.l.b16 %v9910
        %v10008 = vunpack.c.h.b16 %v9910
        %v10009 = vunpack.c.l.b16 %v9911
        %v10010 = vunpack.c.h.b16 %v9911
        %v10011 = vunpack.c.l.b16 %v9912
        %v10012 = vunpack.c.h.b16 %v9912
        %v10013 = vunpack.c.l.b16 %v9913
        %v10014 = vunpack.c.h.b16 %v9913
        %v10015 = vunpack.c.l.b16 %v9914
        %v10016 = vunpack.c.h.b16 %v9914
        %v10017 = vunpack.c.l.b16 %v9915
        %v10018 = vunpack.c.h.b16 %v9915
        %v10019 = vunpack.c.l.b16 %v9916
        %v10020 = vunpack.c.h.b16 %v9916
        %v10021 = vunpack.c.l.b16 %v9917
        %v10022 = vunpack.c.h.b16 %v9917
        %v10023 = vunpack.c.l.b16 %v9918
        %v10024 = vunpack.c.h.b16 %v9918
        %v10025 = vunpack.c.l.b16 %v9919
        %v10026 = vunpack.c.h.b16 %v9919
        %v10027 = vunpack.c.l.b16 %v9920
        %v10028 = vunpack.c.h.b16 %v9920
        %v10029 = vunpack.c.l.b16 %v9921
        %v10030 = vunpack.c.h.b16 %v9921
        %v10031 = vunpack.c.l.b16 %v9922
        %v10032 = vunpack.c.h.b16 %v9922
        %v10033 = vunpack.c.l.b16 %v9923
        %v10034 = vunpack.c.h.b16 %v9923
        %v10035 = vunpack.c.l.b16 %v9924
        %v10036 = vunpack.c.h.b16 %v9924
        %v10037 = vunpack.c.l.b16 %v9925
        %v10038 = vunpack.c.h.b16 %v9925
        %v10039 = vunpack.c.l.b16 %v9926
        %v10040 = vunpack.c.h.b16 %v9926
        %v10041 = vunpack.c.l.b16 %v9927
        %v10042 = vunpack.c.h.b16 %v9927
        %v10043 = vunpack.c.l.b16 %v9928
        %v10044 = vunpack.c.h.b16 %v9928
        %v10045 = vunpack.c.l.b16 %v9929
        %v10046 = vunpack.c.h.b16 %v9929
        %v10047 = vunpack.c.l.b16 %v9930
        %v10048 = vunpack.c.h.b16 %v9930
        %v10049 = vpack.c.b16 %v9989, %v9985
        %v10050 = vpack.c.b16 %v9990, %v9986
        %v10051 = vpack.c.b16 %v9991, %v9987
        %v10052 = vpack.c.b16 %v9992, %v9988
        %v10053 = vpack.c.b16 %v9997, %v9993
        %v10054 = vpack.c.b16 %v9998, %v9994
        %v10055 = vpack.c.b16 %v9999, %v9995
        %v10056 = vpack.c.b16 %v10000, %v9996
        %v10057 = vpack.c.b16 %v10005, %v10001
        %v10058 = vpack.c.b16 %v10006, %v10002
        %v10059 = vpack.c.b16 %v10007, %v10003
        %v10060 = vpack.c.b16 %v10008, %v10004
        %v10061 = vpack.c.b16 %v10013, %v10009
        %v10062 = vpack.c.b16 %v10014, %v10010
        %v10063 = vpack.c.b16 %v10015, %v10011
        %v10064 = vpack.c.b16 %v10016, %v10012
        %v10065 = vpack.c.b16 %v10021, %v10017
        %v10066 = vpack.c.b16 %v10022, %v10018
        %v10067 = vpack.c.b16 %v10023, %v10019
        %v10068 = vpack.c.b16 %v10024, %v10020
        %v10069 = vpack.c.b16 %v10029, %v10025
        %v10070 = vpack.c.b16 %v10030, %v10026
        %v10071 = vpack.c.b16 %v10031, %v10027
        %v10072 = vpack.c.b16 %v10032, %v10028
        %v10073 = vpack.c.b16 %v10037, %v10033
        %v10074 = vpack.c.b16 %v10038, %v10034
        %v10075 = vpack.c.b16 %v10039, %v10035
        %v10076 = vpack.c.b16 %v10040, %v10036
        %v10077 = vpack.c.b16 %v10045, %v10041
        %v10078 = vpack.c.b16 %v10046, %v10042
        %v10079 = vpack.c.b16 %v10047, %v10043
        %v10080 = vpack.c.b16 %v10048, %v10044
        %10113 = vmatprep.subr.bf16.mxu0 %v10078
        %10114 = vmatpush1.bf16.msra.mxu0 %v10077
        %10115 = vmatprep.subr.bf16.mxu0 %v10074
        %10116 = vmatpush1.bf16.msra.mxu0 %v10073
        %10117 = vmatprep.subr.bf16.mxu0 %v10070
        %10118 = vmatpush1.bf16.msra.mxu0 %v10069
        %10119 = vmatprep.subr.bf16.mxu0 %v10066
        %10120 = vmatpush1.bf16.msra.mxu0 %v10065
        %10121 = vmatprep.subr.bf16.mxu0 %v10062
        %10122 = vmatpush1.bf16.msra.mxu0 %v10061
        %10123 = vmatprep.subr.bf16.mxu0 %v10058
        %10124 = vmatpush1.bf16.msra.mxu0 %v10057
        %10125 = vmatprep.subr.bf16.mxu0 %v10054
        %10126 = vmatpush1.bf16.msra.mxu0 %v10053
        %10127 = vmatprep.subr.bf16.mxu0 %v10050
        %10128 = vmatpush1.bf16.msra.mxu0 %v10049
        %10129 = vmatprep.subr.bf16.mxu0 0
        %10130 = vmatpush2.bf16.msra.mxu0 0
        %10131 = vmatprep.subr.bf16.mxu0 0
        %10132 = vmatpush2.bf16.msra.mxu0 0
        %10133 = vmatprep.subr.bf16.mxu0 0
        %10134 = vmatpush2.bf16.msra.mxu0 0
        %10135 = vmatprep.subr.bf16.mxu0 0
        %10136 = vmatpush2.bf16.msra.mxu0 0
        %10137 = vmatprep.subr.bf16.mxu0 0
        %10138 = vmatpush2.bf16.msra.mxu0 0
        %10139 = vmatprep.subr.bf16.mxu0 0
        %10140 = vmatpush2.bf16.msra.mxu0 0
        %10141 = vmatprep.subr.bf16.mxu0 0
        %10142 = vmatpush2.bf16.msra.mxu0 0
        %10143 = vmatprep.subr.bf16.mxu0 0
        %10144 = vmatpush2.bf16.msra.mxu0 0
        %10145 = vmatprep.mubr.bf16.mxu0 0
        %10146 = vmatmul.mubr.bf16.gmra.mxu0 %v9898
        %v10147 = vpop.f32.mrf.mxu0
        %v10148 = vadd.f32 %v9936, %v10147
        %v10149 = vpop.f32.mrf.mxu0
        %v10150 = vadd.f32 %v9940, %v10149
        %v10151 = vpop.f32.mrf.mxu0
        %v10152 = vpop.f32.mrf.mxu0
        %10153 = vdwg.mxu0
        %10154 = vmatprep.subr.bf16.mxu0 %v10080
        %10155 = vmatpush1.bf16.msra.mxu0 %v10079
        %10156 = vmatprep.subr.bf16.mxu0 %v10076
        %10157 = vmatpush1.bf16.msra.mxu0 %v10075
        %10158 = vmatprep.subr.bf16.mxu0 %v10072
        %10159 = vmatpush1.bf16.msra.mxu0 %v10071
        %10160 = vmatprep.subr.bf16.mxu0 %v10068
        %10161 = vmatpush1.bf16.msra.mxu0 %v10067
        %10162 = vmatprep.subr.bf16.mxu0 %v10064
        %10163 = vmatpush1.bf16.msra.mxu0 %v10063
        %10164 = vmatprep.subr.bf16.mxu0 %v10060
        %10165 = vmatpush1.bf16.msra.mxu0 %v10059
        %10166 = vmatprep.subr.bf16.mxu0 %v10056
        %10167 = vmatpush1.bf16.msra.mxu0 %v10055
        %10168 = vmatprep.subr.bf16.mxu0 %v10052
        %10169 = vmatpush1.bf16.msra.mxu0 %v10051
        %10170 = vmatprep.subr.bf16.mxu0 0
        %10171 = vmatpush2.bf16.msra.mxu0 0
        %10172 = vmatprep.subr.bf16.mxu0 0
        %10173 = vmatpush2.bf16.msra.mxu0 0
        %10174 = vmatprep.subr.bf16.mxu0 0
        %10175 = vmatpush2.bf16.msra.mxu0 0
        %10176 = vmatprep.subr.bf16.mxu0 0
        %10177 = vmatpush2.bf16.msra.mxu0 0
        %10178 = vmatprep.subr.bf16.mxu0 0
        %10179 = vmatpush2.bf16.msra.mxu0 0
        %10180 = vmatprep.subr.bf16.mxu0 0
        %10181 = vmatpush2.bf16.msra.mxu0 0
        %10182 = vmatprep.subr.bf16.mxu0 0
        %10183 = vmatpush2.bf16.msra.mxu0 0
        %10184 = vmatprep.subr.bf16.mxu0 0
        %10185 = vmatpush2.bf16.msra.mxu0 0
        %10186 = vmatprep.mubr.bf16.mxu0 0
        %10187 = vmatmul.mubr.bf16.gmra.mxu0 %v9898
        %v10188 = vpop.f32.mrf.mxu0
        %v10189 = vadd.f32 %v9944, %v10188
        %v10190 = vpop.f32.mrf.mxu0
        %v10191 = vadd.f32 %v9948, %v10190
        %v10192 = vpop.f32.mrf.mxu0
        %v10193 = vpop.f32.mrf.mxu0
        %10194 = vdwg.mxu0
        %v10195 = vld [vmem:[%s661 + $0x1] sm:$0x1]
        %v10196 = vld [vmem:[%s670 + $0x1] sm:$0x1]
        %v10197 = vpack.c.bf16 %v10195, %v10195
        %v10198 = vld [vmem:[#allocation14] sm:$0xff]
        %v10199 = vld [vmem:[#allocation14 + $0x8] sm:$0xff]
        %v10200 = vld [vmem:[#allocation14 + $0x10] sm:$0xff]
        %v10201 = vld [vmem:[#allocation14 + $0x18] sm:$0xff]
        %v10202 = vld [vmem:[#allocation14 + $0x20] sm:$0xff]
        %v10203 = vld [vmem:[#allocation14 + $0x28] sm:$0xff]
        %v10204 = vld [vmem:[#allocation14 + $0x30] sm:$0xff]
        %v10205 = vld [vmem:[#allocation14 + $0x38] sm:$0xff]
        %v10206 = vld [vmem:[#allocation14 + $0x40] sm:$0xff]
        %v10207 = vld [vmem:[#allocation14 + $0x48] sm:$0xff]
        %v10208 = vld [vmem:[#allocation14 + $0x50] sm:$0xff]
        %v10209 = vld [vmem:[#allocation14 + $0x58] sm:$0xff]
        %v10210 = vld [vmem:[#allocation14 + $0x60] sm:$0xff]
        %v10211 = vld [vmem:[#allocation14 + $0x68] sm:$0xff]
        %v10212 = vld [vmem:[#allocation14 + $0x70] sm:$0xff]
        %v10213 = vld [vmem:[#allocation14 + $0x78] sm:$0xff]
        %v10214 = vld [vmem:[#allocation14 + $0x80] sm:$0xff]
        %v10215 = vld [vmem:[#allocation14 + $0x88] sm:$0xff]
        %v10216 = vld [vmem:[#allocation14 + $0x90] sm:$0xff]
        %v10217 = vld [vmem:[#allocation14 + $0x98] sm:$0xff]
        %v10218 = vld [vmem:[#allocation14 + $0xa0] sm:$0xff]
        %v10219 = vld [vmem:[#allocation14 + $0xa8] sm:$0xff]
        %v10220 = vld [vmem:[#allocation14 + $0xb0] sm:$0xff]
        %v10221 = vld [vmem:[#allocation14 + $0xb8] sm:$0xff]
        %v10222 = vld [vmem:[#allocation14 + $0xc0] sm:$0xff]
        %v10223 = vld [vmem:[#allocation14 + $0xc8] sm:$0xff]
        %v10224 = vld [vmem:[#allocation14 + $0xd0] sm:$0xff]
        %v10225 = vld [vmem:[#allocation14 + $0xd8] sm:$0xff]
        %v10226 = vld [vmem:[#allocation14 + $0xe0] sm:$0xff]
        %v10227 = vld [vmem:[#allocation14 + $0xe8] sm:$0xff]
        %v10228 = vld [vmem:[#allocation14 + $0xf0] sm:$0xff]
        %v10229 = vld [vmem:[#allocation14 + $0xf8] sm:$0xff]
        %v10262 = vunpack.c.l.b16 %v10198
        %v10263 = vunpack.c.h.b16 %v10198
        %v10264 = vunpack.c.l.b16 %v10199
        %v10265 = vunpack.c.h.b16 %v10199
        %v10266 = vunpack.c.l.b16 %v10200
        %v10267 = vunpack.c.h.b16 %v10200
        %v10268 = vunpack.c.l.b16 %v10201
        %v10269 = vunpack.c.h.b16 %v10201
        %v10270 = vunpack.c.l.b16 %v10202
        %v10271 = vunpack.c.h.b16 %v10202
        %v10272 = vunpack.c.l.b16 %v10203
        %v10273 = vunpack.c.h.b16 %v10203
        %v10274 = vunpack.c.l.b16 %v10204
        %v10275 = vunpack.c.h.b16 %v10204
        %v10276 = vunpack.c.l.b16 %v10205
        %v10277 = vunpack.c.h.b16 %v10205
        %v10278 = vunpack.c.l.b16 %v10206
        %v10279 = vunpack.c.h.b16 %v10206
        %v10280 = vunpack.c.l.b16 %v10207
        %v10281 = vunpack.c.h.b16 %v10207
        %v10282 = vunpack.c.l.b16 %v10208
        %v10283 = vunpack.c.h.b16 %v10208
        %v10284 = vunpack.c.l.b16 %v10209
        %v10285 = vunpack.c.h.b16 %v10209
        %v10286 = vunpack.c.l.b16 %v10210
        %v10287 = vunpack.c.h.b16 %v10210
        %v10288 = vunpack.c.l.b16 %v10211
        %v10289 = vunpack.c.h.b16 %v10211
        %v10290 = vunpack.c.l.b16 %v10212
        %v10291 = vunpack.c.h.b16 %v10212
        %v10292 = vunpack.c.l.b16 %v10213
        %v10293 = vunpack.c.h.b16 %v10213
        %v10294 = vunpack.c.l.b16 %v10214
        %v10295 = vunpack.c.h.b16 %v10214
        %v10296 = vunpack.c.l.b16 %v10215
        %v10297 = vunpack.c.h.b16 %v10215
        %v10298 = vunpack.c.l.b16 %v10216
        %v10299 = vunpack.c.h.b16 %v10216
        %v10300 = vunpack.c.l.b16 %v10217
        %v10301 = vunpack.c.h.b16 %v10217
        %v10302 = vunpack.c.l.b16 %v10218
        %v10303 = vunpack.c.h.b16 %v10218
        %v10304 = vunpack.c.l.b16 %v10219
        %v10305 = vunpack.c.h.b16 %v10219
        %v10306 = vunpack.c.l.b16 %v10220
        %v10307 = vunpack.c.h.b16 %v10220
        %v10308 = vunpack.c.l.b16 %v10221
        %v10309 = vunpack.c.h.b16 %v10221
        %v10310 = vunpack.c.l.b16 %v10222
        %v10311 = vunpack.c.h.b16 %v10222
        %v10312 = vunpack.c.l.b16 %v10223
        %v10313 = vunpack.c.h.b16 %v10223
        %v10314 = vunpack.c.l.b16 %v10224
        %v10315 = vunpack.c.h.b16 %v10224
        %v10316 = vunpack.c.l.b16 %v10225
        %v10317 = vunpack.c.h.b16 %v10225
        %v10318 = vunpack.c.l.b16 %v10226
        %v10319 = vunpack.c.h.b16 %v10226
        %v10320 = vunpack.c.l.b16 %v10227
        %v10321 = vunpack.c.h.b16 %v10227
        %v10322 = vunpack.c.l.b16 %v10228
        %v10323 = vunpack.c.h.b16 %v10228
        %v10324 = vunpack.c.l.b16 %v10229
        %v10325 = vunpack.c.h.b16 %v10229
        %v10326 = vpack.c.b16 %v10266, %v10262
        %v10327 = vpack.c.b16 %v10267, %v10263
        %v10328 = vpack.c.b16 %v10268, %v10264
        %v10329 = vpack.c.b16 %v10269, %v10265
        %v10330 = vpack.c.b16 %v10274, %v10270
        %v10331 = vpack.c.b16 %v10275, %v10271
        %v10332 = vpack.c.b16 %v10276, %v10272
        %v10333 = vpack.c.b16 %v10277, %v10273
        %v10334 = vpack.c.b16 %v10282, %v10278
        %v10335 = vpack.c.b16 %v10283, %v10279
        %v10336 = vpack.c.b16 %v10284, %v10280
        %v10337 = vpack.c.b16 %v10285, %v10281
        %v10338 = vpack.c.b16 %v10290, %v10286
        %v10339 = vpack.c.b16 %v10291, %v10287
        %v10340 = vpack.c.b16 %v10292, %v10288
        %v10341 = vpack.c.b16 %v10293, %v10289
        %v10342 = vpack.c.b16 %v10298, %v10294
        %v10343 = vpack.c.b16 %v10299, %v10295
        %v10344 = vpack.c.b16 %v10300, %v10296
        %v10345 = vpack.c.b16 %v10301, %v10297
        %v10346 = vpack.c.b16 %v10306, %v10302
        %v10347 = vpack.c.b16 %v10307, %v10303
        %v10348 = vpack.c.b16 %v10308, %v10304
        %v10349 = vpack.c.b16 %v10309, %v10305
        %v10350 = vpack.c.b16 %v10314, %v10310
        %v10351 = vpack.c.b16 %v10315, %v10311
        %v10352 = vpack.c.b16 %v10316, %v10312
        %v10353 = vpack.c.b16 %v10317, %v10313
        %v10354 = vpack.c.b16 %v10322, %v10318
        %v10355 = vpack.c.b16 %v10323, %v10319
        %v10356 = vpack.c.b16 %v10324, %v10320
        %v10357 = vpack.c.b16 %v10325, %v10321
        %10390 = vmatprep.subr.bf16.mxu0 %v10355
        %10391 = vmatpush1.bf16.msra.mxu0 %v10354
        %10392 = vmatprep.subr.bf16.mxu0 %v10351
        %10393 = vmatpush1.bf16.msra.mxu0 %v10350
        %10394 = vmatprep.subr.bf16.mxu0 %v10347
        %10395 = vmatpush1.bf16.msra.mxu0 %v10346
        %10396 = vmatprep.subr.bf16.mxu0 %v10343
        %10397 = vmatpush1.bf16.msra.mxu0 %v10342
        %10398 = vmatprep.subr.bf16.mxu0 %v10339
        %10399 = vmatpush1.bf16.msra.mxu0 %v10338
        %10400 = vmatprep.subr.bf16.mxu0 %v10335
        %10401 = vmatpush1.bf16.msra.mxu0 %v10334
        %10402 = vmatprep.subr.bf16.mxu0 %v10331
        %10403 = vmatpush1.bf16.msra.mxu0 %v10330
        %10404 = vmatprep.subr.bf16.mxu0 %v10327
        %10405 = vmatpush1.bf16.msra.mxu0 %v10326
        %10406 = vmatprep.subr.bf16.mxu0 0
        %10407 = vmatpush2.bf16.msra.mxu0 0
        %10408 = vmatprep.subr.bf16.mxu0 0
        %10409 = vmatpush2.bf16.msra.mxu0 0
        %10410 = vmatprep.subr.bf16.mxu0 0
        %10411 = vmatpush2.bf16.msra.mxu0 0
        %10412 = vmatprep.subr.bf16.mxu0 0
        %10413 = vmatpush2.bf16.msra.mxu0 0
        %10414 = vmatprep.subr.bf16.mxu0 0
        %10415 = vmatpush2.bf16.msra.mxu0 0
        %10416 = vmatprep.subr.bf16.mxu0 0
        %10417 = vmatpush2.bf16.msra.mxu0 0
        %10418 = vmatprep.subr.bf16.mxu0 0
        %10419 = vmatpush2.bf16.msra.mxu0 0
        %10420 = vmatprep.subr.bf16.mxu0 0
        %10421 = vmatpush2.bf16.msra.mxu0 0
        %10422 = vmatprep.mubr.bf16.mxu0 0
        %10423 = vmatmul.mubr.bf16.gmra.mxu0 %v10197
        %v10424 = vpop.f32.mrf.mxu0
        %v10425 = vadd.f32 0.0, %v10424
        %v10426 = vpop.f32.mrf.mxu0
        %v10427 = vadd.f32 0.0, %v10426
        %v10428 = vpop.f32.mrf.mxu0
        %v10429 = vpop.f32.mrf.mxu0
        %10430 = vdwg.mxu0
        %10431 = vmatprep.subr.bf16.mxu0 %v10357
        %10432 = vmatpush1.bf16.msra.mxu0 %v10356
        %10433 = vmatprep.subr.bf16.mxu0 %v10353
        %10434 = vmatpush1.bf16.msra.mxu0 %v10352
        %10435 = vmatprep.subr.bf16.mxu0 %v10349
        %10436 = vmatpush1.bf16.msra.mxu0 %v10348
        %10437 = vmatprep.subr.bf16.mxu0 %v10345
        %10438 = vmatpush1.bf16.msra.mxu0 %v10344
        %10439 = vmatprep.subr.bf16.mxu0 %v10341
        %10440 = vmatpush1.bf16.msra.mxu0 %v10340
        %10441 = vmatprep.subr.bf16.mxu0 %v10337
        %10442 = vmatpush1.bf16.msra.mxu0 %v10336
        %10443 = vmatprep.subr.bf16.mxu0 %v10333
        %10444 = vmatpush1.bf16.msra.mxu0 %v10332
        %10445 = vmatprep.subr.bf16.mxu0 %v10329
        %10446 = vmatpush1.bf16.msra.mxu0 %v10328
        %10447 = vmatprep.subr.bf16.mxu0 0
        %10448 = vmatpush2.bf16.msra.mxu0 0
        %10449 = vmatprep.subr.bf16.mxu0 0
        %10450 = vmatpush2.bf16.msra.mxu0 0
        %10451 = vmatprep.subr.bf16.mxu0 0
        %10452 = vmatpush2.bf16.msra.mxu0 0
        %10453 = vmatprep.subr.bf16.mxu0 0
        %10454 = vmatpush2.bf16.msra.mxu0 0
        %10455 = vmatprep.subr.bf16.mxu0 0
        %10456 = vmatpush2.bf16.msra.mxu0 0
        %10457 = vmatprep.subr.bf16.mxu0 0
        %10458 = vmatpush2.bf16.msra.mxu0 0
        %10459 = vmatprep.subr.bf16.mxu0 0
        %10460 = vmatpush2.bf16.msra.mxu0 0
        %10461 = vmatprep.subr.bf16.mxu0 0
        %10462 = vmatpush2.bf16.msra.mxu0 0
        %10463 = vmatprep.mubr.bf16.mxu0 0
        %10464 = vmatmul.mubr.bf16.gmra.mxu0 %v10197
        %v10465 = vpop.f32.mrf.mxu0
        %v10466 = vadd.f32 0.0, %v10465
        %v10467 = vpop.f32.mrf.mxu0
        %v10468 = vadd.f32 0.0, %v10467
        %v10469 = vpop.f32.mrf.mxu0
        %v10470 = vpop.f32.mrf.mxu0
        %10471 = vdwg.mxu0
        %v10472 = vadd.f32 %v10148, %v10425
        %v10473 = vadd.f32 %v10150, %v10427
        %v10474 = vadd.f32 %v10189, %v10466
        %v10475 = vadd.f32 %v10191, %v10468
        %v10476 = vxor.u32 %v10472, 2147483648
        %v10477 = vmul.f32 %v10476, 1.442695
        %v10478 = vpow.pop %v10477
        %v10479 = vadd.f32 %v10478, 1.0
        %v10480 = vrcp.pop %v10479
        %v10481 = vmul.f32 1.0, %v10480
        %v10482 = vxor.u32 %v10473, 2147483648
        %v10483 = vmul.f32 %v10482, 1.442695
        %v10484 = vpow.pop %v10483
        %v10485 = vadd.f32 %v10484, 1.0
        %v10486 = vrcp.pop %v10485
        %v10487 = vmul.f32 1.0, %v10486
        %v10488 = vtanh.pop %v10474
        %v10489 = vxor.u32 %v10475, 2147483648
        %v10490 = vmul.f32 %v10489, 1.442695
        %v10491 = vpow.pop %v10490
        %v10492 = vadd.f32 %v10491, 1.0
        %v10493 = vrcp.pop %v10492
        %v10494 = vmul.f32 1.0, %v10493
        %v10495 = vmul.f32 %v10487, %v10196
        %v10496 = vmul.f32 %v10481, %v10488
        %v10497 = vadd.f32 %v10495, %v10496
        %v10498 = vtanh.pop %v10497
        %v10499 = vmul.f32 %v10494, %v10498
        %v10500 = vpack.c.bf16 %v10499, %v10499
        %10501 = vmatprep.subr.bf16.mxu0 %v10355
        %10502 = vmatpush1.bf16.msra.mxu0 %v10354
        %10503 = vmatprep.subr.bf16.mxu0 %v10351
        %10504 = vmatpush1.bf16.msra.mxu0 %v10350
        %10505 = vmatprep.subr.bf16.mxu0 %v10347
        %10506 = vmatpush1.bf16.msra.mxu0 %v10346
        %10507 = vmatprep.subr.bf16.mxu0 %v10343
        %10508 = vmatpush1.bf16.msra.mxu0 %v10342
        %10509 = vmatprep.subr.bf16.mxu0 %v10339
        %10510 = vmatpush1.bf16.msra.mxu0 %v10338
        %10511 = vmatprep.subr.bf16.mxu0 %v10335
        %10512 = vmatpush1.bf16.msra.mxu0 %v10334
        %10513 = vmatprep.subr.bf16.mxu0 %v10331
        %10514 = vmatpush1.bf16.msra.mxu0 %v10330
        %10515 = vmatprep.subr.bf16.mxu0 %v10327
        %10516 = vmatpush1.bf16.msra.mxu0 %v10326
        %10517 = vmatprep.subr.bf16.mxu0 0
        %10518 = vmatpush2.bf16.msra.mxu0 0
        %10519 = vmatprep.subr.bf16.mxu0 0
        %10520 = vmatpush2.bf16.msra.mxu0 0
        %10521 = vmatprep.subr.bf16.mxu0 0
        %10522 = vmatpush2.bf16.msra.mxu0 0
        %10523 = vmatprep.subr.bf16.mxu0 0
        %10524 = vmatpush2.bf16.msra.mxu0 0
        %10525 = vmatprep.subr.bf16.mxu0 0
        %10526 = vmatpush2.bf16.msra.mxu0 0
        %10527 = vmatprep.subr.bf16.mxu0 0
        %10528 = vmatpush2.bf16.msra.mxu0 0
        %10529 = vmatprep.subr.bf16.mxu0 0
        %10530 = vmatpush2.bf16.msra.mxu0 0
        %10531 = vmatprep.subr.bf16.mxu0 0
        %10532 = vmatpush2.bf16.msra.mxu0 0
        %10533 = vmatprep.mubr.bf16.mxu0 0
        %10534 = vmatmul.mubr.bf16.gmra.mxu0 %v10500
        %v10535 = vpop.f32.mrf.mxu0
        %v10536 = vadd.f32 0.0, %v10535
        %v10537 = vpop.f32.mrf.mxu0
        %v10538 = vadd.f32 0.0, %v10537
        %v10539 = vpop.f32.mrf.mxu0
        %v10540 = vpop.f32.mrf.mxu0
        %10541 = vdwg.mxu0
        %10542 = vmatprep.subr.bf16.mxu0 %v10357
        %10543 = vmatpush1.bf16.msra.mxu0 %v10356
        %10544 = vmatprep.subr.bf16.mxu0 %v10353
        %10545 = vmatpush1.bf16.msra.mxu0 %v10352
        %10546 = vmatprep.subr.bf16.mxu0 %v10349
        %10547 = vmatpush1.bf16.msra.mxu0 %v10348
        %10548 = vmatprep.subr.bf16.mxu0 %v10345
        %10549 = vmatpush1.bf16.msra.mxu0 %v10344
        %10550 = vmatprep.subr.bf16.mxu0 %v10341
        %10551 = vmatpush1.bf16.msra.mxu0 %v10340
        %10552 = vmatprep.subr.bf16.mxu0 %v10337
        %10553 = vmatpush1.bf16.msra.mxu0 %v10336
        %10554 = vmatprep.subr.bf16.mxu0 %v10333
        %10555 = vmatpush1.bf16.msra.mxu0 %v10332
        %10556 = vmatprep.subr.bf16.mxu0 %v10329
        %10557 = vmatpush1.bf16.msra.mxu0 %v10328
        %10558 = vmatprep.subr.bf16.mxu0 0
        %10559 = vmatpush2.bf16.msra.mxu0 0
        %10560 = vmatprep.subr.bf16.mxu0 0
        %10561 = vmatpush2.bf16.msra.mxu0 0
        %10562 = vmatprep.subr.bf16.mxu0 0
        %10563 = vmatpush2.bf16.msra.mxu0 0
        %10564 = vmatprep.subr.bf16.mxu0 0
        %10565 = vmatpush2.bf16.msra.mxu0 0
        %10566 = vmatprep.subr.bf16.mxu0 0
        %10567 = vmatpush2.bf16.msra.mxu0 0
        %10568 = vmatprep.subr.bf16.mxu0 0
        %10569 = vmatpush2.bf16.msra.mxu0 0
        %10570 = vmatprep.subr.bf16.mxu0 0
        %10571 = vmatpush2.bf16.msra.mxu0 0
        %10572 = vmatprep.subr.bf16.mxu0 0
        %10573 = vmatpush2.bf16.msra.mxu0 0
        %10574 = vmatprep.mubr.bf16.mxu0 0
        %10575 = vmatmul.mubr.bf16.gmra.mxu0 %v10500
        %v10576 = vpop.f32.mrf.mxu0
        %v10577 = vadd.f32 0.0, %v10576
        %v10578 = vpop.f32.mrf.mxu0
        %v10579 = vadd.f32 0.0, %v10578
        %v10580 = vpop.f32.mrf.mxu0
        %v10581 = vpop.f32.mrf.mxu0
        %10582 = vdwg.mxu0
        %v10587 = vrot.slane %v10536, 7
        %v10588 = vrot.slane %v10538, 7
        %v10589 = vrot.slane %v10577, 7
        %v10590 = vrot.slane %v10579, 7
        %v10595 = vadd.f32 %v10148, %v10587
        %v10596 = vadd.f32 %v10150, %v10588
        %v10597 = vadd.f32 %v10189, %v10589
        %v10598 = vadd.f32 %v10191, %v10590
        %v10599 = vxor.u32 %v10595, 2147483648
        %v10600 = vmul.f32 %v10599, 1.442695
        %v10601 = vpow.pop %v10600
        %v10602 = vadd.f32 %v10601, 1.0
        %v10603 = vrcp.pop %v10602
        %v10604 = vmul.f32 1.0, %v10603
        %v10605 = vxor.u32 %v10596, 2147483648
        %v10606 = vmul.f32 %v10605, 1.442695
        %v10607 = vpow.pop %v10606
        %v10608 = vadd.f32 %v10607, 1.0
        %v10609 = vrcp.pop %v10608
        %v10610 = vmul.f32 1.0, %v10609
        %v10611 = vtanh.pop %v10597
        %v10612 = vxor.u32 %v10598, 2147483648
        %v10613 = vmul.f32 %v10612, 1.442695
        %v10614 = vpow.pop %v10613
        %v10615 = vadd.f32 %v10614, 1.0
        %v10616 = vrcp.pop %v10615
        %v10617 = vmul.f32 1.0, %v10616
        %v10619 = vrot.slane %v10497, 7
        %v10621 = vmul.f32 %v10610, %v10619
        %v10622 = vmul.f32 %v10604, %v10611
        %v10623 = vadd.f32 %v10621, %v10622
        %v10624 = vtanh.pop %v10623
        %v10625 = vmul.f32 %v10617, %v10624
        %v10626 = vpack.c.bf16 %v10625, %v10625
        %v10628 = vshrl.u32 %v10626, 16
        %10631 = vmatprep.subr.bf16.mxu0 %v10355
        %10632 = vmatpush1.bf16.msra.mxu0 %v10354
        %10633 = vmatprep.subr.bf16.mxu0 %v10351
        %10634 = vmatpush1.bf16.msra.mxu0 %v10350
        %10635 = vmatprep.subr.bf16.mxu0 %v10347
        %10636 = vmatpush1.bf16.msra.mxu0 %v10346
        %10637 = vmatprep.subr.bf16.mxu0 %v10343
        %10638 = vmatpush1.bf16.msra.mxu0 %v10342
        %10639 = vmatprep.subr.bf16.mxu0 %v10339
        %10640 = vmatpush1.bf16.msra.mxu0 %v10338
        %10641 = vmatprep.subr.bf16.mxu0 %v10335
        %10642 = vmatpush1.bf16.msra.mxu0 %v10334
        %10643 = vmatprep.subr.bf16.mxu0 %v10331
        %10644 = vmatpush1.bf16.msra.mxu0 %v10330
        %10645 = vmatprep.subr.bf16.mxu0 %v10327
        %10646 = vmatpush1.bf16.msra.mxu0 %v10326
        %10647 = vmatprep.subr.bf16.mxu0 0
        %10648 = vmatpush2.bf16.msra.mxu0 0
        %10649 = vmatprep.subr.bf16.mxu0 0
        %10650 = vmatpush2.bf16.msra.mxu0 0
        %10651 = vmatprep.subr.bf16.mxu0 0
        %10652 = vmatpush2.bf16.msra.mxu0 0
        %10653 = vmatprep.subr.bf16.mxu0 0
        %10654 = vmatpush2.bf16.msra.mxu0 0
        %10655 = vmatprep.subr.bf16.mxu0 0
        %10656 = vmatpush2.bf16.msra.mxu0 0
        %10657 = vmatprep.subr.bf16.mxu0 0
        %10658 = vmatpush2.bf16.msra.mxu0 0
        %10659 = vmatprep.subr.bf16.mxu0 0
        %10660 = vmatpush2.bf16.msra.mxu0 0
        %10661 = vmatprep.subr.bf16.mxu0 0
        %10662 = vmatpush2.bf16.msra.mxu0 0
        %10663 = vmatprep.mubr.bf16.mxu0 0
        %10664 = vmatmul.mubr.bf16.gmra.mxu0 %v10628
        %v10665 = vpop.f32.mrf.mxu0
        %v10666 = vadd.f32 0.0, %v10665
        %v10667 = vpop.f32.mrf.mxu0
        %v10668 = vadd.f32 0.0, %v10667
        %v10669 = vpop.f32.mrf.mxu0
        %v10670 = vpop.f32.mrf.mxu0
        %10671 = vdwg.mxu0
        %10672 = vmatprep.subr.bf16.mxu0 %v10357
        %10673 = vmatpush1.bf16.msra.mxu0 %v10356
        %10674 = vmatprep.subr.bf16.mxu0 %v10353
        %10675 = vmatpush1.bf16.msra.mxu0 %v10352
        %10676 = vmatprep.subr.bf16.mxu0 %v10349
        %10677 = vmatpush1.bf16.msra.mxu0 %v10348
        %10678 = vmatprep.subr.bf16.mxu0 %v10345
        %10679 = vmatpush1.bf16.msra.mxu0 %v10344
        %10680 = vmatprep.subr.bf16.mxu0 %v10341
        %10681 = vmatpush1.bf16.msra.mxu0 %v10340
        %10682 = vmatprep.subr.bf16.mxu0 %v10337
        %10683 = vmatpush1.bf16.msra.mxu0 %v10336
        %10684 = vmatprep.subr.bf16.mxu0 %v10333
        %10685 = vmatpush1.bf16.msra.mxu0 %v10332
        %10686 = vmatprep.subr.bf16.mxu0 %v10329
        %10687 = vmatpush1.bf16.msra.mxu0 %v10328
        %10688 = vmatprep.subr.bf16.mxu0 0
        %10689 = vmatpush2.bf16.msra.mxu0 0
        %10690 = vmatprep.subr.bf16.mxu0 0
        %10691 = vmatpush2.bf16.msra.mxu0 0
        %10692 = vmatprep.subr.bf16.mxu0 0
        %10693 = vmatpush2.bf16.msra.mxu0 0
        %10694 = vmatprep.subr.bf16.mxu0 0
        %10695 = vmatpush2.bf16.msra.mxu0 0
        %10696 = vmatprep.subr.bf16.mxu0 0
        %10697 = vmatpush2.bf16.msra.mxu0 0
        %10698 = vmatprep.subr.bf16.mxu0 0
        %10699 = vmatpush2.bf16.msra.mxu0 0
        %10700 = vmatprep.subr.bf16.mxu0 0
        %10701 = vmatpush2.bf16.msra.mxu0 0
        %10702 = vmatprep.subr.bf16.mxu0 0
        %10703 = vmatpush2.bf16.msra.mxu0 0
        %10704 = vmatprep.mubr.bf16.mxu0 0
        %10705 = vmatmul.mubr.bf16.gmra.mxu0 %v10628
        %v10706 = vpop.f32.mrf.mxu0
        %v10707 = vadd.f32 0.0, %v10706
        %v10708 = vpop.f32.mrf.mxu0
        %v10709 = vadd.f32 0.0, %v10708
        %v10710 = vpop.f32.mrf.mxu0
        %v10711 = vpop.f32.mrf.mxu0
        %10712 = vdwg.mxu0
        %v10717 = vrot.slane %v10666, 6
        %v10718 = vrot.slane %v10668, 6
        %v10719 = vrot.slane %v10707, 6
        %v10720 = vrot.slane %v10709, 6
        %v10725 = vadd.f32 %v10148, %v10717
        %v10726 = vadd.f32 %v10150, %v10718
        %v10727 = vadd.f32 %v10189, %v10719
        %v10728 = vadd.f32 %v10191, %v10720
        %v10729 = vxor.u32 %v10725, 2147483648
        %v10730 = vmul.f32 %v10729, 1.442695
        %v10731 = vpow.pop %v10730
        %v10732 = vadd.f32 %v10731, 1.0
        %v10733 = vrcp.pop %v10732
        %v10734 = vmul.f32 1.0, %v10733
        %v10735 = vxor.u32 %v10726, 2147483648
        %v10736 = vmul.f32 %v10735, 1.442695
        %v10737 = vpow.pop %v10736
        %v10738 = vadd.f32 %v10737, 1.0
        %v10739 = vrcp.pop %v10738
        %v10740 = vmul.f32 1.0, %v10739
        %v10741 = vtanh.pop %v10727
        %v10742 = vxor.u32 %v10728, 2147483648
        %v10743 = vmul.f32 %v10742, 1.442695
        %v10744 = vpow.pop %v10743
        %v10745 = vadd.f32 %v10744, 1.0
        %v10746 = vrcp.pop %v10745
        %v10747 = vmul.f32 1.0, %v10746
        %v10749 = vrot.slane %v10623, 7
        %v10751 = vmul.f32 %v10740, %v10749
        %v10752 = vmul.f32 %v10734, %v10741
        %v10753 = vadd.f32 %v10751, %v10752
        %v10754 = vtanh.pop %v10753
        %v10755 = vmul.f32 %v10747, %v10754
        %v10756 = vpack.c.bf16 %v10755, %v10755
        %v10758 = vrot.slane %v10756, 1
        %10760 = vmatprep.subr.bf16.mxu0 %v10355
        %10761 = vmatpush1.bf16.msra.mxu0 %v10354
        %10762 = vmatprep.subr.bf16.mxu0 %v10351
        %10763 = vmatpush1.bf16.msra.mxu0 %v10350
        %10764 = vmatprep.subr.bf16.mxu0 %v10347
        %10765 = vmatpush1.bf16.msra.mxu0 %v10346
        %10766 = vmatprep.subr.bf16.mxu0 %v10343
        %10767 = vmatpush1.bf16.msra.mxu0 %v10342
        %10768 = vmatprep.subr.bf16.mxu0 %v10339
        %10769 = vmatpush1.bf16.msra.mxu0 %v10338
        %10770 = vmatprep.subr.bf16.mxu0 %v10335
        %10771 = vmatpush1.bf16.msra.mxu0 %v10334
        %10772 = vmatprep.subr.bf16.mxu0 %v10331
        %10773 = vmatpush1.bf16.msra.mxu0 %v10330
        %10774 = vmatprep.subr.bf16.mxu0 %v10327
        %10775 = vmatpush1.bf16.msra.mxu0 %v10326
        %10776 = vmatprep.subr.bf16.mxu0 0
        %10777 = vmatpush2.bf16.msra.mxu0 0
        %10778 = vmatprep.subr.bf16.mxu0 0
        %10779 = vmatpush2.bf16.msra.mxu0 0
        %10780 = vmatprep.subr.bf16.mxu0 0
        %10781 = vmatpush2.bf16.msra.mxu0 0
        %10782 = vmatprep.subr.bf16.mxu0 0
        %10783 = vmatpush2.bf16.msra.mxu0 0
        %10784 = vmatprep.subr.bf16.mxu0 0
        %10785 = vmatpush2.bf16.msra.mxu0 0
        %10786 = vmatprep.subr.bf16.mxu0 0
        %10787 = vmatpush2.bf16.msra.mxu0 0
        %10788 = vmatprep.subr.bf16.mxu0 0
        %10789 = vmatpush2.bf16.msra.mxu0 0
        %10790 = vmatprep.subr.bf16.mxu0 0
        %10791 = vmatpush2.bf16.msra.mxu0 0
        %10792 = vmatprep.mubr.bf16.mxu0 0
        %10793 = vmatmul.mubr.bf16.gmra.mxu0 %v10758
        %v10794 = vpop.f32.mrf.mxu0
        %v10795 = vadd.f32 0.0, %v10794
        %v10796 = vpop.f32.mrf.mxu0
        %v10797 = vadd.f32 0.0, %v10796
        %v10798 = vpop.f32.mrf.mxu0
        %v10799 = vpop.f32.mrf.mxu0
        %10800 = vdwg.mxu0
        %10801 = vmatprep.subr.bf16.mxu0 %v10357
        %10802 = vmatpush1.bf16.msra.mxu0 %v10356
        %10803 = vmatprep.subr.bf16.mxu0 %v10353
        %10804 = vmatpush1.bf16.msra.mxu0 %v10352
        %10805 = vmatprep.subr.bf16.mxu0 %v10349
        %10806 = vmatpush1.bf16.msra.mxu0 %v10348
        %10807 = vmatprep.subr.bf16.mxu0 %v10345
        %10808 = vmatpush1.bf16.msra.mxu0 %v10344
        %10809 = vmatprep.subr.bf16.mxu0 %v10341
        %10810 = vmatpush1.bf16.msra.mxu0 %v10340
        %10811 = vmatprep.subr.bf16.mxu0 %v10337
        %10812 = vmatpush1.bf16.msra.mxu0 %v10336
        %10813 = vmatprep.subr.bf16.mxu0 %v10333
        %10814 = vmatpush1.bf16.msra.mxu0 %v10332
        %10815 = vmatprep.subr.bf16.mxu0 %v10329
        %10816 = vmatpush1.bf16.msra.mxu0 %v10328
        %10817 = vmatprep.subr.bf16.mxu0 0
        %10818 = vmatpush2.bf16.msra.mxu0 0
        %10819 = vmatprep.subr.bf16.mxu0 0
        %10820 = vmatpush2.bf16.msra.mxu0 0
        %10821 = vmatprep.subr.bf16.mxu0 0
        %10822 = vmatpush2.bf16.msra.mxu0 0
        %10823 = vmatprep.subr.bf16.mxu0 0
        %10824 = vmatpush2.bf16.msra.mxu0 0
        %10825 = vmatprep.subr.bf16.mxu0 0
        %10826 = vmatpush2.bf16.msra.mxu0 0
        %10827 = vmatprep.subr.bf16.mxu0 0
        %10828 = vmatpush2.bf16.msra.mxu0 0
        %10829 = vmatprep.subr.bf16.mxu0 0
        %10830 = vmatpush2.bf16.msra.mxu0 0
        %10831 = vmatprep.subr.bf16.mxu0 0
        %10832 = vmatpush2.bf16.msra.mxu0 0
        %10833 = vmatprep.mubr.bf16.mxu0 0
        %10834 = vmatmul.mubr.bf16.gmra.mxu0 %v10758
        %v10835 = vpop.f32.mrf.mxu0
        %v10836 = vadd.f32 0.0, %v10835
        %v10837 = vpop.f32.mrf.mxu0
        %v10838 = vadd.f32 0.0, %v10837
        %v10839 = vpop.f32.mrf.mxu0
        %v10840 = vpop.f32.mrf.mxu0
        %10841 = vdwg.mxu0
        %v10846 = vrot.slane %v10795, 5
        %v10847 = vrot.slane %v10797, 5
        %v10848 = vrot.slane %v10836, 5
        %v10849 = vrot.slane %v10838, 5
        %v10854 = vadd.f32 %v10148, %v10846
        %v10855 = vadd.f32 %v10150, %v10847
        %v10856 = vadd.f32 %v10189, %v10848
        %v10857 = vadd.f32 %v10191, %v10849
        %v10858 = vxor.u32 %v10854, 2147483648
        %v10859 = vmul.f32 %v10858, 1.442695
        %v10860 = vpow.pop %v10859
        %v10861 = vadd.f32 %v10860, 1.0
        %v10862 = vrcp.pop %v10861
        %v10863 = vmul.f32 1.0, %v10862
        %v10864 = vxor.u32 %v10855, 2147483648
        %v10865 = vmul.f32 %v10864, 1.442695
        %v10866 = vpow.pop %v10865
        %v10867 = vadd.f32 %v10866, 1.0
        %v10868 = vrcp.pop %v10867
        %v10869 = vmul.f32 1.0, %v10868
        %v10870 = vtanh.pop %v10856
        %v10871 = vxor.u32 %v10857, 2147483648
        %v10872 = vmul.f32 %v10871, 1.442695
        %v10873 = vpow.pop %v10872
        %v10874 = vadd.f32 %v10873, 1.0
        %v10875 = vrcp.pop %v10874
        %v10876 = vmul.f32 1.0, %v10875
        %v10878 = vrot.slane %v10753, 7
        %v10880 = vmul.f32 %v10869, %v10878
        %v10881 = vmul.f32 %v10863, %v10870
        %v10882 = vadd.f32 %v10880, %v10881
        %v10883 = vtanh.pop %v10882
        %v10884 = vmul.f32 %v10876, %v10883
        %v10885 = vpack.c.bf16 %v10884, %v10884
        %v10887 = vshrl.u32 %v10885, 16
        %v10889 = vrot.slane %v10887, 1
        %10891 = vmatprep.subr.bf16.mxu0 %v10355
        %10892 = vmatpush1.bf16.msra.mxu0 %v10354
        %10893 = vmatprep.subr.bf16.mxu0 %v10351
        %10894 = vmatpush1.bf16.msra.mxu0 %v10350
        %10895 = vmatprep.subr.bf16.mxu0 %v10347
        %10896 = vmatpush1.bf16.msra.mxu0 %v10346
        %10897 = vmatprep.subr.bf16.mxu0 %v10343
        %10898 = vmatpush1.bf16.msra.mxu0 %v10342
        %10899 = vmatprep.subr.bf16.mxu0 %v10339
        %10900 = vmatpush1.bf16.msra.mxu0 %v10338
        %10901 = vmatprep.subr.bf16.mxu0 %v10335
        %10902 = vmatpush1.bf16.msra.mxu0 %v10334
        %10903 = vmatprep.subr.bf16.mxu0 %v10331
        %10904 = vmatpush1.bf16.msra.mxu0 %v10330
        %10905 = vmatprep.subr.bf16.mxu0 %v10327
        %10906 = vmatpush1.bf16.msra.mxu0 %v10326
        %10907 = vmatprep.subr.bf16.mxu0 0
        %10908 = vmatpush2.bf16.msra.mxu0 0
        %10909 = vmatprep.subr.bf16.mxu0 0
        %10910 = vmatpush2.bf16.msra.mxu0 0
        %10911 = vmatprep.subr.bf16.mxu0 0
        %10912 = vmatpush2.bf16.msra.mxu0 0
        %10913 = vmatprep.subr.bf16.mxu0 0
        %10914 = vmatpush2.bf16.msra.mxu0 0
        %10915 = vmatprep.subr.bf16.mxu0 0
        %10916 = vmatpush2.bf16.msra.mxu0 0
        %10917 = vmatprep.subr.bf16.mxu0 0
        %10918 = vmatpush2.bf16.msra.mxu0 0
        %10919 = vmatprep.subr.bf16.mxu0 0
        %10920 = vmatpush2.bf16.msra.mxu0 0
        %10921 = vmatprep.subr.bf16.mxu0 0
        %10922 = vmatpush2.bf16.msra.mxu0 0
        %10923 = vmatprep.mubr.bf16.mxu0 0
        %10924 = vmatmul.mubr.bf16.gmra.mxu0 %v10889
        %v10925 = vpop.f32.mrf.mxu0
        %v10926 = vadd.f32 0.0, %v10925
        %v10927 = vpop.f32.mrf.mxu0
        %v10928 = vadd.f32 0.0, %v10927
        %v10929 = vpop.f32.mrf.mxu0
        %v10930 = vpop.f32.mrf.mxu0
        %10931 = vdwg.mxu0
        %10932 = vmatprep.subr.bf16.mxu0 %v10357
        %10933 = vmatpush1.bf16.msra.mxu0 %v10356
        %10934 = vmatprep.subr.bf16.mxu0 %v10353
        %10935 = vmatpush1.bf16.msra.mxu0 %v10352
        %10936 = vmatprep.subr.bf16.mxu0 %v10349
        %10937 = vmatpush1.bf16.msra.mxu0 %v10348
        %10938 = vmatprep.subr.bf16.mxu0 %v10345
        %10939 = vmatpush1.bf16.msra.mxu0 %v10344
        %10940 = vmatprep.subr.bf16.mxu0 %v10341
        %10941 = vmatpush1.bf16.msra.mxu0 %v10340
        %10942 = vmatprep.subr.bf16.mxu0 %v10337
        %10943 = vmatpush1.bf16.msra.mxu0 %v10336
        %10944 = vmatprep.subr.bf16.mxu0 %v10333
        %10945 = vmatpush1.bf16.msra.mxu0 %v10332
        %10946 = vmatprep.subr.bf16.mxu0 %v10329
        %10947 = vmatpush1.bf16.msra.mxu0 %v10328
        %10948 = vmatprep.subr.bf16.mxu0 0
        %10949 = vmatpush2.bf16.msra.mxu0 0
        %10950 = vmatprep.subr.bf16.mxu0 0
        %10951 = vmatpush2.bf16.msra.mxu0 0
        %10952 = vmatprep.subr.bf16.mxu0 0
        %10953 = vmatpush2.bf16.msra.mxu0 0
        %10954 = vmatprep.subr.bf16.mxu0 0
        %10955 = vmatpush2.bf16.msra.mxu0 0
        %10956 = vmatprep.subr.bf16.mxu0 0
        %10957 = vmatpush2.bf16.msra.mxu0 0
        %10958 = vmatprep.subr.bf16.mxu0 0
        %10959 = vmatpush2.bf16.msra.mxu0 0
        %10960 = vmatprep.subr.bf16.mxu0 0
        %10961 = vmatpush2.bf16.msra.mxu0 0
        %10962 = vmatprep.subr.bf16.mxu0 0
        %10963 = vmatpush2.bf16.msra.mxu0 0
        %10964 = vmatprep.mubr.bf16.mxu0 0
        %10965 = vmatmul.mubr.bf16.gmra.mxu0 %v10889
        %v10966 = vpop.f32.mrf.mxu0
        %v10967 = vadd.f32 0.0, %v10966
        %v10968 = vpop.f32.mrf.mxu0
        %v10969 = vadd.f32 0.0, %v10968
        %v10970 = vpop.f32.mrf.mxu0
        %v10971 = vpop.f32.mrf.mxu0
        %10972 = vdwg.mxu0
        %v10977 = vrot.slane %v10926, 4
        %v10978 = vrot.slane %v10928, 4
        %v10979 = vrot.slane %v10967, 4
        %v10980 = vrot.slane %v10969, 4
        %v10985 = vadd.f32 %v10148, %v10977
        %v10986 = vadd.f32 %v10150, %v10978
        %v10987 = vadd.f32 %v10189, %v10979
        %v10988 = vadd.f32 %v10191, %v10980
        %v10989 = vxor.u32 %v10985, 2147483648
        %v10990 = vmul.f32 %v10989, 1.442695
        %v10991 = vpow.pop %v10990
        %v10992 = vadd.f32 %v10991, 1.0
        %v10993 = vrcp.pop %v10992
        %v10994 = vmul.f32 1.0, %v10993
        %v10995 = vxor.u32 %v10986, 2147483648
        %v10996 = vmul.f32 %v10995, 1.442695
        %v10997 = vpow.pop %v10996
        %v10998 = vadd.f32 %v10997, 1.0
        %v10999 = vrcp.pop %v10998
        %v11000 = vmul.f32 1.0, %v10999
        %v11001 = vtanh.pop %v10987
        %v11002 = vxor.u32 %v10988, 2147483648
        %v11003 = vmul.f32 %v11002, 1.442695
        %v11004 = vpow.pop %v11003
        %v11005 = vadd.f32 %v11004, 1.0
        %v11006 = vrcp.pop %v11005
        %v11007 = vmul.f32 1.0, %v11006
        %v11009 = vrot.slane %v10882, 7
        %v11011 = vmul.f32 %v11000, %v11009
        %v11012 = vmul.f32 %v10994, %v11001
        %v11013 = vadd.f32 %v11011, %v11012
        %v11014 = vtanh.pop %v11013
        %v11015 = vmul.f32 %v11007, %v11014
        %v11016 = vpack.c.bf16 %v11015, %v11015
        %v11018 = vrot.slane %v11016, 2
        %11020 = vmatprep.subr.bf16.mxu0 %v10355
        %11021 = vmatpush1.bf16.msra.mxu0 %v10354
        %11022 = vmatprep.subr.bf16.mxu0 %v10351
        %11023 = vmatpush1.bf16.msra.mxu0 %v10350
        %11024 = vmatprep.subr.bf16.mxu0 %v10347
        %11025 = vmatpush1.bf16.msra.mxu0 %v10346
        %11026 = vmatprep.subr.bf16.mxu0 %v10343
        %11027 = vmatpush1.bf16.msra.mxu0 %v10342
        %11028 = vmatprep.subr.bf16.mxu0 %v10339
        %11029 = vmatpush1.bf16.msra.mxu0 %v10338
        %11030 = vmatprep.subr.bf16.mxu0 %v10335
        %11031 = vmatpush1.bf16.msra.mxu0 %v10334
        %11032 = vmatprep.subr.bf16.mxu0 %v10331
        %11033 = vmatpush1.bf16.msra.mxu0 %v10330
        %11034 = vmatprep.subr.bf16.mxu0 %v10327
        %11035 = vmatpush1.bf16.msra.mxu0 %v10326
        %11036 = vmatprep.subr.bf16.mxu0 0
        %11037 = vmatpush2.bf16.msra.mxu0 0
        %11038 = vmatprep.subr.bf16.mxu0 0
        %11039 = vmatpush2.bf16.msra.mxu0 0
        %11040 = vmatprep.subr.bf16.mxu0 0
        %11041 = vmatpush2.bf16.msra.mxu0 0
        %11042 = vmatprep.subr.bf16.mxu0 0
        %11043 = vmatpush2.bf16.msra.mxu0 0
        %11044 = vmatprep.subr.bf16.mxu0 0
        %11045 = vmatpush2.bf16.msra.mxu0 0
        %11046 = vmatprep.subr.bf16.mxu0 0
        %11047 = vmatpush2.bf16.msra.mxu0 0
        %11048 = vmatprep.subr.bf16.mxu0 0
        %11049 = vmatpush2.bf16.msra.mxu0 0
        %11050 = vmatprep.subr.bf16.mxu0 0
        %11051 = vmatpush2.bf16.msra.mxu0 0
        %11052 = vmatprep.mubr.bf16.mxu0 0
        %11053 = vmatmul.mubr.bf16.gmra.mxu0 %v11018
        %v11054 = vpop.f32.mrf.mxu0
        %v11055 = vadd.f32 0.0, %v11054
        %v11056 = vpop.f32.mrf.mxu0
        %v11057 = vadd.f32 0.0, %v11056
        %v11058 = vpop.f32.mrf.mxu0
        %v11059 = vpop.f32.mrf.mxu0
        %11060 = vdwg.mxu0
        %11061 = vmatprep.subr.bf16.mxu0 %v10357
        %11062 = vmatpush1.bf16.msra.mxu0 %v10356
        %11063 = vmatprep.subr.bf16.mxu0 %v10353
        %11064 = vmatpush1.bf16.msra.mxu0 %v10352
        %11065 = vmatprep.subr.bf16.mxu0 %v10349
        %11066 = vmatpush1.bf16.msra.mxu0 %v10348
        %11067 = vmatprep.subr.bf16.mxu0 %v10345
        %11068 = vmatpush1.bf16.msra.mxu0 %v10344
        %11069 = vmatprep.subr.bf16.mxu0 %v10341
        %11070 = vmatpush1.bf16.msra.mxu0 %v10340
        %11071 = vmatprep.subr.bf16.mxu0 %v10337
        %11072 = vmatpush1.bf16.msra.mxu0 %v10336
        %11073 = vmatprep.subr.bf16.mxu0 %v10333
        %11074 = vmatpush1.bf16.msra.mxu0 %v10332
        %11075 = vmatprep.subr.bf16.mxu0 %v10329
        %11076 = vmatpush1.bf16.msra.mxu0 %v10328
        %11077 = vmatprep.subr.bf16.mxu0 0
        %11078 = vmatpush2.bf16.msra.mxu0 0
        %11079 = vmatprep.subr.bf16.mxu0 0
        %11080 = vmatpush2.bf16.msra.mxu0 0
        %11081 = vmatprep.subr.bf16.mxu0 0
        %11082 = vmatpush2.bf16.msra.mxu0 0
        %11083 = vmatprep.subr.bf16.mxu0 0
        %11084 = vmatpush2.bf16.msra.mxu0 0
        %11085 = vmatprep.subr.bf16.mxu0 0
        %11086 = vmatpush2.bf16.msra.mxu0 0
        %11087 = vmatprep.subr.bf16.mxu0 0
        %11088 = vmatpush2.bf16.msra.mxu0 0
        %11089 = vmatprep.subr.bf16.mxu0 0
        %11090 = vmatpush2.bf16.msra.mxu0 0
        %11091 = vmatprep.subr.bf16.mxu0 0
        %11092 = vmatpush2.bf16.msra.mxu0 0
        %11093 = vmatprep.mubr.bf16.mxu0 0
        %11094 = vmatmul.mubr.bf16.gmra.mxu0 %v11018
        %v11095 = vpop.f32.mrf.mxu0
        %v11096 = vadd.f32 0.0, %v11095
        %v11097 = vpop.f32.mrf.mxu0
        %v11098 = vadd.f32 0.0, %v11097
        %v11099 = vpop.f32.mrf.mxu0
        %v11100 = vpop.f32.mrf.mxu0
        %11101 = vdwg.mxu0
        %v11106 = vrot.slane %v11055, 3
        %v11107 = vrot.slane %v11057, 3
        %v11108 = vrot.slane %v11096, 3
        %v11109 = vrot.slane %v11098, 3
        %v11114 = vadd.f32 %v10148, %v11106
        %v11115 = vadd.f32 %v10150, %v11107
        %v11116 = vadd.f32 %v10189, %v11108
        %v11117 = vadd.f32 %v10191, %v11109
        %v11118 = vxor.u32 %v11114, 2147483648
        %v11119 = vmul.f32 %v11118, 1.442695
        %v11120 = vpow.pop %v11119
        %v11121 = vadd.f32 %v11120, 1.0
        %v11122 = vrcp.pop %v11121
        %v11123 = vmul.f32 1.0, %v11122
        %v11124 = vxor.u32 %v11115, 2147483648
        %v11125 = vmul.f32 %v11124, 1.442695
        %v11126 = vpow.pop %v11125
        %v11127 = vadd.f32 %v11126, 1.0
        %v11128 = vrcp.pop %v11127
        %v11129 = vmul.f32 1.0, %v11128
        %v11130 = vtanh.pop %v11116
        %v11131 = vxor.u32 %v11117, 2147483648
        %v11132 = vmul.f32 %v11131, 1.442695
        %v11133 = vpow.pop %v11132
        %v11134 = vadd.f32 %v11133, 1.0
        %v11135 = vrcp.pop %v11134
        %v11136 = vmul.f32 1.0, %v11135
        %v11138 = vrot.slane %v11013, 7
        %v11140 = vmul.f32 %v11129, %v11138
        %v11141 = vmul.f32 %v11123, %v11130
        %v11142 = vadd.f32 %v11140, %v11141
        %v11143 = vtanh.pop %v11142
        %v11144 = vmul.f32 %v11136, %v11143
        %v11145 = vpack.c.bf16 %v11144, %v11144
        %v11147 = vshrl.u32 %v11145, 16
        %v11149 = vrot.slane %v11147, 2
        %11151 = vmatprep.subr.bf16.mxu0 %v10355
        %11152 = vmatpush1.bf16.msra.mxu0 %v10354
        %11153 = vmatprep.subr.bf16.mxu0 %v10351
        %11154 = vmatpush1.bf16.msra.mxu0 %v10350
        %11155 = vmatprep.subr.bf16.mxu0 %v10347
        %11156 = vmatpush1.bf16.msra.mxu0 %v10346
        %11157 = vmatprep.subr.bf16.mxu0 %v10343
        %11158 = vmatpush1.bf16.msra.mxu0 %v10342
        %11159 = vmatprep.subr.bf16.mxu0 %v10339
        %11160 = vmatpush1.bf16.msra.mxu0 %v10338
        %11161 = vmatprep.subr.bf16.mxu0 %v10335
        %11162 = vmatpush1.bf16.msra.mxu0 %v10334
        %11163 = vmatprep.subr.bf16.mxu0 %v10331
        %11164 = vmatpush1.bf16.msra.mxu0 %v10330
        %11165 = vmatprep.subr.bf16.mxu0 %v10327
        %11166 = vmatpush1.bf16.msra.mxu0 %v10326
        %11167 = vmatprep.subr.bf16.mxu0 0
        %11168 = vmatpush2.bf16.msra.mxu0 0
        %11169 = vmatprep.subr.bf16.mxu0 0
        %11170 = vmatpush2.bf16.msra.mxu0 0
        %11171 = vmatprep.subr.bf16.mxu0 0
        %11172 = vmatpush2.bf16.msra.mxu0 0
        %11173 = vmatprep.subr.bf16.mxu0 0
        %11174 = vmatpush2.bf16.msra.mxu0 0
        %11175 = vmatprep.subr.bf16.mxu0 0
        %11176 = vmatpush2.bf16.msra.mxu0 0
        %11177 = vmatprep.subr.bf16.mxu0 0
        %11178 = vmatpush2.bf16.msra.mxu0 0
        %11179 = vmatprep.subr.bf16.mxu0 0
        %11180 = vmatpush2.bf16.msra.mxu0 0
        %11181 = vmatprep.subr.bf16.mxu0 0
        %11182 = vmatpush2.bf16.msra.mxu0 0
        %11183 = vmatprep.mubr.bf16.mxu0 0
        %11184 = vmatmul.mubr.bf16.gmra.mxu0 %v11149
        %v11185 = vpop.f32.mrf.mxu0
        %v11186 = vadd.f32 0.0, %v11185
        %v11187 = vpop.f32.mrf.mxu0
        %v11188 = vadd.f32 0.0, %v11187
        %v11189 = vpop.f32.mrf.mxu0
        %v11190 = vpop.f32.mrf.mxu0
        %11191 = vdwg.mxu0
        %11192 = vmatprep.subr.bf16.mxu0 %v10357
        %11193 = vmatpush1.bf16.msra.mxu0 %v10356
        %11194 = vmatprep.subr.bf16.mxu0 %v10353
        %11195 = vmatpush1.bf16.msra.mxu0 %v10352
        %11196 = vmatprep.subr.bf16.mxu0 %v10349
        %11197 = vmatpush1.bf16.msra.mxu0 %v10348
        %11198 = vmatprep.subr.bf16.mxu0 %v10345
        %11199 = vmatpush1.bf16.msra.mxu0 %v10344
        %11200 = vmatprep.subr.bf16.mxu0 %v10341
        %11201 = vmatpush1.bf16.msra.mxu0 %v10340
        %11202 = vmatprep.subr.bf16.mxu0 %v10337
        %11203 = vmatpush1.bf16.msra.mxu0 %v10336
        %11204 = vmatprep.subr.bf16.mxu0 %v10333
        %11205 = vmatpush1.bf16.msra.mxu0 %v10332
        %11206 = vmatprep.subr.bf16.mxu0 %v10329
        %11207 = vmatpush1.bf16.msra.mxu0 %v10328
        %11208 = vmatprep.subr.bf16.mxu0 0
        %11209 = vmatpush2.bf16.msra.mxu0 0
        %11210 = vmatprep.subr.bf16.mxu0 0
        %11211 = vmatpush2.bf16.msra.mxu0 0
        %11212 = vmatprep.subr.bf16.mxu0 0
        %11213 = vmatpush2.bf16.msra.mxu0 0
        %11214 = vmatprep.subr.bf16.mxu0 0
        %11215 = vmatpush2.bf16.msra.mxu0 0
        %11216 = vmatprep.subr.bf16.mxu0 0
        %11217 = vmatpush2.bf16.msra.mxu0 0
        %11218 = vmatprep.subr.bf16.mxu0 0
        %11219 = vmatpush2.bf16.msra.mxu0 0
        %11220 = vmatprep.subr.bf16.mxu0 0
        %11221 = vmatpush2.bf16.msra.mxu0 0
        %11222 = vmatprep.subr.bf16.mxu0 0
        %11223 = vmatpush2.bf16.msra.mxu0 0
        %11224 = vmatprep.mubr.bf16.mxu0 0
        %11225 = vmatmul.mubr.bf16.gmra.mxu0 %v11149
        %v11226 = vpop.f32.mrf.mxu0
        %v11227 = vadd.f32 0.0, %v11226
        %v11228 = vpop.f32.mrf.mxu0
        %v11229 = vadd.f32 0.0, %v11228
        %v11230 = vpop.f32.mrf.mxu0
        %v11231 = vpop.f32.mrf.mxu0
        %11232 = vdwg.mxu0
        %v11237 = vrot.slane %v11186, 2
        %v11238 = vrot.slane %v11188, 2
        %v11239 = vrot.slane %v11227, 2
        %v11240 = vrot.slane %v11229, 2
        %v11245 = vadd.f32 %v10148, %v11237
        %v11246 = vadd.f32 %v10150, %v11238
        %v11247 = vadd.f32 %v10189, %v11239
        %v11248 = vadd.f32 %v10191, %v11240
        %v11249 = vxor.u32 %v11245, 2147483648
        %v11250 = vmul.f32 %v11249, 1.442695
        %v11251 = vpow.pop %v11250
        %v11252 = vadd.f32 %v11251, 1.0
        %v11253 = vrcp.pop %v11252
        %v11254 = vmul.f32 1.0, %v11253
        %v11255 = vxor.u32 %v11246, 2147483648
        %v11256 = vmul.f32 %v11255, 1.442695
        %v11257 = vpow.pop %v11256
        %v11258 = vadd.f32 %v11257, 1.0
        %v11259 = vrcp.pop %v11258
        %v11260 = vmul.f32 1.0, %v11259
        %v11261 = vtanh.pop %v11247
        %v11262 = vxor.u32 %v11248, 2147483648
        %v11263 = vmul.f32 %v11262, 1.442695
        %v11264 = vpow.pop %v11263
        %v11265 = vadd.f32 %v11264, 1.0
        %v11266 = vrcp.pop %v11265
        %v11267 = vmul.f32 1.0, %v11266
        %v11269 = vrot.slane %v11142, 7
        %v11271 = vmul.f32 %v11260, %v11269
        %v11272 = vmul.f32 %v11254, %v11261
        %v11273 = vadd.f32 %v11271, %v11272
        %v11274 = vtanh.pop %v11273
        %v11275 = vmul.f32 %v11267, %v11274
        %v11276 = vpack.c.bf16 %v11275, %v11275
        %v11278 = vrot.slane %v11276, 3
        %11280 = vmatprep.subr.bf16.mxu0 %v10355
        %11281 = vmatpush1.bf16.msra.mxu0 %v10354
        %11282 = vmatprep.subr.bf16.mxu0 %v10351
        %11283 = vmatpush1.bf16.msra.mxu0 %v10350
        %11284 = vmatprep.subr.bf16.mxu0 %v10347
        %11285 = vmatpush1.bf16.msra.mxu0 %v10346
        %11286 = vmatprep.subr.bf16.mxu0 %v10343
        %11287 = vmatpush1.bf16.msra.mxu0 %v10342
        %11288 = vmatprep.subr.bf16.mxu0 %v10339
        %11289 = vmatpush1.bf16.msra.mxu0 %v10338
        %11290 = vmatprep.subr.bf16.mxu0 %v10335
        %11291 = vmatpush1.bf16.msra.mxu0 %v10334
        %11292 = vmatprep.subr.bf16.mxu0 %v10331
        %11293 = vmatpush1.bf16.msra.mxu0 %v10330
        %11294 = vmatprep.subr.bf16.mxu0 %v10327
        %11295 = vmatpush1.bf16.msra.mxu0 %v10326
        %11296 = vmatprep.subr.bf16.mxu0 0
        %11297 = vmatpush2.bf16.msra.mxu0 0
        %11298 = vmatprep.subr.bf16.mxu0 0
        %11299 = vmatpush2.bf16.msra.mxu0 0
        %11300 = vmatprep.subr.bf16.mxu0 0
        %11301 = vmatpush2.bf16.msra.mxu0 0
        %11302 = vmatprep.subr.bf16.mxu0 0
        %11303 = vmatpush2.bf16.msra.mxu0 0
        %11304 = vmatprep.subr.bf16.mxu0 0
        %11305 = vmatpush2.bf16.msra.mxu0 0
        %11306 = vmatprep.subr.bf16.mxu0 0
        %11307 = vmatpush2.bf16.msra.mxu0 0
        %11308 = vmatprep.subr.bf16.mxu0 0
        %11309 = vmatpush2.bf16.msra.mxu0 0
        %11310 = vmatprep.subr.bf16.mxu0 0
        %11311 = vmatpush2.bf16.msra.mxu0 0
        %11312 = vmatprep.mubr.bf16.mxu0 0
        %11313 = vmatmul.mubr.bf16.gmra.mxu0 %v11278
        %v11314 = vpop.f32.mrf.mxu0
        %v11315 = vadd.f32 0.0, %v11314
        %v11316 = vpop.f32.mrf.mxu0
        %v11317 = vadd.f32 0.0, %v11316
        %v11318 = vpop.f32.mrf.mxu0
        %v11319 = vpop.f32.mrf.mxu0
        %11320 = vdwg.mxu0
        %11321 = vmatprep.subr.bf16.mxu0 %v10357
        %11322 = vmatpush1.bf16.msra.mxu0 %v10356
        %11323 = vmatprep.subr.bf16.mxu0 %v10353
        %11324 = vmatpush1.bf16.msra.mxu0 %v10352
        %11325 = vmatprep.subr.bf16.mxu0 %v10349
        %11326 = vmatpush1.bf16.msra.mxu0 %v10348
        %11327 = vmatprep.subr.bf16.mxu0 %v10345
        %11328 = vmatpush1.bf16.msra.mxu0 %v10344
        %11329 = vmatprep.subr.bf16.mxu0 %v10341
        %11330 = vmatpush1.bf16.msra.mxu0 %v10340
        %11331 = vmatprep.subr.bf16.mxu0 %v10337
        %11332 = vmatpush1.bf16.msra.mxu0 %v10336
        %11333 = vmatprep.subr.bf16.mxu0 %v10333
        %11334 = vmatpush1.bf16.msra.mxu0 %v10332
        %11335 = vmatprep.subr.bf16.mxu0 %v10329
        %11336 = vmatpush1.bf16.msra.mxu0 %v10328
        %11337 = vmatprep.subr.bf16.mxu0 0
        %11338 = vmatpush2.bf16.msra.mxu0 0
        %11339 = vmatprep.subr.bf16.mxu0 0
        %11340 = vmatpush2.bf16.msra.mxu0 0
        %11341 = vmatprep.subr.bf16.mxu0 0
        %11342 = vmatpush2.bf16.msra.mxu0 0
        %11343 = vmatprep.subr.bf16.mxu0 0
        %11344 = vmatpush2.bf16.msra.mxu0 0
        %11345 = vmatprep.subr.bf16.mxu0 0
        %11346 = vmatpush2.bf16.msra.mxu0 0
        %11347 = vmatprep.subr.bf16.mxu0 0
        %11348 = vmatpush2.bf16.msra.mxu0 0
        %11349 = vmatprep.subr.bf16.mxu0 0
        %11350 = vmatpush2.bf16.msra.mxu0 0
        %11351 = vmatprep.subr.bf16.mxu0 0
        %11352 = vmatpush2.bf16.msra.mxu0 0
        %11353 = vmatprep.mubr.bf16.mxu0 0
        %11354 = vmatmul.mubr.bf16.gmra.mxu0 %v11278
        %v11355 = vpop.f32.mrf.mxu0
        %v11356 = vadd.f32 0.0, %v11355
        %v11357 = vpop.f32.mrf.mxu0
        %v11358 = vadd.f32 0.0, %v11357
        %v11359 = vpop.f32.mrf.mxu0
        %v11360 = vpop.f32.mrf.mxu0
        %11361 = vdwg.mxu0
        %v11366 = vrot.slane %v11315, 1
        %v11367 = vrot.slane %v11317, 1
        %v11368 = vrot.slane %v11356, 1
        %v11369 = vrot.slane %v11358, 1
        %v11374 = vadd.f32 %v10148, %v11366
        %v11375 = vadd.f32 %v10150, %v11367
        %v11376 = vadd.f32 %v10189, %v11368
        %v11377 = vadd.f32 %v10191, %v11369
        %v11378 = vxor.u32 %v11374, 2147483648
        %v11379 = vmul.f32 %v11378, 1.442695
        %v11380 = vpow.pop %v11379
        %v11381 = vadd.f32 %v11380, 1.0
        %v11382 = vrcp.pop %v11381
        %v11383 = vmul.f32 1.0, %v11382
        %v11384 = vxor.u32 %v11375, 2147483648
        %v11385 = vmul.f32 %v11384, 1.442695
        %v11386 = vpow.pop %v11385
        %v11387 = vadd.f32 %v11386, 1.0
        %v11388 = vrcp.pop %v11387
        %v11389 = vmul.f32 1.0, %v11388
        %v11390 = vtanh.pop %v11376
        %v11391 = vxor.u32 %v11377, 2147483648
        %v11392 = vmul.f32 %v11391, 1.442695
        %v11393 = vpow.pop %v11392
        %v11394 = vadd.f32 %v11393, 1.0
        %v11395 = vrcp.pop %v11394
        %v11396 = vmul.f32 1.0, %v11395
        %v11398 = vrot.slane %v11273, 7
        %v11400 = vmul.f32 %v11389, %v11398
        %v11401 = vmul.f32 %v11383, %v11390
        %v11402 = vadd.f32 %v11400, %v11401
        %v11403 = vtanh.pop %v11402
        %v11404 = vmul.f32 %v11396, %v11403
        %v11405 = vsel %vm9890, %v10499, %v10625
        %v11406 = vsel %vm8295, %v11405, %v10755
        %v11407 = vsel %vm8285, %v11406, %v10884
        %v11408 = vsel %vm750, %v11407, %v11015
        %v11409 = vsel %vm8266, %v11408, %v11144
        %v11410 = vsel %vm8256, %v11409, %v11275
        %v11411 = vsel %vm8246, %v11410, %v11404
        %v11412 = vpack.c.bf16 %v11411, %v11411
        %v11413 = vld [vmem:[#allocation20] sm:$0xf]
        %v11414 = vld [vmem:[#allocation20 + $0x4] sm:$0xf]
        %v11415 = vld [vmem:[#allocation20 + $0x8] sm:$0xf]
        %v11416 = vld [vmem:[#allocation20 + $0xc] sm:$0xf]
        %v11417 = vld [vmem:[#allocation20 + $0x10] sm:$0xf]
        %v11418 = vld [vmem:[#allocation20 + $0x14] sm:$0xf]
        %v11419 = vld [vmem:[#allocation20 + $0x18] sm:$0xf]
        %v11420 = vld [vmem:[#allocation20 + $0x1c] sm:$0xf]
        %v11421 = vld [vmem:[#allocation20 + $0x20] sm:$0xf]
        %v11422 = vld [vmem:[#allocation20 + $0x24] sm:$0xf]
        %v11423 = vld [vmem:[#allocation20 + $0x28] sm:$0xf]
        %v11424 = vld [vmem:[#allocation20 + $0x2c] sm:$0xf]
        %v11425 = vld [vmem:[#allocation20 + $0x30] sm:$0xf]
        %v11426 = vld [vmem:[#allocation20 + $0x34] sm:$0xf]
        %v11427 = vld [vmem:[#allocation20 + $0x38] sm:$0xf]
        %v11428 = vld [vmem:[#allocation20 + $0x3c] sm:$0xf]
        %v11429 = vld [vmem:[#allocation22] sm:$0x1]
        %v11431 = vlaneseq
        %v11432 = vshrl.u32 %v11431, 7
        %v11433 = vsub.s32 0, %v11432
        %v11434 = vrot.slane %v11429, %v11433
        %v11452 = vunpack.c.l.b16 %v11413
        %v11453 = vunpack.c.l.b16 %v11414
        %v11454 = vunpack.c.l.b16 %v11415
        %v11455 = vunpack.c.l.b16 %v11416
        %v11456 = vunpack.c.l.b16 %v11417
        %v11457 = vunpack.c.l.b16 %v11418
        %v11458 = vunpack.c.l.b16 %v11419
        %v11459 = vunpack.c.l.b16 %v11420
        %v11460 = vunpack.c.l.b16 %v11421
        %v11461 = vunpack.c.l.b16 %v11422
        %v11462 = vunpack.c.l.b16 %v11423
        %v11463 = vunpack.c.l.b16 %v11424
        %v11464 = vunpack.c.l.b16 %v11425
        %v11465 = vunpack.c.l.b16 %v11426
        %v11466 = vunpack.c.l.b16 %v11427
        %v11467 = vunpack.c.l.b16 %v11428
        %v11468 = vpack.c.b16 %v11453, %v11452
        %v11469 = vpack.c.b16 %v11455, %v11454
        %v11470 = vpack.c.b16 %v11457, %v11456
        %v11471 = vpack.c.b16 %v11459, %v11458
        %v11472 = vpack.c.b16 %v11461, %v11460
        %v11473 = vpack.c.b16 %v11463, %v11462
        %v11474 = vpack.c.b16 %v11465, %v11464
        %v11475 = vpack.c.b16 %v11467, %v11466
        %11484 = vmatprep.subr.bf16.mxu0 0
        %11485 = vmatpush1.bf16.msra.mxu0 %v11475
        %11486 = vmatprep.subr.bf16.mxu0 0
        %11487 = vmatpush1.bf16.msra.mxu0 %v11474
        %11488 = vmatprep.subr.bf16.mxu0 0
        %11489 = vmatpush1.bf16.msra.mxu0 %v11473
        %11490 = vmatprep.subr.bf16.mxu0 0
        %11491 = vmatpush1.bf16.msra.mxu0 %v11472
        %11492 = vmatprep.subr.bf16.mxu0 0
        %11493 = vmatpush1.bf16.msra.mxu0 %v11471
        %11494 = vmatprep.subr.bf16.mxu0 0
        %11495 = vmatpush1.bf16.msra.mxu0 %v11470
        %11496 = vmatprep.subr.bf16.mxu0 0
        %11497 = vmatpush1.bf16.msra.mxu0 %v11469
        %11498 = vmatprep.subr.bf16.mxu0 0
        %11499 = vmatpush1.bf16.msra.mxu0 %v11468
        %11500 = vmatprep.subr.bf16.mxu0 0
        %11501 = vmatpush2.bf16.msra.mxu0 0
        %11502 = vmatprep.subr.bf16.mxu0 0
        %11503 = vmatpush2.bf16.msra.mxu0 0
        %11504 = vmatprep.subr.bf16.mxu0 0
        %11505 = vmatpush2.bf16.msra.mxu0 0
        %11506 = vmatprep.subr.bf16.mxu0 0
        %11507 = vmatpush2.bf16.msra.mxu0 0
        %11508 = vmatprep.subr.bf16.mxu0 0
        %11509 = vmatpush2.bf16.msra.mxu0 0
        %11510 = vmatprep.subr.bf16.mxu0 0
        %11511 = vmatpush2.bf16.msra.mxu0 0
        %11512 = vmatprep.subr.bf16.mxu0 0
        %11513 = vmatpush2.bf16.msra.mxu0 0
        %11514 = vmatprep.subr.bf16.mxu0 0
        %11515 = vmatpush2.bf16.msra.mxu0 0
        %11516 = vmatprep.mubr.bf16.mxu0 0
        %11517 = vmatmul.mubr.bf16.gmra.mxu0 %v11412
        %v11518 = vpop.f32.mrf.mxu0
        %v11519 = vadd.f32 %v11434, %v11518
        %v11520 = vpop.f32.mrf.mxu0
        %v11521 = vpop.f32.mrf.mxu0
        %v11522 = vpop.f32.mrf.mxu0
        %11523 = vdwg.mxu0
        %v11524 = vmax.f32 %v11519, 0.0
        %v11525 = vpack.c.bf16 %v11524, %v11524
        %v11526 = vld [vmem:[#allocation23] sm:$0xf]
        %v11527 = vld [vmem:[#allocation23 + $0x4] sm:$0xf]
        %v11528 = vld [vmem:[#allocation23 + $0x8] sm:$0xf]
        %v11529 = vld [vmem:[#allocation23 + $0xc] sm:$0xf]
        %v11530 = vld [vmem:[#allocation23 + $0x10] sm:$0xf]
        %v11531 = vld [vmem:[#allocation23 + $0x14] sm:$0xf]
        %v11532 = vld [vmem:[#allocation23 + $0x18] sm:$0xf]
        %v11533 = vld [vmem:[#allocation23 + $0x1c] sm:$0xf]
        %v11534 = vld [vmem:[#allocation23 + $0x20] sm:$0xf]
        %v11535 = vld [vmem:[#allocation23 + $0x24] sm:$0xf]
        %v11536 = vld [vmem:[#allocation23 + $0x28] sm:$0xf]
        %v11537 = vld [vmem:[#allocation23 + $0x2c] sm:$0xf]
        %v11538 = vld [vmem:[#allocation23 + $0x30] sm:$0xf]
        %v11539 = vld [vmem:[#allocation23 + $0x34] sm:$0xf]
        %v11540 = vld [vmem:[#allocation23 + $0x38] sm:$0xf]
        %v11541 = vld [vmem:[#allocation23 + $0x3c] sm:$0xf]
        %v11542 = vld [vmem:[#allocation25] sm:$0x1]
        %v11544 = vlaneseq
        %v11545 = vshrl.u32 %v11544, 7
        %v11546 = vsub.s32 0, %v11545
        %v11547 = vrot.slane %v11542, %v11546
        %v11565 = vunpack.c.l.b16 %v11526
        %v11566 = vunpack.c.l.b16 %v11527
        %v11567 = vunpack.c.l.b16 %v11528
        %v11568 = vunpack.c.l.b16 %v11529
        %v11569 = vunpack.c.l.b16 %v11530
        %v11570 = vunpack.c.l.b16 %v11531
        %v11571 = vunpack.c.l.b16 %v11532
        %v11572 = vunpack.c.l.b16 %v11533
        %v11573 = vunpack.c.l.b16 %v11534
        %v11574 = vunpack.c.l.b16 %v11535
        %v11575 = vunpack.c.l.b16 %v11536
        %v11576 = vunpack.c.l.b16 %v11537
        %v11577 = vunpack.c.l.b16 %v11538
        %v11578 = vunpack.c.l.b16 %v11539
        %v11579 = vunpack.c.l.b16 %v11540
        %v11580 = vunpack.c.l.b16 %v11541
        %v11581 = vpack.c.b16 %v11566, %v11565
        %v11582 = vpack.c.b16 %v11568, %v11567
        %v11583 = vpack.c.b16 %v11570, %v11569
        %v11584 = vpack.c.b16 %v11572, %v11571
        %v11585 = vpack.c.b16 %v11574, %v11573
        %v11586 = vpack.c.b16 %v11576, %v11575
        %v11587 = vpack.c.b16 %v11578, %v11577
        %v11588 = vpack.c.b16 %v11580, %v11579
        %11597 = vmatprep.subr.bf16.mxu0 0
        %11598 = vmatpush1.bf16.msra.mxu0 %v11588
        %11599 = vmatprep.subr.bf16.mxu0 0
        %11600 = vmatpush1.bf16.msra.mxu0 %v11587
        %11601 = vmatprep.subr.bf16.mxu0 0
        %11602 = vmatpush1.bf16.msra.mxu0 %v11586
        %11603 = vmatprep.subr.bf16.mxu0 0
        %11604 = vmatpush1.bf16.msra.mxu0 %v11585
        %11605 = vmatprep.subr.bf16.mxu0 0
        %11606 = vmatpush1.bf16.msra.mxu0 %v11584
        %11607 = vmatprep.subr.bf16.mxu0 0
        %11608 = vmatpush1.bf16.msra.mxu0 %v11583
        %11609 = vmatprep.subr.bf16.mxu0 0
        %11610 = vmatpush1.bf16.msra.mxu0 %v11582
        %11611 = vmatprep.subr.bf16.mxu0 0
        %11612 = vmatpush1.bf16.msra.mxu0 %v11581
        %11613 = vmatprep.subr.bf16.mxu0 0
        %11614 = vmatpush2.bf16.msra.mxu0 0
        %11615 = vmatprep.subr.bf16.mxu0 0
        %11616 = vmatpush2.bf16.msra.mxu0 0
        %11617 = vmatprep.subr.bf16.mxu0 0
        %11618 = vmatpush2.bf16.msra.mxu0 0
        %11619 = vmatprep.subr.bf16.mxu0 0
        %11620 = vmatpush2.bf16.msra.mxu0 0
        %11621 = vmatprep.subr.bf16.mxu0 0
        %11622 = vmatpush2.bf16.msra.mxu0 0
        %11623 = vmatprep.subr.bf16.mxu0 0
        %11624 = vmatpush2.bf16.msra.mxu0 0
        %11625 = vmatprep.subr.bf16.mxu0 0
        %11626 = vmatpush2.bf16.msra.mxu0 0
        %11627 = vmatprep.subr.bf16.mxu0 0
        %11628 = vmatpush2.bf16.msra.mxu0 0
        %11629 = vmatprep.mubr.bf16.mxu0 0
        %11630 = vmatmul.mubr.bf16.gmra.mxu0 %v11525
        %v11631 = vpop.f32.mrf.mxu0
        %v11632 = vadd.f32 %v11547, %v11631
        %v11633 = vpop.f32.mrf.mxu0
        %v11634 = vpop.f32.mrf.mxu0
        %v11635 = vpop.f32.mrf.mxu0
        %11636 = vdwg.mxu0
        %vm11637 = vcmask 23552
        %11638 = vst.msk [vmem:[%s745] sm:$0xff] %vm11637, %v11632
        %p11639 = scmp.lt.s32.totalorder %s38, 1
        %s11640 = scalar_select %p11639, %s38, 1
        %s11641 = smul.addr %s11640, 8
        %s11642 = scalar_lea.vmem %s15, %s11641
        // Predicated region
        $region141: #{forward.1} parent=79 // pred_check
          %p11643 = pneg %p386
        $region142: #{forward.1} parent=79 // pred_check_branch
          %11645 = sbr.rel (%p11643) target = $region144
        $region143: #{forward.1} parent=79 // pred_region
          _
        $region144: #{forward.1} parent=79 // pred_fallthru
          _
      $region80: #{forward.1} parent=5 // pred_fallthru
        _
      %p11646 = scmp.le.s32.totalorder 2, %s33
      // Predicated region
      $region145: #{forward.1} parent=5 // pred_check
        %p11647 = pneg %p11646
      $region146: #{forward.1} parent=5 // pred_check_branch
        %11649 = sbr.rel (%p11647) target = $region148
      $region147: #{forward.1} parent=5 // pred_region
        %s11650 = ssub.s32 %s33, 2
        // Predicated region
        $region149: #{forward.1} parent=147 // pred_check
          %p11651 = pneg %p392
        $region150: #{forward.1} parent=147 // pred_check_branch
          %11653 = sbr.rel (%p11651) target = $region152
        $region151: #{forward.1} parent=147 // pred_region
          %p11654 = scmp.lt.s32.totalorder %s39, 1
          %s11655 = scalar_select %p11654, %s39, 1
          %s11656 = smul.addr %s11655, 8
          %s11657 = scalar_lea.vmem %s15, %s11656
        $region152: #{forward.1} parent=147 // pred_fallthru
          _
      $region148: #{forward.1} parent=5 // pred_fallthru
        _
    $region6: #{forward.1} parent=1 // loop_footer
      %s37 = sadd.s32 1, %s33
    $region7: #{forward.1} parent=1 // loop_footer_branch
      %32 = sbr.rel target = $region3
    $region8: #{forward.1} parent=1 // loop_exit
      _
    %11658 = vsyncpa [#allocation4], 1
    %s11659 = scalar_lea.sflag [#allocation4], 1
    %11660 = vsyncpa %s11659, 1
    %11661 = vsyncpa [#allocation6], 1
    %11662 = vsyncpa [#allocation9], 1
    %11663 = vsyncpa [#allocation12], 1
    %11664 = vsyncpa [#allocation15], 1
    %11665 = vsyncpa [#allocation18], 1
    %s11666 = scalar_lea.sflag [#allocation18], 1
    %11667 = vsyncpa %s11666, 1
    %11668 = vsyncpa [#allocation21], 1
    %11669 = vsyncpa [#allocation24], 1

</llo_original>
